<compile_context>
chip_gen: v7x
topology: tpu7x:2x2x1
jax: 0.10.0
libtpu: 0.0.40
codegen_flags: <defaults>
</compile_context>

<pallas_src>
import functools
import math

import jax
import jax.numpy as jnp
from jax.experimental import pallas as pl
from jax.experimental.pallas import tpu as pltpu


VMEM_LIMIT = 32 * 1024 * 1024  # safe on v5e/v6e (128 MiB phys) and v7x (64 MiB phys)


def _round_up(x, m):
    return (x + m - 1) // m * m


# --------------------------- generic matmul + bias -------------------------- #

def _matmul_bias_kernel(x_ref, w_ref, b_ref, o_ref, acc_ref, *, apply_relu):
    # grid = (M/tm, N/tn, K/tk); K is the last ("arbitrary") axis.
    @pl.when(pl.program_id(2) == 0)
    def _():
        acc_ref[...] = jnp.zeros_like(acc_ref)

    acc_ref[...] += jnp.dot(x_ref[...], w_ref[...],
                            preferred_element_type=jnp.float32)

    @pl.when(pl.program_id(2) == pl.num_programs(2) - 1)
    def _():
        out = acc_ref[...] + b_ref[...]          # bias in f32 on the accumulator
        if apply_relu:
            out = jnp.maximum(out, 0.0)
        o_ref[...] = out.astype(o_ref.dtype)     # single store


def matmul_bias(x, w, b, *, apply_relu=False, out_dtype=jnp.float32,
                max_tm=256, max_tn=512, max_tk=512):
    """y = x @ w + b (optional ReLU). bf16 MXU inputs, f32 accumulation.

    M is padded to a multiple of 8, N to a multiple of 128 (lane-dense stores),
    K to a multiple of 128; padding is zeros and sliced off afterwards.
    """
    M, K = x.shape
    K2, N = w.shape
    assert K == K2 and b.shape == (N,)

    tm = min(max_tm, _round_up(M, 8))
    tn = min(max_tn, _round_up(N, 128))
    tk = min(max_tk, _round_up(K, 128))
    Mp, Np, Kp = _round_up(M, tm), _round_up(N, tn), _round_up(K, tk)

    xp = jnp.pad(x.astype(jnp.bfloat16), ((0, Mp - M), (0, Kp - K)))
    wp = jnp.pad(w.astype(jnp.bfloat16), ((0, Kp - K), (0, Np - N)))
    bp = jnp.pad(b.astype(jnp.float32), (0, Np - N)).reshape(1, Np)

    grid = (Mp // tm, Np // tn, Kp // tk)
    out = pl.pallas_call(
        functools.partial(_matmul_bias_kernel, apply_relu=apply_relu),
        out_shape=jax.ShapeDtypeStruct((Mp, Np), out_dtype),
        grid=grid,
        in_specs=[
            pl.BlockSpec((tm, tk), lambda i, j, k: (i, k)),
            pl.BlockSpec((tk, tn), lambda i, j, k: (k, j)),
            pl.BlockSpec((1, tn), lambda i, j, k: (0, j)),   # constant i/k -> stays resident
        ],
        out_specs=pl.BlockSpec((tm, tn), lambda i, j, k: (i, j)),
        scratch_shapes=[pltpu.VMEM((tm, tn), jnp.float32)],
        compiler_params=pltpu.CompilerParams(
            dimension_semantics=("parallel", "parallel", "arbitrary"),
            vmem_limit_bytes=VMEM_LIMIT),
    )(xp, wp, bp)
    return out[:M, :N]


# ------------------------------ 3x3 conv + ReLU ----------------------------- #

def _conv3x3_kernel(x_ref, w_ref, b_ref, o_ref, *, Wp, L):
    # x_ref: (1, Sp_pad, Cin) bf16 -- whole padded image (flattened spatial) for
    #        one batch element, resident in VMEM.
    # w_ref: (9, Cin, Cout) bf16, b_ref: (1, Cout) f32, o_ref: (1, L, Cout) bf16.
    #
    # For tap (kh, kw): out[h*Wp + w] += xflat[h*Wp + w + kh*Wp + kw] @ W[kh,kw].
    # We slice the bf16 input rows per tap (static offsets; cheap sublane shift
    # of L x Cin values) and accumulate 9 matmuls in an f32 register tile --
    # no im2col, no HBM blow-up.
    x2 = x_ref[0]                                  # (Sp_pad, Cin)
    cout = o_ref.shape[-1]
    acc = jnp.zeros((L, cout), jnp.float32)
    for k in range(9):
        kh, kw = divmod(k, 3)
        off = kh * Wp + kw
        acc = acc + jnp.dot(x2[off:off + L], w_ref[k],
                            preferred_element_type=jnp.float32)
    acc = acc + b_ref[...]                         # bias in f32
    acc = jnp.maximum(acc, 0.0)                    # fused ReLU
    o_ref[0] = acc.astype(o_ref.dtype)


def conv3x3_relu(x_nhwc, w, b):
    """3x3 conv, stride 1, pad 1, fused bias + ReLU. bf16 MXU, f32 accumulate."""
    N, H, W, Cin = x_nhwc.shape
    KH, KW, Cin2, Cout = w.shape
    assert (KH, KW, Cin2) == (3, 3, Cin)

    Hp, Wp = H + 2, W + 2
    Sp = Hp * Wp              # flattened padded spatial
    L = H * Wp                # rows of the (padded-width) output slab
    Sp_pad = _round_up(Sp + 2, 8)   # room for the largest tap shift (2*Wp+2)

    xp = jnp.pad(x_nhwc, ((0, 0), (1, 1), (1, 1), (0, 0)))
    xf = xp.reshape(N, Sp, Cin)                               # free reshape
    xf = jnp.pad(xf, ((0, 0), (0, Sp_pad - Sp), (0, 0))).astype(jnp.bfloat16)
    w9 = w.reshape(9, Cin, Cout).astype(jnp.bfloat16)
    b2 = b.reshape(1, Cout).astype(jnp.float32)

    # TODO(synk): for large H*W the whole padded image per batch may not fit VMEM;
    # that case needs halo-overlapped row tiling (pl.Element offsets) not done here.
    out = pl.pallas_call(
        functools.partial(_conv3x3_kernel, Wp=Wp, L=L),
        out_shape=jax.ShapeDtypeStruct((N, L, Cout), jnp.bfloat16),
        grid=(N,),
        in_specs=[
            pl.BlockSpec((1, Sp_pad, Cin), lambda n: (n, 0, 0)),
            pl.BlockSpec((9, Cin, Cout), lambda n: (0, 0, 0)),   # resident weights
            pl.BlockSpec((1, Cout), lambda n: (0, 0)),           # resident bias
        ],
        out_specs=pl.BlockSpec((1, L, Cout), lambda n: (n, 0, 0)),
        compiler_params=pltpu.CompilerParams(
            dimension_semantics=("parallel",),
            vmem_limit_bytes=VMEM_LIMIT),
    )(xf, w9, b2)

    # rows are h*Wp + w on the padded-width grid: drop the 2 wrap columns.
    return out.reshape(N, H, Wp, Cout)[:, :, :W, :]


# -------------------------------- 2x2 maxpool ------------------------------- #

def _maxpool_kernel(a_ref, b_ref, c_ref, d_ref, o_ref):
    # pairwise elementwise max -> pure VPU, no cross-lane reduce
    o_ref[...] = jnp.maximum(jnp.maximum(a_ref[...], b_ref[...]),
                             jnp.maximum(c_ref[...], d_ref[...]))


def maxpool2x2(x_nhwc):
    """2x2 / stride-2 max pooling (floors odd H/W like torch's default)."""
    N, H, W, C = x_nhwc.shape
    Ho, Wo = H // 2, W // 2
    # 4 window taps as 4 separate (M, C) inputs (cheap XLA strided slices).
    views = [x_nhwc[:, i:2 * Ho:2, j:2 * Wo:2, :].reshape(N * Ho * Wo, C)
             for i in (0, 1) for j in (0, 1)]
    M = N * Ho * Wo

    tile_m = M                       # tiny-M fallback: single full block
    for t in (2048, 1024, 512, 256, 128):
        if M % t == 0:
            tile_m = t
            break

    out = pl.pallas_call(
        _maxpool_kernel,
        out_shape=jax.ShapeDtypeStruct((M, C), x_nhwc.dtype),
        grid=(M // tile_m,),
        in_specs=[pl.BlockSpec((tile_m, C), lambda i: (i, 0)) for _ in range(4)],
        out_specs=pl.BlockSpec((tile_m, C), lambda i: (i, 0)),
        compiler_params=pltpu.CompilerParams(
            dimension_semantics=("parallel",),
            vmem_limit_bytes=VMEM_LIMIT),
    )(*views)
    return out.reshape(N, Ho, Wo, C)


# ------------------------------- VGG wiring --------------------------------- #

CFG = [16, 'M', 32, 'M', 64, 'M', 512, 'M']   # small VGG-style features


def init_vgg_params(key, cfg, in_channels=3, num_classes=1000):
    """Deterministic init matching VGG._initialize_weights semantics."""
    conv_params = []
    c_in = in_channels
    for v in cfg:
        if v == 'M':
            continue
        key, k1 = jax.random.split(key)
        n = 3 * 3 * v                              # kh * kw * out_channels (fan_out)
        w = jax.random.normal(k1, (3, 3, c_in, v), jnp.float32) * math.sqrt(2.0 / n)
        b = jnp.zeros((v,), jnp.float32)
        conv_params.append((w, b))
        c_in = v
    key, k1 = jax.random.split(key)
    wc = jax.random.normal(k1, (512, num_classes), jnp.float32) * 0.01
    bc = jnp.zeros((num_classes,), jnp.float32)
    return conv_params, (wc, bc)


def vgg_forward(x_nchw, conv_params, cls_params, cfg):
    x = jnp.transpose(x_nchw, (0, 2, 3, 1)).astype(jnp.bfloat16)   # NCHW -> NHWC
    ci = 0
    for v in cfg:
        if v == 'M':
            x = maxpool2x2(x)
        else:
            w, b = conv_params[ci]
            x = conv3x3_relu(x, w, b)
            ci += 1
    N, Hf, Wf, Cf = x.shape
    # final spatial is 1x1, so NHWC flatten == PyTorch's NCHW x.view(N, -1)
    assert Hf == 1 and Wf == 1 and Cf == 512, (Hf, Wf, Cf)
    feat = x.reshape(N, Cf)
    wc, bc = cls_params
    # classifier: N padded 1000 -> 1024 inside matmul_bias (lane-dense), sliced back
    return matmul_bias(feat, wc, bc, apply_relu=False, out_dtype=jnp.float32)


if __name__ == "__main__":
    key = jax.random.PRNGKey(0)
    key, kx, kp = jax.random.split(key, 3)

    num_classes = 1000
    conv_params, cls_params = init_vgg_params(kp, CFG, in_channels=3,
                                              num_classes=num_classes)

    # small input consistent with the module: 4 pools bring 16x16 -> 1x1x512
    x = jax.random.normal(kx, (2, 3, 16, 16), jnp.float32)

    fwd = jax.jit(functools.partial(vgg_forward, cfg=CFG))
    out = fwd(x, conv_params, cls_params)
    jax.block_until_ready(out)

    assert out.shape == (2, num_classes), out.shape
    assert jnp.all(jnp.isfinite(out))
    print("KERNEL_OK")
</pallas_src>

<mosaic_0001>
module attributes {stable_mosaic.version = 11 : i64} {
  func.func @_conv3x3_kernel(%arg0: i32, %arg1: memref<1x328x3xbf16, #tpu.memory_space<vmem>>, %arg2: memref<9x3x16xbf16, #tpu.memory_space<vmem>>, %arg3: memref<1x16xf32, #tpu.memory_space<vmem>>, %arg4: memref<1x288x16xbf16, #tpu.memory_space<vmem>>) attributes {dimension_semantics = [#tpu.dimension_semantics<parallel>], iteration_bounds = array<i64: 2>, scalar_prefetch = 0 : i64, scratch_operands = 0 : i64, tpu.core_type = #tpu.core_type<tc>, window_params = [{transform_indices = @transform_0, window_bounds = array<i64: 1, 328, 3>}, {pipeline_mode = #tpu.pipeline_mode<synchronous>, transform_indices = @transform_1, window_bounds = array<i64: 9, 3, 16>}, {pipeline_mode = #tpu.pipeline_mode<synchronous>, transform_indices = @transform_2, window_bounds = array<i64: 1, 16>}, {transform_indices = @transform_3, window_bounds = array<i64: 1, 288, 16>}]} {
    %c0 = arith.constant 0 : index
    %c0_0 = arith.constant 0 : index
    %c0_1 = arith.constant 0 : index
    %0 = vector.load %arg1[%c0, %c0_0, %c0_1] : memref<1x328x3xbf16, #tpu.memory_space<vmem>>, vector<1x328x3xbf16>
    %1 = vector.shape_cast %0 : vector<1x328x3xbf16> to vector<328x3xbf16>
    %cst = arith.constant 0.000000e+00 : f32
    %2 = vector.broadcast %cst : f32 to vector<288x16xf32>
    %3 = vector.extract_strided_slice %1 {offsets = [0, 0], sizes = [288, 3], strides = [1, 1]} : vector<328x3xbf16> to vector<288x3xbf16>
    %c0_2 = arith.constant 0 : index
    %c0_3 = arith.constant 0 : index
    %c0_4 = arith.constant 0 : index
    %4 = vector.load %arg2[%c0_2, %c0_3, %c0_4] : memref<9x3x16xbf16, #tpu.memory_space<vmem>>, vector<1x3x16xbf16>
    %5 = vector.shape_cast %4 : vector<1x3x16xbf16> to vector<3x16xbf16>
    %cst_5 = arith.constant dense<0.000000e+00> : vector<288x16xf32>
    %6 = tpu.matmul %3, %5, %cst_5 {dimension_numbers = #tpu.dot_dimension_numbers<[1], [0], [0], [1], [0, 0, 1, 1], [], []>} : vector<288x3xbf16>, vector<3x16xbf16>, vector<288x16xf32> -> vector<288x16xf32>
    %7 = arith.addf %2, %6 : vector<288x16xf32>
    %8 = vector.extract_strided_slice %1 {offsets = [1, 0], sizes = [288, 3], strides = [1, 1]} : vector<328x3xbf16> to vector<288x3xbf16>
    %c1 = arith.constant 1 : index
    %c0_6 = arith.constant 0 : index
    %c0_7 = arith.constant 0 : index
    %9 = vector.load %arg2[%c1, %c0_6, %c0_7] : memref<9x3x16xbf16, #tpu.memory_space<vmem>>, vector<1x3x16xbf16>
    %10 = vector.shape_cast %9 : vector<1x3x16xbf16> to vector<3x16xbf16>
    %cst_8 = arith.constant dense<0.000000e+00> : vector<288x16xf32>
    %11 = tpu.matmul %8, %10, %cst_8 {dimension_numbers = #tpu.dot_dimension_numbers<[1], [0], [0], [1], [0, 0, 1, 1], [], []>} : vector<288x3xbf16>, vector<3x16xbf16>, vector<288x16xf32> -> vector<288x16xf32>
    %12 = arith.addf %7, %11 : vector<288x16xf32>
    %13 = vector.extract_strided_slice %1 {offsets = [2, 0], sizes = [288, 3], strides = [1, 1]} : vector<328x3xbf16> to vector<288x3xbf16>
    %c2 = arith.constant 2 : index
    %c0_9 = arith.constant 0 : index
    %c0_10 = arith.constant 0 : index
    %14 = vector.load %arg2[%c2, %c0_9, %c0_10] : memref<9x3x16xbf16, #tpu.memory_space<vmem>>, vector<1x3x16xbf16>
    %15 = vector.shape_cast %14 : vector<1x3x16xbf16> to vector<3x16xbf16>
    %cst_11 = arith.constant dense<0.000000e+00> : vector<288x16xf32>
    %16 = tpu.matmul %13, %15, %cst_11 {dimension_numbers = #tpu.dot_dimension_numbers<[1], [0], [0], [1], [0, 0, 1, 1], [], []>} : vector<288x3xbf16>, vector<3x16xbf16>, vector<288x16xf32> -> vector<288x16xf32>
    %17 = arith.addf %12, %16 : vector<288x16xf32>
    %18 = vector.extract_strided_slice %1 {offsets = [18, 0], sizes = [288, 3], strides = [1, 1]} : vector<328x3xbf16> to vector<288x3xbf16>
    %c3 = arith.constant 3 : index
    %c0_12 = arith.constant 0 : index
    %c0_13 = arith.constant 0 : index
    %19 = vector.load %arg2[%c3, %c0_12, %c0_13] : memref<9x3x16xbf16, #tpu.memory_space<vmem>>, vector<1x3x16xbf16>
    %20 = vector.shape_cast %19 : vector<1x3x16xbf16> to vector<3x16xbf16>
    %cst_14 = arith.constant dense<0.000000e+00> : vector<288x16xf32>
    %21 = tpu.matmul %18, %20, %cst_14 {dimension_numbers = #tpu.dot_dimension_numbers<[1], [0], [0], [1], [0, 0, 1, 1], [], []>} : vector<288x3xbf16>, vector<3x16xbf16>, vector<288x16xf32> -> vector<288x16xf32>
    %22 = arith.addf %17, %21 : vector<288x16xf32>
    %23 = vector.extract_strided_slice %1 {offsets = [19, 0], sizes = [288, 3], strides = [1, 1]} : vector<328x3xbf16> to vector<288x3xbf16>
    %c4 = arith.constant 4 : index
    %c0_15 = arith.constant 0 : index
    %c0_16 = arith.constant 0 : index
    %24 = vector.load %arg2[%c4, %c0_15, %c0_16] : memref<9x3x16xbf16, #tpu.memory_space<vmem>>, vector<1x3x16xbf16>
    %25 = vector.shape_cast %24 : vector<1x3x16xbf16> to vector<3x16xbf16>
    %cst_17 = arith.constant dense<0.000000e+00> : vector<288x16xf32>
    %26 = tpu.matmul %23, %25, %cst_17 {dimension_numbers = #tpu.dot_dimension_numbers<[1], [0], [0], [1], [0, 0, 1, 1], [], []>} : vector<288x3xbf16>, vector<3x16xbf16>, vector<288x16xf32> -> vector<288x16xf32>
    %27 = arith.addf %22, %26 : vector<288x16xf32>
    %28 = vector.extract_strided_slice %1 {offsets = [20, 0], sizes = [288, 3], strides = [1, 1]} : vector<328x3xbf16> to vector<288x3xbf16>
    %c5 = arith.constant 5 : index
    %c0_18 = arith.constant 0 : index
    %c0_19 = arith.constant 0 : index
    %29 = vector.load %arg2[%c5, %c0_18, %c0_19] : memref<9x3x16xbf16, #tpu.memory_space<vmem>>, vector<1x3x16xbf16>
    %30 = vector.shape_cast %29 : vector<1x3x16xbf16> to vector<3x16xbf16>
    %cst_20 = arith.constant dense<0.000000e+00> : vector<288x16xf32>
    %31 = tpu.matmul %28, %30, %cst_20 {dimension_numbers = #tpu.dot_dimension_numbers<[1], [0], [0], [1], [0, 0, 1, 1], [], []>} : vector<288x3xbf16>, vector<3x16xbf16>, vector<288x16xf32> -> vector<288x16xf32>
    %32 = arith.addf %27, %31 : vector<288x16xf32>
    %33 = vector.extract_strided_slice %1 {offsets = [36, 0], sizes = [288, 3], strides = [1, 1]} : vector<328x3xbf16> to vector<288x3xbf16>
    %c6 = arith.constant 6 : index
    %c0_21 = arith.constant 0 : index
    %c0_22 = arith.constant 0 : index
    %34 = vector.load %arg2[%c6, %c0_21, %c0_22] : memref<9x3x16xbf16, #tpu.memory_space<vmem>>, vector<1x3x16xbf16>
    %35 = vector.shape_cast %34 : vector<1x3x16xbf16> to vector<3x16xbf16>
    %cst_23 = arith.constant dense<0.000000e+00> : vector<288x16xf32>
    %36 = tpu.matmul %33, %35, %cst_23 {dimension_numbers = #tpu.dot_dimension_numbers<[1], [0], [0], [1], [0, 0, 1, 1], [], []>} : vector<288x3xbf16>, vector<3x16xbf16>, vector<288x16xf32> -> vector<288x16xf32>
    %37 = arith.addf %32, %36 : vector<288x16xf32>
    %38 = vector.extract_strided_slice %1 {offsets = [37, 0], sizes = [288, 3], strides = [1, 1]} : vector<328x3xbf16> to vector<288x3xbf16>
    %c7 = arith.constant 7 : index
    %c0_24 = arith.constant 0 : index
    %c0_25 = arith.constant 0 : index
    %39 = vector.load %arg2[%c7, %c0_24, %c0_25] : memref<9x3x16xbf16, #tpu.memory_space<vmem>>, vector<1x3x16xbf16>
    %40 = vector.shape_cast %39 : vector<1x3x16xbf16> to vector<3x16xbf16>
    %cst_26 = arith.constant dense<0.000000e+00> : vector<288x16xf32>
    %41 = tpu.matmul %38, %40, %cst_26 {dimension_numbers = #tpu.dot_dimension_numbers<[1], [0], [0], [1], [0, 0, 1, 1], [], []>} : vector<288x3xbf16>, vector<3x16xbf16>, vector<288x16xf32> -> vector<288x16xf32>
    %42 = arith.addf %37, %41 : vector<288x16xf32>
    %43 = vector.extract_strided_slice %1 {offsets = [38, 0], sizes = [288, 3], strides = [1, 1]} : vector<328x3xbf16> to vector<288x3xbf16>
    %c8 = arith.constant 8 : index
    %c0_27 = arith.constant 0 : index
    %c0_28 = arith.constant 0 : index
    %44 = vector.load %arg2[%c8, %c0_27, %c0_28] : memref<9x3x16xbf16, #tpu.memory_space<vmem>>, vector<1x3x16xbf16>
    %45 = vector.shape_cast %44 : vector<1x3x16xbf16> to vector<3x16xbf16>
    %cst_29 = arith.constant dense<0.000000e+00> : vector<288x16xf32>
    %46 = tpu.matmul %43, %45, %cst_29 {dimension_numbers = #tpu.dot_dimension_numbers<[1], [0], [0], [1], [0, 0, 1, 1], [], []>} : vector<288x3xbf16>, vector<3x16xbf16>, vector<288x16xf32> -> vector<288x16xf32>
    %47 = arith.addf %42, %46 : vector<288x16xf32>
    %c0_30 = arith.constant 0 : index
    %c0_31 = arith.constant 0 : index
    %48 = vector.load %arg3[%c0_30, %c0_31] : memref<1x16xf32, #tpu.memory_space<vmem>>, vector<1x16xf32>
    %49 = vector.broadcast %48 : vector<1x16xf32> to vector<288x16xf32>
    %50 = arith.addf %47, %49 : vector<288x16xf32>
    %cst_32 = arith.constant 0.000000e+00 : f32
    %51 = vector.broadcast %cst_32 : f32 to vector<288x16xf32>
    %52 = arith.maximumf %50, %51 : vector<288x16xf32>
    %53 = arith.truncf %52 : vector<288x16xf32> to vector<288x16xbf16>
    %c0_33 = arith.constant 0 : index
    %c0_34 = arith.constant 0 : index
    %c0_35 = arith.constant 0 : index
    %54 = vector.load %arg4[%c0_33, %c0_34, %c0_35] : memref<1x288x16xbf16, #tpu.memory_space<vmem>>, vector<1x288x16xbf16>
    %55 = vector.shape_cast %54 : vector<1x288x16xbf16> to vector<288x16xbf16>
    %56 = vector.shape_cast %53 : vector<288x16xbf16> to vector<1x288x16xbf16>
    tpu.vector_store %arg4[%c0_33, %c0_34, %c0_35], %56 {strides = array<i32>} : memref<1x288x16xbf16, #tpu.memory_space<vmem>>, vector<1x288x16xbf16>,
    return
  }
  func.func @transform_0(%arg0: i32) -> (i32, i32, i32) {
    %c0_i32 = arith.constant 0 : i32
    %c0_i32_0 = arith.constant 0 : i32
    %c0_i32_1 = arith.constant 0 : i32
    return %arg0, %c0_i32, %c0_i32_0 : i32, i32, i32
  }
  func.func @transform_1(%arg0: i32) -> (i32, i32, i32) {
    %c0_i32 = arith.constant 0 : i32
    %c0_i32_0 = arith.constant 0 : i32
    %c0_i32_1 = arith.constant 0 : i32
    %c0_i32_2 = arith.constant 0 : i32
    return %c0_i32, %c0_i32_0, %c0_i32_1 : i32, i32, i32
  }
  func.func @transform_2(%arg0: i32) -> (i32, i32) {
    %c0_i32 = arith.constant 0 : i32
    %c0_i32_0 = arith.constant 0 : i32
    %c0_i32_1 = arith.constant 0 : i32
    return %c0_i32, %c0_i32_0 : i32, i32
  }
  func.func @transform_3(%arg0: i32) -> (i32, i32, i32) {
    %c0_i32 = arith.constant 0 : i32
    %c0_i32_0 = arith.constant 0 : i32
    %c0_i32_1 = arith.constant 0 : i32
    return %arg0, %c0_i32, %c0_i32_0 : i32, i32, i32
  }
}

module attributes {stable_mosaic.version = 11 : i64} {
  func.func @_maxpool_kernel(%arg0: i32, %arg1: memref<128x16xbf16, #tpu.memory_space<vmem>>, %arg2: memref<128x16xbf16, #tpu.memory_space<vmem>>, %arg3: memref<128x16xbf16, #tpu.memory_space<vmem>>, %arg4: memref<128x16xbf16, #tpu.memory_space<vmem>>, %arg5: memref<128x16xbf16, #tpu.memory_space<vmem>>) attributes {dimension_semantics = [#tpu.dimension_semantics<parallel>], iteration_bounds = array<i64: 1>, scalar_prefetch = 0 : i64, scratch_operands = 0 : i64, tpu.core_type = #tpu.core_type<tc>, window_params = [{transform_indices = @transform_0, window_bounds = array<i64: 128, 16>}, {transform_indices = @transform_1, window_bounds = array<i64: 128, 16>}, {transform_indices = @transform_2, window_bounds = array<i64: 128, 16>}, {transform_indices = @transform_3, window_bounds = array<i64: 128, 16>}, {transform_indices = @transform_4, window_bounds = array<i64: 128, 16>}]} {
    %c0 = arith.constant 0 : index
    %c0_0 = arith.constant 0 : index
    %0 = vector.load %arg1[%c0, %c0_0] : memref<128x16xbf16, #tpu.memory_space<vmem>>, vector<128x16xbf16>
    %c0_1 = arith.constant 0 : index
    %c0_2 = arith.constant 0 : index
    %1 = vector.load %arg2[%c0_1, %c0_2] : memref<128x16xbf16, #tpu.memory_space<vmem>>, vector<128x16xbf16>
    %2 = arith.maximumf %0, %1 : vector<128x16xbf16>
    %c0_3 = arith.constant 0 : index
    %c0_4 = arith.constant 0 : index
    %3 = vector.load %arg3[%c0_3, %c0_4] : memref<128x16xbf16, #tpu.memory_space<vmem>>, vector<128x16xbf16>
    %c0_5 = arith.constant 0 : index
    %c0_6 = arith.constant 0 : index
    %4 = vector.load %arg4[%c0_5, %c0_6] : memref<128x16xbf16, #tpu.memory_space<vmem>>, vector<128x16xbf16>
    %5 = arith.maximumf %3, %4 : vector<128x16xbf16>
    %6 = arith.maximumf %2, %5 : vector<128x16xbf16>
    %c0_7 = arith.constant 0 : index
    %c0_8 = arith.constant 0 : index
    %7 = vector.load %arg5[%c0_7, %c0_8] : memref<128x16xbf16, #tpu.memory_space<vmem>>, vector<128x16xbf16>
    tpu.vector_store %arg5[%c0_7, %c0_8], %6 {strides = array<i32>} : memref<128x16xbf16, #tpu.memory_space<vmem>>, vector<128x16xbf16>,
    return
  }
  func.func @transform_0(%arg0: i32) -> (i32, i32) {
    %c0_i32 = arith.constant 0 : i32
    %c0_i32_0 = arith.constant 0 : i32
    return %arg0, %c0_i32 : i32, i32
  }
  func.func @transform_1(%arg0: i32) -> (i32, i32) {
    %c0_i32 = arith.constant 0 : i32
    %c0_i32_0 = arith.constant 0 : i32
    return %arg0, %c0_i32 : i32, i32
  }
  func.func @transform_2(%arg0: i32) -> (i32, i32) {
    %c0_i32 = arith.constant 0 : i32
    %c0_i32_0 = arith.constant 0 : i32
    return %arg0, %c0_i32 : i32, i32
  }
  func.func @transform_3(%arg0: i32) -> (i32, i32) {
    %c0_i32 = arith.constant 0 : i32
    %c0_i32_0 = arith.constant 0 : i32
    return %arg0, %c0_i32 : i32, i32
  }
  func.func @transform_4(%arg0: i32) -> (i32, i32) {
    %c0_i32 = arith.constant 0 : i32
    %c0_i32_0 = arith.constant 0 : i32
    return %arg0, %c0_i32 : i32, i32
  }
}

module attributes {stable_mosaic.version = 11 : i64} {
  func.func @_conv3x3_kernel(%arg0: i32, %arg1: memref<1x104x16xbf16, #tpu.memory_space<vmem>>, %arg2: memref<9x16x32xbf16, #tpu.memory_space<vmem>>, %arg3: memref<1x32xf32, #tpu.memory_space<vmem>>, %arg4: memref<1x80x32xbf16, #tpu.memory_space<vmem>>) attributes {dimension_semantics = [#tpu.dimension_semantics<parallel>], iteration_bounds = array<i64: 2>, scalar_prefetch = 0 : i64, scratch_operands = 0 : i64, tpu.core_type = #tpu.core_type<tc>, window_params = [{transform_indices = @transform_0, window_bounds = array<i64: 1, 104, 16>}, {pipeline_mode = #tpu.pipeline_mode<synchronous>, transform_indices = @transform_1, window_bounds = array<i64: 9, 16, 32>}, {pipeline_mode = #tpu.pipeline_mode<synchronous>, transform_indices = @transform_2, window_bounds = array<i64: 1, 32>}, {transform_indices = @transform_3, window_bounds = array<i64: 1, 80, 32>}]} {
    %c0 = arith.constant 0 : index
    %c0_0 = arith.constant 0 : index
    %c0_1 = arith.constant 0 : index
    %0 = vector.load %arg1[%c0, %c0_0, %c0_1] : memref<1x104x16xbf16, #tpu.memory_space<vmem>>, vector<1x104x16xbf16>
    %1 = vector.shape_cast %0 : vector<1x104x16xbf16> to vector<104x16xbf16>
    %cst = arith.constant 0.000000e+00 : f32
    %2 = vector.broadcast %cst : f32 to vector<80x32xf32>
    %3 = vector.extract_strided_slice %1 {offsets = [0, 0], sizes = [80, 16], strides = [1, 1]} : vector<104x16xbf16> to vector<80x16xbf16>
    %c0_2 = arith.constant 0 : index
    %c0_3 = arith.constant 0 : index
    %c0_4 = arith.constant 0 : index
    %4 = vector.load %arg2[%c0_2, %c0_3, %c0_4] : memref<9x16x32xbf16, #tpu.memory_space<vmem>>, vector<1x16x32xbf16>
    %5 = vector.shape_cast %4 : vector<1x16x32xbf16> to vector<16x32xbf16>
    %cst_5 = arith.constant dense<0.000000e+00> : vector<80x32xf32>
    %6 = tpu.matmul %3, %5, %cst_5 {dimension_numbers = #tpu.dot_dimension_numbers<[1], [0], [0], [1], [0, 0, 1, 1], [], []>} : vector<80x16xbf16>, vector<16x32xbf16>, vector<80x32xf32> -> vector<80x32xf32>
    %7 = arith.addf %2, %6 : vector<80x32xf32>
    %8 = vector.extract_strided_slice %1 {offsets = [1, 0], sizes = [80, 16], strides = [1, 1]} : vector<104x16xbf16> to vector<80x16xbf16>
    %c1 = arith.constant 1 : index
    %c0_6 = arith.constant 0 : index
    %c0_7 = arith.constant 0 : index
    %9 = vector.load %arg2[%c1, %c0_6, %c0_7] : memref<9x16x32xbf16, #tpu.memory_space<vmem>>, vector<1x16x32xbf16>
    %10 = vector.shape_cast %9 : vector<1x16x32xbf16> to vector<16x32xbf16>
    %cst_8 = arith.constant dense<0.000000e+00> : vector<80x32xf32>
    %11 = tpu.matmul %8, %10, %cst_8 {dimension_numbers = #tpu.dot_dimension_numbers<[1], [0], [0], [1], [0, 0, 1, 1], [], []>} : vector<80x16xbf16>, vector<16x32xbf16>, vector<80x32xf32> -> vector<80x32xf32>
    %12 = arith.addf %7, %11 : vector<80x32xf32>
    %13 = vector.extract_strided_slice %1 {offsets = [2, 0], sizes = [80, 16], strides = [1, 1]} : vector<104x16xbf16> to vector<80x16xbf16>
    %c2 = arith.constant 2 : index
    %c0_9 = arith.constant 0 : index
    %c0_10 = arith.constant 0 : index
    %14 = vector.load %arg2[%c2, %c0_9, %c0_10] : memref<9x16x32xbf16, #tpu.memory_space<vmem>>, vector<1x16x32xbf16>
    %15 = vector.shape_cast %14 : vector<1x16x32xbf16> to vector<16x32xbf16>
    %cst_11 = arith.constant dense<0.000000e+00> : vector<80x32xf32>
    %16 = tpu.matmul %13, %15, %cst_11 {dimension_numbers = #tpu.dot_dimension_numbers<[1], [0], [0], [1], [0, 0, 1, 1], [], []>} : vector<80x16xbf16>, vector<16x32xbf16>, vector<80x32xf32> -> vector<80x32xf32>
    %17 = arith.addf %12, %16 : vector<80x32xf32>
    %18 = vector.extract_strided_slice %1 {offsets = [10, 0], sizes = [80, 16], strides = [1, 1]} : vector<104x16xbf16> to vector<80x16xbf16>
    %c3 = arith.constant 3 : index
    %c0_12 = arith.constant 0 : index
    %c0_13 = arith.constant 0 : index
    %19 = vector.load %arg2[%c3, %c0_12, %c0_13] : memref<9x16x32xbf16, #tpu.memory_space<vmem>>, vector<1x16x32xbf16>
    %20 = vector.shape_cast %19 : vector<1x16x32xbf16> to vector<16x32xbf16>
    %cst_14 = arith.constant dense<0.000000e+00> : vector<80x32xf32>
    %21 = tpu.matmul %18, %20, %cst_14 {dimension_numbers = #tpu.dot_dimension_numbers<[1], [0], [0], [1], [0, 0, 1, 1], [], []>} : vector<80x16xbf16>, vector<16x32xbf16>, vector<80x32xf32> -> vector<80x32xf32>
    %22 = arith.addf %17, %21 : vector<80x32xf32>
    %23 = vector.extract_strided_slice %1 {offsets = [11, 0], sizes = [80, 16], strides = [1, 1]} : vector<104x16xbf16> to vector<80x16xbf16>
    %c4 = arith.constant 4 : index
    %c0_15 = arith.constant 0 : index
    %c0_16 = arith.constant 0 : index
    %24 = vector.load %arg2[%c4, %c0_15, %c0_16] : memref<9x16x32xbf16, #tpu.memory_space<vmem>>, vector<1x16x32xbf16>
    %25 = vector.shape_cast %24 : vector<1x16x32xbf16> to vector<16x32xbf16>
    %cst_17 = arith.constant dense<0.000000e+00> : vector<80x32xf32>
    %26 = tpu.matmul %23, %25, %cst_17 {dimension_numbers = #tpu.dot_dimension_numbers<[1], [0], [0], [1], [0, 0, 1, 1], [], []>} : vector<80x16xbf16>, vector<16x32xbf16>, vector<80x32xf32> -> vector<80x32xf32>
    %27 = arith.addf %22, %26 : vector<80x32xf32>
    %28 = vector.extract_strided_slice %1 {offsets = [12, 0], sizes = [80, 16], strides = [1, 1]} : vector<104x16xbf16> to vector<80x16xbf16>
    %c5 = arith.constant 5 : index
    %c0_18 = arith.constant 0 : index
    %c0_19 = arith.constant 0 : index
    %29 = vector.load %arg2[%c5, %c0_18, %c0_19] : memref<9x16x32xbf16, #tpu.memory_space<vmem>>, vector<1x16x32xbf16>
    %30 = vector.shape_cast %29 : vector<1x16x32xbf16> to vector<16x32xbf16>
    %cst_20 = arith.constant dense<0.000000e+00> : vector<80x32xf32>
    %31 = tpu.matmul %28, %30, %cst_20 {dimension_numbers = #tpu.dot_dimension_numbers<[1], [0], [0], [1], [0, 0, 1, 1], [], []>} : vector<80x16xbf16>, vector<16x32xbf16>, vector<80x32xf32> -> vector<80x32xf32>
    %32 = arith.addf %27, %31 : vector<80x32xf32>
    %33 = vector.extract_strided_slice %1 {offsets = [20, 0], sizes = [80, 16], strides = [1, 1]} : vector<104x16xbf16> to vector<80x16xbf16>
    %c6 = arith.constant 6 : index
    %c0_21 = arith.constant 0 : index
    %c0_22 = arith.constant 0 : index
    %34 = vector.load %arg2[%c6, %c0_21, %c0_22] : memref<9x16x32xbf16, #tpu.memory_space<vmem>>, vector<1x16x32xbf16>
    %35 = vector.shape_cast %34 : vector<1x16x32xbf16> to vector<16x32xbf16>
    %cst_23 = arith.constant dense<0.000000e+00> : vector<80x32xf32>
    %36 = tpu.matmul %33, %35, %cst_23 {dimension_numbers = #tpu.dot_dimension_numbers<[1], [0], [0], [1], [0, 0, 1, 1], [], []>} : vector<80x16xbf16>, vector<16x32xbf16>, vector<80x32xf32> -> vector<80x32xf32>
    %37 = arith.addf %32, %36 : vector<80x32xf32>
    %38 = vector.extract_strided_slice %1 {offsets = [21, 0], sizes = [80, 16], strides = [1, 1]} : vector<104x16xbf16> to vector<80x16xbf16>
    %c7 = arith.constant 7 : index
    %c0_24 = arith.constant 0 : index
    %c0_25 = arith.constant 0 : index
    %39 = vector.load %arg2[%c7, %c0_24, %c0_25] : memref<9x16x32xbf16, #tpu.memory_space<vmem>>, vector<1x16x32xbf16>
    %40 = vector.shape_cast %39 : vector<1x16x32xbf16> to vector<16x32xbf16>
    %cst_26 = arith.constant dense<0.000000e+00> : vector<80x32xf32>
    %41 = tpu.matmul %38, %40, %cst_26 {dimension_numbers = #tpu.dot_dimension_numbers<[1], [0], [0], [1], [0, 0, 1, 1], [], []>} : vector<80x16xbf16>, vector<16x32xbf16>, vector<80x32xf32> -> vector<80x32xf32>
    %42 = arith.addf %37, %41 : vector<80x32xf32>
    %43 = vector.extract_strided_slice %1 {offsets = [22, 0], sizes = [80, 16], strides = [1, 1]} : vector<104x16xbf16> to vector<80x16xbf16>
    %c8 = arith.constant 8 : index
    %c0_27 = arith.constant 0 : index
    %c0_28 = arith.constant 0 : index
    %44 = vector.load %arg2[%c8, %c0_27, %c0_28] : memref<9x16x32xbf16, #tpu.memory_space<vmem>>, vector<1x16x32xbf16>
    %45 = vector.shape_cast %44 : vector<1x16x32xbf16> to vector<16x32xbf16>
    %cst_29 = arith.constant dense<0.000000e+00> : vector<80x32xf32>
    %46 = tpu.matmul %43, %45, %cst_29 {dimension_numbers = #tpu.dot_dimension_numbers<[1], [0], [0], [1], [0, 0, 1, 1], [], []>} : vector<80x16xbf16>, vector<16x32xbf16>, vector<80x32xf32> -> vector<80x32xf32>
    %47 = arith.addf %42, %46 : vector<80x32xf32>
    %c0_30 = arith.constant 0 : index
    %c0_31 = arith.constant 0 : index
    %48 = vector.load %arg3[%c0_30, %c0_31] : memref<1x32xf32, #tpu.memory_space<vmem>>, vector<1x32xf32>
    %49 = vector.broadcast %48 : vector<1x32xf32> to vector<80x32xf32>
    %50 = arith.addf %47, %49 : vector<80x32xf32>
    %cst_32 = arith.constant 0.000000e+00 : f32
    %51 = vector.broadcast %cst_32 : f32 to vector<80x32xf32>
    %52 = arith.maximumf %50, %51 : vector<80x32xf32>
    %53 = arith.truncf %52 : vector<80x32xf32> to vector<80x32xbf16>
    %c0_33 = arith.constant 0 : index
    %c0_34 = arith.constant 0 : index
    %c0_35 = arith.constant 0 : index
    %54 = vector.load %arg4[%c0_33, %c0_34, %c0_35] : memref<1x80x32xbf16, #tpu.memory_space<vmem>>, vector<1x80x32xbf16>
    %55 = vector.shape_cast %54 : vector<1x80x32xbf16> to vector<80x32xbf16>
    %56 = vector.shape_cast %53 : vector<80x32xbf16> to vector<1x80x32xbf16>
    tpu.vector_store %arg4[%c0_33, %c0_34, %c0_35], %56 {strides = array<i32>} : memref<1x80x32xbf16, #tpu.memory_space<vmem>>, vector<1x80x32xbf16>,
    return
  }
  func.func @transform_0(%arg0: i32) -> (i32, i32, i32) {
    %c0_i32 = arith.constant 0 : i32
    %c0_i32_0 = arith.constant 0 : i32
    %c0_i32_1 = arith.constant 0 : i32
    return %arg0, %c0_i32, %c0_i32_0 : i32, i32, i32
  }
  func.func @transform_1(%arg0: i32) -> (i32, i32, i32) {
    %c0_i32 = arith.constant 0 : i32
    %c0_i32_0 = arith.constant 0 : i32
    %c0_i32_1 = arith.constant 0 : i32
    %c0_i32_2 = arith.constant 0 : i32
    return %c0_i32, %c0_i32_0, %c0_i32_1 : i32, i32, i32
  }
  func.func @transform_2(%arg0: i32) -> (i32, i32) {
    %c0_i32 = arith.constant 0 : i32
    %c0_i32_0 = arith.constant 0 : i32
    %c0_i32_1 = arith.constant 0 : i32
    return %c0_i32, %c0_i32_0 : i32, i32
  }
  func.func @transform_3(%arg0: i32) -> (i32, i32, i32) {
    %c0_i32 = arith.constant 0 : i32
    %c0_i32_0 = arith.constant 0 : i32
    %c0_i32_1 = arith.constant 0 : i32
    return %arg0, %c0_i32, %c0_i32_0 : i32, i32, i32
  }
}

module attributes {stable_mosaic.version = 11 : i64} {
  func.func @_maxpool_kernel(%arg0: i32, %arg1: memref<32x32xbf16, #tpu.memory_space<vmem>>, %arg2: memref<32x32xbf16, #tpu.memory_space<vmem>>, %arg3: memref<32x32xbf16, #tpu.memory_space<vmem>>, %arg4: memref<32x32xbf16, #tpu.memory_space<vmem>>, %arg5: memref<32x32xbf16, #tpu.memory_space<vmem>>) attributes {dimension_semantics = [#tpu.dimension_semantics<parallel>], iteration_bounds = array<i64: 1>, scalar_prefetch = 0 : i64, scratch_operands = 0 : i64, tpu.core_type = #tpu.core_type<tc>, window_params = [{transform_indices = @transform_0, window_bounds = array<i64: 32, 32>}, {transform_indices = @transform_1, window_bounds = array<i64: 32, 32>}, {transform_indices = @transform_2, window_bounds = array<i64: 32, 32>}, {transform_indices = @transform_3, window_bounds = array<i64: 32, 32>}, {transform_indices = @transform_4, window_bounds = array<i64: 32, 32>}]} {
    %c0 = arith.constant 0 : index
    %c0_0 = arith.constant 0 : index
    %0 = vector.load %arg1[%c0, %c0_0] : memref<32x32xbf16, #tpu.memory_space<vmem>>, vector<32x32xbf16>
    %c0_1 = arith.constant 0 : index
    %c0_2 = arith.constant 0 : index
    %1 = vector.load %arg2[%c0_1, %c0_2] : memref<32x32xbf16, #tpu.memory_space<vmem>>, vector<32x32xbf16>
    %2 = arith.maximumf %0, %1 : vector<32x32xbf16>
    %c0_3 = arith.constant 0 : index
    %c0_4 = arith.constant 0 : index
    %3 = vector.load %arg3[%c0_3, %c0_4] : memref<32x32xbf16, #tpu.memory_space<vmem>>, vector<32x32xbf16>
    %c0_5 = arith.constant 0 : index
    %c0_6 = arith.constant 0 : index
    %4 = vector.load %arg4[%c0_5, %c0_6] : memref<32x32xbf16, #tpu.memory_space<vmem>>, vector<32x32xbf16>
    %5 = arith.maximumf %3, %4 : vector<32x32xbf16>
    %6 = arith.maximumf %2, %5 : vector<32x32xbf16>
    %c0_7 = arith.constant 0 : index
    %c0_8 = arith.constant 0 : index
    %7 = vector.load %arg5[%c0_7, %c0_8] : memref<32x32xbf16, #tpu.memory_space<vmem>>, vector<32x32xbf16>
    tpu.vector_store %arg5[%c0_7, %c0_8], %6 {strides = array<i32>} : memref<32x32xbf16, #tpu.memory_space<vmem>>, vector<32x32xbf16>,
    return
  }
  func.func @transform_0(%arg0: i32) -> (i32, i32) {
    %c0_i32 = arith.constant 0 : i32
    %c0_i32_0 = arith.constant 0 : i32
    return %arg0, %c0_i32 : i32, i32
  }
  func.func @transform_1(%arg0: i32) -> (i32, i32) {
    %c0_i32 = arith.constant 0 : i32
    %c0_i32_0 = arith.constant 0 : i32
    return %arg0, %c0_i32 : i32, i32
  }
  func.func @transform_2(%arg0: i32) -> (i32, i32) {
    %c0_i32 = arith.constant 0 : i32
    %c0_i32_0 = arith.constant 0 : i32
    return %arg0, %c0_i32 : i32, i32
  }
  func.func @transform_3(%arg0: i32) -> (i32, i32) {
    %c0_i32 = arith.constant 0 : i32
    %c0_i32_0 = arith.constant 0 : i32
    return %arg0, %c0_i32 : i32, i32
  }
  func.func @transform_4(%arg0: i32) -> (i32, i32) {
    %c0_i32 = arith.constant 0 : i32
    %c0_i32_0 = arith.constant 0 : i32
    return %arg0, %c0_i32 : i32, i32
  }
}

module attributes {stable_mosaic.version = 11 : i64} {
  func.func @_maxpool_kernel(%arg0: i32, %arg1: memref<8x64xbf16, #tpu.memory_space<vmem>>, %arg2: memref<8x64xbf16, #tpu.memory_space<vmem>>, %arg3: memref<8x64xbf16, #tpu.memory_space<vmem>>, %arg4: memref<8x64xbf16, #tpu.memory_space<vmem>>, %arg5: memref<8x64xbf16, #tpu.memory_space<vmem>>) attributes {dimension_semantics = [#tpu.dimension_semantics<parallel>], iteration_bounds = array<i64: 1>, scalar_prefetch = 0 : i64, scratch_operands = 0 : i64, tpu.core_type = #tpu.core_type<tc>, window_params = [{transform_indices = @transform_0, window_bounds = array<i64: 8, 64>}, {transform_indices = @transform_1, window_bounds = array<i64: 8, 64>}, {transform_indices = @transform_2, window_bounds = array<i64: 8, 64>}, {transform_indices = @transform_3, window_bounds = array<i64: 8, 64>}, {transform_indices = @transform_4, window_bounds = array<i64: 8, 64>}]} {
    %c0 = arith.constant 0 : index
    %c0_0 = arith.constant 0 : index
    %0 = vector.load %arg1[%c0, %c0_0] : memref<8x64xbf16, #tpu.memory_space<vmem>>, vector<8x64xbf16>
    %c0_1 = arith.constant 0 : index
    %c0_2 = arith.constant 0 : index
    %1 = vector.load %arg2[%c0_1, %c0_2] : memref<8x64xbf16, #tpu.memory_space<vmem>>, vector<8x64xbf16>
    %2 = arith.maximumf %0, %1 : vector<8x64xbf16>
    %c0_3 = arith.constant 0 : index
    %c0_4 = arith.constant 0 : index
    %3 = vector.load %arg3[%c0_3, %c0_4] : memref<8x64xbf16, #tpu.memory_space<vmem>>, vector<8x64xbf16>
    %c0_5 = arith.constant 0 : index
    %c0_6 = arith.constant 0 : index
    %4 = vector.load %arg4[%c0_5, %c0_6] : memref<8x64xbf16, #tpu.memory_space<vmem>>, vector<8x64xbf16>
    %5 = arith.maximumf %3, %4 : vector<8x64xbf16>
    %6 = arith.maximumf %2, %5 : vector<8x64xbf16>
    %c0_7 = arith.constant 0 : index
    %c0_8 = arith.constant 0 : index
    %7 = vector.load %arg5[%c0_7, %c0_8] : memref<8x64xbf16, #tpu.memory_space<vmem>>, vector<8x64xbf16>
    tpu.vector_store %arg5[%c0_7, %c0_8], %6 {strides = array<i32>} : memref<8x64xbf16, #tpu.memory_space<vmem>>, vector<8x64xbf16>,
    return
  }
  func.func @transform_0(%arg0: i32) -> (i32, i32) {
    %c0_i32 = arith.constant 0 : i32
    %c0_i32_0 = arith.constant 0 : i32
    return %arg0, %c0_i32 : i32, i32
  }
  func.func @transform_1(%arg0: i32) -> (i32, i32) {
    %c0_i32 = arith.constant 0 : i32
    %c0_i32_0 = arith.constant 0 : i32
    return %arg0, %c0_i32 : i32, i32
  }
  func.func @transform_2(%arg0: i32) -> (i32, i32) {
    %c0_i32 = arith.constant 0 : i32
    %c0_i32_0 = arith.constant 0 : i32
    return %arg0, %c0_i32 : i32, i32
  }
  func.func @transform_3(%arg0: i32) -> (i32, i32) {
    %c0_i32 = arith.constant 0 : i32
    %c0_i32_0 = arith.constant 0 : i32
    return %arg0, %c0_i32 : i32, i32
  }
  func.func @transform_4(%arg0: i32) -> (i32, i32) {
    %c0_i32 = arith.constant 0 : i32
    %c0_i32_0 = arith.constant 0 : i32
    return %arg0, %c0_i32 : i32, i32
  }
}

module attributes {stable_mosaic.version = 11 : i64} {
  func.func @_conv3x3_kernel(%arg0: i32, %arg1: memref<1x24x64xbf16, #tpu.memory_space<vmem>>, %arg2: memref<9x64x512xbf16, #tpu.memory_space<vmem>>, %arg3: memref<1x512xf32, #tpu.memory_space<vmem>>, %arg4: memref<1x8x512xbf16, #tpu.memory_space<vmem>>) attributes {dimension_semantics = [#tpu.dimension_semantics<parallel>], iteration_bounds = array<i64: 2>, scalar_prefetch = 0 : i64, scratch_operands = 0 : i64, tpu.core_type = #tpu.core_type<tc>, window_params = [{transform_indices = @transform_0, window_bounds = array<i64: 1, 24, 64>}, {pipeline_mode = #tpu.pipeline_mode<synchronous>, transform_indices = @transform_1, window_bounds = array<i64: 9, 64, 512>}, {pipeline_mode = #tpu.pipeline_mode<synchronous>, transform_indices = @transform_2, window_bounds = array<i64: 1, 512>}, {transform_indices = @transform_3, window_bounds = array<i64: 1, 8, 512>}]} {
    %c0 = arith.constant 0 : index
    %c0_0 = arith.constant 0 : index
    %c0_1 = arith.constant 0 : index
    %0 = vector.load %arg1[%c0, %c0_0, %c0_1] : memref<1x24x64xbf16, #tpu.memory_space<vmem>>, vector<1x24x64xbf16>
    %1 = vector.shape_cast %0 : vector<1x24x64xbf16> to vector<24x64xbf16>
    %cst = arith.constant 0.000000e+00 : f32
    %2 = vector.broadcast %cst : f32 to vector<8x512xf32>
    %3 = vector.extract_strided_slice %1 {offsets = [0, 0], sizes = [8, 64], strides = [1, 1]} : vector<24x64xbf16> to vector<8x64xbf16>
    %c0_2 = arith.constant 0 : index
    %c0_3 = arith.constant 0 : index
    %c0_4 = arith.constant 0 : index
    %4 = vector.load %arg2[%c0_2, %c0_3, %c0_4] : memref<9x64x512xbf16, #tpu.memory_space<vmem>>, vector<1x64x512xbf16>
    %5 = vector.shape_cast %4 : vector<1x64x512xbf16> to vector<64x512xbf16>
    %cst_5 = arith.constant dense<0.000000e+00> : vector<8x512xf32>
    %6 = tpu.matmul %3, %5, %cst_5 {dimension_numbers = #tpu.dot_dimension_numbers<[1], [0], [0], [1], [0, 0, 1, 1], [], []>} : vector<8x64xbf16>, vector<64x512xbf16>, vector<8x512xf32> -> vector<8x512xf32>
    %7 = arith.addf %2, %6 : vector<8x512xf32>
    %8 = vector.extract_strided_slice %1 {offsets = [1, 0], sizes = [8, 64], strides = [1, 1]} : vector<24x64xbf16> to vector<8x64xbf16>
    %c1 = arith.constant 1 : index
    %c0_6 = arith.constant 0 : index
    %c0_7 = arith.constant 0 : index
    %9 = vector.load %arg2[%c1, %c0_6, %c0_7] : memref<9x64x512xbf16, #tpu.memory_space<vmem>>, vector<1x64x512xbf16>
    %10 = vector.shape_cast %9 : vector<1x64x512xbf16> to vector<64x512xbf16>
    %cst_8 = arith.constant dense<0.000000e+00> : vector<8x512xf32>
    %11 = tpu.matmul %8, %10, %cst_8 {dimension_numbers = #tpu.dot_dimension_numbers<[1], [0], [0], [1], [0, 0, 1, 1], [], []>} : vector<8x64xbf16>, vector<64x512xbf16>, vector<8x512xf32> -> vector<8x512xf32>
    %12 = arith.addf %7, %11 : vector<8x512xf32>
    %13 = vector.extract_strided_slice %1 {offsets = [2, 0], sizes = [8, 64], strides = [1, 1]} : vector<24x64xbf16> to vector<8x64xbf16>
    %c2 = arith.constant 2 : index
    %c0_9 = arith.constant 0 : index
    %c0_10 = arith.constant 0 : index
    %14 = vector.load %arg2[%c2, %c0_9, %c0_10] : memref<9x64x512xbf16, #tpu.memory_space<vmem>>, vector<1x64x512xbf16>
    %15 = vector.shape_cast %14 : vector<1x64x512xbf16> to vector<64x512xbf16>
    %cst_11 = arith.constant dense<0.000000e+00> : vector<8x512xf32>
    %16 = tpu.matmul %13, %15, %cst_11 {dimension_numbers = #tpu.dot_dimension_numbers<[1], [0], [0], [1], [0, 0, 1, 1], [], []>} : vector<8x64xbf16>, vector<64x512xbf16>, vector<8x512xf32> -> vector<8x512xf32>
    %17 = arith.addf %12, %16 : vector<8x512xf32>
    %18 = vector.extract_strided_slice %1 {offsets = [4, 0], sizes = [8, 64], strides = [1, 1]} : vector<24x64xbf16> to vector<8x64xbf16>
    %c3 = arith.constant 3 : index
    %c0_12 = arith.constant 0 : index
    %c0_13 = arith.constant 0 : index
    %19 = vector.load %arg2[%c3, %c0_12, %c0_13] : memref<9x64x512xbf16, #tpu.memory_space<vmem>>, vector<1x64x512xbf16>
    %20 = vector.shape_cast %19 : vector<1x64x512xbf16> to vector<64x512xbf16>
    %cst_14 = arith.constant dense<0.000000e+00> : vector<8x512xf32>
    %21 = tpu.matmul %18, %20, %cst_14 {dimension_numbers = #tpu.dot_dimension_numbers<[1], [0], [0], [1], [0, 0, 1, 1], [], []>} : vector<8x64xbf16>, vector<64x512xbf16>, vector<8x512xf32> -> vector<8x512xf32>
    %22 = arith.addf %17, %21 : vector<8x512xf32>
    %23 = vector.extract_strided_slice %1 {offsets = [5, 0], sizes = [8, 64], strides = [1, 1]} : vector<24x64xbf16> to vector<8x64xbf16>
    %c4 = arith.constant 4 : index
    %c0_15 = arith.constant 0 : index
    %c0_16 = arith.constant 0 : index
    %24 = vector.load %arg2[%c4, %c0_15, %c0_16] : memref<9x64x512xbf16, #tpu.memory_space<vmem>>, vector<1x64x512xbf16>
    %25 = vector.shape_cast %24 : vector<1x64x512xbf16> to vector<64x512xbf16>
    %cst_17 = arith.constant dense<0.000000e+00> : vector<8x512xf32>
    %26 = tpu.matmul %23, %25, %cst_17 {dimension_numbers = #tpu.dot_dimension_numbers<[1], [0], [0], [1], [0, 0, 1, 1], [], []>} : vector<8x64xbf16>, vector<64x512xbf16>, vector<8x512xf32> -> vector<8x512xf32>
    %27 = arith.addf %22, %26 : vector<8x512xf32>
    %28 = vector.extract_strided_slice %1 {offsets = [6, 0], sizes = [8, 64], strides = [1, 1]} : vector<24x64xbf16> to vector<8x64xbf16>
    %c5 = arith.constant 5 : index
    %c0_18 = arith.constant 0 : index
    %c0_19 = arith.constant 0 : index
    %29 = vector.load %arg2[%c5, %c0_18, %c0_19] : memref<9x64x512xbf16, #tpu.memory_space<vmem>>, vector<1x64x512xbf16>
    %30 = vector.shape_cast %29 : vector<1x64x512xbf16> to vector<64x512xbf16>
    %cst_20 = arith.constant dense<0.000000e+00> : vector<8x512xf32>
    %31 = tpu.matmul %28, %30, %cst_20 {dimension_numbers = #tpu.dot_dimension_numbers<[1], [0], [0], [1], [0, 0, 1, 1], [], []>} : vector<8x64xbf16>, vector<64x512xbf16>, vector<8x512xf32> -> vector<8x512xf32>
    %32 = arith.addf %27, %31 : vector<8x512xf32>
    %33 = vector.extract_strided_slice %1 {offsets = [8, 0], sizes = [8, 64], strides = [1, 1]} : vector<24x64xbf16> to vector<8x64xbf16>
    %c6 = arith.constant 6 : index
    %c0_21 = arith.constant 0 : index
    %c0_22 = arith.constant 0 : index
    %34 = vector.load %arg2[%c6, %c0_21, %c0_22] : memref<9x64x512xbf16, #tpu.memory_space<vmem>>, vector<1x64x512xbf16>
    %35 = vector.shape_cast %34 : vector<1x64x512xbf16> to vector<64x512xbf16>
    %cst_23 = arith.constant dense<0.000000e+00> : vector<8x512xf32>
    %36 = tpu.matmul %33, %35, %cst_23 {dimension_numbers = #tpu.dot_dimension_numbers<[1], [0], [0], [1], [0, 0, 1, 1], [], []>} : vector<8x64xbf16>, vector<64x512xbf16>, vector<8x512xf32> -> vector<8x512xf32>
    %37 = arith.addf %32, %36 : vector<8x512xf32>
    %38 = vector.extract_strided_slice %1 {offsets = [9, 0], sizes = [8, 64], strides = [1, 1]} : vector<24x64xbf16> to vector<8x64xbf16>
    %c7 = arith.constant 7 : index
    %c0_24 = arith.constant 0 : index
    %c0_25 = arith.constant 0 : index
    %39 = vector.load %arg2[%c7, %c0_24, %c0_25] : memref<9x64x512xbf16, #tpu.memory_space<vmem>>, vector<1x64x512xbf16>
    %40 = vector.shape_cast %39 : vector<1x64x512xbf16> to vector<64x512xbf16>
    %cst_26 = arith.constant dense<0.000000e+00> : vector<8x512xf32>
    %41 = tpu.matmul %38, %40, %cst_26 {dimension_numbers = #tpu.dot_dimension_numbers<[1], [0], [0], [1], [0, 0, 1, 1], [], []>} : vector<8x64xbf16>, vector<64x512xbf16>, vector<8x512xf32> -> vector<8x512xf32>
    %42 = arith.addf %37, %41 : vector<8x512xf32>
    %43 = vector.extract_strided_slice %1 {offsets = [10, 0], sizes = [8, 64], strides = [1, 1]} : vector<24x64xbf16> to vector<8x64xbf16>
    %c8 = arith.constant 8 : index
    %c0_27 = arith.constant 0 : index
    %c0_28 = arith.constant 0 : index
    %44 = vector.load %arg2[%c8, %c0_27, %c0_28] : memref<9x64x512xbf16, #tpu.memory_space<vmem>>, vector<1x64x512xbf16>
    %45 = vector.shape_cast %44 : vector<1x64x512xbf16> to vector<64x512xbf16>
    %cst_29 = arith.constant dense<0.000000e+00> : vector<8x512xf32>
    %46 = tpu.matmul %43, %45, %cst_29 {dimension_numbers = #tpu.dot_dimension_numbers<[1], [0], [0], [1], [0, 0, 1, 1], [], []>} : vector<8x64xbf16>, vector<64x512xbf16>, vector<8x512xf32> -> vector<8x512xf32>
    %47 = arith.addf %42, %46 : vector<8x512xf32>
    %c0_30 = arith.constant 0 : index
    %c0_31 = arith.constant 0 : index
    %48 = vector.load %arg3[%c0_30, %c0_31] : memref<1x512xf32, #tpu.memory_space<vmem>>, vector<1x512xf32>
    %49 = vector.broadcast %48 : vector<1x512xf32> to vector<8x512xf32>
    %50 = arith.addf %47, %49 : vector<8x512xf32>
    %cst_32 = arith.constant 0.000000e+00 : f32
    %51 = vector.broadcast %cst_32 : f32 to vector<8x512xf32>
    %52 = arith.maximumf %50, %51 : vector<8x512xf32>
    %53 = arith.truncf %52 : vector<8x512xf32> to vector<8x512xbf16>
    %c0_33 = arith.constant 0 : index
    %c0_34 = arith.constant 0 : index
    %c0_35 = arith.constant 0 : index
    %54 = vector.load %arg4[%c0_33, %c0_34, %c0_35] : memref<1x8x512xbf16, #tpu.memory_space<vmem>>, vector<1x8x512xbf16>
    %55 = vector.shape_cast %54 : vector<1x8x512xbf16> to vector<8x512xbf16>
    %56 = vector.shape_cast %53 : vector<8x512xbf16> to vector<1x8x512xbf16>
    tpu.vector_store %arg4[%c0_33, %c0_34, %c0_35], %56 {strides = array<i32>} : memref<1x8x512xbf16, #tpu.memory_space<vmem>>, vector<1x8x512xbf16>,
    return
  }
  func.func @transform_0(%arg0: i32) -> (i32, i32, i32) {
    %c0_i32 = arith.constant 0 : i32
    %c0_i32_0 = arith.constant 0 : i32
    %c0_i32_1 = arith.constant 0 : i32
    return %arg0, %c0_i32, %c0_i32_0 : i32, i32, i32
  }
  func.func @transform_1(%arg0: i32) -> (i32, i32, i32) {
    %c0_i32 = arith.constant 0 : i32
    %c0_i32_0 = arith.constant 0 : i32
    %c0_i32_1 = arith.constant 0 : i32
    %c0_i32_2 = arith.constant 0 : i32
    return %c0_i32, %c0_i32_0, %c0_i32_1 : i32, i32, i32
  }
  func.func @transform_2(%arg0: i32) -> (i32, i32) {
    %c0_i32 = arith.constant 0 : i32
    %c0_i32_0 = arith.constant 0 : i32
    %c0_i32_1 = arith.constant 0 : i32
    return %c0_i32, %c0_i32_0 : i32, i32
  }
  func.func @transform_3(%arg0: i32) -> (i32, i32, i32) {
    %c0_i32 = arith.constant 0 : i32
    %c0_i32_0 = arith.constant 0 : i32
    %c0_i32_1 = arith.constant 0 : i32
    return %arg0, %c0_i32, %c0_i32_0 : i32, i32, i32
  }
}

module attributes {stable_mosaic.version = 11 : i64} {
  func.func @_conv3x3_kernel(%arg0: i32, %arg1: memref<1x40x32xbf16, #tpu.memory_space<vmem>>, %arg2: memref<9x32x64xbf16, #tpu.memory_space<vmem>>, %arg3: memref<1x64xf32, #tpu.memory_space<vmem>>, %arg4: memref<1x24x64xbf16, #tpu.memory_space<vmem>>) attributes {dimension_semantics = [#tpu.dimension_semantics<parallel>], iteration_bounds = array<i64: 2>, scalar_prefetch = 0 : i64, scratch_operands = 0 : i64, tpu.core_type = #tpu.core_type<tc>, window_params = [{transform_indices = @transform_0, window_bounds = array<i64: 1, 40, 32>}, {pipeline_mode = #tpu.pipeline_mode<synchronous>, transform_indices = @transform_1, window_bounds = array<i64: 9, 32, 64>}, {pipeline_mode = #tpu.pipeline_mode<synchronous>, transform_indices = @transform_2, window_bounds = array<i64: 1, 64>}, {transform_indices = @transform_3, window_bounds = array<i64: 1, 24, 64>}]} {
    %c0 = arith.constant 0 : index
    %c0_0 = arith.constant 0 : index
    %c0_1 = arith.constant 0 : index
    %0 = vector.load %arg1[%c0, %c0_0, %c0_1] : memref<1x40x32xbf16, #tpu.memory_space<vmem>>, vector<1x40x32xbf16>
    %1 = vector.shape_cast %0 : vector<1x40x32xbf16> to vector<40x32xbf16>
    %cst = arith.constant 0.000000e+00 : f32
    %2 = vector.broadcast %cst : f32 to vector<24x64xf32>
    %3 = vector.extract_strided_slice %1 {offsets = [0, 0], sizes = [24, 32], strides = [1, 1]} : vector<40x32xbf16> to vector<24x32xbf16>
    %c0_2 = arith.constant 0 : index
    %c0_3 = arith.constant 0 : index
    %c0_4 = arith.constant 0 : index
    %4 = vector.load %arg2[%c0_2, %c0_3, %c0_4] : memref<9x32x64xbf16, #tpu.memory_space<vmem>>, vector<1x32x64xbf16>
    %5 = vector.shape_cast %4 : vector<1x32x64xbf16> to vector<32x64xbf16>
    %cst_5 = arith.constant dense<0.000000e+00> : vector<24x64xf32>
    %6 = tpu.matmul %3, %5, %cst_5 {dimension_numbers = #tpu.dot_dimension_numbers<[1], [0], [0], [1], [0, 0, 1, 1], [], []>} : vector<24x32xbf16>, vector<32x64xbf16>, vector<24x64xf32> -> vector<24x64xf32>
    %7 = arith.addf %2, %6 : vector<24x64xf32>
    %8 = vector.extract_strided_slice %1 {offsets = [1, 0], sizes = [24, 32], strides = [1, 1]} : vector<40x32xbf16> to vector<24x32xbf16>
    %c1 = arith.constant 1 : index
    %c0_6 = arith.constant 0 : index
    %c0_7 = arith.constant 0 : index
    %9 = vector.load %arg2[%c1, %c0_6, %c0_7] : memref<9x32x64xbf16, #tpu.memory_space<vmem>>, vector<1x32x64xbf16>
    %10 = vector.shape_cast %9 : vector<1x32x64xbf16> to vector<32x64xbf16>
    %cst_8 = arith.constant dense<0.000000e+00> : vector<24x64xf32>
    %11 = tpu.matmul %8, %10, %cst_8 {dimension_numbers = #tpu.dot_dimension_numbers<[1], [0], [0], [1], [0, 0, 1, 1], [], []>} : vector<24x32xbf16>, vector<32x64xbf16>, vector<24x64xf32> -> vector<24x64xf32>
    %12 = arith.addf %7, %11 : vector<24x64xf32>
    %13 = vector.extract_strided_slice %1 {offsets = [2, 0], sizes = [24, 32], strides = [1, 1]} : vector<40x32xbf16> to vector<24x32xbf16>
    %c2 = arith.constant 2 : index
    %c0_9 = arith.constant 0 : index
    %c0_10 = arith.constant 0 : index
    %14 = vector.load %arg2[%c2, %c0_9, %c0_10] : memref<9x32x64xbf16, #tpu.memory_space<vmem>>, vector<1x32x64xbf16>
    %15 = vector.shape_cast %14 : vector<1x32x64xbf16> to vector<32x64xbf16>
    %cst_11 = arith.constant dense<0.000000e+00> : vector<24x64xf32>
    %16 = tpu.matmul %13, %15, %cst_11 {dimension_numbers = #tpu.dot_dimension_numbers<[1], [0], [0], [1], [0, 0, 1, 1], [], []>} : vector<24x32xbf16>, vector<32x64xbf16>, vector<24x64xf32> -> vector<24x64xf32>
    %17 = arith.addf %12, %16 : vector<24x64xf32>
    %18 = vector.extract_strided_slice %1 {offsets = [6, 0], sizes = [24, 32], strides = [1, 1]} : vector<40x32xbf16> to vector<24x32xbf16>
    %c3 = arith.constant 3 : index
    %c0_12 = arith.constant 0 : index
    %c0_13 = arith.constant 0 : index
    %19 = vector.load %arg2[%c3, %c0_12, %c0_13] : memref<9x32x64xbf16, #tpu.memory_space<vmem>>, vector<1x32x64xbf16>
    %20 = vector.shape_cast %19 : vector<1x32x64xbf16> to vector<32x64xbf16>
    %cst_14 = arith.constant dense<0.000000e+00> : vector<24x64xf32>
    %21 = tpu.matmul %18, %20, %cst_14 {dimension_numbers = #tpu.dot_dimension_numbers<[1], [0], [0], [1], [0, 0, 1, 1], [], []>} : vector<24x32xbf16>, vector<32x64xbf16>, vector<24x64xf32> -> vector<24x64xf32>
    %22 = arith.addf %17, %21 : vector<24x64xf32>
    %23 = vector.extract_strided_slice %1 {offsets = [7, 0], sizes = [24, 32], strides = [1, 1]} : vector<40x32xbf16> to vector<24x32xbf16>
    %c4 = arith.constant 4 : index
    %c0_15 = arith.constant 0 : index
    %c0_16 = arith.constant 0 : index
    %24 = vector.load %arg2[%c4, %c0_15, %c0_16] : memref<9x32x64xbf16, #tpu.memory_space<vmem>>, vector<1x32x64xbf16>
    %25 = vector.shape_cast %24 : vector<1x32x64xbf16> to vector<32x64xbf16>
    %cst_17 = arith.constant dense<0.000000e+00> : vector<24x64xf32>
    %26 = tpu.matmul %23, %25, %cst_17 {dimension_numbers = #tpu.dot_dimension_numbers<[1], [0], [0], [1], [0, 0, 1, 1], [], []>} : vector<24x32xbf16>, vector<32x64xbf16>, vector<24x64xf32> -> vector<24x64xf32>
    %27 = arith.addf %22, %26 : vector<24x64xf32>
    %28 = vector.extract_strided_slice %1 {offsets = [8, 0], sizes = [24, 32], strides = [1, 1]} : vector<40x32xbf16> to vector<24x32xbf16>
    %c5 = arith.constant 5 : index
    %c0_18 = arith.constant 0 : index
    %c0_19 = arith.constant 0 : index
    %29 = vector.load %arg2[%c5, %c0_18, %c0_19] : memref<9x32x64xbf16, #tpu.memory_space<vmem>>, vector<1x32x64xbf16>
    %30 = vector.shape_cast %29 : vector<1x32x64xbf16> to vector<32x64xbf16>
    %cst_20 = arith.constant dense<0.000000e+00> : vector<24x64xf32>
    %31 = tpu.matmul %28, %30, %cst_20 {dimension_numbers = #tpu.dot_dimension_numbers<[1], [0], [0], [1], [0, 0, 1, 1], [], []>} : vector<24x32xbf16>, vector<32x64xbf16>, vector<24x64xf32> -> vector<24x64xf32>
    %32 = arith.addf %27, %31 : vector<24x64xf32>
    %33 = vector.extract_strided_slice %1 {offsets = [12, 0], sizes = [24, 32], strides = [1, 1]} : vector<40x32xbf16> to vector<24x32xbf16>
    %c6 = arith.constant 6 : index
    %c0_21 = arith.constant 0 : index
    %c0_22 = arith.constant 0 : index
    %34 = vector.load %arg2[%c6, %c0_21, %c0_22] : memref<9x32x64xbf16, #tpu.memory_space<vmem>>, vector<1x32x64xbf16>
    %35 = vector.shape_cast %34 : vector<1x32x64xbf16> to vector<32x64xbf16>
    %cst_23 = arith.constant dense<0.000000e+00> : vector<24x64xf32>
    %36 = tpu.matmul %33, %35, %cst_23 {dimension_numbers = #tpu.dot_dimension_numbers<[1], [0], [0], [1], [0, 0, 1, 1], [], []>} : vector<24x32xbf16>, vector<32x64xbf16>, vector<24x64xf32> -> vector<24x64xf32>
    %37 = arith.addf %32, %36 : vector<24x64xf32>
    %38 = vector.extract_strided_slice %1 {offsets = [13, 0], sizes = [24, 32], strides = [1, 1]} : vector<40x32xbf16> to vector<24x32xbf16>
    %c7 = arith.constant 7 : index
    %c0_24 = arith.constant 0 : index
    %c0_25 = arith.constant 0 : index
    %39 = vector.load %arg2[%c7, %c0_24, %c0_25] : memref<9x32x64xbf16, #tpu.memory_space<vmem>>, vector<1x32x64xbf16>
    %40 = vector.shape_cast %39 : vector<1x32x64xbf16> to vector<32x64xbf16>
    %cst_26 = arith.constant dense<0.000000e+00> : vector<24x64xf32>
    %41 = tpu.matmul %38, %40, %cst_26 {dimension_numbers = #tpu.dot_dimension_numbers<[1], [0], [0], [1], [0, 0, 1, 1], [], []>} : vector<24x32xbf16>, vector<32x64xbf16>, vector<24x64xf32> -> vector<24x64xf32>
    %42 = arith.addf %37, %41 : vector<24x64xf32>
    %43 = vector.extract_strided_slice %1 {offsets = [14, 0], sizes = [24, 32], strides = [1, 1]} : vector<40x32xbf16> to vector<24x32xbf16>
    %c8 = arith.constant 8 : index
    %c0_27 = arith.constant 0 : index
    %c0_28 = arith.constant 0 : index
    %44 = vector.load %arg2[%c8, %c0_27, %c0_28] : memref<9x32x64xbf16, #tpu.memory_space<vmem>>, vector<1x32x64xbf16>
    %45 = vector.shape_cast %44 : vector<1x32x64xbf16> to vector<32x64xbf16>
    %cst_29 = arith.constant dense<0.000000e+00> : vector<24x64xf32>
    %46 = tpu.matmul %43, %45, %cst_29 {dimension_numbers = #tpu.dot_dimension_numbers<[1], [0], [0], [1], [0, 0, 1, 1], [], []>} : vector<24x32xbf16>, vector<32x64xbf16>, vector<24x64xf32> -> vector<24x64xf32>
    %47 = arith.addf %42, %46 : vector<24x64xf32>
    %c0_30 = arith.constant 0 : index
    %c0_31 = arith.constant 0 : index
    %48 = vector.load %arg3[%c0_30, %c0_31] : memref<1x64xf32, #tpu.memory_space<vmem>>, vector<1x64xf32>
    %49 = vector.broadcast %48 : vector<1x64xf32> to vector<24x64xf32>
    %50 = arith.addf %47, %49 : vector<24x64xf32>
    %cst_32 = arith.constant 0.000000e+00 : f32
    %51 = vector.broadcast %cst_32 : f32 to vector<24x64xf32>
    %52 = arith.maximumf %50, %51 : vector<24x64xf32>
    %53 = arith.truncf %52 : vector<24x64xf32> to vector<24x64xbf16>
    %c0_33 = arith.constant 0 : index
    %c0_34 = arith.constant 0 : index
    %c0_35 = arith.constant 0 : index
    %54 = vector.load %arg4[%c0_33, %c0_34, %c0_35] : memref<1x24x64xbf16, #tpu.memory_space<vmem>>, vector<1x24x64xbf16>
    %55 = vector.shape_cast %54 : vector<1x24x64xbf16> to vector<24x64xbf16>
    %56 = vector.shape_cast %53 : vector<24x64xbf16> to vector<1x24x64xbf16>
    tpu.vector_store %arg4[%c0_33, %c0_34, %c0_35], %56 {strides = array<i32>} : memref<1x24x64xbf16, #tpu.memory_space<vmem>>, vector<1x24x64xbf16>,
    return
  }
  func.func @transform_0(%arg0: i32) -> (i32, i32, i32) {
    %c0_i32 = arith.constant 0 : i32
    %c0_i32_0 = arith.constant 0 : i32
    %c0_i32_1 = arith.constant 0 : i32
    return %arg0, %c0_i32, %c0_i32_0 : i32, i32, i32
  }
  func.func @transform_1(%arg0: i32) -> (i32, i32, i32) {
    %c0_i32 = arith.constant 0 : i32
    %c0_i32_0 = arith.constant 0 : i32
    %c0_i32_1 = arith.constant 0 : i32
    %c0_i32_2 = arith.constant 0 : i32
    return %c0_i32, %c0_i32_0, %c0_i32_1 : i32, i32, i32
  }
  func.func @transform_2(%arg0: i32) -> (i32, i32) {
    %c0_i32 = arith.constant 0 : i32
    %c0_i32_0 = arith.constant 0 : i32
    %c0_i32_1 = arith.constant 0 : i32
    return %c0_i32, %c0_i32_0 : i32, i32
  }
  func.func @transform_3(%arg0: i32) -> (i32, i32, i32) {
    %c0_i32 = arith.constant 0 : i32
    %c0_i32_0 = arith.constant 0 : i32
    %c0_i32_1 = arith.constant 0 : i32
    return %arg0, %c0_i32, %c0_i32_0 : i32, i32, i32
  }
}

module attributes {stable_mosaic.version = 11 : i64} {
  func.func @_maxpool_kernel(%arg0: i32, %arg1: memref<2x512xbf16, #tpu.memory_space<vmem>>, %arg2: memref<2x512xbf16, #tpu.memory_space<vmem>>, %arg3: memref<2x512xbf16, #tpu.memory_space<vmem>>, %arg4: memref<2x512xbf16, #tpu.memory_space<vmem>>, %arg5: memref<2x512xbf16, #tpu.memory_space<vmem>>) attributes {dimension_semantics = [#tpu.dimension_semantics<parallel>], iteration_bounds = array<i64: 1>, scalar_prefetch = 0 : i64, scratch_operands = 0 : i64, tpu.core_type = #tpu.core_type<tc>, window_params = [{transform_indices = @transform_0, window_bounds = array<i64: 2, 512>}, {transform_indices = @transform_1, window_bounds = array<i64: 2, 512>}, {transform_indices = @transform_2, window_bounds = array<i64: 2, 512>}, {transform_indices = @transform_3, window_bounds = array<i64: 2, 512>}, {transform_indices = @transform_4, window_bounds = array<i64: 2, 512>}]} {
    %c0 = arith.constant 0 : index
    %c0_0 = arith.constant 0 : index
    %0 = vector.load %arg1[%c0, %c0_0] : memref<2x512xbf16, #tpu.memory_space<vmem>>, vector<2x512xbf16>
    %c0_1 = arith.constant 0 : index
    %c0_2 = arith.constant 0 : index
    %1 = vector.load %arg2[%c0_1, %c0_2] : memref<2x512xbf16, #tpu.memory_space<vmem>>, vector<2x512xbf16>
    %2 = arith.maximumf %0, %1 : vector<2x512xbf16>
    %c0_3 = arith.constant 0 : index
    %c0_4 = arith.constant 0 : index
    %3 = vector.load %arg3[%c0_3, %c0_4] : memref<2x512xbf16, #tpu.memory_space<vmem>>, vector<2x512xbf16>
    %c0_5 = arith.constant 0 : index
    %c0_6 = arith.constant 0 : index
    %4 = vector.load %arg4[%c0_5, %c0_6] : memref<2x512xbf16, #tpu.memory_space<vmem>>, vector<2x512xbf16>
    %5 = arith.maximumf %3, %4 : vector<2x512xbf16>
    %6 = arith.maximumf %2, %5 : vector<2x512xbf16>
    %c0_7 = arith.constant 0 : index
    %c0_8 = arith.constant 0 : index
    %7 = vector.load %arg5[%c0_7, %c0_8] : memref<2x512xbf16, #tpu.memory_space<vmem>>, vector<2x512xbf16>
    tpu.vector_store %arg5[%c0_7, %c0_8], %6 {strides = array<i32>} : memref<2x512xbf16, #tpu.memory_space<vmem>>, vector<2x512xbf16>,
    return
  }
  func.func @transform_0(%arg0: i32) -> (i32, i32) {
    %c0_i32 = arith.constant 0 : i32
    %c0_i32_0 = arith.constant 0 : i32
    return %arg0, %c0_i32 : i32, i32
  }
  func.func @transform_1(%arg0: i32) -> (i32, i32) {
    %c0_i32 = arith.constant 0 : i32
    %c0_i32_0 = arith.constant 0 : i32
    return %arg0, %c0_i32 : i32, i32
  }
  func.func @transform_2(%arg0: i32) -> (i32, i32) {
    %c0_i32 = arith.constant 0 : i32
    %c0_i32_0 = arith.constant 0 : i32
    return %arg0, %c0_i32 : i32, i32
  }
  func.func @transform_3(%arg0: i32) -> (i32, i32) {
    %c0_i32 = arith.constant 0 : i32
    %c0_i32_0 = arith.constant 0 : i32
    return %arg0, %c0_i32 : i32, i32
  }
  func.func @transform_4(%arg0: i32) -> (i32, i32) {
    %c0_i32 = arith.constant 0 : i32
    %c0_i32_0 = arith.constant 0 : i32
    return %arg0, %c0_i32 : i32, i32
  }
}

module attributes {stable_mosaic.version = 11 : i64} {
  func.func @_matmul_bias_kernel(%arg0: i32, %arg1: i32, %arg2: i32, %arg3: memref<8x512xbf16, #tpu.memory_space<vmem>>, %arg4: memref<512x512xbf16, #tpu.memory_space<vmem>>, %arg5: memref<1x512xf32, #tpu.memory_space<vmem>>, %arg6: memref<8x512xf32, #tpu.memory_space<vmem>>, %arg7: memref<8x512xf32, #tpu.memory_space<vmem>>) attributes {dimension_semantics = [#tpu.dimension_semantics<parallel>, #tpu.dimension_semantics<parallel>, #tpu.dimension_semantics<arbitrary>], iteration_bounds = array<i64: 1, 2, 1>, scalar_prefetch = 0 : i64, scratch_operands = 1 : i64, tpu.core_type = #tpu.core_type<tc>, window_params = [{transform_indices = @transform_0, window_bounds = array<i64: 8, 512>}, {transform_indices = @transform_1, window_bounds = array<i64: 512, 512>}, {transform_indices = @transform_2, window_bounds = array<i64: 1, 512>}, {transform_indices = @transform_3, window_bounds = array<i64: 8, 512>}]} {
    %c0_i32 = arith.constant 0 : i32
    %0 = arith.cmpi eq, %arg2, %c0_i32 : i32
    %1 = arith.extui %0 : i1 to i32
    %c0_i32_0 = arith.constant 0 : i32
    %2 = arith.cmpi ne, %1, %c0_i32_0 : i32
    scf.if %2 {
      %cst_10 = arith.constant 0.000000e+00 : f32
      %12 = vector.broadcast %cst_10 : f32 to vector<8x512xf32>
      %c0_11 = arith.constant 0 : index
      %c0_12 = arith.constant 0 : index
      %13 = vector.load %arg7[%c0_11, %c0_12] : memref<8x512xf32, #tpu.memory_space<vmem>>, vector<8x512xf32>
      tpu.vector_store %arg7[%c0_11, %c0_12], %12 {strides = array<i32>} : memref<8x512xf32, #tpu.memory_space<vmem>>, vector<8x512xf32>,
    } else {
    }
    %c0 = arith.constant 0 : index
    %c0_1 = arith.constant 0 : index
    %3 = vector.load %arg7[%c0, %c0_1] : memref<8x512xf32, #tpu.memory_space<vmem>>, vector<8x512xf32>
    %c0_2 = arith.constant 0 : index
    %c0_3 = arith.constant 0 : index
    %4 = vector.load %arg3[%c0_2, %c0_3] : memref<8x512xbf16, #tpu.memory_space<vmem>>, vector<8x512xbf16>
    %c0_4 = arith.constant 0 : index
    %c0_5 = arith.constant 0 : index
    %5 = vector.load %arg4[%c0_4, %c0_5] : memref<512x512xbf16, #tpu.memory_space<vmem>>, vector<512x512xbf16>
    %cst = arith.constant dense<0.000000e+00> : vector<8x512xf32>
    %6 = tpu.matmul %4, %5, %cst {dimension_numbers = #tpu.dot_dimension_numbers<[1], [0], [0], [1], [0, 0, 1, 1], [], []>} : vector<8x512xbf16>, vector<512x512xbf16>, vector<8x512xf32> -> vector<8x512xf32>
    %7 = arith.addf %3, %6 : vector<8x512xf32>
    %c0_6 = arith.constant 0 : index
    %c0_7 = arith.constant 0 : index
    %8 = vector.load %arg7[%c0_6, %c0_7] : memref<8x512xf32, #tpu.memory_space<vmem>>, vector<8x512xf32>
    tpu.vector_store %arg7[%c0_6, %c0_7], %7 {strides = array<i32>} : memref<8x512xf32, #tpu.memory_space<vmem>>, vector<8x512xf32>,
    %c0_i32_8 = arith.constant 0 : i32
    %9 = arith.cmpi eq, %arg2, %c0_i32_8 : i32
    %10 = arith.extui %9 : i1 to i32
    %c0_i32_9 = arith.constant 0 : i32
    %11 = arith.cmpi ne, %10, %c0_i32_9 : i32
    scf.if %11 {
      %c0_10 = arith.constant 0 : index
      %c0_11 = arith.constant 0 : index
      %12 = vector.load %arg7[%c0_10, %c0_11] : memref<8x512xf32, #tpu.memory_space<vmem>>, vector<8x512xf32>
      %c0_12 = arith.constant 0 : index
      %c0_13 = arith.constant 0 : index
      %13 = vector.load %arg5[%c0_12, %c0_13] : memref<1x512xf32, #tpu.memory_space<vmem>>, vector<1x512xf32>
      %14 = vector.broadcast %13 : vector<1x512xf32> to vector<8x512xf32>
      %15 = arith.addf %12, %14 : vector<8x512xf32>
      %c0_14 = arith.constant 0 : index
      %c0_15 = arith.constant 0 : index
      %16 = vector.load %arg6[%c0_14, %c0_15] : memref<8x512xf32, #tpu.memory_space<vmem>>, vector<8x512xf32>
      tpu.vector_store %arg6[%c0_14, %c0_15], %15 {strides = array<i32>} : memref<8x512xf32, #tpu.memory_space<vmem>>, vector<8x512xf32>,
    } else {
    }
    return
  }
  func.func @transform_0(%arg0: i32, %arg1: i32, %arg2: i32) -> (i32, i32) {
    %c0_i32 = arith.constant 0 : i32
    return %arg0, %arg2 : i32, i32
  }
  func.func @transform_1(%arg0: i32, %arg1: i32, %arg2: i32) -> (i32, i32) {
    %c0_i32 = arith.constant 0 : i32
    return %arg2, %arg1 : i32, i32
  }
  func.func @transform_2(%arg0: i32, %arg1: i32, %arg2: i32) -> (i32, i32) {
    %c0_i32 = arith.constant 0 : i32
    %c0_i32_0 = arith.constant 0 : i32
    return %c0_i32, %arg1 : i32, i32
  }
  func.func @transform_3(%arg0: i32, %arg1: i32, %arg2: i32) -> (i32, i32) {
    %c0_i32 = arith.constant 0 : i32
    return %arg0, %arg1 : i32, i32
  }
}

</mosaic_0001>

<llo_original>
// kernel: vgg_forward.10
$region0: #{vgg_forward.10}
  #allocation0 [shape = 'u32[]', space=smem, size = 0x4, offset = 0x4, fixed_abs, tag = 'smem constant byte address 0x4 - core index']
  #allocation1 [shape = 'u32[144,128]{1,0:T(1,128)}', space=vmem, size = 0x12000, scoped, tag = 'internal scratch']
  %s0 = inlined_call_operand.vmem [shape: bf16[128,16], index: 0, kind: input, shape index: {}]
  %s1 = inlined_call_operand.vmem [shape: bf16[128,16], index: 1, kind: input, shape index: {}]
  %s2 = inlined_call_operand.vmem [shape: bf16[128,16], index: 2, kind: input, shape index: {}]
  %s3 = inlined_call_operand.vmem [shape: bf16[128,16], index: 3, kind: input, shape index: {}]
  %s4 = inlined_call_operand.vmem [shape: bf16[128,16], index: 4, kind: output, shape index: {}]
  %s5 = sld [smem:[#allocation0]]
  $region26: #{vgg_forward.10} parent=0
    _
  %s7 = ssub.s32 1, %s5
  %s8 = scalar_select 0, %s7, %s5
  // Predicated region
  $region2: #{vgg_forward.10} parent=0 // pred_check
    _
  $region3: #{vgg_forward.10} parent=0 // pred_check_branch
    %10 = sbr.rel (0) target = $region5
  $region4: #{vgg_forward.10} parent=0 // pred_region
    _
  $region5: #{vgg_forward.10} parent=0 // pred_fallthru
    _
  // Predicated region
  $region6: #{vgg_forward.10} parent=0 // pred_check
    _
  $region7: #{vgg_forward.10} parent=0 // pred_check_branch
    %12 = sbr.rel (0) target = $region9
  $region8: #{vgg_forward.10} parent=0 // pred_region
    _
  $region9: #{vgg_forward.10} parent=0 // pred_fallthru
    _
  // Predicated region
  $region10: #{vgg_forward.10} parent=0 // pred_check
    _
  $region11: #{vgg_forward.10} parent=0 // pred_check_branch
    %14 = sbr.rel (0) target = $region13
  $region12: #{vgg_forward.10} parent=0 // pred_region
    _
  $region13: #{vgg_forward.10} parent=0 // pred_fallthru
    _
  // Predicated region
  $region14: #{vgg_forward.10} parent=0 // pred_check
    _
  $region15: #{vgg_forward.10} parent=0 // pred_check_branch
    %16 = sbr.rel (0) target = $region17
  $region16: #{vgg_forward.10} parent=0 // pred_region
    _
  $region17: #{vgg_forward.10} parent=0 // pred_fallthru
    _
  %v17 = vld [vmem:[%s0] sm:$0xf]
  %v18 = vld [vmem:[%s0 + $0x4] sm:$0xf]
  %v19 = vld [vmem:[%s0 + $0x8] sm:$0xf]
  %v20 = vld [vmem:[%s0 + $0xc] sm:$0xf]
  %v21 = vld [vmem:[%s0 + $0x10] sm:$0xf]
  %v22 = vld [vmem:[%s0 + $0x14] sm:$0xf]
  %v23 = vld [vmem:[%s0 + $0x18] sm:$0xf]
  %v24 = vld [vmem:[%s0 + $0x1c] sm:$0xf]
  %v25 = vld [vmem:[%s0 + $0x20] sm:$0xf]
  %v26 = vld [vmem:[%s0 + $0x24] sm:$0xf]
  %v27 = vld [vmem:[%s0 + $0x28] sm:$0xf]
  %v28 = vld [vmem:[%s0 + $0x2c] sm:$0xf]
  %v29 = vld [vmem:[%s0 + $0x30] sm:$0xf]
  %v30 = vld [vmem:[%s0 + $0x34] sm:$0xf]
  %v31 = vld [vmem:[%s0 + $0x38] sm:$0xf]
  %v32 = vld [vmem:[%s0 + $0x3c] sm:$0xf]
  %v33 = vld [vmem:[%s1] sm:$0xf]
  %v34 = vld [vmem:[%s1 + $0x4] sm:$0xf]
  %v35 = vld [vmem:[%s1 + $0x8] sm:$0xf]
  %v36 = vld [vmem:[%s1 + $0xc] sm:$0xf]
  %v37 = vld [vmem:[%s1 + $0x10] sm:$0xf]
  %v38 = vld [vmem:[%s1 + $0x14] sm:$0xf]
  %v39 = vld [vmem:[%s1 + $0x18] sm:$0xf]
  %v40 = vld [vmem:[%s1 + $0x1c] sm:$0xf]
  %v41 = vld [vmem:[%s1 + $0x20] sm:$0xf]
  %v42 = vld [vmem:[%s1 + $0x24] sm:$0xf]
  %v43 = vld [vmem:[%s1 + $0x28] sm:$0xf]
  %v44 = vld [vmem:[%s1 + $0x2c] sm:$0xf]
  %v45 = vld [vmem:[%s1 + $0x30] sm:$0xf]
  %v46 = vld [vmem:[%s1 + $0x34] sm:$0xf]
  %v47 = vld [vmem:[%s1 + $0x38] sm:$0xf]
  %v48 = vld [vmem:[%s1 + $0x3c] sm:$0xf]
  %v49 = vmax.bf16 %v17, %v33
  %v50 = vmax.bf16 %v18, %v34
  %v51 = vmax.bf16 %v19, %v35
  %v52 = vmax.bf16 %v20, %v36
  %v53 = vmax.bf16 %v21, %v37
  %v54 = vmax.bf16 %v22, %v38
  %v55 = vmax.bf16 %v23, %v39
  %v56 = vmax.bf16 %v24, %v40
  %v57 = vmax.bf16 %v25, %v41
  %v58 = vmax.bf16 %v26, %v42
  %v59 = vmax.bf16 %v27, %v43
  %v60 = vmax.bf16 %v28, %v44
  %v61 = vmax.bf16 %v29, %v45
  %v62 = vmax.bf16 %v30, %v46
  %v63 = vmax.bf16 %v31, %v47
  %v64 = vmax.bf16 %v32, %v48
  %v65 = vld [vmem:[%s2] sm:$0xf]
  %v66 = vld [vmem:[%s2 + $0x4] sm:$0xf]
  %v67 = vld [vmem:[%s2 + $0x8] sm:$0xf]
  %v68 = vld [vmem:[%s2 + $0xc] sm:$0xf]
  %v69 = vld [vmem:[%s2 + $0x10] sm:$0xf]
  %v70 = vld [vmem:[%s2 + $0x14] sm:$0xf]
  %v71 = vld [vmem:[%s2 + $0x18] sm:$0xf]
  %v72 = vld [vmem:[%s2 + $0x1c] sm:$0xf]
  %v73 = vld [vmem:[%s2 + $0x20] sm:$0xf]
  %v74 = vld [vmem:[%s2 + $0x24] sm:$0xf]
  %v75 = vld [vmem:[%s2 + $0x28] sm:$0xf]
  %v76 = vld [vmem:[%s2 + $0x2c] sm:$0xf]
  %v77 = vld [vmem:[%s2 + $0x30] sm:$0xf]
  %v78 = vld [vmem:[%s2 + $0x34] sm:$0xf]
  %v79 = vld [vmem:[%s2 + $0x38] sm:$0xf]
  %v80 = vld [vmem:[%s2 + $0x3c] sm:$0xf]
  %v81 = vld [vmem:[%s3] sm:$0xf]
  %v82 = vld [vmem:[%s3 + $0x4] sm:$0xf]
  %v83 = vld [vmem:[%s3 + $0x8] sm:$0xf]
  %v84 = vld [vmem:[%s3 + $0xc] sm:$0xf]
  %v85 = vld [vmem:[%s3 + $0x10] sm:$0xf]
  %v86 = vld [vmem:[%s3 + $0x14] sm:$0xf]
  %v87 = vld [vmem:[%s3 + $0x18] sm:$0xf]
  %v88 = vld [vmem:[%s3 + $0x1c] sm:$0xf]
  %v89 = vld [vmem:[%s3 + $0x20] sm:$0xf]
  %v90 = vld [vmem:[%s3 + $0x24] sm:$0xf]
  %v91 = vld [vmem:[%s3 + $0x28] sm:$0xf]
  %v92 = vld [vmem:[%s3 + $0x2c] sm:$0xf]
  %v93 = vld [vmem:[%s3 + $0x30] sm:$0xf]
  %v94 = vld [vmem:[%s3 + $0x34] sm:$0xf]
  %v95 = vld [vmem:[%s3 + $0x38] sm:$0xf]
  %v96 = vld [vmem:[%s3 + $0x3c] sm:$0xf]
  %v97 = vmax.bf16 %v65, %v81
  %v98 = vmax.bf16 %v66, %v82
  %v99 = vmax.bf16 %v67, %v83
  %v100 = vmax.bf16 %v68, %v84
  %v101 = vmax.bf16 %v69, %v85
  %v102 = vmax.bf16 %v70, %v86
  %v103 = vmax.bf16 %v71, %v87
  %v104 = vmax.bf16 %v72, %v88
  %v105 = vmax.bf16 %v73, %v89
  %v106 = vmax.bf16 %v74, %v90
  %v107 = vmax.bf16 %v75, %v91
  %v108 = vmax.bf16 %v76, %v92
  %v109 = vmax.bf16 %v77, %v93
  %v110 = vmax.bf16 %v78, %v94
  %v111 = vmax.bf16 %v79, %v95
  %v112 = vmax.bf16 %v80, %v96
  %v113 = vmax.bf16 %v49, %v97
  %v114 = vmax.bf16 %v50, %v98
  %v115 = vmax.bf16 %v51, %v99
  %v116 = vmax.bf16 %v52, %v100
  %v117 = vmax.bf16 %v53, %v101
  %v118 = vmax.bf16 %v54, %v102
  %v119 = vmax.bf16 %v55, %v103
  %v120 = vmax.bf16 %v56, %v104
  %v121 = vmax.bf16 %v57, %v105
  %v122 = vmax.bf16 %v58, %v106
  %v123 = vmax.bf16 %v59, %v107
  %v124 = vmax.bf16 %v60, %v108
  %v125 = vmax.bf16 %v61, %v109
  %v126 = vmax.bf16 %v62, %v110
  %v127 = vmax.bf16 %v63, %v111
  %v128 = vmax.bf16 %v64, %v112
  %vm129 = vcmask 125952
  %130 = vst.msk [vmem:[%s4] sm:$0xf] %vm129, %v113
  %131 = vst.msk [vmem:[%s4 + $0x4] sm:$0xf] %vm129, %v114
  %132 = vst.msk [vmem:[%s4 + $0x8] sm:$0xf] %vm129, %v115
  %133 = vst.msk [vmem:[%s4 + $0xc] sm:$0xf] %vm129, %v116
  %134 = vst.msk [vmem:[%s4 + $0x10] sm:$0xf] %vm129, %v117
  %135 = vst.msk [vmem:[%s4 + $0x14] sm:$0xf] %vm129, %v118
  %136 = vst.msk [vmem:[%s4 + $0x18] sm:$0xf] %vm129, %v119
  %137 = vst.msk [vmem:[%s4 + $0x1c] sm:$0xf] %vm129, %v120
  %138 = vst.msk [vmem:[%s4 + $0x20] sm:$0xf] %vm129, %v121
  %139 = vst.msk [vmem:[%s4 + $0x24] sm:$0xf] %vm129, %v122
  %140 = vst.msk [vmem:[%s4 + $0x28] sm:$0xf] %vm129, %v123
  %141 = vst.msk [vmem:[%s4 + $0x2c] sm:$0xf] %vm129, %v124
  %142 = vst.msk [vmem:[%s4 + $0x30] sm:$0xf] %vm129, %v125
  %143 = vst.msk [vmem:[%s4 + $0x34] sm:$0xf] %vm129, %v126
  %144 = vst.msk [vmem:[%s4 + $0x38] sm:$0xf] %vm129, %v127
  %145 = vst.msk [vmem:[%s4 + $0x3c] sm:$0xf] %vm129, %v128
  // Predicated region
  $region18: #{vgg_forward.10} parent=0 // pred_check
    _
  $region19: #{vgg_forward.10} parent=0 // pred_check_branch
    %147 = sbr.rel (0) target = $region21
  $region20: #{vgg_forward.10} parent=0 // pred_region
    _
  $region21: #{vgg_forward.10} parent=0 // pred_fallthru
    _
  // Predicated region
  $region22: #{vgg_forward.10} parent=0 // pred_check
    _
  $region23: #{vgg_forward.10} parent=0 // pred_check_branch
    %149 = sbr.rel (0) target = $region25
  $region24: #{vgg_forward.10} parent=0 // pred_region
    _
  $region25: #{vgg_forward.10} parent=0 // pred_fallthru
    _

// kernel: vgg_forward.9
$region0: #{vgg_forward.9}
  #allocation0 [shape = 'u32[]', space=smem, size = 0x4, offset = 0x4, fixed_abs, tag = 'smem constant byte address 0x4 - core index']
  #allocation1 [shape = 'u32[144,128]{1,0:T(1,128)}', space=vmem, size = 0x12000, scoped, tag = 'internal scratch']
  %s0 = inlined_call_operand.vmem [shape: bf16[2,328,3], index: 0, kind: input, shape index: {}]
  %s1 = inlined_call_operand.vmem [shape: bf16[9,3,16], index: 1, kind: input, shape index: {}]
  %s2 = inlined_call_operand.hbm [shape: f32[1,16], index: 2, kind: input, shape index: {}]
  %s3 = inlined_call_operand.vmem [shape: bf16[2,288,16], index: 3, kind: output, shape index: {}]
  %s4 = sld [smem:[#allocation0]]
  $region49: #{vgg_forward.9} parent=0
    _
  %s6 = ssub.s32 1, %s4
  %s7 = scalar_select 0, %s6, %s4
  $region1: #{vgg_forward.9} parent=0
    #allocation2 [shape = 'u8[512]{0}', space=vmem, size = 0x400, scoped, tag = 'input window, operand 2, single buffered']
    #allocation3 [shape = 's32[2]{0}', space=sflag, size = 0x8, scoped, tag = 'scoped memory for vgg_forward.9']
    %8 = vsyncpa [#allocation3], 0
    loop: start=0, step=1, limit=4
    $region2: #{vgg_forward.9} parent=1 // loop_pre_header
      _
    $region3: #{vgg_forward.9} parent=1 // loop_header
      %s10 = sphi 0, %s14
      %p11 = scmp.ge.s32.totalorder %s10, 4
      %s20 = sphi 0, %s22
      %s23 = sphi 0, %s20
      %s24 = sphi 0, %s23
      %s40 = sphi 0, %s24
      %s44 = sphi 0, %s44
      %s46 = sphi 0, %s44
      %s47 = sphi 0, %s46
      %s61 = sphi 0, %s47
      %s65 = sphi 0, %s65
      %s67 = sphi 0, %s65
      %s68 = sphi 0, %s67
      %s82 = sphi 0, %s68
      %s88 = sphi 0, %s90
      %s91 = sphi 0, %s88
      %s92 = sphi 0, %s91
      %s108 = sphi 0, %s92
    $region4: #{vgg_forward.9} parent=1 // loop_header_branch
      %13 = sbr.rel (%p11) target = $region8
    $region5: #{vgg_forward.9} parent=1 // loop_body
      %s15 = ssub.s32 %s10, 1
      %s16 = ssub.s32 %s10, 2
      %s17 = sadd.s32 %s10, 1
      %s18 = ssub.s32 %s10, %s17
      %p19 = scmp.eq.s32.totalorder %s18, 0
      %s21 = sadd.s32 %s20, 1
      %s22 = scalar_select %p19, %s20, %s21
      %p25 = pneg %p19
      %p26 = scmp.eq.s32.totalorder %s10, 1
      %p27 = por %p25, %p26
      %p28 = scmp.ne.s32.totalorder %s20, %s23
      %p29 = scmp.eq.s32.totalorder %s10, 0
      %p30 = por %p28, %p29
      %p31 = scmp.ne.s32.totalorder %s20, %s23
      %p32 = scmp.eq.s32.totalorder %s15, 1
      %p33 = por %p31, %p32
      %p34 = scmp.ne.s32.totalorder %s23, %s24
      %p35 = scmp.eq.s32.totalorder %s15, 0
      %p36 = por %p34, %p35
      %p37 = scmp.ne.s32.totalorder %s23, %s24
      %p38 = scmp.eq.s32.totalorder %s16, 1
      %p39 = por %p37, %p38
      %p41 = scmp.ne.s32.totalorder %s24, %s40
      %p42 = scmp.eq.s32.totalorder %s16, 0
      %p43 = por %p41, %p42
      %s45 = sadd.s32 %s44, 1
      %p48 = scmp.eq.s32.totalorder %s10, 1
      %p49 = scmp.ne.s32.totalorder %s44, %s46
      %p50 = scmp.eq.s32.totalorder %s10, 0
      %p51 = por %p49, %p50
      %p52 = scmp.ne.s32.totalorder %s44, %s46
      %p53 = scmp.eq.s32.totalorder %s15, 1
      %p54 = por %p52, %p53
      %p55 = scmp.ne.s32.totalorder %s46, %s47
      %p56 = scmp.eq.s32.totalorder %s15, 0
      %p57 = por %p55, %p56
      %p58 = scmp.ne.s32.totalorder %s46, %s47
      %p59 = scmp.eq.s32.totalorder %s16, 1
      %p60 = por %p58, %p59
      %p62 = scmp.ne.s32.totalorder %s47, %s61
      %p63 = scmp.eq.s32.totalorder %s16, 0
      %p64 = por %p62, %p63
      %s66 = sadd.s32 %s65, 1
      %p69 = scmp.eq.s32.totalorder %s10, 1
      %p70 = scmp.ne.s32.totalorder %s65, %s67
      %p71 = scmp.eq.s32.totalorder %s10, 0
      %p72 = por %p70, %p71
      %p73 = scmp.ne.s32.totalorder %s65, %s67
      %p74 = scmp.eq.s32.totalorder %s15, 1
      %p75 = por %p73, %p74
      %p76 = scmp.ne.s32.totalorder %s67, %s68
      %p77 = scmp.eq.s32.totalorder %s15, 0
      %p78 = por %p76, %p77
      %p79 = scmp.ne.s32.totalorder %s67, %s68
      %p80 = scmp.eq.s32.totalorder %s16, 1
      %p81 = por %p79, %p80
      %p83 = scmp.ne.s32.totalorder %s68, %s82
      %p84 = scmp.eq.s32.totalorder %s16, 0
      %p85 = por %p83, %p84
      %s86 = ssub.s32 %s10, %s17
      %p87 = scmp.eq.s32.totalorder %s86, 0
      %s89 = sadd.s32 %s88, 1
      %s90 = scalar_select %p87, %s88, %s89
      %p93 = pneg %p87
      %p94 = scmp.eq.s32.totalorder %s10, 1
      %p95 = por %p93, %p94
      %p96 = scmp.ne.s32.totalorder %s88, %s91
      %p97 = scmp.eq.s32.totalorder %s10, 0
      %p98 = por %p96, %p97
      %p99 = scmp.ne.s32.totalorder %s88, %s91
      %p100 = scmp.eq.s32.totalorder %s15, 1
      %p101 = por %p99, %p100
      %p102 = scmp.ne.s32.totalorder %s91, %s92
      %p103 = scmp.eq.s32.totalorder %s15, 0
      %p104 = por %p102, %p103
      %p105 = scmp.ne.s32.totalorder %s91, %s92
      %p106 = scmp.eq.s32.totalorder %s16, 1
      %p107 = por %p105, %p106
      %p109 = scmp.ne.s32.totalorder %s92, %s108
      %p110 = scmp.eq.s32.totalorder %s16, 0
      %p111 = por %p109, %p110
      %p112 = scmp.le.s32.totalorder 1, %s10
      %p113 = scmp.lt.s32.totalorder %s10, 3
      %p114 = pnand %p112, %p113
      %p115 = pneg %p114
      // Predicated region
      $region9: #{vgg_forward.9} parent=5 // pred_check
        _
      $region10: #{vgg_forward.9} parent=5 // pred_check_branch
        %117 = sbr.rel (%p114) target = $region12
      $region11: #{vgg_forward.9} parent=5 // pred_region
        %s118 = ssub.s32 %s10, 1
        // Predicated region
        $region13: #{vgg_forward.9} parent=11 // pred_check
          %p119 = pneg %p57
        $region14: #{vgg_forward.9} parent=11 // pred_check_branch
          %121 = sbr.rel (%p119) target = $region16
        $region15: #{vgg_forward.9} parent=11 // pred_region
          _
        $region16: #{vgg_forward.9} parent=11 // pred_fallthru
          _
        // Predicated region
        $region17: #{vgg_forward.9} parent=11 // pred_check
          %p122 = pneg %p78
        $region18: #{vgg_forward.9} parent=11 // pred_check_branch
          %124 = sbr.rel (%p122) target = $region20
        $region19: #{vgg_forward.9} parent=11 // pred_region
          %s126 = ssub.s32 16, 16
          %127 = vsyncadd [#allocation3], %s126
          %s129 = sshll.u32 [#allocation2], 4
          %s130 = int_to_ptr.vmem [resolvable:$true] %s129
          %132 = dma.hbm_to_vmem [thread:$0]  %s2, 16, %s130, [#allocation3]
        $region20: #{vgg_forward.9} parent=11 // pred_fallthru
          _
      $region12: #{vgg_forward.9} parent=5 // pred_fallthru
        _
      %p133 = scmp.lt.s32.totalorder %s10, 2
      // Predicated region
      $region21: #{vgg_forward.9} parent=5 // pred_check
        %p134 = pneg %p133
      $region22: #{vgg_forward.9} parent=5 // pred_check_branch
        %136 = sbr.rel (%p134) target = $region24
      $region23: #{vgg_forward.9} parent=5 // pred_region
        // Predicated region
        $region25: #{vgg_forward.9} parent=23 // pred_check
          %p137 = pneg %p30
        $region26: #{vgg_forward.9} parent=23 // pred_check_branch
          %139 = sbr.rel (%p137) target = $region28
        $region27: #{vgg_forward.9} parent=23 // pred_region
          %p140 = scmp.lt.s32.totalorder %s10, 1
          %s141 = scalar_select %p140, %s10, 1
          %s142 = smul.addr %s141, 41
          %s143 = smul.addr %s142, 4
          %s144 = scalar_lea.vmem %s0, %s143
        $region28: #{vgg_forward.9} parent=23 // pred_fallthru
          _
      $region24: #{vgg_forward.9} parent=5 // pred_fallthru
        _
      %p145 = scmp.le.s32.totalorder 1, %s10
      %p146 = scmp.lt.s32.totalorder %s10, 3
      %p147 = pnand %p145, %p146
      %p148 = pneg %p147
      // Predicated region
      $region29: #{vgg_forward.9} parent=5 // pred_check
        _
      $region30: #{vgg_forward.9} parent=5 // pred_check_branch
        %150 = sbr.rel (%p147) target = $region32
      $region31: #{vgg_forward.9} parent=5 // pred_region
        %s151 = ssub.s32 %s10, 1
        // Predicated region
        $region33: #{vgg_forward.9} parent=31 // pred_check
          %p152 = pneg %p78
        $region34: #{vgg_forward.9} parent=31 // pred_check_branch
          %154 = sbr.rel (%p152) target = $region36
        $region35: #{vgg_forward.9} parent=31 // pred_region
          %155 = dma.done [#allocation3], 16
        $region36: #{vgg_forward.9} parent=31 // pred_fallthru
          _
        %p156 = scmp.lt.s32.totalorder %s15, 1
        %s157 = scalar_select %p156, %s15, 1
        %s158 = smul.addr %s157, 41
        %s159 = smul.addr %s158, 4
        %s160 = scalar_lea.vmem %s0, %s159
        %p161 = pneg %p36
        %p162 = pneg %p33
        %p163 = pneg %p57
        %p164 = pneg %p54
        %p165 = pneg %p78
        %p166 = pneg %p75
        %p167 = pneg %p104
        %p168 = pneg %p101
        %p169 = scmp.lt.s32.totalorder %s15, 1
        %s170 = scalar_select %p169, %s15, 1
        %s171 = smul.addr %s170, 36
        %s172 = smul.addr %s171, 4
        %s173 = scalar_lea.vmem %s3, %s172
        %p174 = scmp.lt.s32.totalorder %s15, 1
        %s175 = scalar_select %p174, %s15, 1
        %s176 = smul.addr %s175, 41
        %s177 = smul.addr %s176, 4
        %s178 = scalar_lea.vmem %s0, %s177
        %p179 = scmp.lt.s32.totalorder %s15, 1
        %s180 = scalar_select %p179, %s15, 1
        %s181 = smul.addr %s180, 36
        %s182 = smul.addr %s181, 4
        %s183 = scalar_lea.vmem %s3, %s182
        %v185 = vld [vmem:[%s178] sm:$0xf]
        %v186 = vld [vmem:[%s178 + $0x4] sm:$0xf]
        %v187 = vld [vmem:[%s178 + $0x8] sm:$0xf]
        %v188 = vld [vmem:[%s178 + $0xc] sm:$0xf]
        %v189 = vld [vmem:[%s178 + $0x10] sm:$0xf]
        %v190 = vld [vmem:[%s178 + $0x14] sm:$0xf]
        %v191 = vld [vmem:[%s178 + $0x18] sm:$0xf]
        %v192 = vld [vmem:[%s178 + $0x1c] sm:$0xf]
        %v193 = vld [vmem:[%s178 + $0x20] sm:$0xf]
        %v194 = vld [vmem:[%s178 + $0x24] sm:$0xf]
        %v195 = vld [vmem:[%s178 + $0x28] sm:$0xf]
        %v196 = vld [vmem:[%s178 + $0x2c] sm:$0xf]
        %v197 = vld [vmem:[%s178 + $0x30] sm:$0xf]
        %v198 = vld [vmem:[%s178 + $0x34] sm:$0xf]
        %v199 = vld [vmem:[%s178 + $0x38] sm:$0xf]
        %v200 = vld [vmem:[%s178 + $0x3c] sm:$0xf]
        %v201 = vld [vmem:[%s178 + $0x40] sm:$0xf]
        %v202 = vld [vmem:[%s178 + $0x44] sm:$0xf]
        %v203 = vld [vmem:[%s178 + $0x48] sm:$0xf]
        %v204 = vld [vmem:[%s178 + $0x4c] sm:$0xf]
        %v205 = vld [vmem:[%s178 + $0x50] sm:$0xf]
        %v206 = vld [vmem:[%s178 + $0x54] sm:$0xf]
        %v207 = vld [vmem:[%s178 + $0x58] sm:$0xf]
        %v208 = vld [vmem:[%s178 + $0x5c] sm:$0xf]
        %v209 = vld [vmem:[%s178 + $0x60] sm:$0xf]
        %v210 = vld [vmem:[%s178 + $0x64] sm:$0xf]
        %v211 = vld [vmem:[%s178 + $0x68] sm:$0xf]
        %v212 = vld [vmem:[%s178 + $0x6c] sm:$0xf]
        %v213 = vld [vmem:[%s178 + $0x70] sm:$0xf]
        %v214 = vld [vmem:[%s178 + $0x74] sm:$0xf]
        %v215 = vld [vmem:[%s178 + $0x78] sm:$0xf]
        %v216 = vld [vmem:[%s178 + $0x7c] sm:$0xf]
        %v217 = vld [vmem:[%s178 + $0x80] sm:$0xf]
        %v218 = vld [vmem:[%s178 + $0x84] sm:$0xf]
        %v219 = vld [vmem:[%s178 + $0x88] sm:$0xf]
        %v220 = vld [vmem:[%s178 + $0x8c] sm:$0xf]
        %v221 = vld [vmem:[%s178 + $0x90] sm:$0xf]
        %v222 = vld [vmem:[%s178 + $0x94] sm:$0xf]
        %v223 = vld [vmem:[%s178 + $0x98] sm:$0xf]
        %v224 = vld [vmem:[%s178 + $0x9c] sm:$0xf]
        %v225 = vld [vmem:[%s178 + $0xa0] sm:$0xf]
        %v226 = vld [vmem:[%s1] sm:$0x3]
        %s227 = scalar_lea.vmem %s1, 2
        %v228 = vld [vmem:[%s227] sm:$0x3]
        %v266 = vunpack.c.l.b16 %v185
        %v267 = vunpack.c.l.b16 %v186
        %v268 = vunpack.c.l.b16 %v187
        %v269 = vunpack.c.l.b16 %v188
        %v270 = vunpack.c.l.b16 %v189
        %v271 = vunpack.c.l.b16 %v190
        %v272 = vunpack.c.l.b16 %v191
        %v273 = vunpack.c.l.b16 %v192
        %v274 = vunpack.c.l.b16 %v193
        %v275 = vunpack.c.l.b16 %v194
        %v276 = vunpack.c.l.b16 %v195
        %v277 = vunpack.c.l.b16 %v196
        %v278 = vunpack.c.l.b16 %v197
        %v279 = vunpack.c.l.b16 %v198
        %v280 = vunpack.c.l.b16 %v199
        %v281 = vunpack.c.l.b16 %v200
        %v282 = vunpack.c.l.b16 %v201
        %v283 = vunpack.c.l.b16 %v202
        %v284 = vunpack.c.l.b16 %v203
        %v285 = vunpack.c.l.b16 %v204
        %v286 = vunpack.c.l.b16 %v205
        %v287 = vunpack.c.l.b16 %v206
        %v288 = vunpack.c.l.b16 %v207
        %v289 = vunpack.c.l.b16 %v208
        %v290 = vunpack.c.l.b16 %v209
        %v291 = vunpack.c.l.b16 %v210
        %v292 = vunpack.c.l.b16 %v211
        %v293 = vunpack.c.l.b16 %v212
        %v294 = vunpack.c.l.b16 %v213
        %v295 = vunpack.c.l.b16 %v214
        %v296 = vunpack.c.l.b16 %v215
        %v297 = vunpack.c.l.b16 %v216
        %v298 = vunpack.c.l.b16 %v217
        %v299 = vunpack.c.l.b16 %v218
        %v300 = vunpack.c.l.b16 %v219
        %v301 = vunpack.c.l.b16 %v220
        %v302 = vunpack.c.l.b16 %v221
        %v303 = vpack.c.b16 %v267, %v266
        %v304 = vpack.c.b16 %v269, %v268
        %v305 = vpack.c.b16 %v271, %v270
        %v306 = vpack.c.b16 %v273, %v272
        %v307 = vpack.c.b16 %v275, %v274
        %v308 = vpack.c.b16 %v277, %v276
        %v309 = vpack.c.b16 %v279, %v278
        %v310 = vpack.c.b16 %v281, %v280
        %v311 = vpack.c.b16 %v283, %v282
        %v312 = vpack.c.b16 %v285, %v284
        %v313 = vpack.c.b16 %v287, %v286
        %v314 = vpack.c.b16 %v289, %v288
        %v315 = vpack.c.b16 %v291, %v290
        %v316 = vpack.c.b16 %v293, %v292
        %v317 = vpack.c.b16 %v295, %v294
        %v318 = vpack.c.b16 %v297, %v296
        %v319 = vpack.c.b16 %v299, %v298
        %v320 = vpack.c.b16 %v301, %v300
        %v321 = vpack.c.b16 %v302, %v302
        %vm322 = vsmask.f32 7424
        %v324 = vshrl.u32 %v303, 16
        %v326 = vshll.u32 %v303, 16
        %v328 = vrot.slane %v326, 1
        %v329 = vor.u32 %v324, %v328
        %v331 = vshll.u32 %v304, 16
        %v333 = vrot.slane %v331, 1
        %v334 = vsel %vm322, %v329, %v333
        %v335 = vshrl.u32 %v304, 16
        %v337 = vor.u32 %v335, %v333
        %v339 = vshll.u32 %v305, 16
        %v341 = vrot.slane %v339, 1
        %v342 = vsel %vm322, %v337, %v341
        %v343 = vshrl.u32 %v305, 16
        %v345 = vor.u32 %v343, %v341
        %v347 = vshll.u32 %v306, 16
        %v349 = vrot.slane %v347, 1
        %v350 = vsel %vm322, %v345, %v349
        %v351 = vshrl.u32 %v306, 16
        %v353 = vor.u32 %v351, %v349
        %v355 = vshll.u32 %v307, 16
        %v357 = vrot.slane %v355, 1
        %v358 = vsel %vm322, %v353, %v357
        %v359 = vshrl.u32 %v307, 16
        %v361 = vor.u32 %v359, %v357
        %v363 = vshll.u32 %v308, 16
        %v365 = vrot.slane %v363, 1
        %v366 = vsel %vm322, %v361, %v365
        %v367 = vshrl.u32 %v308, 16
        %v369 = vor.u32 %v367, %v365
        %v371 = vshll.u32 %v309, 16
        %v373 = vrot.slane %v371, 1
        %v374 = vsel %vm322, %v369, %v373
        %v375 = vshrl.u32 %v309, 16
        %v377 = vor.u32 %v375, %v373
        %v379 = vshll.u32 %v310, 16
        %v381 = vrot.slane %v379, 1
        %v382 = vsel %vm322, %v377, %v381
        %v383 = vshrl.u32 %v310, 16
        %v385 = vor.u32 %v383, %v381
        %v387 = vshll.u32 %v311, 16
        %v389 = vrot.slane %v387, 1
        %v390 = vsel %vm322, %v385, %v389
        %v391 = vshrl.u32 %v311, 16
        %v393 = vor.u32 %v391, %v389
        %v395 = vshll.u32 %v312, 16
        %v397 = vrot.slane %v395, 1
        %v398 = vsel %vm322, %v393, %v397
        %v399 = vshrl.u32 %v312, 16
        %v401 = vor.u32 %v399, %v397
        %v403 = vshll.u32 %v313, 16
        %v405 = vrot.slane %v403, 1
        %v406 = vsel %vm322, %v401, %v405
        %v407 = vshrl.u32 %v313, 16
        %v409 = vor.u32 %v407, %v405
        %v411 = vshll.u32 %v314, 16
        %v413 = vrot.slane %v411, 1
        %v414 = vsel %vm322, %v409, %v413
        %v415 = vshrl.u32 %v314, 16
        %v417 = vor.u32 %v415, %v413
        %v419 = vshll.u32 %v315, 16
        %v421 = vrot.slane %v419, 1
        %v422 = vsel %vm322, %v417, %v421
        %v423 = vshrl.u32 %v315, 16
        %v425 = vor.u32 %v423, %v421
        %v427 = vshll.u32 %v316, 16
        %v429 = vrot.slane %v427, 1
        %v430 = vsel %vm322, %v425, %v429
        %v431 = vshrl.u32 %v316, 16
        %v433 = vor.u32 %v431, %v429
        %v435 = vshll.u32 %v317, 16
        %v437 = vrot.slane %v435, 1
        %v438 = vsel %vm322, %v433, %v437
        %v439 = vshrl.u32 %v317, 16
        %v441 = vor.u32 %v439, %v437
        %v443 = vshll.u32 %v318, 16
        %v445 = vrot.slane %v443, 1
        %v446 = vsel %vm322, %v441, %v445
        %v447 = vshrl.u32 %v318, 16
        %v449 = vor.u32 %v447, %v445
        %v451 = vshll.u32 %v319, 16
        %v453 = vrot.slane %v451, 1
        %v454 = vsel %vm322, %v449, %v453
        %v455 = vshrl.u32 %v319, 16
        %v457 = vor.u32 %v455, %v453
        %v459 = vshll.u32 %v320, 16
        %v461 = vrot.slane %v459, 1
        %v462 = vsel %vm322, %v457, %v461
        %v463 = vshrl.u32 %v320, 16
        %v465 = vor.u32 %v463, %v461
        %v467 = vshll.u32 %v321, 16
        %v469 = vrot.slane %v467, 1
        %v470 = vsel %vm322, %v465, %v469
        %vm471 = vcmask 23552
        %v473 = vsel %vm471, %v334, 0
        %v476 = vsel %vm471, %v342, 0
        %v479 = vsel %vm471, %v350, 0
        %v482 = vsel %vm471, %v358, 0
        %v485 = vsel %vm471, %v366, 0
        %v488 = vsel %vm471, %v374, 0
        %v491 = vsel %vm471, %v382, 0
        %v494 = vsel %vm471, %v390, 0
        %v497 = vsel %vm471, %v398, 0
        %v500 = vsel %vm471, %v406, 0
        %v503 = vsel %vm471, %v414, 0
        %v506 = vsel %vm471, %v422, 0
        %v509 = vsel %vm471, %v430, 0
        %v512 = vsel %vm471, %v438, 0
        %v515 = vsel %vm471, %v446, 0
        %v518 = vsel %vm471, %v454, 0
        %v521 = vsel %vm471, %v462, 0
        %v524 = vsel %vm471, %v470, 0
        %vm526 = vcmask 1040384
        %vm527 = vcmask 1041408
        %v528 = vsel %vm526, 4294967295, 65535
        %v529 = vsel %vm527, %v528, 0
        %v531 = vand.u32 %v228, %v529
        %533 = vmatprep.subr.bf16.mxu0 0
        %534 = vmatpush1.bf16.msra.mxu0 %v531
        %535 = vmatprep.subr.bf16.mxu0 0
        %536 = vmatpush1.bf16.msra.mxu0 0
        %537 = vmatprep.subr.bf16.mxu0 0
        %538 = vmatpush1.bf16.msra.mxu0 0
        %539 = vmatprep.subr.bf16.mxu0 0
        %540 = vmatpush1.bf16.msra.mxu0 0
        %541 = vmatprep.subr.bf16.mxu0 0
        %542 = vmatpush1.bf16.msra.mxu0 0
        %543 = vmatprep.subr.bf16.mxu0 0
        %544 = vmatpush1.bf16.msra.mxu0 0
        %545 = vmatprep.subr.bf16.mxu0 0
        %546 = vmatpush1.bf16.msra.mxu0 0
        %547 = vmatprep.subr.bf16.mxu0 0
        %548 = vmatpush1.bf16.msra.mxu0 0
        %549 = vmatprep.subr.bf16.mxu0 0
        %550 = vmatpush1.bf16.msra.mxu0 0
        %551 = vmatprep.subr.bf16.mxu0 0
        %552 = vmatpush1.bf16.msra.mxu0 0
        %553 = vmatprep.subr.bf16.mxu0 0
        %554 = vmatpush1.bf16.msra.mxu0 0
        %555 = vmatprep.subr.bf16.mxu0 0
        %556 = vmatpush1.bf16.msra.mxu0 0
        %557 = vmatprep.subr.bf16.mxu0 0
        %558 = vmatpush1.bf16.msra.mxu0 0
        %559 = vmatprep.subr.bf16.mxu0 0
        %560 = vmatpush1.bf16.msra.mxu0 0
        %561 = vmatprep.subr.bf16.mxu0 0
        %562 = vmatpush1.bf16.msra.mxu0 0
        %563 = vmatprep.subr.bf16.mxu0 0
        %564 = vmatpush1.bf16.msra.mxu0 0
        %565 = vmatprep.mubr.bf16.mxu0 0
        %566 = vmatmul.mubr.bf16.gmra.mrb[0].mxu0 %v473
        %v567 = vpop.f32.mrb[0].mxu0
        %v568 = vadd.f32 0.0, %v567
        %v569 = vpop.f32.mrb[0].mxu0
        %v570 = vpop.f32.mrb[0].mxu0
        %v571 = vadd.f32 0.0, %v570
        %v572 = vpop.f32.mrb[0].mxu0
        %573 = vmatprep.mubr.bf16.mxu0 0
        %574 = vmatmul.mubr.bf16.gmra.mrb[0].mxu0 %v476
        %v575 = vpop.f32.mrb[0].mxu0
        %v576 = vadd.f32 0.0, %v575
        %v577 = vpop.f32.mrb[0].mxu0
        %v578 = vpop.f32.mrb[0].mxu0
        %v579 = vadd.f32 0.0, %v578
        %v580 = vpop.f32.mrb[0].mxu0
        %581 = vmatprep.mubr.bf16.mxu0 0
        %582 = vmatmul.mubr.bf16.gmra.mrb[0].mxu0 %v479
        %v583 = vpop.f32.mrb[0].mxu0
        %v584 = vadd.f32 0.0, %v583
        %v585 = vpop.f32.mrb[0].mxu0
        %v586 = vpop.f32.mrb[0].mxu0
        %v587 = vadd.f32 0.0, %v586
        %v588 = vpop.f32.mrb[0].mxu0
        %589 = vmatprep.mubr.bf16.mxu0 0
        %590 = vmatmul.mubr.bf16.gmra.mrb[0].mxu0 %v482
        %v591 = vpop.f32.mrb[0].mxu0
        %v592 = vadd.f32 0.0, %v591
        %v593 = vpop.f32.mrb[0].mxu0
        %v594 = vpop.f32.mrb[0].mxu0
        %v595 = vadd.f32 0.0, %v594
        %v596 = vpop.f32.mrb[0].mxu0
        %597 = vmatprep.mubr.bf16.mxu0 0
        %598 = vmatmul.mubr.bf16.gmra.mrb[0].mxu0 %v485
        %v599 = vpop.f32.mrb[0].mxu0
        %v600 = vadd.f32 0.0, %v599
        %v601 = vpop.f32.mrb[0].mxu0
        %v602 = vpop.f32.mrb[0].mxu0
        %v603 = vadd.f32 0.0, %v602
        %v604 = vpop.f32.mrb[0].mxu0
        %605 = vmatprep.mubr.bf16.mxu0 0
        %606 = vmatmul.mubr.bf16.gmra.mrb[0].mxu0 %v488
        %v607 = vpop.f32.mrb[0].mxu0
        %v608 = vadd.f32 0.0, %v607
        %v609 = vpop.f32.mrb[0].mxu0
        %v610 = vpop.f32.mrb[0].mxu0
        %v611 = vadd.f32 0.0, %v610
        %v612 = vpop.f32.mrb[0].mxu0
        %613 = vmatprep.mubr.bf16.mxu0 0
        %614 = vmatmul.mubr.bf16.gmra.mrb[0].mxu0 %v491
        %v615 = vpop.f32.mrb[0].mxu0
        %v616 = vadd.f32 0.0, %v615
        %v617 = vpop.f32.mrb[0].mxu0
        %v618 = vpop.f32.mrb[0].mxu0
        %v619 = vadd.f32 0.0, %v618
        %v620 = vpop.f32.mrb[0].mxu0
        %621 = vmatprep.mubr.bf16.mxu0 0
        %622 = vmatmul.mubr.bf16.gmra.mrb[0].mxu0 %v494
        %v623 = vpop.f32.mrb[0].mxu0
        %v624 = vadd.f32 0.0, %v623
        %v625 = vpop.f32.mrb[0].mxu0
        %v626 = vpop.f32.mrb[0].mxu0
        %v627 = vadd.f32 0.0, %v626
        %v628 = vpop.f32.mrb[0].mxu0
        %629 = vmatprep.mubr.bf16.mxu0 0
        %630 = vmatmul.mubr.bf16.gmra.mrb[0].mxu0 %v497
        %v631 = vpop.f32.mrb[0].mxu0
        %v632 = vadd.f32 0.0, %v631
        %v633 = vpop.f32.mrb[0].mxu0
        %v634 = vpop.f32.mrb[0].mxu0
        %v635 = vadd.f32 0.0, %v634
        %v636 = vpop.f32.mrb[0].mxu0
        %637 = vmatprep.mubr.bf16.mxu0 0
        %638 = vmatmul.mubr.bf16.gmra.mrb[0].mxu0 %v500
        %v639 = vpop.f32.mrb[0].mxu0
        %v640 = vadd.f32 0.0, %v639
        %v641 = vpop.f32.mrb[0].mxu0
        %v642 = vpop.f32.mrb[0].mxu0
        %v643 = vadd.f32 0.0, %v642
        %v644 = vpop.f32.mrb[0].mxu0
        %645 = vmatprep.mubr.bf16.mxu0 0
        %646 = vmatmul.mubr.bf16.gmra.mrb[0].mxu0 %v503
        %v647 = vpop.f32.mrb[0].mxu0
        %v648 = vadd.f32 0.0, %v647
        %v649 = vpop.f32.mrb[0].mxu0
        %v650 = vpop.f32.mrb[0].mxu0
        %v651 = vadd.f32 0.0, %v650
        %v652 = vpop.f32.mrb[0].mxu0
        %653 = vmatprep.mubr.bf16.mxu0 0
        %654 = vmatmul.mubr.bf16.gmra.mrb[0].mxu0 %v506
        %v655 = vpop.f32.mrb[0].mxu0
        %v656 = vadd.f32 0.0, %v655
        %v657 = vpop.f32.mrb[0].mxu0
        %v658 = vpop.f32.mrb[0].mxu0
        %v659 = vadd.f32 0.0, %v658
        %v660 = vpop.f32.mrb[0].mxu0
        %661 = vmatprep.mubr.bf16.mxu0 0
        %662 = vmatmul.mubr.bf16.gmra.mrb[0].mxu0 %v509
        %v663 = vpop.f32.mrb[0].mxu0
        %v664 = vadd.f32 0.0, %v663
        %v665 = vpop.f32.mrb[0].mxu0
        %v666 = vpop.f32.mrb[0].mxu0
        %v667 = vadd.f32 0.0, %v666
        %v668 = vpop.f32.mrb[0].mxu0
        %669 = vmatprep.mubr.bf16.mxu0 0
        %670 = vmatmul.mubr.bf16.gmra.mrb[0].mxu0 %v512
        %v671 = vpop.f32.mrb[0].mxu0
        %v672 = vadd.f32 0.0, %v671
        %v673 = vpop.f32.mrb[0].mxu0
        %v674 = vpop.f32.mrb[0].mxu0
        %v675 = vadd.f32 0.0, %v674
        %v676 = vpop.f32.mrb[0].mxu0
        %677 = vmatprep.mubr.bf16.mxu0 0
        %678 = vmatmul.mubr.bf16.gmra.mrb[0].mxu0 %v515
        %v679 = vpop.f32.mrb[0].mxu0
        %v680 = vadd.f32 0.0, %v679
        %v681 = vpop.f32.mrb[0].mxu0
        %v682 = vpop.f32.mrb[0].mxu0
        %v683 = vadd.f32 0.0, %v682
        %v684 = vpop.f32.mrb[0].mxu0
        %685 = vmatprep.mubr.bf16.mxu0 0
        %686 = vmatmul.mubr.bf16.gmra.mrb[0].mxu0 %v518
        %v687 = vpop.f32.mrb[0].mxu0
        %v688 = vadd.f32 0.0, %v687
        %v689 = vpop.f32.mrb[0].mxu0
        %v690 = vpop.f32.mrb[0].mxu0
        %v691 = vadd.f32 0.0, %v690
        %v692 = vpop.f32.mrb[0].mxu0
        %693 = vmatprep.mubr.bf16.mxu0 0
        %694 = vmatmul.mubr.bf16.gmra.mrb[0].mxu0 %v521
        %v695 = vpop.f32.mrb[0].mxu0
        %v696 = vadd.f32 0.0, %v695
        %v697 = vpop.f32.mrb[0].mxu0
        %v698 = vpop.f32.mrb[0].mxu0
        %v699 = vadd.f32 0.0, %v698
        %v700 = vpop.f32.mrb[0].mxu0
        %701 = vmatprep.mubr.bf16.mxu0 0
        %702 = vmatmul.mubr.bf16.gmra.mrb[0].mxu0 %v524
        %v703 = vpop.f32.mrb[0].mxu0
        %v704 = vadd.f32 0.0, %v703
        %v705 = vpop.f32.mrb[0].mxu0
        %v706 = vpop.f32.mrb[0].mxu0
        %v707 = vadd.f32 0.0, %v706
        %v708 = vpop.f32.mrb[0].mxu0
        %709 = vdwg.mxu0
        %v710 = vsel %vm471, %v303, 0
        %v712 = vsel %vm471, %v304, 0
        %v714 = vsel %vm471, %v305, 0
        %v716 = vsel %vm471, %v306, 0
        %v718 = vsel %vm471, %v307, 0
        %v720 = vsel %vm471, %v308, 0
        %v722 = vsel %vm471, %v309, 0
        %v724 = vsel %vm471, %v310, 0
        %v726 = vsel %vm471, %v311, 0
        %v728 = vsel %vm471, %v312, 0
        %v730 = vsel %vm471, %v313, 0
        %v732 = vsel %vm471, %v314, 0
        %v734 = vsel %vm471, %v315, 0
        %v736 = vsel %vm471, %v316, 0
        %v738 = vsel %vm471, %v317, 0
        %v740 = vsel %vm471, %v318, 0
        %v742 = vsel %vm471, %v319, 0
        %v744 = vsel %vm471, %v320, 0
        %v747 = vand.u32 %v226, %v529
        %749 = vmatprep.subr.bf16.mxu0 0
        %750 = vmatpush1.bf16.msra.mxu0 %v747
        %751 = vmatprep.subr.bf16.mxu0 0
        %752 = vmatpush1.bf16.msra.mxu0 0
        %753 = vmatprep.subr.bf16.mxu0 0
        %754 = vmatpush1.bf16.msra.mxu0 0
        %755 = vmatprep.subr.bf16.mxu0 0
        %756 = vmatpush1.bf16.msra.mxu0 0
        %757 = vmatprep.subr.bf16.mxu0 0
        %758 = vmatpush1.bf16.msra.mxu0 0
        %759 = vmatprep.subr.bf16.mxu0 0
        %760 = vmatpush1.bf16.msra.mxu0 0
        %761 = vmatprep.subr.bf16.mxu0 0
        %762 = vmatpush1.bf16.msra.mxu0 0
        %763 = vmatprep.subr.bf16.mxu0 0
        %764 = vmatpush1.bf16.msra.mxu0 0
        %765 = vmatprep.subr.bf16.mxu0 0
        %766 = vmatpush1.bf16.msra.mxu0 0
        %767 = vmatprep.subr.bf16.mxu0 0
        %768 = vmatpush1.bf16.msra.mxu0 0
        %769 = vmatprep.subr.bf16.mxu0 0
        %770 = vmatpush1.bf16.msra.mxu0 0
        %771 = vmatprep.subr.bf16.mxu0 0
        %772 = vmatpush1.bf16.msra.mxu0 0
        %773 = vmatprep.subr.bf16.mxu0 0
        %774 = vmatpush1.bf16.msra.mxu0 0
        %775 = vmatprep.subr.bf16.mxu0 0
        %776 = vmatpush1.bf16.msra.mxu0 0
        %777 = vmatprep.subr.bf16.mxu0 0
        %778 = vmatpush1.bf16.msra.mxu0 0
        %779 = vmatprep.subr.bf16.mxu0 0
        %780 = vmatpush1.bf16.msra.mxu0 0
        %781 = vmatprep.mubr.bf16.mxu0 0
        %782 = vmatmul.mubr.bf16.gmra.mrb[0].mxu0 %v710
        %v783 = vpop.f32.mrb[0].mxu0
        %v784 = vadd.f32 %v568, %v783
        %v785 = vpop.f32.mrb[0].mxu0
        %v786 = vpop.f32.mrb[0].mxu0
        %v787 = vadd.f32 %v571, %v786
        %v788 = vpop.f32.mrb[0].mxu0
        %789 = vmatprep.mubr.bf16.mxu0 0
        %790 = vmatmul.mubr.bf16.gmra.mrb[0].mxu0 %v712
        %v791 = vpop.f32.mrb[0].mxu0
        %v792 = vadd.f32 %v576, %v791
        %v793 = vpop.f32.mrb[0].mxu0
        %v794 = vpop.f32.mrb[0].mxu0
        %v795 = vadd.f32 %v579, %v794
        %v796 = vpop.f32.mrb[0].mxu0
        %797 = vmatprep.mubr.bf16.mxu0 0
        %798 = vmatmul.mubr.bf16.gmra.mrb[0].mxu0 %v714
        %v799 = vpop.f32.mrb[0].mxu0
        %v800 = vadd.f32 %v584, %v799
        %v801 = vpop.f32.mrb[0].mxu0
        %v802 = vpop.f32.mrb[0].mxu0
        %v803 = vadd.f32 %v587, %v802
        %v804 = vpop.f32.mrb[0].mxu0
        %805 = vmatprep.mubr.bf16.mxu0 0
        %806 = vmatmul.mubr.bf16.gmra.mrb[0].mxu0 %v716
        %v807 = vpop.f32.mrb[0].mxu0
        %v808 = vadd.f32 %v592, %v807
        %v809 = vpop.f32.mrb[0].mxu0
        %v810 = vpop.f32.mrb[0].mxu0
        %v811 = vadd.f32 %v595, %v810
        %v812 = vpop.f32.mrb[0].mxu0
        %813 = vmatprep.mubr.bf16.mxu0 0
        %814 = vmatmul.mubr.bf16.gmra.mrb[0].mxu0 %v718
        %v815 = vpop.f32.mrb[0].mxu0
        %v816 = vadd.f32 %v600, %v815
        %v817 = vpop.f32.mrb[0].mxu0
        %v818 = vpop.f32.mrb[0].mxu0
        %v819 = vadd.f32 %v603, %v818
        %v820 = vpop.f32.mrb[0].mxu0
        %821 = vmatprep.mubr.bf16.mxu0 0
        %822 = vmatmul.mubr.bf16.gmra.mrb[0].mxu0 %v720
        %v823 = vpop.f32.mrb[0].mxu0
        %v824 = vadd.f32 %v608, %v823
        %v825 = vpop.f32.mrb[0].mxu0
        %v826 = vpop.f32.mrb[0].mxu0
        %v827 = vadd.f32 %v611, %v826
        %v828 = vpop.f32.mrb[0].mxu0
        %829 = vmatprep.mubr.bf16.mxu0 0
        %830 = vmatmul.mubr.bf16.gmra.mrb[0].mxu0 %v722
        %v831 = vpop.f32.mrb[0].mxu0
        %v832 = vadd.f32 %v616, %v831
        %v833 = vpop.f32.mrb[0].mxu0
        %v834 = vpop.f32.mrb[0].mxu0
        %v835 = vadd.f32 %v619, %v834
        %v836 = vpop.f32.mrb[0].mxu0
        %837 = vmatprep.mubr.bf16.mxu0 0
        %838 = vmatmul.mubr.bf16.gmra.mrb[0].mxu0 %v724
        %v839 = vpop.f32.mrb[0].mxu0
        %v840 = vadd.f32 %v624, %v839
        %v841 = vpop.f32.mrb[0].mxu0
        %v842 = vpop.f32.mrb[0].mxu0
        %v843 = vadd.f32 %v627, %v842
        %v844 = vpop.f32.mrb[0].mxu0
        %845 = vmatprep.mubr.bf16.mxu0 0
        %846 = vmatmul.mubr.bf16.gmra.mrb[0].mxu0 %v726
        %v847 = vpop.f32.mrb[0].mxu0
        %v848 = vadd.f32 %v632, %v847
        %v849 = vpop.f32.mrb[0].mxu0
        %v850 = vpop.f32.mrb[0].mxu0
        %v851 = vadd.f32 %v635, %v850
        %v852 = vpop.f32.mrb[0].mxu0
        %853 = vmatprep.mubr.bf16.mxu0 0
        %854 = vmatmul.mubr.bf16.gmra.mrb[0].mxu0 %v728
        %v855 = vpop.f32.mrb[0].mxu0
        %v856 = vadd.f32 %v640, %v855
        %v857 = vpop.f32.mrb[0].mxu0
        %v858 = vpop.f32.mrb[0].mxu0
        %v859 = vadd.f32 %v643, %v858
        %v860 = vpop.f32.mrb[0].mxu0
        %861 = vmatprep.mubr.bf16.mxu0 0
        %862 = vmatmul.mubr.bf16.gmra.mrb[0].mxu0 %v730
        %v863 = vpop.f32.mrb[0].mxu0
        %v864 = vadd.f32 %v648, %v863
        %v865 = vpop.f32.mrb[0].mxu0
        %v866 = vpop.f32.mrb[0].mxu0
        %v867 = vadd.f32 %v651, %v866
        %v868 = vpop.f32.mrb[0].mxu0
        %869 = vmatprep.mubr.bf16.mxu0 0
        %870 = vmatmul.mubr.bf16.gmra.mrb[0].mxu0 %v732
        %v871 = vpop.f32.mrb[0].mxu0
        %v872 = vadd.f32 %v656, %v871
        %v873 = vpop.f32.mrb[0].mxu0
        %v874 = vpop.f32.mrb[0].mxu0
        %v875 = vadd.f32 %v659, %v874
        %v876 = vpop.f32.mrb[0].mxu0
        %877 = vmatprep.mubr.bf16.mxu0 0
        %878 = vmatmul.mubr.bf16.gmra.mrb[0].mxu0 %v734
        %v879 = vpop.f32.mrb[0].mxu0
        %v880 = vadd.f32 %v664, %v879
        %v881 = vpop.f32.mrb[0].mxu0
        %v882 = vpop.f32.mrb[0].mxu0
        %v883 = vadd.f32 %v667, %v882
        %v884 = vpop.f32.mrb[0].mxu0
        %885 = vmatprep.mubr.bf16.mxu0 0
        %886 = vmatmul.mubr.bf16.gmra.mrb[0].mxu0 %v736
        %v887 = vpop.f32.mrb[0].mxu0
        %v888 = vadd.f32 %v672, %v887
        %v889 = vpop.f32.mrb[0].mxu0
        %v890 = vpop.f32.mrb[0].mxu0
        %v891 = vadd.f32 %v675, %v890
        %v892 = vpop.f32.mrb[0].mxu0
        %893 = vmatprep.mubr.bf16.mxu0 0
        %894 = vmatmul.mubr.bf16.gmra.mrb[0].mxu0 %v738
        %v895 = vpop.f32.mrb[0].mxu0
        %v896 = vadd.f32 %v680, %v895
        %v897 = vpop.f32.mrb[0].mxu0
        %v898 = vpop.f32.mrb[0].mxu0
        %v899 = vadd.f32 %v683, %v898
        %v900 = vpop.f32.mrb[0].mxu0
        %901 = vmatprep.mubr.bf16.mxu0 0
        %902 = vmatmul.mubr.bf16.gmra.mrb[0].mxu0 %v740
        %v903 = vpop.f32.mrb[0].mxu0
        %v904 = vadd.f32 %v688, %v903
        %v905 = vpop.f32.mrb[0].mxu0
        %v906 = vpop.f32.mrb[0].mxu0
        %v907 = vadd.f32 %v691, %v906
        %v908 = vpop.f32.mrb[0].mxu0
        %909 = vmatprep.mubr.bf16.mxu0 0
        %910 = vmatmul.mubr.bf16.gmra.mrb[0].mxu0 %v742
        %v911 = vpop.f32.mrb[0].mxu0
        %v912 = vadd.f32 %v696, %v911
        %v913 = vpop.f32.mrb[0].mxu0
        %v914 = vpop.f32.mrb[0].mxu0
        %v915 = vadd.f32 %v699, %v914
        %v916 = vpop.f32.mrb[0].mxu0
        %917 = vmatprep.mubr.bf16.mxu0 0
        %918 = vmatmul.mubr.bf16.gmra.mrb[0].mxu0 %v744
        %v919 = vpop.f32.mrb[0].mxu0
        %v920 = vadd.f32 %v704, %v919
        %v921 = vpop.f32.mrb[0].mxu0
        %v922 = vpop.f32.mrb[0].mxu0
        %v923 = vadd.f32 %v707, %v922
        %v924 = vpop.f32.mrb[0].mxu0
        %925 = vdwg.mxu0
        %s926 = scalar_lea.vmem %s1, 4
        %v927 = vld [vmem:[%s926] sm:$0x3]
        %vm928 = vcmask 1046528
        %v929 = vrot.slane %v303, 1
        %v930 = vrot.slane %v304, 1
        %v931 = vsel %vm928, %v929, %v930
        %v932 = vrot.slane %v305, 1
        %v933 = vsel %vm928, %v930, %v932
        %v934 = vrot.slane %v306, 1
        %v935 = vsel %vm928, %v932, %v934
        %v936 = vrot.slane %v307, 1
        %v937 = vsel %vm928, %v934, %v936
        %v938 = vrot.slane %v308, 1
        %v939 = vsel %vm928, %v936, %v938
        %v940 = vrot.slane %v309, 1
        %v941 = vsel %vm928, %v938, %v940
        %v942 = vrot.slane %v310, 1
        %v943 = vsel %vm928, %v940, %v942
        %v944 = vrot.slane %v311, 1
        %v945 = vsel %vm928, %v942, %v944
        %v946 = vrot.slane %v312, 1
        %v947 = vsel %vm928, %v944, %v946
        %v948 = vrot.slane %v313, 1
        %v949 = vsel %vm928, %v946, %v948
        %v950 = vrot.slane %v314, 1
        %v951 = vsel %vm928, %v948, %v950
        %v952 = vrot.slane %v315, 1
        %v953 = vsel %vm928, %v950, %v952
        %v954 = vrot.slane %v316, 1
        %v955 = vsel %vm928, %v952, %v954
        %v956 = vrot.slane %v317, 1
        %v957 = vsel %vm928, %v954, %v956
        %v958 = vrot.slane %v318, 1
        %v959 = vsel %vm928, %v956, %v958
        %v960 = vrot.slane %v319, 1
        %v961 = vsel %vm928, %v958, %v960
        %v962 = vrot.slane %v320, 1
        %v963 = vsel %vm928, %v960, %v962
        %v964 = vrot.slane %v321, 1
        %v965 = vsel %vm928, %v962, %v964
        %v967 = vsel %vm471, %v931, 0
        %v970 = vsel %vm471, %v933, 0
        %v973 = vsel %vm471, %v935, 0
        %v976 = vsel %vm471, %v937, 0
        %v979 = vsel %vm471, %v939, 0
        %v982 = vsel %vm471, %v941, 0
        %v985 = vsel %vm471, %v943, 0
        %v988 = vsel %vm471, %v945, 0
        %v991 = vsel %vm471, %v947, 0
        %v994 = vsel %vm471, %v949, 0
        %v997 = vsel %vm471, %v951, 0
        %v1000 = vsel %vm471, %v953, 0
        %v1003 = vsel %vm471, %v955, 0
        %v1006 = vsel %vm471, %v957, 0
        %v1009 = vsel %vm471, %v959, 0
        %v1012 = vsel %vm471, %v961, 0
        %v1015 = vsel %vm471, %v963, 0
        %v1018 = vsel %vm471, %v965, 0
        %v1021 = vand.u32 %v927, %v529
        %1023 = vmatprep.subr.bf16.mxu0 0
        %1024 = vmatpush1.bf16.msra.mxu0 %v1021
        %1025 = vmatprep.subr.bf16.mxu0 0
        %1026 = vmatpush1.bf16.msra.mxu0 0
        %1027 = vmatprep.subr.bf16.mxu0 0
        %1028 = vmatpush1.bf16.msra.mxu0 0
        %1029 = vmatprep.subr.bf16.mxu0 0
        %1030 = vmatpush1.bf16.msra.mxu0 0
        %1031 = vmatprep.subr.bf16.mxu0 0
        %1032 = vmatpush1.bf16.msra.mxu0 0
        %1033 = vmatprep.subr.bf16.mxu0 0
        %1034 = vmatpush1.bf16.msra.mxu0 0
        %1035 = vmatprep.subr.bf16.mxu0 0
        %1036 = vmatpush1.bf16.msra.mxu0 0
        %1037 = vmatprep.subr.bf16.mxu0 0
        %1038 = vmatpush1.bf16.msra.mxu0 0
        %1039 = vmatprep.subr.bf16.mxu0 0
        %1040 = vmatpush1.bf16.msra.mxu0 0
        %1041 = vmatprep.subr.bf16.mxu0 0
        %1042 = vmatpush1.bf16.msra.mxu0 0
        %1043 = vmatprep.subr.bf16.mxu0 0
        %1044 = vmatpush1.bf16.msra.mxu0 0
        %1045 = vmatprep.subr.bf16.mxu0 0
        %1046 = vmatpush1.bf16.msra.mxu0 0
        %1047 = vmatprep.subr.bf16.mxu0 0
        %1048 = vmatpush1.bf16.msra.mxu0 0
        %1049 = vmatprep.subr.bf16.mxu0 0
        %1050 = vmatpush1.bf16.msra.mxu0 0
        %1051 = vmatprep.subr.bf16.mxu0 0
        %1052 = vmatpush1.bf16.msra.mxu0 0
        %1053 = vmatprep.subr.bf16.mxu0 0
        %1054 = vmatpush1.bf16.msra.mxu0 0
        %1055 = vmatprep.mubr.bf16.mxu0 0
        %1056 = vmatmul.mubr.bf16.gmra.mrb[0].mxu0 %v967
        %v1057 = vpop.f32.mrb[0].mxu0
        %v1058 = vadd.f32 0.0, %v1057
        %v1059 = vpop.f32.mrb[0].mxu0
        %v1060 = vpop.f32.mrb[0].mxu0
        %v1061 = vadd.f32 0.0, %v1060
        %v1062 = vpop.f32.mrb[0].mxu0
        %1063 = vmatprep.mubr.bf16.mxu0 0
        %1064 = vmatmul.mubr.bf16.gmra.mrb[0].mxu0 %v970
        %v1065 = vpop.f32.mrb[0].mxu0
        %v1066 = vadd.f32 0.0, %v1065
        %v1067 = vpop.f32.mrb[0].mxu0
        %v1068 = vpop.f32.mrb[0].mxu0
        %v1069 = vadd.f32 0.0, %v1068
        %v1070 = vpop.f32.mrb[0].mxu0
        %1071 = vmatprep.mubr.bf16.mxu0 0
        %1072 = vmatmul.mubr.bf16.gmra.mrb[0].mxu0 %v973
        %v1073 = vpop.f32.mrb[0].mxu0
        %v1074 = vadd.f32 0.0, %v1073
        %v1075 = vpop.f32.mrb[0].mxu0
        %v1076 = vpop.f32.mrb[0].mxu0
        %v1077 = vadd.f32 0.0, %v1076
        %v1078 = vpop.f32.mrb[0].mxu0
        %1079 = vmatprep.mubr.bf16.mxu0 0
        %1080 = vmatmul.mubr.bf16.gmra.mrb[0].mxu0 %v976
        %v1081 = vpop.f32.mrb[0].mxu0
        %v1082 = vadd.f32 0.0, %v1081
        %v1083 = vpop.f32.mrb[0].mxu0
        %v1084 = vpop.f32.mrb[0].mxu0
        %v1085 = vadd.f32 0.0, %v1084
        %v1086 = vpop.f32.mrb[0].mxu0
        %1087 = vmatprep.mubr.bf16.mxu0 0
        %1088 = vmatmul.mubr.bf16.gmra.mrb[0].mxu0 %v979
        %v1089 = vpop.f32.mrb[0].mxu0
        %v1090 = vadd.f32 0.0, %v1089
        %v1091 = vpop.f32.mrb[0].mxu0
        %v1092 = vpop.f32.mrb[0].mxu0
        %v1093 = vadd.f32 0.0, %v1092
        %v1094 = vpop.f32.mrb[0].mxu0
        %1095 = vmatprep.mubr.bf16.mxu0 0
        %1096 = vmatmul.mubr.bf16.gmra.mrb[0].mxu0 %v982
        %v1097 = vpop.f32.mrb[0].mxu0
        %v1098 = vadd.f32 0.0, %v1097
        %v1099 = vpop.f32.mrb[0].mxu0
        %v1100 = vpop.f32.mrb[0].mxu0
        %v1101 = vadd.f32 0.0, %v1100
        %v1102 = vpop.f32.mrb[0].mxu0
        %1103 = vmatprep.mubr.bf16.mxu0 0
        %1104 = vmatmul.mubr.bf16.gmra.mrb[0].mxu0 %v985
        %v1105 = vpop.f32.mrb[0].mxu0
        %v1106 = vadd.f32 0.0, %v1105
        %v1107 = vpop.f32.mrb[0].mxu0
        %v1108 = vpop.f32.mrb[0].mxu0
        %v1109 = vadd.f32 0.0, %v1108
        %v1110 = vpop.f32.mrb[0].mxu0
        %1111 = vmatprep.mubr.bf16.mxu0 0
        %1112 = vmatmul.mubr.bf16.gmra.mrb[0].mxu0 %v988
        %v1113 = vpop.f32.mrb[0].mxu0
        %v1114 = vadd.f32 0.0, %v1113
        %v1115 = vpop.f32.mrb[0].mxu0
        %v1116 = vpop.f32.mrb[0].mxu0
        %v1117 = vadd.f32 0.0, %v1116
        %v1118 = vpop.f32.mrb[0].mxu0
        %1119 = vmatprep.mubr.bf16.mxu0 0
        %1120 = vmatmul.mubr.bf16.gmra.mrb[0].mxu0 %v991
        %v1121 = vpop.f32.mrb[0].mxu0
        %v1122 = vadd.f32 0.0, %v1121
        %v1123 = vpop.f32.mrb[0].mxu0
        %v1124 = vpop.f32.mrb[0].mxu0
        %v1125 = vadd.f32 0.0, %v1124
        %v1126 = vpop.f32.mrb[0].mxu0
        %1127 = vmatprep.mubr.bf16.mxu0 0
        %1128 = vmatmul.mubr.bf16.gmra.mrb[0].mxu0 %v994
        %v1129 = vpop.f32.mrb[0].mxu0
        %v1130 = vadd.f32 0.0, %v1129
        %v1131 = vpop.f32.mrb[0].mxu0
        %v1132 = vpop.f32.mrb[0].mxu0
        %v1133 = vadd.f32 0.0, %v1132
        %v1134 = vpop.f32.mrb[0].mxu0
        %1135 = vmatprep.mubr.bf16.mxu0 0
        %1136 = vmatmul.mubr.bf16.gmra.mrb[0].mxu0 %v997
        %v1137 = vpop.f32.mrb[0].mxu0
        %v1138 = vadd.f32 0.0, %v1137
        %v1139 = vpop.f32.mrb[0].mxu0
        %v1140 = vpop.f32.mrb[0].mxu0
        %v1141 = vadd.f32 0.0, %v1140
        %v1142 = vpop.f32.mrb[0].mxu0
        %1143 = vmatprep.mubr.bf16.mxu0 0
        %1144 = vmatmul.mubr.bf16.gmra.mrb[0].mxu0 %v1000
        %v1145 = vpop.f32.mrb[0].mxu0
        %v1146 = vadd.f32 0.0, %v1145
        %v1147 = vpop.f32.mrb[0].mxu0
        %v1148 = vpop.f32.mrb[0].mxu0
        %v1149 = vadd.f32 0.0, %v1148
        %v1150 = vpop.f32.mrb[0].mxu0
        %1151 = vmatprep.mubr.bf16.mxu0 0
        %1152 = vmatmul.mubr.bf16.gmra.mrb[0].mxu0 %v1003
        %v1153 = vpop.f32.mrb[0].mxu0
        %v1154 = vadd.f32 0.0, %v1153
        %v1155 = vpop.f32.mrb[0].mxu0
        %v1156 = vpop.f32.mrb[0].mxu0
        %v1157 = vadd.f32 0.0, %v1156
        %v1158 = vpop.f32.mrb[0].mxu0
        %1159 = vmatprep.mubr.bf16.mxu0 0
        %1160 = vmatmul.mubr.bf16.gmra.mrb[0].mxu0 %v1006
        %v1161 = vpop.f32.mrb[0].mxu0
        %v1162 = vadd.f32 0.0, %v1161
        %v1163 = vpop.f32.mrb[0].mxu0
        %v1164 = vpop.f32.mrb[0].mxu0
        %v1165 = vadd.f32 0.0, %v1164
        %v1166 = vpop.f32.mrb[0].mxu0
        %1167 = vmatprep.mubr.bf16.mxu0 0
        %1168 = vmatmul.mubr.bf16.gmra.mrb[0].mxu0 %v1009
        %v1169 = vpop.f32.mrb[0].mxu0
        %v1170 = vadd.f32 0.0, %v1169
        %v1171 = vpop.f32.mrb[0].mxu0
        %v1172 = vpop.f32.mrb[0].mxu0
        %v1173 = vadd.f32 0.0, %v1172
        %v1174 = vpop.f32.mrb[0].mxu0
        %1175 = vmatprep.mubr.bf16.mxu0 0
        %1176 = vmatmul.mubr.bf16.gmra.mrb[0].mxu0 %v1012
        %v1177 = vpop.f32.mrb[0].mxu0
        %v1178 = vadd.f32 0.0, %v1177
        %v1179 = vpop.f32.mrb[0].mxu0
        %v1180 = vpop.f32.mrb[0].mxu0
        %v1181 = vadd.f32 0.0, %v1180
        %v1182 = vpop.f32.mrb[0].mxu0
        %1183 = vmatprep.mubr.bf16.mxu0 0
        %1184 = vmatmul.mubr.bf16.gmra.mrb[0].mxu0 %v1015
        %v1185 = vpop.f32.mrb[0].mxu0
        %v1186 = vadd.f32 0.0, %v1185
        %v1187 = vpop.f32.mrb[0].mxu0
        %v1188 = vpop.f32.mrb[0].mxu0
        %v1189 = vadd.f32 0.0, %v1188
        %v1190 = vpop.f32.mrb[0].mxu0
        %1191 = vmatprep.mubr.bf16.mxu0 0
        %1192 = vmatmul.mubr.bf16.gmra.mrb[0].mxu0 %v1018
        %v1193 = vpop.f32.mrb[0].mxu0
        %v1194 = vadd.f32 0.0, %v1193
        %v1195 = vpop.f32.mrb[0].mxu0
        %v1196 = vpop.f32.mrb[0].mxu0
        %v1197 = vadd.f32 0.0, %v1196
        %v1198 = vpop.f32.mrb[0].mxu0
        %1199 = vdwg.mxu0
        %v1200 = vadd.f32 %v784, %v1058
        %v1201 = vadd.f32 %v787, %v1061
        %v1202 = vadd.f32 %v792, %v1066
        %v1203 = vadd.f32 %v795, %v1069
        %v1204 = vadd.f32 %v800, %v1074
        %v1205 = vadd.f32 %v803, %v1077
        %v1206 = vadd.f32 %v808, %v1082
        %v1207 = vadd.f32 %v811, %v1085
        %v1208 = vadd.f32 %v816, %v1090
        %v1209 = vadd.f32 %v819, %v1093
        %v1210 = vadd.f32 %v824, %v1098
        %v1211 = vadd.f32 %v827, %v1101
        %v1212 = vadd.f32 %v832, %v1106
        %v1213 = vadd.f32 %v835, %v1109
        %v1214 = vadd.f32 %v840, %v1114
        %v1215 = vadd.f32 %v843, %v1117
        %v1216 = vadd.f32 %v848, %v1122
        %v1217 = vadd.f32 %v851, %v1125
        %v1218 = vadd.f32 %v856, %v1130
        %v1219 = vadd.f32 %v859, %v1133
        %v1220 = vadd.f32 %v864, %v1138
        %v1221 = vadd.f32 %v867, %v1141
        %v1222 = vadd.f32 %v872, %v1146
        %v1223 = vadd.f32 %v875, %v1149
        %v1224 = vadd.f32 %v880, %v1154
        %v1225 = vadd.f32 %v883, %v1157
        %v1226 = vadd.f32 %v888, %v1162
        %v1227 = vadd.f32 %v891, %v1165
        %v1228 = vadd.f32 %v896, %v1170
        %v1229 = vadd.f32 %v899, %v1173
        %v1230 = vadd.f32 %v904, %v1178
        %v1231 = vadd.f32 %v907, %v1181
        %v1232 = vadd.f32 %v912, %v1186
        %v1233 = vadd.f32 %v915, %v1189
        %v1234 = vadd.f32 %v920, %v1194
        %v1235 = vadd.f32 %v923, %v1197
        %s1236 = scalar_lea.vmem %s1, 6
        %v1237 = vld [vmem:[%s1236] sm:$0x3]
        %v1240 = vunpack.c.l.b16 %v222
        %v1241 = vunpack.c.l.b16 %v223
        %v1242 = vpack.c.b16 %v1240, %v302
        %v1243 = vpack.c.b16 %v1241, %v1241
        %v1244 = vrot.slane %v1242, 1
        %v1245 = vsel %vm928, %v962, %v1244
        %v1246 = vrot.slane %v1243, 1
        %v1247 = vsel %vm928, %v1244, %v1246
        %v1249 = vsel %vm471, %v1245, 0
        %v1252 = vsel %vm471, %v1247, 0
        %v1255 = vand.u32 %v1237, %v529
        %1257 = vmatprep.subr.bf16.mxu0 0
        %1258 = vmatpush1.bf16.msra.mxu0 %v1255
        %1259 = vmatprep.subr.bf16.mxu0 0
        %1260 = vmatpush1.bf16.msra.mxu0 0
        %1261 = vmatprep.subr.bf16.mxu0 0
        %1262 = vmatpush1.bf16.msra.mxu0 0
        %1263 = vmatprep.subr.bf16.mxu0 0
        %1264 = vmatpush1.bf16.msra.mxu0 0
        %1265 = vmatprep.subr.bf16.mxu0 0
        %1266 = vmatpush1.bf16.msra.mxu0 0
        %1267 = vmatprep.subr.bf16.mxu0 0
        %1268 = vmatpush1.bf16.msra.mxu0 0
        %1269 = vmatprep.subr.bf16.mxu0 0
        %1270 = vmatpush1.bf16.msra.mxu0 0
        %1271 = vmatprep.subr.bf16.mxu0 0
        %1272 = vmatpush1.bf16.msra.mxu0 0
        %1273 = vmatprep.subr.bf16.mxu0 0
        %1274 = vmatpush1.bf16.msra.mxu0 0
        %1275 = vmatprep.subr.bf16.mxu0 0
        %1276 = vmatpush1.bf16.msra.mxu0 0
        %1277 = vmatprep.subr.bf16.mxu0 0
        %1278 = vmatpush1.bf16.msra.mxu0 0
        %1279 = vmatprep.subr.bf16.mxu0 0
        %1280 = vmatpush1.bf16.msra.mxu0 0
        %1281 = vmatprep.subr.bf16.mxu0 0
        %1282 = vmatpush1.bf16.msra.mxu0 0
        %1283 = vmatprep.subr.bf16.mxu0 0
        %1284 = vmatpush1.bf16.msra.mxu0 0
        %1285 = vmatprep.subr.bf16.mxu0 0
        %1286 = vmatpush1.bf16.msra.mxu0 0
        %1287 = vmatprep.subr.bf16.mxu0 0
        %1288 = vmatpush1.bf16.msra.mxu0 0
        %1289 = vmatprep.mubr.bf16.mxu0 0
        %1290 = vmatmul.mubr.bf16.gmra.mrb[0].mxu0 %v970
        %v1291 = vpop.f32.mrb[0].mxu0
        %v1292 = vadd.f32 0.0, %v1291
        %v1293 = vpop.f32.mrb[0].mxu0
        %v1294 = vpop.f32.mrb[0].mxu0
        %v1295 = vadd.f32 0.0, %v1294
        %v1296 = vpop.f32.mrb[0].mxu0
        %1297 = vmatprep.mubr.bf16.mxu0 0
        %1298 = vmatmul.mubr.bf16.gmra.mrb[0].mxu0 %v973
        %v1299 = vpop.f32.mrb[0].mxu0
        %v1300 = vadd.f32 0.0, %v1299
        %v1301 = vpop.f32.mrb[0].mxu0
        %v1302 = vpop.f32.mrb[0].mxu0
        %v1303 = vadd.f32 0.0, %v1302
        %v1304 = vpop.f32.mrb[0].mxu0
        %1305 = vmatprep.mubr.bf16.mxu0 0
        %1306 = vmatmul.mubr.bf16.gmra.mrb[0].mxu0 %v976
        %v1307 = vpop.f32.mrb[0].mxu0
        %v1308 = vadd.f32 0.0, %v1307
        %v1309 = vpop.f32.mrb[0].mxu0
        %v1310 = vpop.f32.mrb[0].mxu0
        %v1311 = vadd.f32 0.0, %v1310
        %v1312 = vpop.f32.mrb[0].mxu0
        %1313 = vmatprep.mubr.bf16.mxu0 0
        %1314 = vmatmul.mubr.bf16.gmra.mrb[0].mxu0 %v979
        %v1315 = vpop.f32.mrb[0].mxu0
        %v1316 = vadd.f32 0.0, %v1315
        %v1317 = vpop.f32.mrb[0].mxu0
        %v1318 = vpop.f32.mrb[0].mxu0
        %v1319 = vadd.f32 0.0, %v1318
        %v1320 = vpop.f32.mrb[0].mxu0
        %1321 = vmatprep.mubr.bf16.mxu0 0
        %1322 = vmatmul.mubr.bf16.gmra.mrb[0].mxu0 %v982
        %v1323 = vpop.f32.mrb[0].mxu0
        %v1324 = vadd.f32 0.0, %v1323
        %v1325 = vpop.f32.mrb[0].mxu0
        %v1326 = vpop.f32.mrb[0].mxu0
        %v1327 = vadd.f32 0.0, %v1326
        %v1328 = vpop.f32.mrb[0].mxu0
        %1329 = vmatprep.mubr.bf16.mxu0 0
        %1330 = vmatmul.mubr.bf16.gmra.mrb[0].mxu0 %v985
        %v1331 = vpop.f32.mrb[0].mxu0
        %v1332 = vadd.f32 0.0, %v1331
        %v1333 = vpop.f32.mrb[0].mxu0
        %v1334 = vpop.f32.mrb[0].mxu0
        %v1335 = vadd.f32 0.0, %v1334
        %v1336 = vpop.f32.mrb[0].mxu0
        %1337 = vmatprep.mubr.bf16.mxu0 0
        %1338 = vmatmul.mubr.bf16.gmra.mrb[0].mxu0 %v988
        %v1339 = vpop.f32.mrb[0].mxu0
        %v1340 = vadd.f32 0.0, %v1339
        %v1341 = vpop.f32.mrb[0].mxu0
        %v1342 = vpop.f32.mrb[0].mxu0
        %v1343 = vadd.f32 0.0, %v1342
        %v1344 = vpop.f32.mrb[0].mxu0
        %1345 = vmatprep.mubr.bf16.mxu0 0
        %1346 = vmatmul.mubr.bf16.gmra.mrb[0].mxu0 %v991
        %v1347 = vpop.f32.mrb[0].mxu0
        %v1348 = vadd.f32 0.0, %v1347
        %v1349 = vpop.f32.mrb[0].mxu0
        %v1350 = vpop.f32.mrb[0].mxu0
        %v1351 = vadd.f32 0.0, %v1350
        %v1352 = vpop.f32.mrb[0].mxu0
        %1353 = vmatprep.mubr.bf16.mxu0 0
        %1354 = vmatmul.mubr.bf16.gmra.mrb[0].mxu0 %v994
        %v1355 = vpop.f32.mrb[0].mxu0
        %v1356 = vadd.f32 0.0, %v1355
        %v1357 = vpop.f32.mrb[0].mxu0
        %v1358 = vpop.f32.mrb[0].mxu0
        %v1359 = vadd.f32 0.0, %v1358
        %v1360 = vpop.f32.mrb[0].mxu0
        %1361 = vmatprep.mubr.bf16.mxu0 0
        %1362 = vmatmul.mubr.bf16.gmra.mrb[0].mxu0 %v997
        %v1363 = vpop.f32.mrb[0].mxu0
        %v1364 = vadd.f32 0.0, %v1363
        %v1365 = vpop.f32.mrb[0].mxu0
        %v1366 = vpop.f32.mrb[0].mxu0
        %v1367 = vadd.f32 0.0, %v1366
        %v1368 = vpop.f32.mrb[0].mxu0
        %1369 = vmatprep.mubr.bf16.mxu0 0
        %1370 = vmatmul.mubr.bf16.gmra.mrb[0].mxu0 %v1000
        %v1371 = vpop.f32.mrb[0].mxu0
        %v1372 = vadd.f32 0.0, %v1371
        %v1373 = vpop.f32.mrb[0].mxu0
        %v1374 = vpop.f32.mrb[0].mxu0
        %v1375 = vadd.f32 0.0, %v1374
        %v1376 = vpop.f32.mrb[0].mxu0
        %1377 = vmatprep.mubr.bf16.mxu0 0
        %1378 = vmatmul.mubr.bf16.gmra.mrb[0].mxu0 %v1003
        %v1379 = vpop.f32.mrb[0].mxu0
        %v1380 = vadd.f32 0.0, %v1379
        %v1381 = vpop.f32.mrb[0].mxu0
        %v1382 = vpop.f32.mrb[0].mxu0
        %v1383 = vadd.f32 0.0, %v1382
        %v1384 = vpop.f32.mrb[0].mxu0
        %1385 = vmatprep.mubr.bf16.mxu0 0
        %1386 = vmatmul.mubr.bf16.gmra.mrb[0].mxu0 %v1006
        %v1387 = vpop.f32.mrb[0].mxu0
        %v1388 = vadd.f32 0.0, %v1387
        %v1389 = vpop.f32.mrb[0].mxu0
        %v1390 = vpop.f32.mrb[0].mxu0
        %v1391 = vadd.f32 0.0, %v1390
        %v1392 = vpop.f32.mrb[0].mxu0
        %1393 = vmatprep.mubr.bf16.mxu0 0
        %1394 = vmatmul.mubr.bf16.gmra.mrb[0].mxu0 %v1009
        %v1395 = vpop.f32.mrb[0].mxu0
        %v1396 = vadd.f32 0.0, %v1395
        %v1397 = vpop.f32.mrb[0].mxu0
        %v1398 = vpop.f32.mrb[0].mxu0
        %v1399 = vadd.f32 0.0, %v1398
        %v1400 = vpop.f32.mrb[0].mxu0
        %1401 = vmatprep.mubr.bf16.mxu0 0
        %1402 = vmatmul.mubr.bf16.gmra.mrb[0].mxu0 %v1012
        %v1403 = vpop.f32.mrb[0].mxu0
        %v1404 = vadd.f32 0.0, %v1403
        %v1405 = vpop.f32.mrb[0].mxu0
        %v1406 = vpop.f32.mrb[0].mxu0
        %v1407 = vadd.f32 0.0, %v1406
        %v1408 = vpop.f32.mrb[0].mxu0
        %1409 = vmatprep.mubr.bf16.mxu0 0
        %1410 = vmatmul.mubr.bf16.gmra.mrb[0].mxu0 %v1015
        %v1411 = vpop.f32.mrb[0].mxu0
        %v1412 = vadd.f32 0.0, %v1411
        %v1413 = vpop.f32.mrb[0].mxu0
        %v1414 = vpop.f32.mrb[0].mxu0
        %v1415 = vadd.f32 0.0, %v1414
        %v1416 = vpop.f32.mrb[0].mxu0
        %1417 = vmatprep.mubr.bf16.mxu0 0
        %1418 = vmatmul.mubr.bf16.gmra.mrb[0].mxu0 %v1249
        %v1419 = vpop.f32.mrb[0].mxu0
        %v1420 = vadd.f32 0.0, %v1419
        %v1421 = vpop.f32.mrb[0].mxu0
        %v1422 = vpop.f32.mrb[0].mxu0
        %v1423 = vadd.f32 0.0, %v1422
        %v1424 = vpop.f32.mrb[0].mxu0
        %1425 = vmatprep.mubr.bf16.mxu0 0
        %1426 = vmatmul.mubr.bf16.gmra.mrb[0].mxu0 %v1252
        %v1427 = vpop.f32.mrb[0].mxu0
        %v1428 = vadd.f32 0.0, %v1427
        %v1429 = vpop.f32.mrb[0].mxu0
        %v1430 = vpop.f32.mrb[0].mxu0
        %v1431 = vadd.f32 0.0, %v1430
        %v1432 = vpop.f32.mrb[0].mxu0
        %1433 = vdwg.mxu0
        %v1434 = vadd.f32 %v1200, %v1292
        %v1435 = vadd.f32 %v1201, %v1295
        %v1436 = vadd.f32 %v1202, %v1300
        %v1437 = vadd.f32 %v1203, %v1303
        %v1438 = vadd.f32 %v1204, %v1308
        %v1439 = vadd.f32 %v1205, %v1311
        %v1440 = vadd.f32 %v1206, %v1316
        %v1441 = vadd.f32 %v1207, %v1319
        %v1442 = vadd.f32 %v1208, %v1324
        %v1443 = vadd.f32 %v1209, %v1327
        %v1444 = vadd.f32 %v1210, %v1332
        %v1445 = vadd.f32 %v1211, %v1335
        %v1446 = vadd.f32 %v1212, %v1340
        %v1447 = vadd.f32 %v1213, %v1343
        %v1448 = vadd.f32 %v1214, %v1348
        %v1449 = vadd.f32 %v1215, %v1351
        %v1450 = vadd.f32 %v1216, %v1356
        %v1451 = vadd.f32 %v1217, %v1359
        %v1452 = vadd.f32 %v1218, %v1364
        %v1453 = vadd.f32 %v1219, %v1367
        %v1454 = vadd.f32 %v1220, %v1372
        %v1455 = vadd.f32 %v1221, %v1375
        %v1456 = vadd.f32 %v1222, %v1380
        %v1457 = vadd.f32 %v1223, %v1383
        %v1458 = vadd.f32 %v1224, %v1388
        %v1459 = vadd.f32 %v1225, %v1391
        %v1460 = vadd.f32 %v1226, %v1396
        %v1461 = vadd.f32 %v1227, %v1399
        %v1462 = vadd.f32 %v1228, %v1404
        %v1463 = vadd.f32 %v1229, %v1407
        %v1464 = vadd.f32 %v1230, %v1412
        %v1465 = vadd.f32 %v1231, %v1415
        %v1466 = vadd.f32 %v1232, %v1420
        %v1467 = vadd.f32 %v1233, %v1423
        %v1468 = vadd.f32 %v1234, %v1428
        %v1469 = vadd.f32 %v1235, %v1431
        %s1470 = scalar_lea.vmem %s1, 8
        %v1471 = vld [vmem:[%s1470] sm:$0x3]
        %vm1472 = vsmask.f32 6400
        %v1473 = vrot.slane %v335, 1
        %v1474 = vrot.slane %v331, 2
        %v1475 = vor.u32 %v1473, %v1474
        %v1476 = vrot.slane %v343, 1
        %v1477 = vrot.slane %v339, 2
        %v1478 = vor.u32 %v1476, %v1477
        %v1479 = vsel %vm1472, %v1475, %v1478
        %v1480 = vrot.slane %v351, 1
        %v1481 = vrot.slane %v347, 2
        %v1482 = vor.u32 %v1480, %v1481
        %v1483 = vsel %vm1472, %v1478, %v1482
        %v1484 = vrot.slane %v359, 1
        %v1485 = vrot.slane %v355, 2
        %v1486 = vor.u32 %v1484, %v1485
        %v1487 = vsel %vm1472, %v1482, %v1486
        %v1488 = vrot.slane %v367, 1
        %v1489 = vrot.slane %v363, 2
        %v1490 = vor.u32 %v1488, %v1489
        %v1491 = vsel %vm1472, %v1486, %v1490
        %v1492 = vrot.slane %v375, 1
        %v1493 = vrot.slane %v371, 2
        %v1494 = vor.u32 %v1492, %v1493
        %v1495 = vsel %vm1472, %v1490, %v1494
        %v1496 = vrot.slane %v383, 1
        %v1497 = vrot.slane %v379, 2
        %v1498 = vor.u32 %v1496, %v1497
        %v1499 = vsel %vm1472, %v1494, %v1498
        %v1500 = vrot.slane %v391, 1
        %v1501 = vrot.slane %v387, 2
        %v1502 = vor.u32 %v1500, %v1501
        %v1503 = vsel %vm1472, %v1498, %v1502
        %v1504 = vrot.slane %v399, 1
        %v1505 = vrot.slane %v395, 2
        %v1506 = vor.u32 %v1504, %v1505
        %v1507 = vsel %vm1472, %v1502, %v1506
        %v1508 = vrot.slane %v407, 1
        %v1509 = vrot.slane %v403, 2
        %v1510 = vor.u32 %v1508, %v1509
        %v1511 = vsel %vm1472, %v1506, %v1510
        %v1512 = vrot.slane %v415, 1
        %v1513 = vrot.slane %v411, 2
        %v1514 = vor.u32 %v1512, %v1513
        %v1515 = vsel %vm1472, %v1510, %v1514
        %v1516 = vrot.slane %v423, 1
        %v1517 = vrot.slane %v419, 2
        %v1518 = vor.u32 %v1516, %v1517
        %v1519 = vsel %vm1472, %v1514, %v1518
        %v1520 = vrot.slane %v431, 1
        %v1521 = vrot.slane %v427, 2
        %v1522 = vor.u32 %v1520, %v1521
        %v1523 = vsel %vm1472, %v1518, %v1522
        %v1524 = vrot.slane %v439, 1
        %v1525 = vrot.slane %v435, 2
        %v1526 = vor.u32 %v1524, %v1525
        %v1527 = vsel %vm1472, %v1522, %v1526
        %v1528 = vrot.slane %v447, 1
        %v1529 = vrot.slane %v443, 2
        %v1530 = vor.u32 %v1528, %v1529
        %v1531 = vsel %vm1472, %v1526, %v1530
        %v1532 = vrot.slane %v455, 1
        %v1533 = vrot.slane %v451, 2
        %v1534 = vor.u32 %v1532, %v1533
        %v1535 = vsel %vm1472, %v1530, %v1534
        %v1536 = vrot.slane %v463, 1
        %v1537 = vrot.slane %v459, 2
        %v1538 = vor.u32 %v1536, %v1537
        %v1539 = vsel %vm1472, %v1534, %v1538
        %v1541 = vshrl.u32 %v1242, 16
        %v1543 = vrot.slane %v1541, 1
        %v1544 = vshll.u32 %v1242, 16
        %v1546 = vrot.slane %v1544, 2
        %v1547 = vor.u32 %v1543, %v1546
        %v1548 = vsel %vm1472, %v1538, %v1547
        %v1550 = vshrl.u32 %v1243, 16
        %v1552 = vrot.slane %v1550, 1
        %v1553 = vshll.u32 %v1243, 16
        %v1555 = vrot.slane %v1553, 2
        %v1556 = vor.u32 %v1552, %v1555
        %v1557 = vsel %vm1472, %v1547, %v1556
        %v1559 = vsel %vm471, %v1479, 0
        %v1562 = vsel %vm471, %v1483, 0
        %v1565 = vsel %vm471, %v1487, 0
        %v1568 = vsel %vm471, %v1491, 0
        %v1571 = vsel %vm471, %v1495, 0
        %v1574 = vsel %vm471, %v1499, 0
        %v1577 = vsel %vm471, %v1503, 0
        %v1580 = vsel %vm471, %v1507, 0
        %v1583 = vsel %vm471, %v1511, 0
        %v1586 = vsel %vm471, %v1515, 0
        %v1589 = vsel %vm471, %v1519, 0
        %v1592 = vsel %vm471, %v1523, 0
        %v1595 = vsel %vm471, %v1527, 0
        %v1598 = vsel %vm471, %v1531, 0
        %v1601 = vsel %vm471, %v1535, 0
        %v1604 = vsel %vm471, %v1539, 0
        %v1607 = vsel %vm471, %v1548, 0
        %v1610 = vsel %vm471, %v1557, 0
        %v1613 = vand.u32 %v1471, %v529
        %1615 = vmatprep.subr.bf16.mxu0 0
        %1616 = vmatpush1.bf16.msra.mxu0 %v1613
        %1617 = vmatprep.subr.bf16.mxu0 0
        %1618 = vmatpush1.bf16.msra.mxu0 0
        %1619 = vmatprep.subr.bf16.mxu0 0
        %1620 = vmatpush1.bf16.msra.mxu0 0
        %1621 = vmatprep.subr.bf16.mxu0 0
        %1622 = vmatpush1.bf16.msra.mxu0 0
        %1623 = vmatprep.subr.bf16.mxu0 0
        %1624 = vmatpush1.bf16.msra.mxu0 0
        %1625 = vmatprep.subr.bf16.mxu0 0
        %1626 = vmatpush1.bf16.msra.mxu0 0
        %1627 = vmatprep.subr.bf16.mxu0 0
        %1628 = vmatpush1.bf16.msra.mxu0 0
        %1629 = vmatprep.subr.bf16.mxu0 0
        %1630 = vmatpush1.bf16.msra.mxu0 0
        %1631 = vmatprep.subr.bf16.mxu0 0
        %1632 = vmatpush1.bf16.msra.mxu0 0
        %1633 = vmatprep.subr.bf16.mxu0 0
        %1634 = vmatpush1.bf16.msra.mxu0 0
        %1635 = vmatprep.subr.bf16.mxu0 0
        %1636 = vmatpush1.bf16.msra.mxu0 0
        %1637 = vmatprep.subr.bf16.mxu0 0
        %1638 = vmatpush1.bf16.msra.mxu0 0
        %1639 = vmatprep.subr.bf16.mxu0 0
        %1640 = vmatpush1.bf16.msra.mxu0 0
        %1641 = vmatprep.subr.bf16.mxu0 0
        %1642 = vmatpush1.bf16.msra.mxu0 0
        %1643 = vmatprep.subr.bf16.mxu0 0
        %1644 = vmatpush1.bf16.msra.mxu0 0
        %1645 = vmatprep.subr.bf16.mxu0 0
        %1646 = vmatpush1.bf16.msra.mxu0 0
        %1647 = vmatprep.mubr.bf16.mxu0 0
        %1648 = vmatmul.mubr.bf16.gmra.mrb[0].mxu0 %v1559
        %v1649 = vpop.f32.mrb[0].mxu0
        %v1650 = vadd.f32 0.0, %v1649
        %v1651 = vpop.f32.mrb[0].mxu0
        %v1652 = vpop.f32.mrb[0].mxu0
        %v1653 = vadd.f32 0.0, %v1652
        %v1654 = vpop.f32.mrb[0].mxu0
        %1655 = vmatprep.mubr.bf16.mxu0 0
        %1656 = vmatmul.mubr.bf16.gmra.mrb[0].mxu0 %v1562
        %v1657 = vpop.f32.mrb[0].mxu0
        %v1658 = vadd.f32 0.0, %v1657
        %v1659 = vpop.f32.mrb[0].mxu0
        %v1660 = vpop.f32.mrb[0].mxu0
        %v1661 = vadd.f32 0.0, %v1660
        %v1662 = vpop.f32.mrb[0].mxu0
        %1663 = vmatprep.mubr.bf16.mxu0 0
        %1664 = vmatmul.mubr.bf16.gmra.mrb[0].mxu0 %v1565
        %v1665 = vpop.f32.mrb[0].mxu0
        %v1666 = vadd.f32 0.0, %v1665
        %v1667 = vpop.f32.mrb[0].mxu0
        %v1668 = vpop.f32.mrb[0].mxu0
        %v1669 = vadd.f32 0.0, %v1668
        %v1670 = vpop.f32.mrb[0].mxu0
        %1671 = vmatprep.mubr.bf16.mxu0 0
        %1672 = vmatmul.mubr.bf16.gmra.mrb[0].mxu0 %v1568
        %v1673 = vpop.f32.mrb[0].mxu0
        %v1674 = vadd.f32 0.0, %v1673
        %v1675 = vpop.f32.mrb[0].mxu0
        %v1676 = vpop.f32.mrb[0].mxu0
        %v1677 = vadd.f32 0.0, %v1676
        %v1678 = vpop.f32.mrb[0].mxu0
        %1679 = vmatprep.mubr.bf16.mxu0 0
        %1680 = vmatmul.mubr.bf16.gmra.mrb[0].mxu0 %v1571
        %v1681 = vpop.f32.mrb[0].mxu0
        %v1682 = vadd.f32 0.0, %v1681
        %v1683 = vpop.f32.mrb[0].mxu0
        %v1684 = vpop.f32.mrb[0].mxu0
        %v1685 = vadd.f32 0.0, %v1684
        %v1686 = vpop.f32.mrb[0].mxu0
        %1687 = vmatprep.mubr.bf16.mxu0 0
        %1688 = vmatmul.mubr.bf16.gmra.mrb[0].mxu0 %v1574
        %v1689 = vpop.f32.mrb[0].mxu0
        %v1690 = vadd.f32 0.0, %v1689
        %v1691 = vpop.f32.mrb[0].mxu0
        %v1692 = vpop.f32.mrb[0].mxu0
        %v1693 = vadd.f32 0.0, %v1692
        %v1694 = vpop.f32.mrb[0].mxu0
        %1695 = vmatprep.mubr.bf16.mxu0 0
        %1696 = vmatmul.mubr.bf16.gmra.mrb[0].mxu0 %v1577
        %v1697 = vpop.f32.mrb[0].mxu0
        %v1698 = vadd.f32 0.0, %v1697
        %v1699 = vpop.f32.mrb[0].mxu0
        %v1700 = vpop.f32.mrb[0].mxu0
        %v1701 = vadd.f32 0.0, %v1700
        %v1702 = vpop.f32.mrb[0].mxu0
        %1703 = vmatprep.mubr.bf16.mxu0 0
        %1704 = vmatmul.mubr.bf16.gmra.mrb[0].mxu0 %v1580
        %v1705 = vpop.f32.mrb[0].mxu0
        %v1706 = vadd.f32 0.0, %v1705
        %v1707 = vpop.f32.mrb[0].mxu0
        %v1708 = vpop.f32.mrb[0].mxu0
        %v1709 = vadd.f32 0.0, %v1708
        %v1710 = vpop.f32.mrb[0].mxu0
        %1711 = vmatprep.mubr.bf16.mxu0 0
        %1712 = vmatmul.mubr.bf16.gmra.mrb[0].mxu0 %v1583
        %v1713 = vpop.f32.mrb[0].mxu0
        %v1714 = vadd.f32 0.0, %v1713
        %v1715 = vpop.f32.mrb[0].mxu0
        %v1716 = vpop.f32.mrb[0].mxu0
        %v1717 = vadd.f32 0.0, %v1716
        %v1718 = vpop.f32.mrb[0].mxu0
        %1719 = vmatprep.mubr.bf16.mxu0 0
        %1720 = vmatmul.mubr.bf16.gmra.mrb[0].mxu0 %v1586
        %v1721 = vpop.f32.mrb[0].mxu0
        %v1722 = vadd.f32 0.0, %v1721
        %v1723 = vpop.f32.mrb[0].mxu0
        %v1724 = vpop.f32.mrb[0].mxu0
        %v1725 = vadd.f32 0.0, %v1724
        %v1726 = vpop.f32.mrb[0].mxu0
        %1727 = vmatprep.mubr.bf16.mxu0 0
        %1728 = vmatmul.mubr.bf16.gmra.mrb[0].mxu0 %v1589
        %v1729 = vpop.f32.mrb[0].mxu0
        %v1730 = vadd.f32 0.0, %v1729
        %v1731 = vpop.f32.mrb[0].mxu0
        %v1732 = vpop.f32.mrb[0].mxu0
        %v1733 = vadd.f32 0.0, %v1732
        %v1734 = vpop.f32.mrb[0].mxu0
        %1735 = vmatprep.mubr.bf16.mxu0 0
        %1736 = vmatmul.mubr.bf16.gmra.mrb[0].mxu0 %v1592
        %v1737 = vpop.f32.mrb[0].mxu0
        %v1738 = vadd.f32 0.0, %v1737
        %v1739 = vpop.f32.mrb[0].mxu0
        %v1740 = vpop.f32.mrb[0].mxu0
        %v1741 = vadd.f32 0.0, %v1740
        %v1742 = vpop.f32.mrb[0].mxu0
        %1743 = vmatprep.mubr.bf16.mxu0 0
        %1744 = vmatmul.mubr.bf16.gmra.mrb[0].mxu0 %v1595
        %v1745 = vpop.f32.mrb[0].mxu0
        %v1746 = vadd.f32 0.0, %v1745
        %v1747 = vpop.f32.mrb[0].mxu0
        %v1748 = vpop.f32.mrb[0].mxu0
        %v1749 = vadd.f32 0.0, %v1748
        %v1750 = vpop.f32.mrb[0].mxu0
        %1751 = vmatprep.mubr.bf16.mxu0 0
        %1752 = vmatmul.mubr.bf16.gmra.mrb[0].mxu0 %v1598
        %v1753 = vpop.f32.mrb[0].mxu0
        %v1754 = vadd.f32 0.0, %v1753
        %v1755 = vpop.f32.mrb[0].mxu0
        %v1756 = vpop.f32.mrb[0].mxu0
        %v1757 = vadd.f32 0.0, %v1756
        %v1758 = vpop.f32.mrb[0].mxu0
        %1759 = vmatprep.mubr.bf16.mxu0 0
        %1760 = vmatmul.mubr.bf16.gmra.mrb[0].mxu0 %v1601
        %v1761 = vpop.f32.mrb[0].mxu0
        %v1762 = vadd.f32 0.0, %v1761
        %v1763 = vpop.f32.mrb[0].mxu0
        %v1764 = vpop.f32.mrb[0].mxu0
        %v1765 = vadd.f32 0.0, %v1764
        %v1766 = vpop.f32.mrb[0].mxu0
        %1767 = vmatprep.mubr.bf16.mxu0 0
        %1768 = vmatmul.mubr.bf16.gmra.mrb[0].mxu0 %v1604
        %v1769 = vpop.f32.mrb[0].mxu0
        %v1770 = vadd.f32 0.0, %v1769
        %v1771 = vpop.f32.mrb[0].mxu0
        %v1772 = vpop.f32.mrb[0].mxu0
        %v1773 = vadd.f32 0.0, %v1772
        %v1774 = vpop.f32.mrb[0].mxu0
        %1775 = vmatprep.mubr.bf16.mxu0 0
        %1776 = vmatmul.mubr.bf16.gmra.mrb[0].mxu0 %v1607
        %v1777 = vpop.f32.mrb[0].mxu0
        %v1778 = vadd.f32 0.0, %v1777
        %v1779 = vpop.f32.mrb[0].mxu0
        %v1780 = vpop.f32.mrb[0].mxu0
        %v1781 = vadd.f32 0.0, %v1780
        %v1782 = vpop.f32.mrb[0].mxu0
        %1783 = vmatprep.mubr.bf16.mxu0 0
        %1784 = vmatmul.mubr.bf16.gmra.mrb[0].mxu0 %v1610
        %v1785 = vpop.f32.mrb[0].mxu0
        %v1786 = vadd.f32 0.0, %v1785
        %v1787 = vpop.f32.mrb[0].mxu0
        %v1788 = vpop.f32.mrb[0].mxu0
        %v1789 = vadd.f32 0.0, %v1788
        %v1790 = vpop.f32.mrb[0].mxu0
        %1791 = vdwg.mxu0
        %v1792 = vadd.f32 %v1434, %v1650
        %v1793 = vadd.f32 %v1435, %v1653
        %v1794 = vadd.f32 %v1436, %v1658
        %v1795 = vadd.f32 %v1437, %v1661
        %v1796 = vadd.f32 %v1438, %v1666
        %v1797 = vadd.f32 %v1439, %v1669
        %v1798 = vadd.f32 %v1440, %v1674
        %v1799 = vadd.f32 %v1441, %v1677
        %v1800 = vadd.f32 %v1442, %v1682
        %v1801 = vadd.f32 %v1443, %v1685
        %v1802 = vadd.f32 %v1444, %v1690
        %v1803 = vadd.f32 %v1445, %v1693
        %v1804 = vadd.f32 %v1446, %v1698
        %v1805 = vadd.f32 %v1447, %v1701
        %v1806 = vadd.f32 %v1448, %v1706
        %v1807 = vadd.f32 %v1449, %v1709
        %v1808 = vadd.f32 %v1450, %v1714
        %v1809 = vadd.f32 %v1451, %v1717
        %v1810 = vadd.f32 %v1452, %v1722
        %v1811 = vadd.f32 %v1453, %v1725
        %v1812 = vadd.f32 %v1454, %v1730
        %v1813 = vadd.f32 %v1455, %v1733
        %v1814 = vadd.f32 %v1456, %v1738
        %v1815 = vadd.f32 %v1457, %v1741
        %v1816 = vadd.f32 %v1458, %v1746
        %v1817 = vadd.f32 %v1459, %v1749
        %v1818 = vadd.f32 %v1460, %v1754
        %v1819 = vadd.f32 %v1461, %v1757
        %v1820 = vadd.f32 %v1462, %v1762
        %v1821 = vadd.f32 %v1463, %v1765
        %v1822 = vadd.f32 %v1464, %v1770
        %v1823 = vadd.f32 %v1465, %v1773
        %v1824 = vadd.f32 %v1466, %v1778
        %v1825 = vadd.f32 %v1467, %v1781
        %v1826 = vadd.f32 %v1468, %v1786
        %v1827 = vadd.f32 %v1469, %v1789
        %s1828 = scalar_lea.vmem %s1, 10
        %v1829 = vld [vmem:[%s1828] sm:$0x3]
        %vm1830 = vcmask 1045504
        %v1831 = vrot.slane %v304, 2
        %v1832 = vrot.slane %v305, 2
        %v1833 = vsel %vm1830, %v1831, %v1832
        %v1834 = vrot.slane %v306, 2
        %v1835 = vsel %vm1830, %v1832, %v1834
        %v1836 = vrot.slane %v307, 2
        %v1837 = vsel %vm1830, %v1834, %v1836
        %v1838 = vrot.slane %v308, 2
        %v1839 = vsel %vm1830, %v1836, %v1838
        %v1840 = vrot.slane %v309, 2
        %v1841 = vsel %vm1830, %v1838, %v1840
        %v1842 = vrot.slane %v310, 2
        %v1843 = vsel %vm1830, %v1840, %v1842
        %v1844 = vrot.slane %v311, 2
        %v1845 = vsel %vm1830, %v1842, %v1844
        %v1846 = vrot.slane %v312, 2
        %v1847 = vsel %vm1830, %v1844, %v1846
        %v1848 = vrot.slane %v313, 2
        %v1849 = vsel %vm1830, %v1846, %v1848
        %v1850 = vrot.slane %v314, 2
        %v1851 = vsel %vm1830, %v1848, %v1850
        %v1852 = vrot.slane %v315, 2
        %v1853 = vsel %vm1830, %v1850, %v1852
        %v1854 = vrot.slane %v316, 2
        %v1855 = vsel %vm1830, %v1852, %v1854
        %v1856 = vrot.slane %v317, 2
        %v1857 = vsel %vm1830, %v1854, %v1856
        %v1858 = vrot.slane %v318, 2
        %v1859 = vsel %vm1830, %v1856, %v1858
        %v1860 = vrot.slane %v319, 2
        %v1861 = vsel %vm1830, %v1858, %v1860
        %v1862 = vrot.slane %v320, 2
        %v1863 = vsel %vm1830, %v1860, %v1862
        %v1864 = vrot.slane %v1242, 2
        %v1865 = vsel %vm1830, %v1862, %v1864
        %v1866 = vrot.slane %v1243, 2
        %v1867 = vsel %vm1830, %v1864, %v1866
        %v1869 = vsel %vm471, %v1833, 0
        %v1872 = vsel %vm471, %v1835, 0
        %v1875 = vsel %vm471, %v1837, 0
        %v1878 = vsel %vm471, %v1839, 0
        %v1881 = vsel %vm471, %v1841, 0
        %v1884 = vsel %vm471, %v1843, 0
        %v1887 = vsel %vm471, %v1845, 0
        %v1890 = vsel %vm471, %v1847, 0
        %v1893 = vsel %vm471, %v1849, 0
        %v1896 = vsel %vm471, %v1851, 0
        %v1899 = vsel %vm471, %v1853, 0
        %v1902 = vsel %vm471, %v1855, 0
        %v1905 = vsel %vm471, %v1857, 0
        %v1908 = vsel %vm471, %v1859, 0
        %v1911 = vsel %vm471, %v1861, 0
        %v1914 = vsel %vm471, %v1863, 0
        %v1917 = vsel %vm471, %v1865, 0
        %v1920 = vsel %vm471, %v1867, 0
        %v1923 = vand.u32 %v1829, %v529
        %1925 = vmatprep.subr.bf16.mxu0 0
        %1926 = vmatpush1.bf16.msra.mxu0 %v1923
        %1927 = vmatprep.subr.bf16.mxu0 0
        %1928 = vmatpush1.bf16.msra.mxu0 0
        %1929 = vmatprep.subr.bf16.mxu0 0
        %1930 = vmatpush1.bf16.msra.mxu0 0
        %1931 = vmatprep.subr.bf16.mxu0 0
        %1932 = vmatpush1.bf16.msra.mxu0 0
        %1933 = vmatprep.subr.bf16.mxu0 0
        %1934 = vmatpush1.bf16.msra.mxu0 0
        %1935 = vmatprep.subr.bf16.mxu0 0
        %1936 = vmatpush1.bf16.msra.mxu0 0
        %1937 = vmatprep.subr.bf16.mxu0 0
        %1938 = vmatpush1.bf16.msra.mxu0 0
        %1939 = vmatprep.subr.bf16.mxu0 0
        %1940 = vmatpush1.bf16.msra.mxu0 0
        %1941 = vmatprep.subr.bf16.mxu0 0
        %1942 = vmatpush1.bf16.msra.mxu0 0
        %1943 = vmatprep.subr.bf16.mxu0 0
        %1944 = vmatpush1.bf16.msra.mxu0 0
        %1945 = vmatprep.subr.bf16.mxu0 0
        %1946 = vmatpush1.bf16.msra.mxu0 0
        %1947 = vmatprep.subr.bf16.mxu0 0
        %1948 = vmatpush1.bf16.msra.mxu0 0
        %1949 = vmatprep.subr.bf16.mxu0 0
        %1950 = vmatpush1.bf16.msra.mxu0 0
        %1951 = vmatprep.subr.bf16.mxu0 0
        %1952 = vmatpush1.bf16.msra.mxu0 0
        %1953 = vmatprep.subr.bf16.mxu0 0
        %1954 = vmatpush1.bf16.msra.mxu0 0
        %1955 = vmatprep.subr.bf16.mxu0 0
        %1956 = vmatpush1.bf16.msra.mxu0 0
        %1957 = vmatprep.mubr.bf16.mxu0 0
        %1958 = vmatmul.mubr.bf16.gmra.mrb[0].mxu0 %v1869
        %v1959 = vpop.f32.mrb[0].mxu0
        %v1960 = vadd.f32 0.0, %v1959
        %v1961 = vpop.f32.mrb[0].mxu0
        %v1962 = vpop.f32.mrb[0].mxu0
        %v1963 = vadd.f32 0.0, %v1962
        %v1964 = vpop.f32.mrb[0].mxu0
        %1965 = vmatprep.mubr.bf16.mxu0 0
        %1966 = vmatmul.mubr.bf16.gmra.mrb[0].mxu0 %v1872
        %v1967 = vpop.f32.mrb[0].mxu0
        %v1968 = vadd.f32 0.0, %v1967
        %v1969 = vpop.f32.mrb[0].mxu0
        %v1970 = vpop.f32.mrb[0].mxu0
        %v1971 = vadd.f32 0.0, %v1970
        %v1972 = vpop.f32.mrb[0].mxu0
        %1973 = vmatprep.mubr.bf16.mxu0 0
        %1974 = vmatmul.mubr.bf16.gmra.mrb[0].mxu0 %v1875
        %v1975 = vpop.f32.mrb[0].mxu0
        %v1976 = vadd.f32 0.0, %v1975
        %v1977 = vpop.f32.mrb[0].mxu0
        %v1978 = vpop.f32.mrb[0].mxu0
        %v1979 = vadd.f32 0.0, %v1978
        %v1980 = vpop.f32.mrb[0].mxu0
        %1981 = vmatprep.mubr.bf16.mxu0 0
        %1982 = vmatmul.mubr.bf16.gmra.mrb[0].mxu0 %v1878
        %v1983 = vpop.f32.mrb[0].mxu0
        %v1984 = vadd.f32 0.0, %v1983
        %v1985 = vpop.f32.mrb[0].mxu0
        %v1986 = vpop.f32.mrb[0].mxu0
        %v1987 = vadd.f32 0.0, %v1986
        %v1988 = vpop.f32.mrb[0].mxu0
        %1989 = vmatprep.mubr.bf16.mxu0 0
        %1990 = vmatmul.mubr.bf16.gmra.mrb[0].mxu0 %v1881
        %v1991 = vpop.f32.mrb[0].mxu0
        %v1992 = vadd.f32 0.0, %v1991
        %v1993 = vpop.f32.mrb[0].mxu0
        %v1994 = vpop.f32.mrb[0].mxu0
        %v1995 = vadd.f32 0.0, %v1994
        %v1996 = vpop.f32.mrb[0].mxu0
        %1997 = vmatprep.mubr.bf16.mxu0 0
        %1998 = vmatmul.mubr.bf16.gmra.mrb[0].mxu0 %v1884
        %v1999 = vpop.f32.mrb[0].mxu0
        %v2000 = vadd.f32 0.0, %v1999
        %v2001 = vpop.f32.mrb[0].mxu0
        %v2002 = vpop.f32.mrb[0].mxu0
        %v2003 = vadd.f32 0.0, %v2002
        %v2004 = vpop.f32.mrb[0].mxu0
        %2005 = vmatprep.mubr.bf16.mxu0 0
        %2006 = vmatmul.mubr.bf16.gmra.mrb[0].mxu0 %v1887
        %v2007 = vpop.f32.mrb[0].mxu0
        %v2008 = vadd.f32 0.0, %v2007
        %v2009 = vpop.f32.mrb[0].mxu0
        %v2010 = vpop.f32.mrb[0].mxu0
        %v2011 = vadd.f32 0.0, %v2010
        %v2012 = vpop.f32.mrb[0].mxu0
        %2013 = vmatprep.mubr.bf16.mxu0 0
        %2014 = vmatmul.mubr.bf16.gmra.mrb[0].mxu0 %v1890
        %v2015 = vpop.f32.mrb[0].mxu0
        %v2016 = vadd.f32 0.0, %v2015
        %v2017 = vpop.f32.mrb[0].mxu0
        %v2018 = vpop.f32.mrb[0].mxu0
        %v2019 = vadd.f32 0.0, %v2018
        %v2020 = vpop.f32.mrb[0].mxu0
        %2021 = vmatprep.mubr.bf16.mxu0 0
        %2022 = vmatmul.mubr.bf16.gmra.mrb[0].mxu0 %v1893
        %v2023 = vpop.f32.mrb[0].mxu0
        %v2024 = vadd.f32 0.0, %v2023
        %v2025 = vpop.f32.mrb[0].mxu0
        %v2026 = vpop.f32.mrb[0].mxu0
        %v2027 = vadd.f32 0.0, %v2026
        %v2028 = vpop.f32.mrb[0].mxu0
        %2029 = vmatprep.mubr.bf16.mxu0 0
        %2030 = vmatmul.mubr.bf16.gmra.mrb[0].mxu0 %v1896
        %v2031 = vpop.f32.mrb[0].mxu0
        %v2032 = vadd.f32 0.0, %v2031
        %v2033 = vpop.f32.mrb[0].mxu0
        %v2034 = vpop.f32.mrb[0].mxu0
        %v2035 = vadd.f32 0.0, %v2034
        %v2036 = vpop.f32.mrb[0].mxu0
        %2037 = vmatprep.mubr.bf16.mxu0 0
        %2038 = vmatmul.mubr.bf16.gmra.mrb[0].mxu0 %v1899
        %v2039 = vpop.f32.mrb[0].mxu0
        %v2040 = vadd.f32 0.0, %v2039
        %v2041 = vpop.f32.mrb[0].mxu0
        %v2042 = vpop.f32.mrb[0].mxu0
        %v2043 = vadd.f32 0.0, %v2042
        %v2044 = vpop.f32.mrb[0].mxu0
        %2045 = vmatprep.mubr.bf16.mxu0 0
        %2046 = vmatmul.mubr.bf16.gmra.mrb[0].mxu0 %v1902
        %v2047 = vpop.f32.mrb[0].mxu0
        %v2048 = vadd.f32 0.0, %v2047
        %v2049 = vpop.f32.mrb[0].mxu0
        %v2050 = vpop.f32.mrb[0].mxu0
        %v2051 = vadd.f32 0.0, %v2050
        %v2052 = vpop.f32.mrb[0].mxu0
        %2053 = vmatprep.mubr.bf16.mxu0 0
        %2054 = vmatmul.mubr.bf16.gmra.mrb[0].mxu0 %v1905
        %v2055 = vpop.f32.mrb[0].mxu0
        %v2056 = vadd.f32 0.0, %v2055
        %v2057 = vpop.f32.mrb[0].mxu0
        %v2058 = vpop.f32.mrb[0].mxu0
        %v2059 = vadd.f32 0.0, %v2058
        %v2060 = vpop.f32.mrb[0].mxu0
        %2061 = vmatprep.mubr.bf16.mxu0 0
        %2062 = vmatmul.mubr.bf16.gmra.mrb[0].mxu0 %v1908
        %v2063 = vpop.f32.mrb[0].mxu0
        %v2064 = vadd.f32 0.0, %v2063
        %v2065 = vpop.f32.mrb[0].mxu0
        %v2066 = vpop.f32.mrb[0].mxu0
        %v2067 = vadd.f32 0.0, %v2066
        %v2068 = vpop.f32.mrb[0].mxu0
        %2069 = vmatprep.mubr.bf16.mxu0 0
        %2070 = vmatmul.mubr.bf16.gmra.mrb[0].mxu0 %v1911
        %v2071 = vpop.f32.mrb[0].mxu0
        %v2072 = vadd.f32 0.0, %v2071
        %v2073 = vpop.f32.mrb[0].mxu0
        %v2074 = vpop.f32.mrb[0].mxu0
        %v2075 = vadd.f32 0.0, %v2074
        %v2076 = vpop.f32.mrb[0].mxu0
        %2077 = vmatprep.mubr.bf16.mxu0 0
        %2078 = vmatmul.mubr.bf16.gmra.mrb[0].mxu0 %v1914
        %v2079 = vpop.f32.mrb[0].mxu0
        %v2080 = vadd.f32 0.0, %v2079
        %v2081 = vpop.f32.mrb[0].mxu0
        %v2082 = vpop.f32.mrb[0].mxu0
        %v2083 = vadd.f32 0.0, %v2082
        %v2084 = vpop.f32.mrb[0].mxu0
        %2085 = vmatprep.mubr.bf16.mxu0 0
        %2086 = vmatmul.mubr.bf16.gmra.mrb[0].mxu0 %v1917
        %v2087 = vpop.f32.mrb[0].mxu0
        %v2088 = vadd.f32 0.0, %v2087
        %v2089 = vpop.f32.mrb[0].mxu0
        %v2090 = vpop.f32.mrb[0].mxu0
        %v2091 = vadd.f32 0.0, %v2090
        %v2092 = vpop.f32.mrb[0].mxu0
        %2093 = vmatprep.mubr.bf16.mxu0 0
        %2094 = vmatmul.mubr.bf16.gmra.mrb[0].mxu0 %v1920
        %v2095 = vpop.f32.mrb[0].mxu0
        %v2096 = vadd.f32 0.0, %v2095
        %v2097 = vpop.f32.mrb[0].mxu0
        %v2098 = vpop.f32.mrb[0].mxu0
        %v2099 = vadd.f32 0.0, %v2098
        %v2100 = vpop.f32.mrb[0].mxu0
        %2101 = vdwg.mxu0
        %v2102 = vadd.f32 %v1792, %v1960
        %v2103 = vadd.f32 %v1793, %v1963
        %v2104 = vadd.f32 %v1794, %v1968
        %v2105 = vadd.f32 %v1795, %v1971
        %v2106 = vadd.f32 %v1796, %v1976
        %v2107 = vadd.f32 %v1797, %v1979
        %v2108 = vadd.f32 %v1798, %v1984
        %v2109 = vadd.f32 %v1799, %v1987
        %v2110 = vadd.f32 %v1800, %v1992
        %v2111 = vadd.f32 %v1801, %v1995
        %v2112 = vadd.f32 %v1802, %v2000
        %v2113 = vadd.f32 %v1803, %v2003
        %v2114 = vadd.f32 %v1804, %v2008
        %v2115 = vadd.f32 %v1805, %v2011
        %v2116 = vadd.f32 %v1806, %v2016
        %v2117 = vadd.f32 %v1807, %v2019
        %v2118 = vadd.f32 %v1808, %v2024
        %v2119 = vadd.f32 %v1809, %v2027
        %v2120 = vadd.f32 %v1810, %v2032
        %v2121 = vadd.f32 %v1811, %v2035
        %v2122 = vadd.f32 %v1812, %v2040
        %v2123 = vadd.f32 %v1813, %v2043
        %v2124 = vadd.f32 %v1814, %v2048
        %v2125 = vadd.f32 %v1815, %v2051
        %v2126 = vadd.f32 %v1816, %v2056
        %v2127 = vadd.f32 %v1817, %v2059
        %v2128 = vadd.f32 %v1818, %v2064
        %v2129 = vadd.f32 %v1819, %v2067
        %v2130 = vadd.f32 %v1820, %v2072
        %v2131 = vadd.f32 %v1821, %v2075
        %v2132 = vadd.f32 %v1822, %v2080
        %v2133 = vadd.f32 %v1823, %v2083
        %v2134 = vadd.f32 %v1824, %v2088
        %v2135 = vadd.f32 %v1825, %v2091
        %v2136 = vadd.f32 %v1826, %v2096
        %v2137 = vadd.f32 %v1827, %v2099
        %s2138 = scalar_lea.vmem %s1, 12
        %v2139 = vld [vmem:[%s2138] sm:$0x3]
        %v2142 = vunpack.c.l.b16 %v224
        %v2143 = vunpack.c.l.b16 %v225
        %v2144 = vpack.c.b16 %v2142, %v1241
        %v2145 = vpack.c.b16 %v2143, %v2143
        %v2146 = vrot.slane %v2144, 2
        %v2147 = vsel %vm1830, %v1864, %v2146
        %v2148 = vrot.slane %v2145, 2
        %v2149 = vsel %vm1830, %v2146, %v2148
        %v2151 = vsel %vm471, %v2147, 0
        %v2154 = vsel %vm471, %v2149, 0
        %v2157 = vand.u32 %v2139, %v529
        %2159 = vmatprep.subr.bf16.mxu0 0
        %2160 = vmatpush1.bf16.msra.mxu0 %v2157
        %2161 = vmatprep.subr.bf16.mxu0 0
        %2162 = vmatpush1.bf16.msra.mxu0 0
        %2163 = vmatprep.subr.bf16.mxu0 0
        %2164 = vmatpush1.bf16.msra.mxu0 0
        %2165 = vmatprep.subr.bf16.mxu0 0
        %2166 = vmatpush1.bf16.msra.mxu0 0
        %2167 = vmatprep.subr.bf16.mxu0 0
        %2168 = vmatpush1.bf16.msra.mxu0 0
        %2169 = vmatprep.subr.bf16.mxu0 0
        %2170 = vmatpush1.bf16.msra.mxu0 0
        %2171 = vmatprep.subr.bf16.mxu0 0
        %2172 = vmatpush1.bf16.msra.mxu0 0
        %2173 = vmatprep.subr.bf16.mxu0 0
        %2174 = vmatpush1.bf16.msra.mxu0 0
        %2175 = vmatprep.subr.bf16.mxu0 0
        %2176 = vmatpush1.bf16.msra.mxu0 0
        %2177 = vmatprep.subr.bf16.mxu0 0
        %2178 = vmatpush1.bf16.msra.mxu0 0
        %2179 = vmatprep.subr.bf16.mxu0 0
        %2180 = vmatpush1.bf16.msra.mxu0 0
        %2181 = vmatprep.subr.bf16.mxu0 0
        %2182 = vmatpush1.bf16.msra.mxu0 0
        %2183 = vmatprep.subr.bf16.mxu0 0
        %2184 = vmatpush1.bf16.msra.mxu0 0
        %2185 = vmatprep.subr.bf16.mxu0 0
        %2186 = vmatpush1.bf16.msra.mxu0 0
        %2187 = vmatprep.subr.bf16.mxu0 0
        %2188 = vmatpush1.bf16.msra.mxu0 0
        %2189 = vmatprep.subr.bf16.mxu0 0
        %2190 = vmatpush1.bf16.msra.mxu0 0
        %2191 = vmatprep.mubr.bf16.mxu0 0
        %2192 = vmatmul.mubr.bf16.gmra.mrb[0].mxu0 %v1872
        %v2193 = vpop.f32.mrb[0].mxu0
        %v2194 = vadd.f32 0.0, %v2193
        %v2195 = vpop.f32.mrb[0].mxu0
        %v2196 = vpop.f32.mrb[0].mxu0
        %v2197 = vadd.f32 0.0, %v2196
        %v2198 = vpop.f32.mrb[0].mxu0
        %2199 = vmatprep.mubr.bf16.mxu0 0
        %2200 = vmatmul.mubr.bf16.gmra.mrb[0].mxu0 %v1875
        %v2201 = vpop.f32.mrb[0].mxu0
        %v2202 = vadd.f32 0.0, %v2201
        %v2203 = vpop.f32.mrb[0].mxu0
        %v2204 = vpop.f32.mrb[0].mxu0
        %v2205 = vadd.f32 0.0, %v2204
        %v2206 = vpop.f32.mrb[0].mxu0
        %2207 = vmatprep.mubr.bf16.mxu0 0
        %2208 = vmatmul.mubr.bf16.gmra.mrb[0].mxu0 %v1878
        %v2209 = vpop.f32.mrb[0].mxu0
        %v2210 = vadd.f32 0.0, %v2209
        %v2211 = vpop.f32.mrb[0].mxu0
        %v2212 = vpop.f32.mrb[0].mxu0
        %v2213 = vadd.f32 0.0, %v2212
        %v2214 = vpop.f32.mrb[0].mxu0
        %2215 = vmatprep.mubr.bf16.mxu0 0
        %2216 = vmatmul.mubr.bf16.gmra.mrb[0].mxu0 %v1881
        %v2217 = vpop.f32.mrb[0].mxu0
        %v2218 = vadd.f32 0.0, %v2217
        %v2219 = vpop.f32.mrb[0].mxu0
        %v2220 = vpop.f32.mrb[0].mxu0
        %v2221 = vadd.f32 0.0, %v2220
        %v2222 = vpop.f32.mrb[0].mxu0
        %2223 = vmatprep.mubr.bf16.mxu0 0
        %2224 = vmatmul.mubr.bf16.gmra.mrb[0].mxu0 %v1884
        %v2225 = vpop.f32.mrb[0].mxu0
        %v2226 = vadd.f32 0.0, %v2225
        %v2227 = vpop.f32.mrb[0].mxu0
        %v2228 = vpop.f32.mrb[0].mxu0
        %v2229 = vadd.f32 0.0, %v2228
        %v2230 = vpop.f32.mrb[0].mxu0
        %2231 = vmatprep.mubr.bf16.mxu0 0
        %2232 = vmatmul.mubr.bf16.gmra.mrb[0].mxu0 %v1887
        %v2233 = vpop.f32.mrb[0].mxu0
        %v2234 = vadd.f32 0.0, %v2233
        %v2235 = vpop.f32.mrb[0].mxu0
        %v2236 = vpop.f32.mrb[0].mxu0
        %v2237 = vadd.f32 0.0, %v2236
        %v2238 = vpop.f32.mrb[0].mxu0
        %2239 = vmatprep.mubr.bf16.mxu0 0
        %2240 = vmatmul.mubr.bf16.gmra.mrb[0].mxu0 %v1890
        %v2241 = vpop.f32.mrb[0].mxu0
        %v2242 = vadd.f32 0.0, %v2241
        %v2243 = vpop.f32.mrb[0].mxu0
        %v2244 = vpop.f32.mrb[0].mxu0
        %v2245 = vadd.f32 0.0, %v2244
        %v2246 = vpop.f32.mrb[0].mxu0
        %2247 = vmatprep.mubr.bf16.mxu0 0
        %2248 = vmatmul.mubr.bf16.gmra.mrb[0].mxu0 %v1893
        %v2249 = vpop.f32.mrb[0].mxu0
        %v2250 = vadd.f32 0.0, %v2249
        %v2251 = vpop.f32.mrb[0].mxu0
        %v2252 = vpop.f32.mrb[0].mxu0
        %v2253 = vadd.f32 0.0, %v2252
        %v2254 = vpop.f32.mrb[0].mxu0
        %2255 = vmatprep.mubr.bf16.mxu0 0
        %2256 = vmatmul.mubr.bf16.gmra.mrb[0].mxu0 %v1896
        %v2257 = vpop.f32.mrb[0].mxu0
        %v2258 = vadd.f32 0.0, %v2257
        %v2259 = vpop.f32.mrb[0].mxu0
        %v2260 = vpop.f32.mrb[0].mxu0
        %v2261 = vadd.f32 0.0, %v2260
        %v2262 = vpop.f32.mrb[0].mxu0
        %2263 = vmatprep.mubr.bf16.mxu0 0
        %2264 = vmatmul.mubr.bf16.gmra.mrb[0].mxu0 %v1899
        %v2265 = vpop.f32.mrb[0].mxu0
        %v2266 = vadd.f32 0.0, %v2265
        %v2267 = vpop.f32.mrb[0].mxu0
        %v2268 = vpop.f32.mrb[0].mxu0
        %v2269 = vadd.f32 0.0, %v2268
        %v2270 = vpop.f32.mrb[0].mxu0
        %2271 = vmatprep.mubr.bf16.mxu0 0
        %2272 = vmatmul.mubr.bf16.gmra.mrb[0].mxu0 %v1902
        %v2273 = vpop.f32.mrb[0].mxu0
        %v2274 = vadd.f32 0.0, %v2273
        %v2275 = vpop.f32.mrb[0].mxu0
        %v2276 = vpop.f32.mrb[0].mxu0
        %v2277 = vadd.f32 0.0, %v2276
        %v2278 = vpop.f32.mrb[0].mxu0
        %2279 = vmatprep.mubr.bf16.mxu0 0
        %2280 = vmatmul.mubr.bf16.gmra.mrb[0].mxu0 %v1905
        %v2281 = vpop.f32.mrb[0].mxu0
        %v2282 = vadd.f32 0.0, %v2281
        %v2283 = vpop.f32.mrb[0].mxu0
        %v2284 = vpop.f32.mrb[0].mxu0
        %v2285 = vadd.f32 0.0, %v2284
        %v2286 = vpop.f32.mrb[0].mxu0
        %2287 = vmatprep.mubr.bf16.mxu0 0
        %2288 = vmatmul.mubr.bf16.gmra.mrb[0].mxu0 %v1908
        %v2289 = vpop.f32.mrb[0].mxu0
        %v2290 = vadd.f32 0.0, %v2289
        %v2291 = vpop.f32.mrb[0].mxu0
        %v2292 = vpop.f32.mrb[0].mxu0
        %v2293 = vadd.f32 0.0, %v2292
        %v2294 = vpop.f32.mrb[0].mxu0
        %2295 = vmatprep.mubr.bf16.mxu0 0
        %2296 = vmatmul.mubr.bf16.gmra.mrb[0].mxu0 %v1911
        %v2297 = vpop.f32.mrb[0].mxu0
        %v2298 = vadd.f32 0.0, %v2297
        %v2299 = vpop.f32.mrb[0].mxu0
        %v2300 = vpop.f32.mrb[0].mxu0
        %v2301 = vadd.f32 0.0, %v2300
        %v2302 = vpop.f32.mrb[0].mxu0
        %2303 = vmatprep.mubr.bf16.mxu0 0
        %2304 = vmatmul.mubr.bf16.gmra.mrb[0].mxu0 %v1914
        %v2305 = vpop.f32.mrb[0].mxu0
        %v2306 = vadd.f32 0.0, %v2305
        %v2307 = vpop.f32.mrb[0].mxu0
        %v2308 = vpop.f32.mrb[0].mxu0
        %v2309 = vadd.f32 0.0, %v2308
        %v2310 = vpop.f32.mrb[0].mxu0
        %2311 = vmatprep.mubr.bf16.mxu0 0
        %2312 = vmatmul.mubr.bf16.gmra.mrb[0].mxu0 %v1917
        %v2313 = vpop.f32.mrb[0].mxu0
        %v2314 = vadd.f32 0.0, %v2313
        %v2315 = vpop.f32.mrb[0].mxu0
        %v2316 = vpop.f32.mrb[0].mxu0
        %v2317 = vadd.f32 0.0, %v2316
        %v2318 = vpop.f32.mrb[0].mxu0
        %2319 = vmatprep.mubr.bf16.mxu0 0
        %2320 = vmatmul.mubr.bf16.gmra.mrb[0].mxu0 %v2151
        %v2321 = vpop.f32.mrb[0].mxu0
        %v2322 = vadd.f32 0.0, %v2321
        %v2323 = vpop.f32.mrb[0].mxu0
        %v2324 = vpop.f32.mrb[0].mxu0
        %v2325 = vadd.f32 0.0, %v2324
        %v2326 = vpop.f32.mrb[0].mxu0
        %2327 = vmatprep.mubr.bf16.mxu0 0
        %2328 = vmatmul.mubr.bf16.gmra.mrb[0].mxu0 %v2154
        %v2329 = vpop.f32.mrb[0].mxu0
        %v2330 = vadd.f32 0.0, %v2329
        %v2331 = vpop.f32.mrb[0].mxu0
        %v2332 = vpop.f32.mrb[0].mxu0
        %v2333 = vadd.f32 0.0, %v2332
        %v2334 = vpop.f32.mrb[0].mxu0
        %2335 = vdwg.mxu0
        %v2336 = vadd.f32 %v2102, %v2194
        %v2337 = vadd.f32 %v2103, %v2197
        %v2338 = vadd.f32 %v2104, %v2202
        %v2339 = vadd.f32 %v2105, %v2205
        %v2340 = vadd.f32 %v2106, %v2210
        %v2341 = vadd.f32 %v2107, %v2213
        %v2342 = vadd.f32 %v2108, %v2218
        %v2343 = vadd.f32 %v2109, %v2221
        %v2344 = vadd.f32 %v2110, %v2226
        %v2345 = vadd.f32 %v2111, %v2229
        %v2346 = vadd.f32 %v2112, %v2234
        %v2347 = vadd.f32 %v2113, %v2237
        %v2348 = vadd.f32 %v2114, %v2242
        %v2349 = vadd.f32 %v2115, %v2245
        %v2350 = vadd.f32 %v2116, %v2250
        %v2351 = vadd.f32 %v2117, %v2253
        %v2352 = vadd.f32 %v2118, %v2258
        %v2353 = vadd.f32 %v2119, %v2261
        %v2354 = vadd.f32 %v2120, %v2266
        %v2355 = vadd.f32 %v2121, %v2269
        %v2356 = vadd.f32 %v2122, %v2274
        %v2357 = vadd.f32 %v2123, %v2277
        %v2358 = vadd.f32 %v2124, %v2282
        %v2359 = vadd.f32 %v2125, %v2285
        %v2360 = vadd.f32 %v2126, %v2290
        %v2361 = vadd.f32 %v2127, %v2293
        %v2362 = vadd.f32 %v2128, %v2298
        %v2363 = vadd.f32 %v2129, %v2301
        %v2364 = vadd.f32 %v2130, %v2306
        %v2365 = vadd.f32 %v2131, %v2309
        %v2366 = vadd.f32 %v2132, %v2314
        %v2367 = vadd.f32 %v2133, %v2317
        %v2368 = vadd.f32 %v2134, %v2322
        %v2369 = vadd.f32 %v2135, %v2325
        %v2370 = vadd.f32 %v2136, %v2330
        %v2371 = vadd.f32 %v2137, %v2333
        %s2372 = scalar_lea.vmem %s1, 14
        %v2373 = vld [vmem:[%s2372] sm:$0x3]
        %vm2374 = vsmask.f32 5376
        %v2375 = vrot.slane %v343, 2
        %v2376 = vrot.slane %v339, 3
        %v2377 = vor.u32 %v2375, %v2376
        %v2378 = vrot.slane %v351, 2
        %v2379 = vrot.slane %v347, 3
        %v2380 = vor.u32 %v2378, %v2379
        %v2381 = vsel %vm2374, %v2377, %v2380
        %v2382 = vrot.slane %v359, 2
        %v2383 = vrot.slane %v355, 3
        %v2384 = vor.u32 %v2382, %v2383
        %v2385 = vsel %vm2374, %v2380, %v2384
        %v2386 = vrot.slane %v367, 2
        %v2387 = vrot.slane %v363, 3
        %v2388 = vor.u32 %v2386, %v2387
        %v2389 = vsel %vm2374, %v2384, %v2388
        %v2390 = vrot.slane %v375, 2
        %v2391 = vrot.slane %v371, 3
        %v2392 = vor.u32 %v2390, %v2391
        %v2393 = vsel %vm2374, %v2388, %v2392
        %v2394 = vrot.slane %v383, 2
        %v2395 = vrot.slane %v379, 3
        %v2396 = vor.u32 %v2394, %v2395
        %v2397 = vsel %vm2374, %v2392, %v2396
        %v2398 = vrot.slane %v391, 2
        %v2399 = vrot.slane %v387, 3
        %v2400 = vor.u32 %v2398, %v2399
        %v2401 = vsel %vm2374, %v2396, %v2400
        %v2402 = vrot.slane %v399, 2
        %v2403 = vrot.slane %v395, 3
        %v2404 = vor.u32 %v2402, %v2403
        %v2405 = vsel %vm2374, %v2400, %v2404
        %v2406 = vrot.slane %v407, 2
        %v2407 = vrot.slane %v403, 3
        %v2408 = vor.u32 %v2406, %v2407
        %v2409 = vsel %vm2374, %v2404, %v2408
        %v2410 = vrot.slane %v415, 2
        %v2411 = vrot.slane %v411, 3
        %v2412 = vor.u32 %v2410, %v2411
        %v2413 = vsel %vm2374, %v2408, %v2412
        %v2414 = vrot.slane %v423, 2
        %v2415 = vrot.slane %v419, 3
        %v2416 = vor.u32 %v2414, %v2415
        %v2417 = vsel %vm2374, %v2412, %v2416
        %v2418 = vrot.slane %v431, 2
        %v2419 = vrot.slane %v427, 3
        %v2420 = vor.u32 %v2418, %v2419
        %v2421 = vsel %vm2374, %v2416, %v2420
        %v2422 = vrot.slane %v439, 2
        %v2423 = vrot.slane %v435, 3
        %v2424 = vor.u32 %v2422, %v2423
        %v2425 = vsel %vm2374, %v2420, %v2424
        %v2426 = vrot.slane %v447, 2
        %v2427 = vrot.slane %v443, 3
        %v2428 = vor.u32 %v2426, %v2427
        %v2429 = vsel %vm2374, %v2424, %v2428
        %v2430 = vrot.slane %v455, 2
        %v2431 = vrot.slane %v451, 3
        %v2432 = vor.u32 %v2430, %v2431
        %v2433 = vsel %vm2374, %v2428, %v2432
        %v2434 = vrot.slane %v463, 2
        %v2435 = vrot.slane %v459, 3
        %v2436 = vor.u32 %v2434, %v2435
        %v2437 = vsel %vm2374, %v2432, %v2436
        %v2438 = vrot.slane %v1541, 2
        %v2439 = vrot.slane %v1544, 3
        %v2440 = vor.u32 %v2438, %v2439
        %v2441 = vsel %vm2374, %v2436, %v2440
        %v2443 = vshrl.u32 %v2144, 16
        %v2445 = vrot.slane %v2443, 2
        %v2446 = vshll.u32 %v2144, 16
        %v2448 = vrot.slane %v2446, 3
        %v2449 = vor.u32 %v2445, %v2448
        %v2450 = vsel %vm2374, %v2440, %v2449
        %v2452 = vshrl.u32 %v2145, 16
        %v2454 = vrot.slane %v2452, 2
        %v2455 = vshll.u32 %v2145, 16
        %v2457 = vrot.slane %v2455, 3
        %v2458 = vor.u32 %v2454, %v2457
        %v2459 = vsel %vm2374, %v2449, %v2458
        %v2461 = vsel %vm471, %v2381, 0
        %v2464 = vsel %vm471, %v2385, 0
        %v2467 = vsel %vm471, %v2389, 0
        %v2470 = vsel %vm471, %v2393, 0
        %v2473 = vsel %vm471, %v2397, 0
        %v2476 = vsel %vm471, %v2401, 0
        %v2479 = vsel %vm471, %v2405, 0
        %v2482 = vsel %vm471, %v2409, 0
        %v2485 = vsel %vm471, %v2413, 0
        %v2488 = vsel %vm471, %v2417, 0
        %v2491 = vsel %vm471, %v2421, 0
        %v2494 = vsel %vm471, %v2425, 0
        %v2497 = vsel %vm471, %v2429, 0
        %v2500 = vsel %vm471, %v2433, 0
        %v2503 = vsel %vm471, %v2437, 0
        %v2506 = vsel %vm471, %v2441, 0
        %v2509 = vsel %vm471, %v2450, 0
        %v2512 = vsel %vm471, %v2459, 0
        %v2515 = vand.u32 %v2373, %v529
        %2517 = vmatprep.subr.bf16.mxu0 0
        %2518 = vmatpush1.bf16.msra.mxu0 %v2515
        %2519 = vmatprep.subr.bf16.mxu0 0
        %2520 = vmatpush1.bf16.msra.mxu0 0
        %2521 = vmatprep.subr.bf16.mxu0 0
        %2522 = vmatpush1.bf16.msra.mxu0 0
        %2523 = vmatprep.subr.bf16.mxu0 0
        %2524 = vmatpush1.bf16.msra.mxu0 0
        %2525 = vmatprep.subr.bf16.mxu0 0
        %2526 = vmatpush1.bf16.msra.mxu0 0
        %2527 = vmatprep.subr.bf16.mxu0 0
        %2528 = vmatpush1.bf16.msra.mxu0 0
        %2529 = vmatprep.subr.bf16.mxu0 0
        %2530 = vmatpush1.bf16.msra.mxu0 0
        %2531 = vmatprep.subr.bf16.mxu0 0
        %2532 = vmatpush1.bf16.msra.mxu0 0
        %2533 = vmatprep.subr.bf16.mxu0 0
        %2534 = vmatpush1.bf16.msra.mxu0 0
        %2535 = vmatprep.subr.bf16.mxu0 0
        %2536 = vmatpush1.bf16.msra.mxu0 0
        %2537 = vmatprep.subr.bf16.mxu0 0
        %2538 = vmatpush1.bf16.msra.mxu0 0
        %2539 = vmatprep.subr.bf16.mxu0 0
        %2540 = vmatpush1.bf16.msra.mxu0 0
        %2541 = vmatprep.subr.bf16.mxu0 0
        %2542 = vmatpush1.bf16.msra.mxu0 0
        %2543 = vmatprep.subr.bf16.mxu0 0
        %2544 = vmatpush1.bf16.msra.mxu0 0
        %2545 = vmatprep.subr.bf16.mxu0 0
        %2546 = vmatpush1.bf16.msra.mxu0 0
        %2547 = vmatprep.subr.bf16.mxu0 0
        %2548 = vmatpush1.bf16.msra.mxu0 0
        %2549 = vmatprep.mubr.bf16.mxu0 0
        %2550 = vmatmul.mubr.bf16.gmra.mrb[0].mxu0 %v2461
        %v2551 = vpop.f32.mrb[0].mxu0
        %v2552 = vadd.f32 0.0, %v2551
        %v2553 = vpop.f32.mrb[0].mxu0
        %v2554 = vpop.f32.mrb[0].mxu0
        %v2555 = vadd.f32 0.0, %v2554
        %v2556 = vpop.f32.mrb[0].mxu0
        %2557 = vmatprep.mubr.bf16.mxu0 0
        %2558 = vmatmul.mubr.bf16.gmra.mrb[0].mxu0 %v2464
        %v2559 = vpop.f32.mrb[0].mxu0
        %v2560 = vadd.f32 0.0, %v2559
        %v2561 = vpop.f32.mrb[0].mxu0
        %v2562 = vpop.f32.mrb[0].mxu0
        %v2563 = vadd.f32 0.0, %v2562
        %v2564 = vpop.f32.mrb[0].mxu0
        %2565 = vmatprep.mubr.bf16.mxu0 0
        %2566 = vmatmul.mubr.bf16.gmra.mrb[0].mxu0 %v2467
        %v2567 = vpop.f32.mrb[0].mxu0
        %v2568 = vadd.f32 0.0, %v2567
        %v2569 = vpop.f32.mrb[0].mxu0
        %v2570 = vpop.f32.mrb[0].mxu0
        %v2571 = vadd.f32 0.0, %v2570
        %v2572 = vpop.f32.mrb[0].mxu0
        %2573 = vmatprep.mubr.bf16.mxu0 0
        %2574 = vmatmul.mubr.bf16.gmra.mrb[0].mxu0 %v2470
        %v2575 = vpop.f32.mrb[0].mxu0
        %v2576 = vadd.f32 0.0, %v2575
        %v2577 = vpop.f32.mrb[0].mxu0
        %v2578 = vpop.f32.mrb[0].mxu0
        %v2579 = vadd.f32 0.0, %v2578
        %v2580 = vpop.f32.mrb[0].mxu0
        %2581 = vmatprep.mubr.bf16.mxu0 0
        %2582 = vmatmul.mubr.bf16.gmra.mrb[0].mxu0 %v2473
        %v2583 = vpop.f32.mrb[0].mxu0
        %v2584 = vadd.f32 0.0, %v2583
        %v2585 = vpop.f32.mrb[0].mxu0
        %v2586 = vpop.f32.mrb[0].mxu0
        %v2587 = vadd.f32 0.0, %v2586
        %v2588 = vpop.f32.mrb[0].mxu0
        %2589 = vmatprep.mubr.bf16.mxu0 0
        %2590 = vmatmul.mubr.bf16.gmra.mrb[0].mxu0 %v2476
        %v2591 = vpop.f32.mrb[0].mxu0
        %v2592 = vadd.f32 0.0, %v2591
        %v2593 = vpop.f32.mrb[0].mxu0
        %v2594 = vpop.f32.mrb[0].mxu0
        %v2595 = vadd.f32 0.0, %v2594
        %v2596 = vpop.f32.mrb[0].mxu0
        %2597 = vmatprep.mubr.bf16.mxu0 0
        %2598 = vmatmul.mubr.bf16.gmra.mrb[0].mxu0 %v2479
        %v2599 = vpop.f32.mrb[0].mxu0
        %v2600 = vadd.f32 0.0, %v2599
        %v2601 = vpop.f32.mrb[0].mxu0
        %v2602 = vpop.f32.mrb[0].mxu0
        %v2603 = vadd.f32 0.0, %v2602
        %v2604 = vpop.f32.mrb[0].mxu0
        %2605 = vmatprep.mubr.bf16.mxu0 0
        %2606 = vmatmul.mubr.bf16.gmra.mrb[0].mxu0 %v2482
        %v2607 = vpop.f32.mrb[0].mxu0
        %v2608 = vadd.f32 0.0, %v2607
        %v2609 = vpop.f32.mrb[0].mxu0
        %v2610 = vpop.f32.mrb[0].mxu0
        %v2611 = vadd.f32 0.0, %v2610
        %v2612 = vpop.f32.mrb[0].mxu0
        %2613 = vmatprep.mubr.bf16.mxu0 0
        %2614 = vmatmul.mubr.bf16.gmra.mrb[0].mxu0 %v2485
        %v2615 = vpop.f32.mrb[0].mxu0
        %v2616 = vadd.f32 0.0, %v2615
        %v2617 = vpop.f32.mrb[0].mxu0
        %v2618 = vpop.f32.mrb[0].mxu0
        %v2619 = vadd.f32 0.0, %v2618
        %v2620 = vpop.f32.mrb[0].mxu0
        %2621 = vmatprep.mubr.bf16.mxu0 0
        %2622 = vmatmul.mubr.bf16.gmra.mrb[0].mxu0 %v2488
        %v2623 = vpop.f32.mrb[0].mxu0
        %v2624 = vadd.f32 0.0, %v2623
        %v2625 = vpop.f32.mrb[0].mxu0
        %v2626 = vpop.f32.mrb[0].mxu0
        %v2627 = vadd.f32 0.0, %v2626
        %v2628 = vpop.f32.mrb[0].mxu0
        %2629 = vmatprep.mubr.bf16.mxu0 0
        %2630 = vmatmul.mubr.bf16.gmra.mrb[0].mxu0 %v2491
        %v2631 = vpop.f32.mrb[0].mxu0
        %v2632 = vadd.f32 0.0, %v2631
        %v2633 = vpop.f32.mrb[0].mxu0
        %v2634 = vpop.f32.mrb[0].mxu0
        %v2635 = vadd.f32 0.0, %v2634
        %v2636 = vpop.f32.mrb[0].mxu0
        %2637 = vmatprep.mubr.bf16.mxu0 0
        %2638 = vmatmul.mubr.bf16.gmra.mrb[0].mxu0 %v2494
        %v2639 = vpop.f32.mrb[0].mxu0
        %v2640 = vadd.f32 0.0, %v2639
        %v2641 = vpop.f32.mrb[0].mxu0
        %v2642 = vpop.f32.mrb[0].mxu0
        %v2643 = vadd.f32 0.0, %v2642
        %v2644 = vpop.f32.mrb[0].mxu0
        %2645 = vmatprep.mubr.bf16.mxu0 0
        %2646 = vmatmul.mubr.bf16.gmra.mrb[0].mxu0 %v2497
        %v2647 = vpop.f32.mrb[0].mxu0
        %v2648 = vadd.f32 0.0, %v2647
        %v2649 = vpop.f32.mrb[0].mxu0
        %v2650 = vpop.f32.mrb[0].mxu0
        %v2651 = vadd.f32 0.0, %v2650
        %v2652 = vpop.f32.mrb[0].mxu0
        %2653 = vmatprep.mubr.bf16.mxu0 0
        %2654 = vmatmul.mubr.bf16.gmra.mrb[0].mxu0 %v2500
        %v2655 = vpop.f32.mrb[0].mxu0
        %v2656 = vadd.f32 0.0, %v2655
        %v2657 = vpop.f32.mrb[0].mxu0
        %v2658 = vpop.f32.mrb[0].mxu0
        %v2659 = vadd.f32 0.0, %v2658
        %v2660 = vpop.f32.mrb[0].mxu0
        %2661 = vmatprep.mubr.bf16.mxu0 0
        %2662 = vmatmul.mubr.bf16.gmra.mrb[0].mxu0 %v2503
        %v2663 = vpop.f32.mrb[0].mxu0
        %v2664 = vadd.f32 0.0, %v2663
        %v2665 = vpop.f32.mrb[0].mxu0
        %v2666 = vpop.f32.mrb[0].mxu0
        %v2667 = vadd.f32 0.0, %v2666
        %v2668 = vpop.f32.mrb[0].mxu0
        %2669 = vmatprep.mubr.bf16.mxu0 0
        %2670 = vmatmul.mubr.bf16.gmra.mrb[0].mxu0 %v2506
        %v2671 = vpop.f32.mrb[0].mxu0
        %v2672 = vadd.f32 0.0, %v2671
        %v2673 = vpop.f32.mrb[0].mxu0
        %v2674 = vpop.f32.mrb[0].mxu0
        %v2675 = vadd.f32 0.0, %v2674
        %v2676 = vpop.f32.mrb[0].mxu0
        %2677 = vmatprep.mubr.bf16.mxu0 0
        %2678 = vmatmul.mubr.bf16.gmra.mrb[0].mxu0 %v2509
        %v2679 = vpop.f32.mrb[0].mxu0
        %v2680 = vadd.f32 0.0, %v2679
        %v2681 = vpop.f32.mrb[0].mxu0
        %v2682 = vpop.f32.mrb[0].mxu0
        %v2683 = vadd.f32 0.0, %v2682
        %v2684 = vpop.f32.mrb[0].mxu0
        %2685 = vmatprep.mubr.bf16.mxu0 0
        %2686 = vmatmul.mubr.bf16.gmra.mrb[0].mxu0 %v2512
        %v2687 = vpop.f32.mrb[0].mxu0
        %v2688 = vadd.f32 0.0, %v2687
        %v2689 = vpop.f32.mrb[0].mxu0
        %v2690 = vpop.f32.mrb[0].mxu0
        %v2691 = vadd.f32 0.0, %v2690
        %v2692 = vpop.f32.mrb[0].mxu0
        %2693 = vdwg.mxu0
        %v2694 = vadd.f32 %v2336, %v2552
        %v2695 = vadd.f32 %v2337, %v2555
        %v2696 = vadd.f32 %v2338, %v2560
        %v2697 = vadd.f32 %v2339, %v2563
        %v2698 = vadd.f32 %v2340, %v2568
        %v2699 = vadd.f32 %v2341, %v2571
        %v2700 = vadd.f32 %v2342, %v2576
        %v2701 = vadd.f32 %v2343, %v2579
        %v2702 = vadd.f32 %v2344, %v2584
        %v2703 = vadd.f32 %v2345, %v2587
        %v2704 = vadd.f32 %v2346, %v2592
        %v2705 = vadd.f32 %v2347, %v2595
        %v2706 = vadd.f32 %v2348, %v2600
        %v2707 = vadd.f32 %v2349, %v2603
        %v2708 = vadd.f32 %v2350, %v2608
        %v2709 = vadd.f32 %v2351, %v2611
        %v2710 = vadd.f32 %v2352, %v2616
        %v2711 = vadd.f32 %v2353, %v2619
        %v2712 = vadd.f32 %v2354, %v2624
        %v2713 = vadd.f32 %v2355, %v2627
        %v2714 = vadd.f32 %v2356, %v2632
        %v2715 = vadd.f32 %v2357, %v2635
        %v2716 = vadd.f32 %v2358, %v2640
        %v2717 = vadd.f32 %v2359, %v2643
        %v2718 = vadd.f32 %v2360, %v2648
        %v2719 = vadd.f32 %v2361, %v2651
        %v2720 = vadd.f32 %v2362, %v2656
        %v2721 = vadd.f32 %v2363, %v2659
        %v2722 = vadd.f32 %v2364, %v2664
        %v2723 = vadd.f32 %v2365, %v2667
        %v2724 = vadd.f32 %v2366, %v2672
        %v2725 = vadd.f32 %v2367, %v2675
        %v2726 = vadd.f32 %v2368, %v2680
        %v2727 = vadd.f32 %v2369, %v2683
        %v2728 = vadd.f32 %v2370, %v2688
        %v2729 = vadd.f32 %v2371, %v2691
        %s2730 = scalar_lea.vmem %s1, 16
        %v2731 = vld [vmem:[%s2730] sm:$0x3]
        %vm2732 = vcmask 1044480
        %v2733 = vrot.slane %v305, 3
        %v2734 = vrot.slane %v306, 3
        %v2735 = vsel %vm2732, %v2733, %v2734
        %v2736 = vrot.slane %v307, 3
        %v2737 = vsel %vm2732, %v2734, %v2736
        %v2738 = vrot.slane %v308, 3
        %v2739 = vsel %vm2732, %v2736, %v2738
        %v2740 = vrot.slane %v309, 3
        %v2741 = vsel %vm2732, %v2738, %v2740
        %v2742 = vrot.slane %v310, 3
        %v2743 = vsel %vm2732, %v2740, %v2742
        %v2744 = vrot.slane %v311, 3
        %v2745 = vsel %vm2732, %v2742, %v2744
        %v2746 = vrot.slane %v312, 3
        %v2747 = vsel %vm2732, %v2744, %v2746
        %v2748 = vrot.slane %v313, 3
        %v2749 = vsel %vm2732, %v2746, %v2748
        %v2750 = vrot.slane %v314, 3
        %v2751 = vsel %vm2732, %v2748, %v2750
        %v2752 = vrot.slane %v315, 3
        %v2753 = vsel %vm2732, %v2750, %v2752
        %v2754 = vrot.slane %v316, 3
        %v2755 = vsel %vm2732, %v2752, %v2754
        %v2756 = vrot.slane %v317, 3
        %v2757 = vsel %vm2732, %v2754, %v2756
        %v2758 = vrot.slane %v318, 3
        %v2759 = vsel %vm2732, %v2756, %v2758
        %v2760 = vrot.slane %v319, 3
        %v2761 = vsel %vm2732, %v2758, %v2760
        %v2762 = vrot.slane %v320, 3
        %v2763 = vsel %vm2732, %v2760, %v2762
        %v2764 = vrot.slane %v1242, 3
        %v2765 = vsel %vm2732, %v2762, %v2764
        %v2766 = vrot.slane %v2144, 3
        %v2767 = vsel %vm2732, %v2764, %v2766
        %v2768 = vrot.slane %v2145, 3
        %v2769 = vsel %vm2732, %v2766, %v2768
        %v2771 = vsel %vm471, %v2735, 0
        %v2774 = vsel %vm471, %v2737, 0
        %v2777 = vsel %vm471, %v2739, 0
        %v2780 = vsel %vm471, %v2741, 0
        %v2783 = vsel %vm471, %v2743, 0
        %v2786 = vsel %vm471, %v2745, 0
        %v2789 = vsel %vm471, %v2747, 0
        %v2792 = vsel %vm471, %v2749, 0
        %v2795 = vsel %vm471, %v2751, 0
        %v2798 = vsel %vm471, %v2753, 0
        %v2801 = vsel %vm471, %v2755, 0
        %v2804 = vsel %vm471, %v2757, 0
        %v2807 = vsel %vm471, %v2759, 0
        %v2810 = vsel %vm471, %v2761, 0
        %v2813 = vsel %vm471, %v2763, 0
        %v2816 = vsel %vm471, %v2765, 0
        %v2819 = vsel %vm471, %v2767, 0
        %v2822 = vsel %vm471, %v2769, 0
        %v2825 = vand.u32 %v2731, %v529
        %2827 = vmatprep.subr.bf16.mxu0 0
        %2828 = vmatpush1.bf16.msra.mxu0 %v2825
        %2829 = vmatprep.subr.bf16.mxu0 0
        %2830 = vmatpush1.bf16.msra.mxu0 0
        %2831 = vmatprep.subr.bf16.mxu0 0
        %2832 = vmatpush1.bf16.msra.mxu0 0
        %2833 = vmatprep.subr.bf16.mxu0 0
        %2834 = vmatpush1.bf16.msra.mxu0 0
        %2835 = vmatprep.subr.bf16.mxu0 0
        %2836 = vmatpush1.bf16.msra.mxu0 0
        %2837 = vmatprep.subr.bf16.mxu0 0
        %2838 = vmatpush1.bf16.msra.mxu0 0
        %2839 = vmatprep.subr.bf16.mxu0 0
        %2840 = vmatpush1.bf16.msra.mxu0 0
        %2841 = vmatprep.subr.bf16.mxu0 0
        %2842 = vmatpush1.bf16.msra.mxu0 0
        %2843 = vmatprep.subr.bf16.mxu0 0
        %2844 = vmatpush1.bf16.msra.mxu0 0
        %2845 = vmatprep.subr.bf16.mxu0 0
        %2846 = vmatpush1.bf16.msra.mxu0 0
        %2847 = vmatprep.subr.bf16.mxu0 0
        %2848 = vmatpush1.bf16.msra.mxu0 0
        %2849 = vmatprep.subr.bf16.mxu0 0
        %2850 = vmatpush1.bf16.msra.mxu0 0
        %2851 = vmatprep.subr.bf16.mxu0 0
        %2852 = vmatpush1.bf16.msra.mxu0 0
        %2853 = vmatprep.subr.bf16.mxu0 0
        %2854 = vmatpush1.bf16.msra.mxu0 0
        %2855 = vmatprep.subr.bf16.mxu0 0
        %2856 = vmatpush1.bf16.msra.mxu0 0
        %2857 = vmatprep.subr.bf16.mxu0 0
        %2858 = vmatpush1.bf16.msra.mxu0 0
        %2859 = vmatprep.mubr.bf16.mxu0 0
        %2860 = vmatmul.mubr.bf16.gmra.mrb[0].mxu0 %v2771
        %v2861 = vpop.f32.mrb[0].mxu0
        %v2862 = vadd.f32 0.0, %v2861
        %v2863 = vpop.f32.mrb[0].mxu0
        %v2864 = vpop.f32.mrb[0].mxu0
        %v2865 = vadd.f32 0.0, %v2864
        %v2866 = vpop.f32.mrb[0].mxu0
        %2867 = vmatprep.mubr.bf16.mxu0 0
        %2868 = vmatmul.mubr.bf16.gmra.mrb[0].mxu0 %v2774
        %v2869 = vpop.f32.mrb[0].mxu0
        %v2870 = vadd.f32 0.0, %v2869
        %v2871 = vpop.f32.mrb[0].mxu0
        %v2872 = vpop.f32.mrb[0].mxu0
        %v2873 = vadd.f32 0.0, %v2872
        %v2874 = vpop.f32.mrb[0].mxu0
        %2875 = vmatprep.mubr.bf16.mxu0 0
        %2876 = vmatmul.mubr.bf16.gmra.mrb[0].mxu0 %v2777
        %v2877 = vpop.f32.mrb[0].mxu0
        %v2878 = vadd.f32 0.0, %v2877
        %v2879 = vpop.f32.mrb[0].mxu0
        %v2880 = vpop.f32.mrb[0].mxu0
        %v2881 = vadd.f32 0.0, %v2880
        %v2882 = vpop.f32.mrb[0].mxu0
        %2883 = vmatprep.mubr.bf16.mxu0 0
        %2884 = vmatmul.mubr.bf16.gmra.mrb[0].mxu0 %v2780
        %v2885 = vpop.f32.mrb[0].mxu0
        %v2886 = vadd.f32 0.0, %v2885
        %v2887 = vpop.f32.mrb[0].mxu0
        %v2888 = vpop.f32.mrb[0].mxu0
        %v2889 = vadd.f32 0.0, %v2888
        %v2890 = vpop.f32.mrb[0].mxu0
        %2891 = vmatprep.mubr.bf16.mxu0 0
        %2892 = vmatmul.mubr.bf16.gmra.mrb[0].mxu0 %v2783
        %v2893 = vpop.f32.mrb[0].mxu0
        %v2894 = vadd.f32 0.0, %v2893
        %v2895 = vpop.f32.mrb[0].mxu0
        %v2896 = vpop.f32.mrb[0].mxu0
        %v2897 = vadd.f32 0.0, %v2896
        %v2898 = vpop.f32.mrb[0].mxu0
        %2899 = vmatprep.mubr.bf16.mxu0 0
        %2900 = vmatmul.mubr.bf16.gmra.mrb[0].mxu0 %v2786
        %v2901 = vpop.f32.mrb[0].mxu0
        %v2902 = vadd.f32 0.0, %v2901
        %v2903 = vpop.f32.mrb[0].mxu0
        %v2904 = vpop.f32.mrb[0].mxu0
        %v2905 = vadd.f32 0.0, %v2904
        %v2906 = vpop.f32.mrb[0].mxu0
        %2907 = vmatprep.mubr.bf16.mxu0 0
        %2908 = vmatmul.mubr.bf16.gmra.mrb[0].mxu0 %v2789
        %v2909 = vpop.f32.mrb[0].mxu0
        %v2910 = vadd.f32 0.0, %v2909
        %v2911 = vpop.f32.mrb[0].mxu0
        %v2912 = vpop.f32.mrb[0].mxu0
        %v2913 = vadd.f32 0.0, %v2912
        %v2914 = vpop.f32.mrb[0].mxu0
        %2915 = vmatprep.mubr.bf16.mxu0 0
        %2916 = vmatmul.mubr.bf16.gmra.mrb[0].mxu0 %v2792
        %v2917 = vpop.f32.mrb[0].mxu0
        %v2918 = vadd.f32 0.0, %v2917
        %v2919 = vpop.f32.mrb[0].mxu0
        %v2920 = vpop.f32.mrb[0].mxu0
        %v2921 = vadd.f32 0.0, %v2920
        %v2922 = vpop.f32.mrb[0].mxu0
        %2923 = vmatprep.mubr.bf16.mxu0 0
        %2924 = vmatmul.mubr.bf16.gmra.mrb[0].mxu0 %v2795
        %v2925 = vpop.f32.mrb[0].mxu0
        %v2926 = vadd.f32 0.0, %v2925
        %v2927 = vpop.f32.mrb[0].mxu0
        %v2928 = vpop.f32.mrb[0].mxu0
        %v2929 = vadd.f32 0.0, %v2928
        %v2930 = vpop.f32.mrb[0].mxu0
        %2931 = vmatprep.mubr.bf16.mxu0 0
        %2932 = vmatmul.mubr.bf16.gmra.mrb[0].mxu0 %v2798
        %v2933 = vpop.f32.mrb[0].mxu0
        %v2934 = vadd.f32 0.0, %v2933
        %v2935 = vpop.f32.mrb[0].mxu0
        %v2936 = vpop.f32.mrb[0].mxu0
        %v2937 = vadd.f32 0.0, %v2936
        %v2938 = vpop.f32.mrb[0].mxu0
        %2939 = vmatprep.mubr.bf16.mxu0 0
        %2940 = vmatmul.mubr.bf16.gmra.mrb[0].mxu0 %v2801
        %v2941 = vpop.f32.mrb[0].mxu0
        %v2942 = vadd.f32 0.0, %v2941
        %v2943 = vpop.f32.mrb[0].mxu0
        %v2944 = vpop.f32.mrb[0].mxu0
        %v2945 = vadd.f32 0.0, %v2944
        %v2946 = vpop.f32.mrb[0].mxu0
        %2947 = vmatprep.mubr.bf16.mxu0 0
        %2948 = vmatmul.mubr.bf16.gmra.mrb[0].mxu0 %v2804
        %v2949 = vpop.f32.mrb[0].mxu0
        %v2950 = vadd.f32 0.0, %v2949
        %v2951 = vpop.f32.mrb[0].mxu0
        %v2952 = vpop.f32.mrb[0].mxu0
        %v2953 = vadd.f32 0.0, %v2952
        %v2954 = vpop.f32.mrb[0].mxu0
        %2955 = vmatprep.mubr.bf16.mxu0 0
        %2956 = vmatmul.mubr.bf16.gmra.mrb[0].mxu0 %v2807
        %v2957 = vpop.f32.mrb[0].mxu0
        %v2958 = vadd.f32 0.0, %v2957
        %v2959 = vpop.f32.mrb[0].mxu0
        %v2960 = vpop.f32.mrb[0].mxu0
        %v2961 = vadd.f32 0.0, %v2960
        %v2962 = vpop.f32.mrb[0].mxu0
        %2963 = vmatprep.mubr.bf16.mxu0 0
        %2964 = vmatmul.mubr.bf16.gmra.mrb[0].mxu0 %v2810
        %v2965 = vpop.f32.mrb[0].mxu0
        %v2966 = vadd.f32 0.0, %v2965
        %v2967 = vpop.f32.mrb[0].mxu0
        %v2968 = vpop.f32.mrb[0].mxu0
        %v2969 = vadd.f32 0.0, %v2968
        %v2970 = vpop.f32.mrb[0].mxu0
        %2971 = vmatprep.mubr.bf16.mxu0 0
        %2972 = vmatmul.mubr.bf16.gmra.mrb[0].mxu0 %v2813
        %v2973 = vpop.f32.mrb[0].mxu0
        %v2974 = vadd.f32 0.0, %v2973
        %v2975 = vpop.f32.mrb[0].mxu0
        %v2976 = vpop.f32.mrb[0].mxu0
        %v2977 = vadd.f32 0.0, %v2976
        %v2978 = vpop.f32.mrb[0].mxu0
        %2979 = vmatprep.mubr.bf16.mxu0 0
        %2980 = vmatmul.mubr.bf16.gmra.mrb[0].mxu0 %v2816
        %v2981 = vpop.f32.mrb[0].mxu0
        %v2982 = vadd.f32 0.0, %v2981
        %v2983 = vpop.f32.mrb[0].mxu0
        %v2984 = vpop.f32.mrb[0].mxu0
        %v2985 = vadd.f32 0.0, %v2984
        %v2986 = vpop.f32.mrb[0].mxu0
        %2987 = vmatprep.mubr.bf16.mxu0 0
        %2988 = vmatmul.mubr.bf16.gmra.mrb[0].mxu0 %v2819
        %v2989 = vpop.f32.mrb[0].mxu0
        %v2990 = vadd.f32 0.0, %v2989
        %v2991 = vpop.f32.mrb[0].mxu0
        %v2992 = vpop.f32.mrb[0].mxu0
        %v2993 = vadd.f32 0.0, %v2992
        %v2994 = vpop.f32.mrb[0].mxu0
        %2995 = vmatprep.mubr.bf16.mxu0 0
        %2996 = vmatmul.mubr.bf16.gmra.mrb[0].mxu0 %v2822
        %v2997 = vpop.f32.mrb[0].mxu0
        %v2998 = vadd.f32 0.0, %v2997
        %v2999 = vpop.f32.mrb[0].mxu0
        %v3000 = vpop.f32.mrb[0].mxu0
        %v3001 = vadd.f32 0.0, %v3000
        %v3002 = vpop.f32.mrb[0].mxu0
        %3003 = vdwg.mxu0
        %v3004 = vadd.f32 %v2694, %v2862
        %v3005 = vadd.f32 %v2695, %v2865
        %v3006 = vadd.f32 %v2696, %v2870
        %v3007 = vadd.f32 %v2697, %v2873
        %v3008 = vadd.f32 %v2698, %v2878
        %v3009 = vadd.f32 %v2699, %v2881
        %v3010 = vadd.f32 %v2700, %v2886
        %v3011 = vadd.f32 %v2701, %v2889
        %v3012 = vadd.f32 %v2702, %v2894
        %v3013 = vadd.f32 %v2703, %v2897
        %v3014 = vadd.f32 %v2704, %v2902
        %v3015 = vadd.f32 %v2705, %v2905
        %v3016 = vadd.f32 %v2706, %v2910
        %v3017 = vadd.f32 %v2707, %v2913
        %v3018 = vadd.f32 %v2708, %v2918
        %v3019 = vadd.f32 %v2709, %v2921
        %v3020 = vadd.f32 %v2710, %v2926
        %v3021 = vadd.f32 %v2711, %v2929
        %v3022 = vadd.f32 %v2712, %v2934
        %v3023 = vadd.f32 %v2713, %v2937
        %v3024 = vadd.f32 %v2714, %v2942
        %v3025 = vadd.f32 %v2715, %v2945
        %v3026 = vadd.f32 %v2716, %v2950
        %v3027 = vadd.f32 %v2717, %v2953
        %v3028 = vadd.f32 %v2718, %v2958
        %v3029 = vadd.f32 %v2719, %v2961
        %v3030 = vadd.f32 %v2720, %v2966
        %v3031 = vadd.f32 %v2721, %v2969
        %v3032 = vadd.f32 %v2722, %v2974
        %v3033 = vadd.f32 %v2723, %v2977
        %v3034 = vadd.f32 %v2724, %v2982
        %v3035 = vadd.f32 %v2725, %v2985
        %v3036 = vadd.f32 %v2726, %v2990
        %v3037 = vadd.f32 %v2727, %v2993
        %v3038 = vadd.f32 %v2728, %v2998
        %v3039 = vadd.f32 %v2729, %v3001
        %v3040 = vld [vmem:[#allocation2] sm:$0x1]
        %v3042 = vlaneseq
        %v3043 = vshrl.u32 %v3042, 7
        %v3044 = vsub.s32 0, %v3043
        %v3045 = vrot.slane %v3040, %v3044
        %v3047 = vadd.f32 %v3004, %v3045
        %v3048 = vadd.f32 %v3005, %v3045
        %v3049 = vadd.f32 %v3006, %v3045
        %v3050 = vadd.f32 %v3007, %v3045
        %v3051 = vadd.f32 %v3008, %v3045
        %v3052 = vadd.f32 %v3009, %v3045
        %v3053 = vadd.f32 %v3010, %v3045
        %v3054 = vadd.f32 %v3011, %v3045
        %v3055 = vadd.f32 %v3012, %v3045
        %v3056 = vadd.f32 %v3013, %v3045
        %v3057 = vadd.f32 %v3014, %v3045
        %v3058 = vadd.f32 %v3015, %v3045
        %v3059 = vadd.f32 %v3016, %v3045
        %v3060 = vadd.f32 %v3017, %v3045
        %v3061 = vadd.f32 %v3018, %v3045
        %v3062 = vadd.f32 %v3019, %v3045
        %v3063 = vadd.f32 %v3020, %v3045
        %v3064 = vadd.f32 %v3021, %v3045
        %v3065 = vadd.f32 %v3022, %v3045
        %v3066 = vadd.f32 %v3023, %v3045
        %v3067 = vadd.f32 %v3024, %v3045
        %v3068 = vadd.f32 %v3025, %v3045
        %v3069 = vadd.f32 %v3026, %v3045
        %v3070 = vadd.f32 %v3027, %v3045
        %v3071 = vadd.f32 %v3028, %v3045
        %v3072 = vadd.f32 %v3029, %v3045
        %v3073 = vadd.f32 %v3030, %v3045
        %v3074 = vadd.f32 %v3031, %v3045
        %v3075 = vadd.f32 %v3032, %v3045
        %v3076 = vadd.f32 %v3033, %v3045
        %v3077 = vadd.f32 %v3034, %v3045
        %v3078 = vadd.f32 %v3035, %v3045
        %v3079 = vadd.f32 %v3036, %v3045
        %v3080 = vadd.f32 %v3037, %v3045
        %v3081 = vadd.f32 %v3038, %v3045
        %v3082 = vadd.f32 %v3039, %v3045
        %v3083 = vmax.f32 %v3047, 0.0
        %v3084 = vmax.f32 %v3048, 0.0
        %v3085 = vmax.f32 %v3049, 0.0
        %v3086 = vmax.f32 %v3050, 0.0
        %v3087 = vmax.f32 %v3051, 0.0
        %v3088 = vmax.f32 %v3052, 0.0
        %v3089 = vmax.f32 %v3053, 0.0
        %v3090 = vmax.f32 %v3054, 0.0
        %v3091 = vmax.f32 %v3055, 0.0
        %v3092 = vmax.f32 %v3056, 0.0
        %v3093 = vmax.f32 %v3057, 0.0
        %v3094 = vmax.f32 %v3058, 0.0
        %v3095 = vmax.f32 %v3059, 0.0
        %v3096 = vmax.f32 %v3060, 0.0
        %v3097 = vmax.f32 %v3061, 0.0
        %v3098 = vmax.f32 %v3062, 0.0
        %v3099 = vmax.f32 %v3063, 0.0
        %v3100 = vmax.f32 %v3064, 0.0
        %v3101 = vmax.f32 %v3065, 0.0
        %v3102 = vmax.f32 %v3066, 0.0
        %v3103 = vmax.f32 %v3067, 0.0
        %v3104 = vmax.f32 %v3068, 0.0
        %v3105 = vmax.f32 %v3069, 0.0
        %v3106 = vmax.f32 %v3070, 0.0
        %v3107 = vmax.f32 %v3071, 0.0
        %v3108 = vmax.f32 %v3072, 0.0
        %v3109 = vmax.f32 %v3073, 0.0
        %v3110 = vmax.f32 %v3074, 0.0
        %v3111 = vmax.f32 %v3075, 0.0
        %v3112 = vmax.f32 %v3076, 0.0
        %v3113 = vmax.f32 %v3077, 0.0
        %v3114 = vmax.f32 %v3078, 0.0
        %v3115 = vmax.f32 %v3079, 0.0
        %v3116 = vmax.f32 %v3080, 0.0
        %v3117 = vmax.f32 %v3081, 0.0
        %v3118 = vmax.f32 %v3082, 0.0
        %v3119 = vpack.c.bf16 %v3084, %v3083
        %v3120 = vpack.c.bf16 %v3086, %v3085
        %v3121 = vpack.c.bf16 %v3088, %v3087
        %v3122 = vpack.c.bf16 %v3090, %v3089
        %v3123 = vpack.c.bf16 %v3092, %v3091
        %v3124 = vpack.c.bf16 %v3094, %v3093
        %v3125 = vpack.c.bf16 %v3096, %v3095
        %v3126 = vpack.c.bf16 %v3098, %v3097
        %v3127 = vpack.c.bf16 %v3100, %v3099
        %v3128 = vpack.c.bf16 %v3102, %v3101
        %v3129 = vpack.c.bf16 %v3104, %v3103
        %v3130 = vpack.c.bf16 %v3106, %v3105
        %v3131 = vpack.c.bf16 %v3108, %v3107
        %v3132 = vpack.c.bf16 %v3110, %v3109
        %v3133 = vpack.c.bf16 %v3112, %v3111
        %v3134 = vpack.c.bf16 %v3114, %v3113
        %v3135 = vpack.c.bf16 %v3116, %v3115
        %v3136 = vpack.c.bf16 %v3118, %v3117
        %v3155 = vunpack.c.l.b16 %v3119
        %v3156 = vunpack.c.h.b16 %v3119
        %v3157 = vunpack.c.l.b16 %v3120
        %v3158 = vunpack.c.h.b16 %v3120
        %v3159 = vunpack.c.l.b16 %v3121
        %v3160 = vunpack.c.h.b16 %v3121
        %v3161 = vunpack.c.l.b16 %v3122
        %v3162 = vunpack.c.h.b16 %v3122
        %v3163 = vunpack.c.l.b16 %v3123
        %v3164 = vunpack.c.h.b16 %v3123
        %v3165 = vunpack.c.l.b16 %v3124
        %v3166 = vunpack.c.h.b16 %v3124
        %v3167 = vunpack.c.l.b16 %v3125
        %v3168 = vunpack.c.h.b16 %v3125
        %v3169 = vunpack.c.l.b16 %v3126
        %v3170 = vunpack.c.h.b16 %v3126
        %v3171 = vunpack.c.l.b16 %v3127
        %v3172 = vunpack.c.h.b16 %v3127
        %v3173 = vunpack.c.l.b16 %v3128
        %v3174 = vunpack.c.h.b16 %v3128
        %v3175 = vunpack.c.l.b16 %v3129
        %v3176 = vunpack.c.h.b16 %v3129
        %v3177 = vunpack.c.l.b16 %v3130
        %v3178 = vunpack.c.h.b16 %v3130
        %v3179 = vunpack.c.l.b16 %v3131
        %v3180 = vunpack.c.h.b16 %v3131
        %v3181 = vunpack.c.l.b16 %v3132
        %v3182 = vunpack.c.h.b16 %v3132
        %v3183 = vunpack.c.l.b16 %v3133
        %v3184 = vunpack.c.h.b16 %v3133
        %v3185 = vunpack.c.l.b16 %v3134
        %v3186 = vunpack.c.h.b16 %v3134
        %v3187 = vunpack.c.l.b16 %v3135
        %v3188 = vunpack.c.h.b16 %v3135
        %v3189 = vunpack.c.l.b16 %v3136
        %v3190 = vunpack.c.h.b16 %v3136
        %v3191 = vpack.c.b16 %v3155, %v3155
        %v3192 = vpack.c.b16 %v3156, %v3156
        %v3193 = vpack.c.b16 %v3157, %v3157
        %v3194 = vpack.c.b16 %v3158, %v3158
        %v3195 = vpack.c.b16 %v3159, %v3159
        %v3196 = vpack.c.b16 %v3160, %v3160
        %v3197 = vpack.c.b16 %v3161, %v3161
        %v3198 = vpack.c.b16 %v3162, %v3162
        %v3199 = vpack.c.b16 %v3163, %v3163
        %v3200 = vpack.c.b16 %v3164, %v3164
        %v3201 = vpack.c.b16 %v3165, %v3165
        %v3202 = vpack.c.b16 %v3166, %v3166
        %v3203 = vpack.c.b16 %v3167, %v3167
        %v3204 = vpack.c.b16 %v3168, %v3168
        %v3205 = vpack.c.b16 %v3169, %v3169
        %v3206 = vpack.c.b16 %v3170, %v3170
        %v3207 = vpack.c.b16 %v3171, %v3171
        %v3208 = vpack.c.b16 %v3172, %v3172
        %v3209 = vpack.c.b16 %v3173, %v3173
        %v3210 = vpack.c.b16 %v3174, %v3174
        %v3211 = vpack.c.b16 %v3175, %v3175
        %v3212 = vpack.c.b16 %v3176, %v3176
        %v3213 = vpack.c.b16 %v3177, %v3177
        %v3214 = vpack.c.b16 %v3178, %v3178
        %v3215 = vpack.c.b16 %v3179, %v3179
        %v3216 = vpack.c.b16 %v3180, %v3180
        %v3217 = vpack.c.b16 %v3181, %v3181
        %v3218 = vpack.c.b16 %v3182, %v3182
        %v3219 = vpack.c.b16 %v3183, %v3183
        %v3220 = vpack.c.b16 %v3184, %v3184
        %v3221 = vpack.c.b16 %v3185, %v3185
        %v3222 = vpack.c.b16 %v3186, %v3186
        %v3223 = vpack.c.b16 %v3187, %v3187
        %v3224 = vpack.c.b16 %v3188, %v3188
        %v3225 = vpack.c.b16 %v3189, %v3189
        %v3226 = vpack.c.b16 %v3190, %v3190
        %vm3263 = vcmask 125952
        %3264 = vst.msk [vmem:[%s183] sm:$0xf] %vm3263, %v3191
        %3265 = vst.msk [vmem:[%s183 + $0x4] sm:$0xf] %vm3263, %v3192
        %3266 = vst.msk [vmem:[%s183 + $0x8] sm:$0xf] %vm3263, %v3193
        %3267 = vst.msk [vmem:[%s183 + $0xc] sm:$0xf] %vm3263, %v3194
        %3268 = vst.msk [vmem:[%s183 + $0x10] sm:$0xf] %vm3263, %v3195
        %3269 = vst.msk [vmem:[%s183 + $0x14] sm:$0xf] %vm3263, %v3196
        %3270 = vst.msk [vmem:[%s183 + $0x18] sm:$0xf] %vm3263, %v3197
        %3271 = vst.msk [vmem:[%s183 + $0x1c] sm:$0xf] %vm3263, %v3198
        %3272 = vst.msk [vmem:[%s183 + $0x20] sm:$0xf] %vm3263, %v3199
        %3273 = vst.msk [vmem:[%s183 + $0x24] sm:$0xf] %vm3263, %v3200
        %3274 = vst.msk [vmem:[%s183 + $0x28] sm:$0xf] %vm3263, %v3201
        %3275 = vst.msk [vmem:[%s183 + $0x2c] sm:$0xf] %vm3263, %v3202
        %3276 = vst.msk [vmem:[%s183 + $0x30] sm:$0xf] %vm3263, %v3203
        %3277 = vst.msk [vmem:[%s183 + $0x34] sm:$0xf] %vm3263, %v3204
        %3278 = vst.msk [vmem:[%s183 + $0x38] sm:$0xf] %vm3263, %v3205
        %3279 = vst.msk [vmem:[%s183 + $0x3c] sm:$0xf] %vm3263, %v3206
        %3280 = vst.msk [vmem:[%s183 + $0x40] sm:$0xf] %vm3263, %v3207
        %3281 = vst.msk [vmem:[%s183 + $0x44] sm:$0xf] %vm3263, %v3208
        %3282 = vst.msk [vmem:[%s183 + $0x48] sm:$0xf] %vm3263, %v3209
        %3283 = vst.msk [vmem:[%s183 + $0x4c] sm:$0xf] %vm3263, %v3210
        %3284 = vst.msk [vmem:[%s183 + $0x50] sm:$0xf] %vm3263, %v3211
        %3285 = vst.msk [vmem:[%s183 + $0x54] sm:$0xf] %vm3263, %v3212
        %3286 = vst.msk [vmem:[%s183 + $0x58] sm:$0xf] %vm3263, %v3213
        %3287 = vst.msk [vmem:[%s183 + $0x5c] sm:$0xf] %vm3263, %v3214
        %3288 = vst.msk [vmem:[%s183 + $0x60] sm:$0xf] %vm3263, %v3215
        %3289 = vst.msk [vmem:[%s183 + $0x64] sm:$0xf] %vm3263, %v3216
        %3290 = vst.msk [vmem:[%s183 + $0x68] sm:$0xf] %vm3263, %v3217
        %3291 = vst.msk [vmem:[%s183 + $0x6c] sm:$0xf] %vm3263, %v3218
        %3292 = vst.msk [vmem:[%s183 + $0x70] sm:$0xf] %vm3263, %v3219
        %3293 = vst.msk [vmem:[%s183 + $0x74] sm:$0xf] %vm3263, %v3220
        %3294 = vst.msk [vmem:[%s183 + $0x78] sm:$0xf] %vm3263, %v3221
        %3295 = vst.msk [vmem:[%s183 + $0x7c] sm:$0xf] %vm3263, %v3222
        %3296 = vst.msk [vmem:[%s183 + $0x80] sm:$0xf] %vm3263, %v3223
        %3297 = vst.msk [vmem:[%s183 + $0x84] sm:$0xf] %vm3263, %v3224
        %3298 = vst.msk [vmem:[%s183 + $0x88] sm:$0xf] %vm3263, %v3225
        %3299 = vst.msk [vmem:[%s183 + $0x8c] sm:$0xf] %vm3263, %v3226
        %p3300 = scmp.lt.s32.totalorder %s15, 1
        %s3301 = scalar_select %p3300, %s15, 1
        %s3302 = smul.addr %s3301, 36
        %s3303 = smul.addr %s3302, 4
        %s3304 = scalar_lea.vmem %s3, %s3303
        // Predicated region
        $region37: #{vgg_forward.9} parent=31 // pred_check
          %p3305 = pneg %p101
        $region38: #{vgg_forward.9} parent=31 // pred_check_branch
          %3307 = sbr.rel (%p3305) target = $region40
        $region39: #{vgg_forward.9} parent=31 // pred_region
          _
        $region40: #{vgg_forward.9} parent=31 // pred_fallthru
          _
      $region32: #{vgg_forward.9} parent=5 // pred_fallthru
        _
      %p3308 = scmp.le.s32.totalorder 2, %s10
      // Predicated region
      $region41: #{vgg_forward.9} parent=5 // pred_check
        %p3309 = pneg %p3308
      $region42: #{vgg_forward.9} parent=5 // pred_check_branch
        %3311 = sbr.rel (%p3309) target = $region44
      $region43: #{vgg_forward.9} parent=5 // pred_region
        %s3312 = ssub.s32 %s10, 2
        // Predicated region
        $region45: #{vgg_forward.9} parent=43 // pred_check
          %p3313 = pneg %p107
        $region46: #{vgg_forward.9} parent=43 // pred_check_branch
          %3315 = sbr.rel (%p3313) target = $region48
        $region47: #{vgg_forward.9} parent=43 // pred_region
          %p3316 = scmp.lt.s32.totalorder %s16, 1
          %s3317 = scalar_select %p3316, %s16, 1
          %s3318 = smul.addr %s3317, 36
          %s3319 = smul.addr %s3318, 4
          %s3320 = scalar_lea.vmem %s3, %s3319
        $region48: #{vgg_forward.9} parent=43 // pred_fallthru
          _
      $region44: #{vgg_forward.9} parent=5 // pred_fallthru
        _
    $region6: #{vgg_forward.9} parent=1 // loop_footer
      %s14 = sadd.s32 1, %s10
    $region7: #{vgg_forward.9} parent=1 // loop_footer_branch
      %9 = sbr.rel target = $region3
    $region8: #{vgg_forward.9} parent=1 // loop_exit
      _
    %3321 = vsyncpa [#allocation3], 1
    %s3322 = scalar_lea.sflag [#allocation3], 1
    %3323 = vsyncpa %s3322, 1

// kernel: vgg_forward.11
$region0: #{vgg_forward.11}
  #allocation0 [shape = 'u32[]', space=smem, size = 0x4, offset = 0x4, fixed_abs, tag = 'smem constant byte address 0x4 - core index']
  #allocation1 [shape = 'u32[144,128]{1,0:T(1,128)}', space=vmem, size = 0x12000, scoped, tag = 'internal scratch']
  %s0 = inlined_call_operand.vmem [shape: bf16[2,104,16], index: 0, kind: input, shape index: {}]
  %s1 = inlined_call_operand.vmem [shape: bf16[9,16,32], index: 1, kind: input, shape index: {}]
  %s2 = inlined_call_operand.vmem [shape: f32[1,32], index: 2, kind: input, shape index: {}]
  %s3 = inlined_call_operand.vmem [shape: bf16[2,80,32], index: 3, kind: output, shape index: {}]
  %s4 = sld [smem:[#allocation0]]
  $region45: #{vgg_forward.11} parent=0
    _
  %s6 = ssub.s32 1, %s4
  %s7 = scalar_select 0, %s6, %s4
  loop: start=0, step=1, limit=4
  $region2: #{vgg_forward.11} parent=0 // loop_pre_header
    _
  $region3: #{vgg_forward.11} parent=0 // loop_header
    %s9 = sphi 0, %s13
    %p10 = scmp.ge.s32.totalorder %s9, 4
    %s19 = sphi 0, %s21
    %s22 = sphi 0, %s19
    %s23 = sphi 0, %s22
    %s39 = sphi 0, %s23
    %s43 = sphi 0, %s43
    %s45 = sphi 0, %s43
    %s46 = sphi 0, %s45
    %s60 = sphi 0, %s46
    %s64 = sphi 0, %s64
    %s66 = sphi 0, %s64
    %s67 = sphi 0, %s66
    %s81 = sphi 0, %s67
    %s87 = sphi 0, %s89
    %s90 = sphi 0, %s87
    %s91 = sphi 0, %s90
    %s107 = sphi 0, %s91
  $region4: #{vgg_forward.11} parent=0 // loop_header_branch
    %12 = sbr.rel (%p10) target = $region8
  $region5: #{vgg_forward.11} parent=0 // loop_body
    %s14 = ssub.s32 %s9, 1
    %s15 = ssub.s32 %s9, 2
    %s16 = sadd.s32 %s9, 1
    %s17 = ssub.s32 %s9, %s16
    %p18 = scmp.eq.s32.totalorder %s17, 0
    %s20 = sadd.s32 %s19, 1
    %s21 = scalar_select %p18, %s19, %s20
    %p24 = pneg %p18
    %p25 = scmp.eq.s32.totalorder %s9, 1
    %p26 = por %p24, %p25
    %p27 = scmp.ne.s32.totalorder %s19, %s22
    %p28 = scmp.eq.s32.totalorder %s9, 0
    %p29 = por %p27, %p28
    %p30 = scmp.ne.s32.totalorder %s19, %s22
    %p31 = scmp.eq.s32.totalorder %s14, 1
    %p32 = por %p30, %p31
    %p33 = scmp.ne.s32.totalorder %s22, %s23
    %p34 = scmp.eq.s32.totalorder %s14, 0
    %p35 = por %p33, %p34
    %p36 = scmp.ne.s32.totalorder %s22, %s23
    %p37 = scmp.eq.s32.totalorder %s15, 1
    %p38 = por %p36, %p37
    %p40 = scmp.ne.s32.totalorder %s23, %s39
    %p41 = scmp.eq.s32.totalorder %s15, 0
    %p42 = por %p40, %p41
    %s44 = sadd.s32 %s43, 1
    %p47 = scmp.eq.s32.totalorder %s9, 1
    %p48 = scmp.ne.s32.totalorder %s43, %s45
    %p49 = scmp.eq.s32.totalorder %s9, 0
    %p50 = por %p48, %p49
    %p51 = scmp.ne.s32.totalorder %s43, %s45
    %p52 = scmp.eq.s32.totalorder %s14, 1
    %p53 = por %p51, %p52
    %p54 = scmp.ne.s32.totalorder %s45, %s46
    %p55 = scmp.eq.s32.totalorder %s14, 0
    %p56 = por %p54, %p55
    %p57 = scmp.ne.s32.totalorder %s45, %s46
    %p58 = scmp.eq.s32.totalorder %s15, 1
    %p59 = por %p57, %p58
    %p61 = scmp.ne.s32.totalorder %s46, %s60
    %p62 = scmp.eq.s32.totalorder %s15, 0
    %p63 = por %p61, %p62
    %s65 = sadd.s32 %s64, 1
    %p68 = scmp.eq.s32.totalorder %s9, 1
    %p69 = scmp.ne.s32.totalorder %s64, %s66
    %p70 = scmp.eq.s32.totalorder %s9, 0
    %p71 = por %p69, %p70
    %p72 = scmp.ne.s32.totalorder %s64, %s66
    %p73 = scmp.eq.s32.totalorder %s14, 1
    %p74 = por %p72, %p73
    %p75 = scmp.ne.s32.totalorder %s66, %s67
    %p76 = scmp.eq.s32.totalorder %s14, 0
    %p77 = por %p75, %p76
    %p78 = scmp.ne.s32.totalorder %s66, %s67
    %p79 = scmp.eq.s32.totalorder %s15, 1
    %p80 = por %p78, %p79
    %p82 = scmp.ne.s32.totalorder %s67, %s81
    %p83 = scmp.eq.s32.totalorder %s15, 0
    %p84 = por %p82, %p83
    %s85 = ssub.s32 %s9, %s16
    %p86 = scmp.eq.s32.totalorder %s85, 0
    %s88 = sadd.s32 %s87, 1
    %s89 = scalar_select %p86, %s87, %s88
    %p92 = pneg %p86
    %p93 = scmp.eq.s32.totalorder %s9, 1
    %p94 = por %p92, %p93
    %p95 = scmp.ne.s32.totalorder %s87, %s90
    %p96 = scmp.eq.s32.totalorder %s9, 0
    %p97 = por %p95, %p96
    %p98 = scmp.ne.s32.totalorder %s87, %s90
    %p99 = scmp.eq.s32.totalorder %s14, 1
    %p100 = por %p98, %p99
    %p101 = scmp.ne.s32.totalorder %s90, %s91
    %p102 = scmp.eq.s32.totalorder %s14, 0
    %p103 = por %p101, %p102
    %p104 = scmp.ne.s32.totalorder %s90, %s91
    %p105 = scmp.eq.s32.totalorder %s15, 1
    %p106 = por %p104, %p105
    %p108 = scmp.ne.s32.totalorder %s91, %s107
    %p109 = scmp.eq.s32.totalorder %s15, 0
    %p110 = por %p108, %p109
    %p111 = scmp.le.s32.totalorder 1, %s9
    %p112 = scmp.lt.s32.totalorder %s9, 3
    %p113 = pnand %p111, %p112
    %p114 = pneg %p113
    // Predicated region
    $region9: #{vgg_forward.11} parent=5 // pred_check
      _
    $region10: #{vgg_forward.11} parent=5 // pred_check_branch
      %116 = sbr.rel (%p113) target = $region12
    $region11: #{vgg_forward.11} parent=5 // pred_region
      %s117 = ssub.s32 %s9, 1
      // Predicated region
      $region13: #{vgg_forward.11} parent=11 // pred_check
        %p118 = pneg %p56
      $region14: #{vgg_forward.11} parent=11 // pred_check_branch
        %120 = sbr.rel (%p118) target = $region16
      $region15: #{vgg_forward.11} parent=11 // pred_region
        _
      $region16: #{vgg_forward.11} parent=11 // pred_fallthru
        _
      // Predicated region
      $region17: #{vgg_forward.11} parent=11 // pred_check
        %p121 = pneg %p77
      $region18: #{vgg_forward.11} parent=11 // pred_check_branch
        %123 = sbr.rel (%p121) target = $region20
      $region19: #{vgg_forward.11} parent=11 // pred_region
        _
      $region20: #{vgg_forward.11} parent=11 // pred_fallthru
        _
    $region12: #{vgg_forward.11} parent=5 // pred_fallthru
      _
    %p124 = scmp.lt.s32.totalorder %s9, 2
    // Predicated region
    $region21: #{vgg_forward.11} parent=5 // pred_check
      %p125 = pneg %p124
    $region22: #{vgg_forward.11} parent=5 // pred_check_branch
      %127 = sbr.rel (%p125) target = $region24
    $region23: #{vgg_forward.11} parent=5 // pred_region
      // Predicated region
      $region25: #{vgg_forward.11} parent=23 // pred_check
        %p128 = pneg %p29
      $region26: #{vgg_forward.11} parent=23 // pred_check_branch
        %130 = sbr.rel (%p128) target = $region28
      $region27: #{vgg_forward.11} parent=23 // pred_region
        %p131 = scmp.lt.s32.totalorder %s9, 1
        %s132 = scalar_select %p131, %s9, 1
        %s133 = smul.addr %s132, 13
        %s134 = smul.addr %s133, 4
        %s135 = scalar_lea.vmem %s0, %s134
      $region28: #{vgg_forward.11} parent=23 // pred_fallthru
        _
    $region24: #{vgg_forward.11} parent=5 // pred_fallthru
      _
    %p136 = scmp.le.s32.totalorder 1, %s9
    %p137 = scmp.lt.s32.totalorder %s9, 3
    %p138 = pnand %p136, %p137
    %p139 = pneg %p138
    // Predicated region
    $region29: #{vgg_forward.11} parent=5 // pred_check
      _
    $region30: #{vgg_forward.11} parent=5 // pred_check_branch
      %141 = sbr.rel (%p138) target = $region32
    $region31: #{vgg_forward.11} parent=5 // pred_region
      %s142 = ssub.s32 %s9, 1
      %p143 = scmp.lt.s32.totalorder %s14, 1
      %s144 = scalar_select %p143, %s14, 1
      %s145 = smul.addr %s144, 13
      %s146 = smul.addr %s145, 4
      %s147 = scalar_lea.vmem %s0, %s146
      %p148 = pneg %p35
      %p149 = pneg %p32
      %p150 = pneg %p56
      %p151 = pneg %p53
      %p152 = pneg %p77
      %p153 = pneg %p74
      %p154 = pneg %p103
      %p155 = pneg %p100
      %p156 = scmp.lt.s32.totalorder %s14, 1
      %s157 = scalar_select %p156, %s14, 1
      %s158 = smul.addr %s157, 10
      %s159 = smul.addr %s158, 4
      %s160 = scalar_lea.vmem %s3, %s159
      %p161 = scmp.lt.s32.totalorder %s14, 1
      %s162 = scalar_select %p161, %s14, 1
      %s163 = smul.addr %s162, 13
      %s164 = smul.addr %s163, 4
      %s165 = scalar_lea.vmem %s0, %s164
      %p166 = scmp.lt.s32.totalorder %s14, 1
      %s167 = scalar_select %p166, %s14, 1
      %s168 = smul.addr %s167, 10
      %s169 = smul.addr %s168, 4
      %s170 = scalar_lea.vmem %s3, %s169
      %v172 = vld [vmem:[%s165] sm:$0xf]
      %v173 = vld [vmem:[%s165 + $0x4] sm:$0xf]
      %v174 = vld [vmem:[%s165 + $0x8] sm:$0xf]
      %v175 = vld [vmem:[%s165 + $0xc] sm:$0xf]
      %v176 = vld [vmem:[%s165 + $0x10] sm:$0xf]
      %v177 = vld [vmem:[%s165 + $0x14] sm:$0xf]
      %v178 = vld [vmem:[%s165 + $0x18] sm:$0xf]
      %v179 = vld [vmem:[%s165 + $0x1c] sm:$0xf]
      %v180 = vld [vmem:[%s165 + $0x20] sm:$0xf]
      %v181 = vld [vmem:[%s165 + $0x24] sm:$0xf]
      %v182 = vld [vmem:[%s165 + $0x28] sm:$0xf]
      %v183 = vld [vmem:[%s165 + $0x2c] sm:$0xf]
      %v184 = vld [vmem:[%s165 + $0x30] sm:$0xf]
      %v185 = vld [vmem:[%s1] sm:$0xf]
      %v186 = vld [vmem:[%s1 + $0x4] sm:$0xf]
      %s187 = scalar_lea.vmem %s1, 8
      %v188 = vld [vmem:[%s187] sm:$0xf]
      %v189 = vld [vmem:[%s187 + $0x4] sm:$0xf]
      %v201 = vunpack.c.l.b16 %v172
      %v202 = vunpack.c.l.b16 %v173
      %v203 = vunpack.c.l.b16 %v174
      %v204 = vunpack.c.l.b16 %v175
      %v205 = vunpack.c.l.b16 %v176
      %v206 = vunpack.c.l.b16 %v177
      %v207 = vunpack.c.l.b16 %v178
      %v208 = vunpack.c.l.b16 %v179
      %v209 = vunpack.c.l.b16 %v180
      %v210 = vunpack.c.l.b16 %v181
      %v211 = vunpack.c.l.b16 %v182
      %v212 = vpack.c.b16 %v202, %v201
      %v213 = vpack.c.b16 %v204, %v203
      %v214 = vpack.c.b16 %v206, %v205
      %v215 = vpack.c.b16 %v208, %v207
      %v216 = vpack.c.b16 %v210, %v209
      %v217 = vpack.c.b16 %v211, %v211
      %vm218 = vsmask.f32 7424
      %v220 = vshrl.u32 %v212, 16
      %v222 = vshll.u32 %v212, 16
      %v224 = vrot.slane %v222, 1
      %v225 = vor.u32 %v220, %v224
      %v227 = vshll.u32 %v213, 16
      %v229 = vrot.slane %v227, 1
      %v230 = vsel %vm218, %v225, %v229
      %v231 = vshrl.u32 %v213, 16
      %v233 = vor.u32 %v231, %v229
      %v235 = vshll.u32 %v214, 16
      %v237 = vrot.slane %v235, 1
      %v238 = vsel %vm218, %v233, %v237
      %v239 = vshrl.u32 %v214, 16
      %v241 = vor.u32 %v239, %v237
      %v243 = vshll.u32 %v215, 16
      %v245 = vrot.slane %v243, 1
      %v246 = vsel %vm218, %v241, %v245
      %v247 = vshrl.u32 %v215, 16
      %v249 = vor.u32 %v247, %v245
      %v251 = vshll.u32 %v216, 16
      %v253 = vrot.slane %v251, 1
      %v254 = vsel %vm218, %v249, %v253
      %v255 = vshrl.u32 %v216, 16
      %v257 = vor.u32 %v255, %v253
      %v259 = vshll.u32 %v217, 16
      %v261 = vrot.slane %v259, 1
      %v262 = vsel %vm218, %v257, %v261
      %v265 = vunpack.c.l.b16 %v188
      %v266 = vunpack.c.l.b16 %v189
      %v267 = vpack.c.b16 %v266, %v265
      %vm269 = vcmask 130048
      %v271 = vsel %vm269, %v230, 0
      %v274 = vsel %vm269, %v238, 0
      %v277 = vsel %vm269, %v246, 0
      %v280 = vsel %vm269, %v254, 0
      %v283 = vsel %vm269, %v262, 0
      %285 = vmatprep.subr.bf16.mxu0 0
      %286 = vmatpush1.bf16.msra.mxu0 %v267
      %287 = vmatprep.subr.bf16.mxu0 0
      %288 = vmatpush1.bf16.msra.mxu0 0
      %289 = vmatprep.subr.bf16.mxu0 0
      %290 = vmatpush1.bf16.msra.mxu0 0
      %291 = vmatprep.subr.bf16.mxu0 0
      %292 = vmatpush1.bf16.msra.mxu0 0
      %293 = vmatprep.subr.bf16.mxu0 0
      %294 = vmatpush1.bf16.msra.mxu0 0
      %295 = vmatprep.subr.bf16.mxu0 0
      %296 = vmatpush1.bf16.msra.mxu0 0
      %297 = vmatprep.subr.bf16.mxu0 0
      %298 = vmatpush1.bf16.msra.mxu0 0
      %299 = vmatprep.subr.bf16.mxu0 0
      %300 = vmatpush1.bf16.msra.mxu0 0
      %301 = vmatprep.subr.bf16.mxu0 0
      %302 = vmatpush1.bf16.msra.mxu0 0
      %303 = vmatprep.subr.bf16.mxu0 0
      %304 = vmatpush1.bf16.msra.mxu0 0
      %305 = vmatprep.subr.bf16.mxu0 0
      %306 = vmatpush1.bf16.msra.mxu0 0
      %307 = vmatprep.subr.bf16.mxu0 0
      %308 = vmatpush1.bf16.msra.mxu0 0
      %309 = vmatprep.subr.bf16.mxu0 0
      %310 = vmatpush1.bf16.msra.mxu0 0
      %311 = vmatprep.subr.bf16.mxu0 0
      %312 = vmatpush1.bf16.msra.mxu0 0
      %313 = vmatprep.subr.bf16.mxu0 0
      %314 = vmatpush1.bf16.msra.mxu0 0
      %315 = vmatprep.subr.bf16.mxu0 0
      %316 = vmatpush1.bf16.msra.mxu0 0
      %317 = vmatprep.mubr.bf16.mxu0 0
      %318 = vmatmul.mubr.bf16.gmra.mrb[0].mxu0 %v271
      %v319 = vpop.f32.mrb[0].mxu0
      %v320 = vadd.f32 0.0, %v319
      %v321 = vpop.f32.mrb[0].mxu0
      %v322 = vpop.f32.mrb[0].mxu0
      %v323 = vadd.f32 0.0, %v322
      %v324 = vpop.f32.mrb[0].mxu0
      %325 = vmatprep.mubr.bf16.mxu0 0
      %326 = vmatmul.mubr.bf16.gmra.mrb[0].mxu0 %v274
      %v327 = vpop.f32.mrb[0].mxu0
      %v328 = vadd.f32 0.0, %v327
      %v329 = vpop.f32.mrb[0].mxu0
      %v330 = vpop.f32.mrb[0].mxu0
      %v331 = vadd.f32 0.0, %v330
      %v332 = vpop.f32.mrb[0].mxu0
      %333 = vmatprep.mubr.bf16.mxu0 0
      %334 = vmatmul.mubr.bf16.gmra.mrb[0].mxu0 %v277
      %v335 = vpop.f32.mrb[0].mxu0
      %v336 = vadd.f32 0.0, %v335
      %v337 = vpop.f32.mrb[0].mxu0
      %v338 = vpop.f32.mrb[0].mxu0
      %v339 = vadd.f32 0.0, %v338
      %v340 = vpop.f32.mrb[0].mxu0
      %341 = vmatprep.mubr.bf16.mxu0 0
      %342 = vmatmul.mubr.bf16.gmra.mrb[0].mxu0 %v280
      %v343 = vpop.f32.mrb[0].mxu0
      %v344 = vadd.f32 0.0, %v343
      %v345 = vpop.f32.mrb[0].mxu0
      %v346 = vpop.f32.mrb[0].mxu0
      %v347 = vadd.f32 0.0, %v346
      %v348 = vpop.f32.mrb[0].mxu0
      %349 = vmatprep.mubr.bf16.mxu0 0
      %350 = vmatmul.mubr.bf16.gmra.mrb[0].mxu0 %v283
      %v351 = vpop.f32.mrb[0].mxu0
      %v352 = vadd.f32 0.0, %v351
      %v353 = vpop.f32.mrb[0].mxu0
      %v354 = vpop.f32.mrb[0].mxu0
      %v355 = vadd.f32 0.0, %v354
      %v356 = vpop.f32.mrb[0].mxu0
      %357 = vdwg.mxu0
      %v360 = vunpack.c.l.b16 %v185
      %v361 = vunpack.c.l.b16 %v186
      %v362 = vpack.c.b16 %v361, %v360
      %v364 = vsel %vm269, %v212, 0
      %v366 = vsel %vm269, %v213, 0
      %v368 = vsel %vm269, %v214, 0
      %v370 = vsel %vm269, %v215, 0
      %v372 = vsel %vm269, %v216, 0
      %374 = vmatprep.subr.bf16.mxu0 0
      %375 = vmatpush1.bf16.msra.mxu0 %v362
      %376 = vmatprep.subr.bf16.mxu0 0
      %377 = vmatpush1.bf16.msra.mxu0 0
      %378 = vmatprep.subr.bf16.mxu0 0
      %379 = vmatpush1.bf16.msra.mxu0 0
      %380 = vmatprep.subr.bf16.mxu0 0
      %381 = vmatpush1.bf16.msra.mxu0 0
      %382 = vmatprep.subr.bf16.mxu0 0
      %383 = vmatpush1.bf16.msra.mxu0 0
      %384 = vmatprep.subr.bf16.mxu0 0
      %385 = vmatpush1.bf16.msra.mxu0 0
      %386 = vmatprep.subr.bf16.mxu0 0
      %387 = vmatpush1.bf16.msra.mxu0 0
      %388 = vmatprep.subr.bf16.mxu0 0
      %389 = vmatpush1.bf16.msra.mxu0 0
      %390 = vmatprep.subr.bf16.mxu0 0
      %391 = vmatpush1.bf16.msra.mxu0 0
      %392 = vmatprep.subr.bf16.mxu0 0
      %393 = vmatpush1.bf16.msra.mxu0 0
      %394 = vmatprep.subr.bf16.mxu0 0
      %395 = vmatpush1.bf16.msra.mxu0 0
      %396 = vmatprep.subr.bf16.mxu0 0
      %397 = vmatpush1.bf16.msra.mxu0 0
      %398 = vmatprep.subr.bf16.mxu0 0
      %399 = vmatpush1.bf16.msra.mxu0 0
      %400 = vmatprep.subr.bf16.mxu0 0
      %401 = vmatpush1.bf16.msra.mxu0 0
      %402 = vmatprep.subr.bf16.mxu0 0
      %403 = vmatpush1.bf16.msra.mxu0 0
      %404 = vmatprep.subr.bf16.mxu0 0
      %405 = vmatpush1.bf16.msra.mxu0 0
      %406 = vmatprep.mubr.bf16.mxu0 0
      %407 = vmatmul.mubr.bf16.gmra.mrb[0].mxu0 %v364
      %v408 = vpop.f32.mrb[0].mxu0
      %v409 = vadd.f32 %v320, %v408
      %v410 = vpop.f32.mrb[0].mxu0
      %v411 = vpop.f32.mrb[0].mxu0
      %v412 = vadd.f32 %v323, %v411
      %v413 = vpop.f32.mrb[0].mxu0
      %414 = vmatprep.mubr.bf16.mxu0 0
      %415 = vmatmul.mubr.bf16.gmra.mrb[0].mxu0 %v366
      %v416 = vpop.f32.mrb[0].mxu0
      %v417 = vadd.f32 %v328, %v416
      %v418 = vpop.f32.mrb[0].mxu0
      %v419 = vpop.f32.mrb[0].mxu0
      %v420 = vadd.f32 %v331, %v419
      %v421 = vpop.f32.mrb[0].mxu0
      %422 = vmatprep.mubr.bf16.mxu0 0
      %423 = vmatmul.mubr.bf16.gmra.mrb[0].mxu0 %v368
      %v424 = vpop.f32.mrb[0].mxu0
      %v425 = vadd.f32 %v336, %v424
      %v426 = vpop.f32.mrb[0].mxu0
      %v427 = vpop.f32.mrb[0].mxu0
      %v428 = vadd.f32 %v339, %v427
      %v429 = vpop.f32.mrb[0].mxu0
      %430 = vmatprep.mubr.bf16.mxu0 0
      %431 = vmatmul.mubr.bf16.gmra.mrb[0].mxu0 %v370
      %v432 = vpop.f32.mrb[0].mxu0
      %v433 = vadd.f32 %v344, %v432
      %v434 = vpop.f32.mrb[0].mxu0
      %v435 = vpop.f32.mrb[0].mxu0
      %v436 = vadd.f32 %v347, %v435
      %v437 = vpop.f32.mrb[0].mxu0
      %438 = vmatprep.mubr.bf16.mxu0 0
      %439 = vmatmul.mubr.bf16.gmra.mrb[0].mxu0 %v372
      %v440 = vpop.f32.mrb[0].mxu0
      %v441 = vadd.f32 %v352, %v440
      %v442 = vpop.f32.mrb[0].mxu0
      %v443 = vpop.f32.mrb[0].mxu0
      %v444 = vadd.f32 %v355, %v443
      %v445 = vpop.f32.mrb[0].mxu0
      %446 = vdwg.mxu0
      %s447 = scalar_lea.vmem %s1, 16
      %v448 = vld [vmem:[%s447] sm:$0xf]
      %v449 = vld [vmem:[%s447 + $0x4] sm:$0xf]
      %vm450 = vcmask 1046528
      %v451 = vrot.slane %v212, 1
      %v452 = vrot.slane %v213, 1
      %v453 = vsel %vm450, %v451, %v452
      %v454 = vrot.slane %v214, 1
      %v455 = vsel %vm450, %v452, %v454
      %v456 = vrot.slane %v215, 1
      %v457 = vsel %vm450, %v454, %v456
      %v458 = vrot.slane %v216, 1
      %v459 = vsel %vm450, %v456, %v458
      %v460 = vrot.slane %v217, 1
      %v461 = vsel %vm450, %v458, %v460
      %v464 = vunpack.c.l.b16 %v448
      %v465 = vunpack.c.l.b16 %v449
      %v466 = vpack.c.b16 %v465, %v464
      %v469 = vsel %vm269, %v453, 0
      %v472 = vsel %vm269, %v455, 0
      %v475 = vsel %vm269, %v457, 0
      %v478 = vsel %vm269, %v459, 0
      %v481 = vsel %vm269, %v461, 0
      %483 = vmatprep.subr.bf16.mxu0 0
      %484 = vmatpush1.bf16.msra.mxu0 %v466
      %485 = vmatprep.subr.bf16.mxu0 0
      %486 = vmatpush1.bf16.msra.mxu0 0
      %487 = vmatprep.subr.bf16.mxu0 0
      %488 = vmatpush1.bf16.msra.mxu0 0
      %489 = vmatprep.subr.bf16.mxu0 0
      %490 = vmatpush1.bf16.msra.mxu0 0
      %491 = vmatprep.subr.bf16.mxu0 0
      %492 = vmatpush1.bf16.msra.mxu0 0
      %493 = vmatprep.subr.bf16.mxu0 0
      %494 = vmatpush1.bf16.msra.mxu0 0
      %495 = vmatprep.subr.bf16.mxu0 0
      %496 = vmatpush1.bf16.msra.mxu0 0
      %497 = vmatprep.subr.bf16.mxu0 0
      %498 = vmatpush1.bf16.msra.mxu0 0
      %499 = vmatprep.subr.bf16.mxu0 0
      %500 = vmatpush1.bf16.msra.mxu0 0
      %501 = vmatprep.subr.bf16.mxu0 0
      %502 = vmatpush1.bf16.msra.mxu0 0
      %503 = vmatprep.subr.bf16.mxu0 0
      %504 = vmatpush1.bf16.msra.mxu0 0
      %505 = vmatprep.subr.bf16.mxu0 0
      %506 = vmatpush1.bf16.msra.mxu0 0
      %507 = vmatprep.subr.bf16.mxu0 0
      %508 = vmatpush1.bf16.msra.mxu0 0
      %509 = vmatprep.subr.bf16.mxu0 0
      %510 = vmatpush1.bf16.msra.mxu0 0
      %511 = vmatprep.subr.bf16.mxu0 0
      %512 = vmatpush1.bf16.msra.mxu0 0
      %513 = vmatprep.subr.bf16.mxu0 0
      %514 = vmatpush1.bf16.msra.mxu0 0
      %515 = vmatprep.mubr.bf16.mxu0 0
      %516 = vmatmul.mubr.bf16.gmra.mrb[0].mxu0 %v469
      %v517 = vpop.f32.mrb[0].mxu0
      %v518 = vadd.f32 0.0, %v517
      %v519 = vpop.f32.mrb[0].mxu0
      %v520 = vpop.f32.mrb[0].mxu0
      %v521 = vadd.f32 0.0, %v520
      %v522 = vpop.f32.mrb[0].mxu0
      %523 = vmatprep.mubr.bf16.mxu0 0
      %524 = vmatmul.mubr.bf16.gmra.mrb[0].mxu0 %v472
      %v525 = vpop.f32.mrb[0].mxu0
      %v526 = vadd.f32 0.0, %v525
      %v527 = vpop.f32.mrb[0].mxu0
      %v528 = vpop.f32.mrb[0].mxu0
      %v529 = vadd.f32 0.0, %v528
      %v530 = vpop.f32.mrb[0].mxu0
      %531 = vmatprep.mubr.bf16.mxu0 0
      %532 = vmatmul.mubr.bf16.gmra.mrb[0].mxu0 %v475
      %v533 = vpop.f32.mrb[0].mxu0
      %v534 = vadd.f32 0.0, %v533
      %v535 = vpop.f32.mrb[0].mxu0
      %v536 = vpop.f32.mrb[0].mxu0
      %v537 = vadd.f32 0.0, %v536
      %v538 = vpop.f32.mrb[0].mxu0
      %539 = vmatprep.mubr.bf16.mxu0 0
      %540 = vmatmul.mubr.bf16.gmra.mrb[0].mxu0 %v478
      %v541 = vpop.f32.mrb[0].mxu0
      %v542 = vadd.f32 0.0, %v541
      %v543 = vpop.f32.mrb[0].mxu0
      %v544 = vpop.f32.mrb[0].mxu0
      %v545 = vadd.f32 0.0, %v544
      %v546 = vpop.f32.mrb[0].mxu0
      %547 = vmatprep.mubr.bf16.mxu0 0
      %548 = vmatmul.mubr.bf16.gmra.mrb[0].mxu0 %v481
      %v549 = vpop.f32.mrb[0].mxu0
      %v550 = vadd.f32 0.0, %v549
      %v551 = vpop.f32.mrb[0].mxu0
      %v552 = vpop.f32.mrb[0].mxu0
      %v553 = vadd.f32 0.0, %v552
      %v554 = vpop.f32.mrb[0].mxu0
      %555 = vdwg.mxu0
      %v556 = vadd.f32 %v409, %v518
      %v557 = vadd.f32 %v412, %v521
      %v558 = vadd.f32 %v417, %v526
      %v559 = vadd.f32 %v420, %v529
      %v560 = vadd.f32 %v425, %v534
      %v561 = vadd.f32 %v428, %v537
      %v562 = vadd.f32 %v433, %v542
      %v563 = vadd.f32 %v436, %v545
      %v564 = vadd.f32 %v441, %v550
      %v565 = vadd.f32 %v444, %v553
      %s566 = scalar_lea.vmem %s1, 24
      %v567 = vld [vmem:[%s566] sm:$0xf]
      %v568 = vld [vmem:[%s566 + $0x4] sm:$0xf]
      %v570 = vunpack.c.l.b16 %v183
      %v571 = vpack.c.b16 %v203, %v202
      %v572 = vpack.c.b16 %v205, %v204
      %v573 = vpack.c.b16 %v207, %v206
      %v574 = vpack.c.b16 %v209, %v208
      %v575 = vpack.c.b16 %v211, %v210
      %v576 = vpack.c.b16 %v570, %v570
      %v577 = vrot.slane %v571, 1
      %v578 = vrot.slane %v572, 1
      %v579 = vsel %vm450, %v577, %v578
      %v580 = vrot.slane %v573, 1
      %v581 = vsel %vm450, %v578, %v580
      %v582 = vrot.slane %v574, 1
      %v583 = vsel %vm450, %v580, %v582
      %v584 = vrot.slane %v575, 1
      %v585 = vsel %vm450, %v582, %v584
      %v586 = vrot.slane %v576, 1
      %v587 = vsel %vm450, %v584, %v586
      %v590 = vunpack.c.l.b16 %v567
      %v591 = vunpack.c.l.b16 %v568
      %v592 = vpack.c.b16 %v591, %v590
      %v595 = vsel %vm269, %v579, 0
      %v598 = vsel %vm269, %v581, 0
      %v601 = vsel %vm269, %v583, 0
      %v604 = vsel %vm269, %v585, 0
      %v607 = vsel %vm269, %v587, 0
      %609 = vmatprep.subr.bf16.mxu0 0
      %610 = vmatpush1.bf16.msra.mxu0 %v592
      %611 = vmatprep.subr.bf16.mxu0 0
      %612 = vmatpush1.bf16.msra.mxu0 0
      %613 = vmatprep.subr.bf16.mxu0 0
      %614 = vmatpush1.bf16.msra.mxu0 0
      %615 = vmatprep.subr.bf16.mxu0 0
      %616 = vmatpush1.bf16.msra.mxu0 0
      %617 = vmatprep.subr.bf16.mxu0 0
      %618 = vmatpush1.bf16.msra.mxu0 0
      %619 = vmatprep.subr.bf16.mxu0 0
      %620 = vmatpush1.bf16.msra.mxu0 0
      %621 = vmatprep.subr.bf16.mxu0 0
      %622 = vmatpush1.bf16.msra.mxu0 0
      %623 = vmatprep.subr.bf16.mxu0 0
      %624 = vmatpush1.bf16.msra.mxu0 0
      %625 = vmatprep.subr.bf16.mxu0 0
      %626 = vmatpush1.bf16.msra.mxu0 0
      %627 = vmatprep.subr.bf16.mxu0 0
      %628 = vmatpush1.bf16.msra.mxu0 0
      %629 = vmatprep.subr.bf16.mxu0 0
      %630 = vmatpush1.bf16.msra.mxu0 0
      %631 = vmatprep.subr.bf16.mxu0 0
      %632 = vmatpush1.bf16.msra.mxu0 0
      %633 = vmatprep.subr.bf16.mxu0 0
      %634 = vmatpush1.bf16.msra.mxu0 0
      %635 = vmatprep.subr.bf16.mxu0 0
      %636 = vmatpush1.bf16.msra.mxu0 0
      %637 = vmatprep.subr.bf16.mxu0 0
      %638 = vmatpush1.bf16.msra.mxu0 0
      %639 = vmatprep.subr.bf16.mxu0 0
      %640 = vmatpush1.bf16.msra.mxu0 0
      %641 = vmatprep.mubr.bf16.mxu0 0
      %642 = vmatmul.mubr.bf16.gmra.mrb[0].mxu0 %v595
      %v643 = vpop.f32.mrb[0].mxu0
      %v644 = vadd.f32 0.0, %v643
      %v645 = vpop.f32.mrb[0].mxu0
      %v646 = vpop.f32.mrb[0].mxu0
      %v647 = vadd.f32 0.0, %v646
      %v648 = vpop.f32.mrb[0].mxu0
      %649 = vmatprep.mubr.bf16.mxu0 0
      %650 = vmatmul.mubr.bf16.gmra.mrb[0].mxu0 %v598
      %v651 = vpop.f32.mrb[0].mxu0
      %v652 = vadd.f32 0.0, %v651
      %v653 = vpop.f32.mrb[0].mxu0
      %v654 = vpop.f32.mrb[0].mxu0
      %v655 = vadd.f32 0.0, %v654
      %v656 = vpop.f32.mrb[0].mxu0
      %657 = vmatprep.mubr.bf16.mxu0 0
      %658 = vmatmul.mubr.bf16.gmra.mrb[0].mxu0 %v601
      %v659 = vpop.f32.mrb[0].mxu0
      %v660 = vadd.f32 0.0, %v659
      %v661 = vpop.f32.mrb[0].mxu0
      %v662 = vpop.f32.mrb[0].mxu0
      %v663 = vadd.f32 0.0, %v662
      %v664 = vpop.f32.mrb[0].mxu0
      %665 = vmatprep.mubr.bf16.mxu0 0
      %666 = vmatmul.mubr.bf16.gmra.mrb[0].mxu0 %v604
      %v667 = vpop.f32.mrb[0].mxu0
      %v668 = vadd.f32 0.0, %v667
      %v669 = vpop.f32.mrb[0].mxu0
      %v670 = vpop.f32.mrb[0].mxu0
      %v671 = vadd.f32 0.0, %v670
      %v672 = vpop.f32.mrb[0].mxu0
      %673 = vmatprep.mubr.bf16.mxu0 0
      %674 = vmatmul.mubr.bf16.gmra.mrb[0].mxu0 %v607
      %v675 = vpop.f32.mrb[0].mxu0
      %v676 = vadd.f32 0.0, %v675
      %v677 = vpop.f32.mrb[0].mxu0
      %v678 = vpop.f32.mrb[0].mxu0
      %v679 = vadd.f32 0.0, %v678
      %v680 = vpop.f32.mrb[0].mxu0
      %681 = vdwg.mxu0
      %v682 = vadd.f32 %v556, %v644
      %v683 = vadd.f32 %v557, %v647
      %v684 = vadd.f32 %v558, %v652
      %v685 = vadd.f32 %v559, %v655
      %v686 = vadd.f32 %v560, %v660
      %v687 = vadd.f32 %v561, %v663
      %v688 = vadd.f32 %v562, %v668
      %v689 = vadd.f32 %v563, %v671
      %v690 = vadd.f32 %v564, %v676
      %v691 = vadd.f32 %v565, %v679
      %s692 = scalar_lea.vmem %s1, 32
      %v693 = vld [vmem:[%s692] sm:$0xf]
      %v694 = vld [vmem:[%s692 + $0x4] sm:$0xf]
      %vm695 = vsmask.f32 6400
      %v697 = vshrl.u32 %v571, 16
      %v699 = vrot.slane %v697, 1
      %v700 = vshll.u32 %v571, 16
      %v702 = vrot.slane %v700, 2
      %v703 = vor.u32 %v699, %v702
      %v705 = vshrl.u32 %v572, 16
      %v707 = vrot.slane %v705, 1
      %v708 = vshll.u32 %v572, 16
      %v710 = vrot.slane %v708, 2
      %v711 = vor.u32 %v707, %v710
      %v712 = vsel %vm695, %v703, %v711
      %v714 = vshrl.u32 %v573, 16
      %v716 = vrot.slane %v714, 1
      %v717 = vshll.u32 %v573, 16
      %v719 = vrot.slane %v717, 2
      %v720 = vor.u32 %v716, %v719
      %v721 = vsel %vm695, %v711, %v720
      %v723 = vshrl.u32 %v574, 16
      %v725 = vrot.slane %v723, 1
      %v726 = vshll.u32 %v574, 16
      %v728 = vrot.slane %v726, 2
      %v729 = vor.u32 %v725, %v728
      %v730 = vsel %vm695, %v720, %v729
      %v732 = vshrl.u32 %v575, 16
      %v734 = vrot.slane %v732, 1
      %v735 = vshll.u32 %v575, 16
      %v737 = vrot.slane %v735, 2
      %v738 = vor.u32 %v734, %v737
      %v739 = vsel %vm695, %v729, %v738
      %v741 = vshrl.u32 %v576, 16
      %v743 = vrot.slane %v741, 1
      %v744 = vshll.u32 %v576, 16
      %v746 = vrot.slane %v744, 2
      %v747 = vor.u32 %v743, %v746
      %v748 = vsel %vm695, %v738, %v747
      %v751 = vunpack.c.l.b16 %v693
      %v752 = vunpack.c.l.b16 %v694
      %v753 = vpack.c.b16 %v752, %v751
      %v756 = vsel %vm269, %v712, 0
      %v759 = vsel %vm269, %v721, 0
      %v762 = vsel %vm269, %v730, 0
      %v765 = vsel %vm269, %v739, 0
      %v768 = vsel %vm269, %v748, 0
      %770 = vmatprep.subr.bf16.mxu0 0
      %771 = vmatpush1.bf16.msra.mxu0 %v753
      %772 = vmatprep.subr.bf16.mxu0 0
      %773 = vmatpush1.bf16.msra.mxu0 0
      %774 = vmatprep.subr.bf16.mxu0 0
      %775 = vmatpush1.bf16.msra.mxu0 0
      %776 = vmatprep.subr.bf16.mxu0 0
      %777 = vmatpush1.bf16.msra.mxu0 0
      %778 = vmatprep.subr.bf16.mxu0 0
      %779 = vmatpush1.bf16.msra.mxu0 0
      %780 = vmatprep.subr.bf16.mxu0 0
      %781 = vmatpush1.bf16.msra.mxu0 0
      %782 = vmatprep.subr.bf16.mxu0 0
      %783 = vmatpush1.bf16.msra.mxu0 0
      %784 = vmatprep.subr.bf16.mxu0 0
      %785 = vmatpush1.bf16.msra.mxu0 0
      %786 = vmatprep.subr.bf16.mxu0 0
      %787 = vmatpush1.bf16.msra.mxu0 0
      %788 = vmatprep.subr.bf16.mxu0 0
      %789 = vmatpush1.bf16.msra.mxu0 0
      %790 = vmatprep.subr.bf16.mxu0 0
      %791 = vmatpush1.bf16.msra.mxu0 0
      %792 = vmatprep.subr.bf16.mxu0 0
      %793 = vmatpush1.bf16.msra.mxu0 0
      %794 = vmatprep.subr.bf16.mxu0 0
      %795 = vmatpush1.bf16.msra.mxu0 0
      %796 = vmatprep.subr.bf16.mxu0 0
      %797 = vmatpush1.bf16.msra.mxu0 0
      %798 = vmatprep.subr.bf16.mxu0 0
      %799 = vmatpush1.bf16.msra.mxu0 0
      %800 = vmatprep.subr.bf16.mxu0 0
      %801 = vmatpush1.bf16.msra.mxu0 0
      %802 = vmatprep.mubr.bf16.mxu0 0
      %803 = vmatmul.mubr.bf16.gmra.mrb[0].mxu0 %v756
      %v804 = vpop.f32.mrb[0].mxu0
      %v805 = vadd.f32 0.0, %v804
      %v806 = vpop.f32.mrb[0].mxu0
      %v807 = vpop.f32.mrb[0].mxu0
      %v808 = vadd.f32 0.0, %v807
      %v809 = vpop.f32.mrb[0].mxu0
      %810 = vmatprep.mubr.bf16.mxu0 0
      %811 = vmatmul.mubr.bf16.gmra.mrb[0].mxu0 %v759
      %v812 = vpop.f32.mrb[0].mxu0
      %v813 = vadd.f32 0.0, %v812
      %v814 = vpop.f32.mrb[0].mxu0
      %v815 = vpop.f32.mrb[0].mxu0
      %v816 = vadd.f32 0.0, %v815
      %v817 = vpop.f32.mrb[0].mxu0
      %818 = vmatprep.mubr.bf16.mxu0 0
      %819 = vmatmul.mubr.bf16.gmra.mrb[0].mxu0 %v762
      %v820 = vpop.f32.mrb[0].mxu0
      %v821 = vadd.f32 0.0, %v820
      %v822 = vpop.f32.mrb[0].mxu0
      %v823 = vpop.f32.mrb[0].mxu0
      %v824 = vadd.f32 0.0, %v823
      %v825 = vpop.f32.mrb[0].mxu0
      %826 = vmatprep.mubr.bf16.mxu0 0
      %827 = vmatmul.mubr.bf16.gmra.mrb[0].mxu0 %v765
      %v828 = vpop.f32.mrb[0].mxu0
      %v829 = vadd.f32 0.0, %v828
      %v830 = vpop.f32.mrb[0].mxu0
      %v831 = vpop.f32.mrb[0].mxu0
      %v832 = vadd.f32 0.0, %v831
      %v833 = vpop.f32.mrb[0].mxu0
      %834 = vmatprep.mubr.bf16.mxu0 0
      %835 = vmatmul.mubr.bf16.gmra.mrb[0].mxu0 %v768
      %v836 = vpop.f32.mrb[0].mxu0
      %v837 = vadd.f32 0.0, %v836
      %v838 = vpop.f32.mrb[0].mxu0
      %v839 = vpop.f32.mrb[0].mxu0
      %v840 = vadd.f32 0.0, %v839
      %v841 = vpop.f32.mrb[0].mxu0
      %842 = vdwg.mxu0
      %v843 = vadd.f32 %v682, %v805
      %v844 = vadd.f32 %v683, %v808
      %v845 = vadd.f32 %v684, %v813
      %v846 = vadd.f32 %v685, %v816
      %v847 = vadd.f32 %v686, %v821
      %v848 = vadd.f32 %v687, %v824
      %v849 = vadd.f32 %v688, %v829
      %v850 = vadd.f32 %v689, %v832
      %v851 = vadd.f32 %v690, %v837
      %v852 = vadd.f32 %v691, %v840
      %s853 = scalar_lea.vmem %s1, 40
      %v854 = vld [vmem:[%s853] sm:$0xf]
      %v855 = vld [vmem:[%s853 + $0x4] sm:$0xf]
      %vm856 = vcmask 1045504
      %v857 = vrot.slane %v571, 2
      %v858 = vrot.slane %v572, 2
      %v859 = vsel %vm856, %v857, %v858
      %v860 = vrot.slane %v573, 2
      %v861 = vsel %vm856, %v858, %v860
      %v862 = vrot.slane %v574, 2
      %v863 = vsel %vm856, %v860, %v862
      %v864 = vrot.slane %v575, 2
      %v865 = vsel %vm856, %v862, %v864
      %v866 = vrot.slane %v576, 2
      %v867 = vsel %vm856, %v864, %v866
      %v870 = vunpack.c.l.b16 %v854
      %v871 = vunpack.c.l.b16 %v855
      %v872 = vpack.c.b16 %v871, %v870
      %v875 = vsel %vm269, %v859, 0
      %v878 = vsel %vm269, %v861, 0
      %v881 = vsel %vm269, %v863, 0
      %v884 = vsel %vm269, %v865, 0
      %v887 = vsel %vm269, %v867, 0
      %889 = vmatprep.subr.bf16.mxu0 0
      %890 = vmatpush1.bf16.msra.mxu0 %v872
      %891 = vmatprep.subr.bf16.mxu0 0
      %892 = vmatpush1.bf16.msra.mxu0 0
      %893 = vmatprep.subr.bf16.mxu0 0
      %894 = vmatpush1.bf16.msra.mxu0 0
      %895 = vmatprep.subr.bf16.mxu0 0
      %896 = vmatpush1.bf16.msra.mxu0 0
      %897 = vmatprep.subr.bf16.mxu0 0
      %898 = vmatpush1.bf16.msra.mxu0 0
      %899 = vmatprep.subr.bf16.mxu0 0
      %900 = vmatpush1.bf16.msra.mxu0 0
      %901 = vmatprep.subr.bf16.mxu0 0
      %902 = vmatpush1.bf16.msra.mxu0 0
      %903 = vmatprep.subr.bf16.mxu0 0
      %904 = vmatpush1.bf16.msra.mxu0 0
      %905 = vmatprep.subr.bf16.mxu0 0
      %906 = vmatpush1.bf16.msra.mxu0 0
      %907 = vmatprep.subr.bf16.mxu0 0
      %908 = vmatpush1.bf16.msra.mxu0 0
      %909 = vmatprep.subr.bf16.mxu0 0
      %910 = vmatpush1.bf16.msra.mxu0 0
      %911 = vmatprep.subr.bf16.mxu0 0
      %912 = vmatpush1.bf16.msra.mxu0 0
      %913 = vmatprep.subr.bf16.mxu0 0
      %914 = vmatpush1.bf16.msra.mxu0 0
      %915 = vmatprep.subr.bf16.mxu0 0
      %916 = vmatpush1.bf16.msra.mxu0 0
      %917 = vmatprep.subr.bf16.mxu0 0
      %918 = vmatpush1.bf16.msra.mxu0 0
      %919 = vmatprep.subr.bf16.mxu0 0
      %920 = vmatpush1.bf16.msra.mxu0 0
      %921 = vmatprep.mubr.bf16.mxu0 0
      %922 = vmatmul.mubr.bf16.gmra.mrb[0].mxu0 %v875
      %v923 = vpop.f32.mrb[0].mxu0
      %v924 = vadd.f32 0.0, %v923
      %v925 = vpop.f32.mrb[0].mxu0
      %v926 = vpop.f32.mrb[0].mxu0
      %v927 = vadd.f32 0.0, %v926
      %v928 = vpop.f32.mrb[0].mxu0
      %929 = vmatprep.mubr.bf16.mxu0 0
      %930 = vmatmul.mubr.bf16.gmra.mrb[0].mxu0 %v878
      %v931 = vpop.f32.mrb[0].mxu0
      %v932 = vadd.f32 0.0, %v931
      %v933 = vpop.f32.mrb[0].mxu0
      %v934 = vpop.f32.mrb[0].mxu0
      %v935 = vadd.f32 0.0, %v934
      %v936 = vpop.f32.mrb[0].mxu0
      %937 = vmatprep.mubr.bf16.mxu0 0
      %938 = vmatmul.mubr.bf16.gmra.mrb[0].mxu0 %v881
      %v939 = vpop.f32.mrb[0].mxu0
      %v940 = vadd.f32 0.0, %v939
      %v941 = vpop.f32.mrb[0].mxu0
      %v942 = vpop.f32.mrb[0].mxu0
      %v943 = vadd.f32 0.0, %v942
      %v944 = vpop.f32.mrb[0].mxu0
      %945 = vmatprep.mubr.bf16.mxu0 0
      %946 = vmatmul.mubr.bf16.gmra.mrb[0].mxu0 %v884
      %v947 = vpop.f32.mrb[0].mxu0
      %v948 = vadd.f32 0.0, %v947
      %v949 = vpop.f32.mrb[0].mxu0
      %v950 = vpop.f32.mrb[0].mxu0
      %v951 = vadd.f32 0.0, %v950
      %v952 = vpop.f32.mrb[0].mxu0
      %953 = vmatprep.mubr.bf16.mxu0 0
      %954 = vmatmul.mubr.bf16.gmra.mrb[0].mxu0 %v887
      %v955 = vpop.f32.mrb[0].mxu0
      %v956 = vadd.f32 0.0, %v955
      %v957 = vpop.f32.mrb[0].mxu0
      %v958 = vpop.f32.mrb[0].mxu0
      %v959 = vadd.f32 0.0, %v958
      %v960 = vpop.f32.mrb[0].mxu0
      %961 = vdwg.mxu0
      %v962 = vadd.f32 %v843, %v924
      %v963 = vadd.f32 %v844, %v927
      %v964 = vadd.f32 %v845, %v932
      %v965 = vadd.f32 %v846, %v935
      %v966 = vadd.f32 %v847, %v940
      %v967 = vadd.f32 %v848, %v943
      %v968 = vadd.f32 %v849, %v948
      %v969 = vadd.f32 %v850, %v951
      %v970 = vadd.f32 %v851, %v956
      %v971 = vadd.f32 %v852, %v959
      %s972 = scalar_lea.vmem %s1, 48
      %v973 = vld [vmem:[%s972] sm:$0xf]
      %v974 = vld [vmem:[%s972 + $0x4] sm:$0xf]
      %v976 = vunpack.c.l.b16 %v184
      %v977 = vpack.c.b16 %v570, %v211
      %v978 = vpack.c.b16 %v976, %v976
      %v979 = vrot.slane %v213, 2
      %v980 = vrot.slane %v214, 2
      %v981 = vsel %vm856, %v979, %v980
      %v982 = vrot.slane %v215, 2
      %v983 = vsel %vm856, %v980, %v982
      %v984 = vrot.slane %v216, 2
      %v985 = vsel %vm856, %v982, %v984
      %v986 = vrot.slane %v977, 2
      %v987 = vsel %vm856, %v984, %v986
      %v988 = vrot.slane %v978, 2
      %v989 = vsel %vm856, %v986, %v988
      %v992 = vunpack.c.l.b16 %v973
      %v993 = vunpack.c.l.b16 %v974
      %v994 = vpack.c.b16 %v993, %v992
      %v997 = vsel %vm269, %v981, 0
      %v1000 = vsel %vm269, %v983, 0
      %v1003 = vsel %vm269, %v985, 0
      %v1006 = vsel %vm269, %v987, 0
      %v1009 = vsel %vm269, %v989, 0
      %1011 = vmatprep.subr.bf16.mxu0 0
      %1012 = vmatpush1.bf16.msra.mxu0 %v994
      %1013 = vmatprep.subr.bf16.mxu0 0
      %1014 = vmatpush1.bf16.msra.mxu0 0
      %1015 = vmatprep.subr.bf16.mxu0 0
      %1016 = vmatpush1.bf16.msra.mxu0 0
      %1017 = vmatprep.subr.bf16.mxu0 0
      %1018 = vmatpush1.bf16.msra.mxu0 0
      %1019 = vmatprep.subr.bf16.mxu0 0
      %1020 = vmatpush1.bf16.msra.mxu0 0
      %1021 = vmatprep.subr.bf16.mxu0 0
      %1022 = vmatpush1.bf16.msra.mxu0 0
      %1023 = vmatprep.subr.bf16.mxu0 0
      %1024 = vmatpush1.bf16.msra.mxu0 0
      %1025 = vmatprep.subr.bf16.mxu0 0
      %1026 = vmatpush1.bf16.msra.mxu0 0
      %1027 = vmatprep.subr.bf16.mxu0 0
      %1028 = vmatpush1.bf16.msra.mxu0 0
      %1029 = vmatprep.subr.bf16.mxu0 0
      %1030 = vmatpush1.bf16.msra.mxu0 0
      %1031 = vmatprep.subr.bf16.mxu0 0
      %1032 = vmatpush1.bf16.msra.mxu0 0
      %1033 = vmatprep.subr.bf16.mxu0 0
      %1034 = vmatpush1.bf16.msra.mxu0 0
      %1035 = vmatprep.subr.bf16.mxu0 0
      %1036 = vmatpush1.bf16.msra.mxu0 0
      %1037 = vmatprep.subr.bf16.mxu0 0
      %1038 = vmatpush1.bf16.msra.mxu0 0
      %1039 = vmatprep.subr.bf16.mxu0 0
      %1040 = vmatpush1.bf16.msra.mxu0 0
      %1041 = vmatprep.subr.bf16.mxu0 0
      %1042 = vmatpush1.bf16.msra.mxu0 0
      %1043 = vmatprep.mubr.bf16.mxu0 0
      %1044 = vmatmul.mubr.bf16.gmra.mrb[0].mxu0 %v997
      %v1045 = vpop.f32.mrb[0].mxu0
      %v1046 = vadd.f32 0.0, %v1045
      %v1047 = vpop.f32.mrb[0].mxu0
      %v1048 = vpop.f32.mrb[0].mxu0
      %v1049 = vadd.f32 0.0, %v1048
      %v1050 = vpop.f32.mrb[0].mxu0
      %1051 = vmatprep.mubr.bf16.mxu0 0
      %1052 = vmatmul.mubr.bf16.gmra.mrb[0].mxu0 %v1000
      %v1053 = vpop.f32.mrb[0].mxu0
      %v1054 = vadd.f32 0.0, %v1053
      %v1055 = vpop.f32.mrb[0].mxu0
      %v1056 = vpop.f32.mrb[0].mxu0
      %v1057 = vadd.f32 0.0, %v1056
      %v1058 = vpop.f32.mrb[0].mxu0
      %1059 = vmatprep.mubr.bf16.mxu0 0
      %1060 = vmatmul.mubr.bf16.gmra.mrb[0].mxu0 %v1003
      %v1061 = vpop.f32.mrb[0].mxu0
      %v1062 = vadd.f32 0.0, %v1061
      %v1063 = vpop.f32.mrb[0].mxu0
      %v1064 = vpop.f32.mrb[0].mxu0
      %v1065 = vadd.f32 0.0, %v1064
      %v1066 = vpop.f32.mrb[0].mxu0
      %1067 = vmatprep.mubr.bf16.mxu0 0
      %1068 = vmatmul.mubr.bf16.gmra.mrb[0].mxu0 %v1006
      %v1069 = vpop.f32.mrb[0].mxu0
      %v1070 = vadd.f32 0.0, %v1069
      %v1071 = vpop.f32.mrb[0].mxu0
      %v1072 = vpop.f32.mrb[0].mxu0
      %v1073 = vadd.f32 0.0, %v1072
      %v1074 = vpop.f32.mrb[0].mxu0
      %1075 = vmatprep.mubr.bf16.mxu0 0
      %1076 = vmatmul.mubr.bf16.gmra.mrb[0].mxu0 %v1009
      %v1077 = vpop.f32.mrb[0].mxu0
      %v1078 = vadd.f32 0.0, %v1077
      %v1079 = vpop.f32.mrb[0].mxu0
      %v1080 = vpop.f32.mrb[0].mxu0
      %v1081 = vadd.f32 0.0, %v1080
      %v1082 = vpop.f32.mrb[0].mxu0
      %1083 = vdwg.mxu0
      %v1084 = vadd.f32 %v962, %v1046
      %v1085 = vadd.f32 %v963, %v1049
      %v1086 = vadd.f32 %v964, %v1054
      %v1087 = vadd.f32 %v965, %v1057
      %v1088 = vadd.f32 %v966, %v1062
      %v1089 = vadd.f32 %v967, %v1065
      %v1090 = vadd.f32 %v968, %v1070
      %v1091 = vadd.f32 %v969, %v1073
      %v1092 = vadd.f32 %v970, %v1078
      %v1093 = vadd.f32 %v971, %v1081
      %s1094 = scalar_lea.vmem %s1, 56
      %v1095 = vld [vmem:[%s1094] sm:$0xf]
      %v1096 = vld [vmem:[%s1094 + $0x4] sm:$0xf]
      %vm1097 = vsmask.f32 5376
      %v1098 = vrot.slane %v231, 2
      %v1099 = vrot.slane %v227, 3
      %v1100 = vor.u32 %v1098, %v1099
      %v1101 = vrot.slane %v239, 2
      %v1102 = vrot.slane %v235, 3
      %v1103 = vor.u32 %v1101, %v1102
      %v1104 = vsel %vm1097, %v1100, %v1103
      %v1105 = vrot.slane %v247, 2
      %v1106 = vrot.slane %v243, 3
      %v1107 = vor.u32 %v1105, %v1106
      %v1108 = vsel %vm1097, %v1103, %v1107
      %v1109 = vrot.slane %v255, 2
      %v1110 = vrot.slane %v251, 3
      %v1111 = vor.u32 %v1109, %v1110
      %v1112 = vsel %vm1097, %v1107, %v1111
      %v1114 = vshrl.u32 %v977, 16
      %v1116 = vrot.slane %v1114, 2
      %v1117 = vshll.u32 %v977, 16
      %v1119 = vrot.slane %v1117, 3
      %v1120 = vor.u32 %v1116, %v1119
      %v1121 = vsel %vm1097, %v1111, %v1120
      %v1123 = vshrl.u32 %v978, 16
      %v1125 = vrot.slane %v1123, 2
      %v1126 = vshll.u32 %v978, 16
      %v1128 = vrot.slane %v1126, 3
      %v1129 = vor.u32 %v1125, %v1128
      %v1130 = vsel %vm1097, %v1120, %v1129
      %v1133 = vunpack.c.l.b16 %v1095
      %v1134 = vunpack.c.l.b16 %v1096
      %v1135 = vpack.c.b16 %v1134, %v1133
      %v1138 = vsel %vm269, %v1104, 0
      %v1141 = vsel %vm269, %v1108, 0
      %v1144 = vsel %vm269, %v1112, 0
      %v1147 = vsel %vm269, %v1121, 0
      %v1150 = vsel %vm269, %v1130, 0
      %1152 = vmatprep.subr.bf16.mxu0 0
      %1153 = vmatpush1.bf16.msra.mxu0 %v1135
      %1154 = vmatprep.subr.bf16.mxu0 0
      %1155 = vmatpush1.bf16.msra.mxu0 0
      %1156 = vmatprep.subr.bf16.mxu0 0
      %1157 = vmatpush1.bf16.msra.mxu0 0
      %1158 = vmatprep.subr.bf16.mxu0 0
      %1159 = vmatpush1.bf16.msra.mxu0 0
      %1160 = vmatprep.subr.bf16.mxu0 0
      %1161 = vmatpush1.bf16.msra.mxu0 0
      %1162 = vmatprep.subr.bf16.mxu0 0
      %1163 = vmatpush1.bf16.msra.mxu0 0
      %1164 = vmatprep.subr.bf16.mxu0 0
      %1165 = vmatpush1.bf16.msra.mxu0 0
      %1166 = vmatprep.subr.bf16.mxu0 0
      %1167 = vmatpush1.bf16.msra.mxu0 0
      %1168 = vmatprep.subr.bf16.mxu0 0
      %1169 = vmatpush1.bf16.msra.mxu0 0
      %1170 = vmatprep.subr.bf16.mxu0 0
      %1171 = vmatpush1.bf16.msra.mxu0 0
      %1172 = vmatprep.subr.bf16.mxu0 0
      %1173 = vmatpush1.bf16.msra.mxu0 0
      %1174 = vmatprep.subr.bf16.mxu0 0
      %1175 = vmatpush1.bf16.msra.mxu0 0
      %1176 = vmatprep.subr.bf16.mxu0 0
      %1177 = vmatpush1.bf16.msra.mxu0 0
      %1178 = vmatprep.subr.bf16.mxu0 0
      %1179 = vmatpush1.bf16.msra.mxu0 0
      %1180 = vmatprep.subr.bf16.mxu0 0
      %1181 = vmatpush1.bf16.msra.mxu0 0
      %1182 = vmatprep.subr.bf16.mxu0 0
      %1183 = vmatpush1.bf16.msra.mxu0 0
      %1184 = vmatprep.mubr.bf16.mxu0 0
      %1185 = vmatmul.mubr.bf16.gmra.mrb[0].mxu0 %v1138
      %v1186 = vpop.f32.mrb[0].mxu0
      %v1187 = vadd.f32 0.0, %v1186
      %v1188 = vpop.f32.mrb[0].mxu0
      %v1189 = vpop.f32.mrb[0].mxu0
      %v1190 = vadd.f32 0.0, %v1189
      %v1191 = vpop.f32.mrb[0].mxu0
      %1192 = vmatprep.mubr.bf16.mxu0 0
      %1193 = vmatmul.mubr.bf16.gmra.mrb[0].mxu0 %v1141
      %v1194 = vpop.f32.mrb[0].mxu0
      %v1195 = vadd.f32 0.0, %v1194
      %v1196 = vpop.f32.mrb[0].mxu0
      %v1197 = vpop.f32.mrb[0].mxu0
      %v1198 = vadd.f32 0.0, %v1197
      %v1199 = vpop.f32.mrb[0].mxu0
      %1200 = vmatprep.mubr.bf16.mxu0 0
      %1201 = vmatmul.mubr.bf16.gmra.mrb[0].mxu0 %v1144
      %v1202 = vpop.f32.mrb[0].mxu0
      %v1203 = vadd.f32 0.0, %v1202
      %v1204 = vpop.f32.mrb[0].mxu0
      %v1205 = vpop.f32.mrb[0].mxu0
      %v1206 = vadd.f32 0.0, %v1205
      %v1207 = vpop.f32.mrb[0].mxu0
      %1208 = vmatprep.mubr.bf16.mxu0 0
      %1209 = vmatmul.mubr.bf16.gmra.mrb[0].mxu0 %v1147
      %v1210 = vpop.f32.mrb[0].mxu0
      %v1211 = vadd.f32 0.0, %v1210
      %v1212 = vpop.f32.mrb[0].mxu0
      %v1213 = vpop.f32.mrb[0].mxu0
      %v1214 = vadd.f32 0.0, %v1213
      %v1215 = vpop.f32.mrb[0].mxu0
      %1216 = vmatprep.mubr.bf16.mxu0 0
      %1217 = vmatmul.mubr.bf16.gmra.mrb[0].mxu0 %v1150
      %v1218 = vpop.f32.mrb[0].mxu0
      %v1219 = vadd.f32 0.0, %v1218
      %v1220 = vpop.f32.mrb[0].mxu0
      %v1221 = vpop.f32.mrb[0].mxu0
      %v1222 = vadd.f32 0.0, %v1221
      %v1223 = vpop.f32.mrb[0].mxu0
      %1224 = vdwg.mxu0
      %v1225 = vadd.f32 %v1084, %v1187
      %v1226 = vadd.f32 %v1085, %v1190
      %v1227 = vadd.f32 %v1086, %v1195
      %v1228 = vadd.f32 %v1087, %v1198
      %v1229 = vadd.f32 %v1088, %v1203
      %v1230 = vadd.f32 %v1089, %v1206
      %v1231 = vadd.f32 %v1090, %v1211
      %v1232 = vadd.f32 %v1091, %v1214
      %v1233 = vadd.f32 %v1092, %v1219
      %v1234 = vadd.f32 %v1093, %v1222
      %s1235 = scalar_lea.vmem %s1, 64
      %v1236 = vld [vmem:[%s1235] sm:$0xf]
      %v1237 = vld [vmem:[%s1235 + $0x4] sm:$0xf]
      %vm1238 = vcmask 1044480
      %v1239 = vrot.slane %v213, 3
      %v1240 = vrot.slane %v214, 3
      %v1241 = vsel %vm1238, %v1239, %v1240
      %v1242 = vrot.slane %v215, 3
      %v1243 = vsel %vm1238, %v1240, %v1242
      %v1244 = vrot.slane %v216, 3
      %v1245 = vsel %vm1238, %v1242, %v1244
      %v1246 = vrot.slane %v977, 3
      %v1247 = vsel %vm1238, %v1244, %v1246
      %v1248 = vrot.slane %v978, 3
      %v1249 = vsel %vm1238, %v1246, %v1248
      %v1252 = vunpack.c.l.b16 %v1236
      %v1253 = vunpack.c.l.b16 %v1237
      %v1254 = vpack.c.b16 %v1253, %v1252
      %v1257 = vsel %vm269, %v1241, 0
      %v1260 = vsel %vm269, %v1243, 0
      %v1263 = vsel %vm269, %v1245, 0
      %v1266 = vsel %vm269, %v1247, 0
      %v1269 = vsel %vm269, %v1249, 0
      %1271 = vmatprep.subr.bf16.mxu0 0
      %1272 = vmatpush1.bf16.msra.mxu0 %v1254
      %1273 = vmatprep.subr.bf16.mxu0 0
      %1274 = vmatpush1.bf16.msra.mxu0 0
      %1275 = vmatprep.subr.bf16.mxu0 0
      %1276 = vmatpush1.bf16.msra.mxu0 0
      %1277 = vmatprep.subr.bf16.mxu0 0
      %1278 = vmatpush1.bf16.msra.mxu0 0
      %1279 = vmatprep.subr.bf16.mxu0 0
      %1280 = vmatpush1.bf16.msra.mxu0 0
      %1281 = vmatprep.subr.bf16.mxu0 0
      %1282 = vmatpush1.bf16.msra.mxu0 0
      %1283 = vmatprep.subr.bf16.mxu0 0
      %1284 = vmatpush1.bf16.msra.mxu0 0
      %1285 = vmatprep.subr.bf16.mxu0 0
      %1286 = vmatpush1.bf16.msra.mxu0 0
      %1287 = vmatprep.subr.bf16.mxu0 0
      %1288 = vmatpush1.bf16.msra.mxu0 0
      %1289 = vmatprep.subr.bf16.mxu0 0
      %1290 = vmatpush1.bf16.msra.mxu0 0
      %1291 = vmatprep.subr.bf16.mxu0 0
      %1292 = vmatpush1.bf16.msra.mxu0 0
      %1293 = vmatprep.subr.bf16.mxu0 0
      %1294 = vmatpush1.bf16.msra.mxu0 0
      %1295 = vmatprep.subr.bf16.mxu0 0
      %1296 = vmatpush1.bf16.msra.mxu0 0
      %1297 = vmatprep.subr.bf16.mxu0 0
      %1298 = vmatpush1.bf16.msra.mxu0 0
      %1299 = vmatprep.subr.bf16.mxu0 0
      %1300 = vmatpush1.bf16.msra.mxu0 0
      %1301 = vmatprep.subr.bf16.mxu0 0
      %1302 = vmatpush1.bf16.msra.mxu0 0
      %1303 = vmatprep.mubr.bf16.mxu0 0
      %1304 = vmatmul.mubr.bf16.gmra.mrb[0].mxu0 %v1257
      %v1305 = vpop.f32.mrb[0].mxu0
      %v1306 = vadd.f32 0.0, %v1305
      %v1307 = vpop.f32.mrb[0].mxu0
      %v1308 = vpop.f32.mrb[0].mxu0
      %v1309 = vadd.f32 0.0, %v1308
      %v1310 = vpop.f32.mrb[0].mxu0
      %1311 = vmatprep.mubr.bf16.mxu0 0
      %1312 = vmatmul.mubr.bf16.gmra.mrb[0].mxu0 %v1260
      %v1313 = vpop.f32.mrb[0].mxu0
      %v1314 = vadd.f32 0.0, %v1313
      %v1315 = vpop.f32.mrb[0].mxu0
      %v1316 = vpop.f32.mrb[0].mxu0
      %v1317 = vadd.f32 0.0, %v1316
      %v1318 = vpop.f32.mrb[0].mxu0
      %1319 = vmatprep.mubr.bf16.mxu0 0
      %1320 = vmatmul.mubr.bf16.gmra.mrb[0].mxu0 %v1263
      %v1321 = vpop.f32.mrb[0].mxu0
      %v1322 = vadd.f32 0.0, %v1321
      %v1323 = vpop.f32.mrb[0].mxu0
      %v1324 = vpop.f32.mrb[0].mxu0
      %v1325 = vadd.f32 0.0, %v1324
      %v1326 = vpop.f32.mrb[0].mxu0
      %1327 = vmatprep.mubr.bf16.mxu0 0
      %1328 = vmatmul.mubr.bf16.gmra.mrb[0].mxu0 %v1266
      %v1329 = vpop.f32.mrb[0].mxu0
      %v1330 = vadd.f32 0.0, %v1329
      %v1331 = vpop.f32.mrb[0].mxu0
      %v1332 = vpop.f32.mrb[0].mxu0
      %v1333 = vadd.f32 0.0, %v1332
      %v1334 = vpop.f32.mrb[0].mxu0
      %1335 = vmatprep.mubr.bf16.mxu0 0
      %1336 = vmatmul.mubr.bf16.gmra.mrb[0].mxu0 %v1269
      %v1337 = vpop.f32.mrb[0].mxu0
      %v1338 = vadd.f32 0.0, %v1337
      %v1339 = vpop.f32.mrb[0].mxu0
      %v1340 = vpop.f32.mrb[0].mxu0
      %v1341 = vadd.f32 0.0, %v1340
      %v1342 = vpop.f32.mrb[0].mxu0
      %1343 = vdwg.mxu0
      %v1344 = vadd.f32 %v1225, %v1306
      %v1345 = vadd.f32 %v1226, %v1309
      %v1346 = vadd.f32 %v1227, %v1314
      %v1347 = vadd.f32 %v1228, %v1317
      %v1348 = vadd.f32 %v1229, %v1322
      %v1349 = vadd.f32 %v1230, %v1325
      %v1350 = vadd.f32 %v1231, %v1330
      %v1351 = vadd.f32 %v1232, %v1333
      %v1352 = vadd.f32 %v1233, %v1338
      %v1353 = vadd.f32 %v1234, %v1341
      %v1354 = vld [vmem:[%s2] sm:$0x1]
      %v1356 = vlaneseq
      %v1357 = vshrl.u32 %v1356, 7
      %v1358 = vsub.s32 0, %v1357
      %v1359 = vrot.slane %v1354, %v1358
      %v1361 = vadd.f32 %v1344, %v1359
      %v1362 = vadd.f32 %v1345, %v1359
      %v1363 = vadd.f32 %v1346, %v1359
      %v1364 = vadd.f32 %v1347, %v1359
      %v1365 = vadd.f32 %v1348, %v1359
      %v1366 = vadd.f32 %v1349, %v1359
      %v1367 = vadd.f32 %v1350, %v1359
      %v1368 = vadd.f32 %v1351, %v1359
      %v1369 = vadd.f32 %v1352, %v1359
      %v1370 = vadd.f32 %v1353, %v1359
      %v1371 = vmax.f32 %v1361, 0.0
      %v1372 = vmax.f32 %v1362, 0.0
      %v1373 = vmax.f32 %v1363, 0.0
      %v1374 = vmax.f32 %v1364, 0.0
      %v1375 = vmax.f32 %v1365, 0.0
      %v1376 = vmax.f32 %v1366, 0.0
      %v1377 = vmax.f32 %v1367, 0.0
      %v1378 = vmax.f32 %v1368, 0.0
      %v1379 = vmax.f32 %v1369, 0.0
      %v1380 = vmax.f32 %v1370, 0.0
      %v1381 = vpack.c.bf16 %v1372, %v1371
      %v1382 = vpack.c.bf16 %v1374, %v1373
      %v1383 = vpack.c.bf16 %v1376, %v1375
      %v1384 = vpack.c.bf16 %v1378, %v1377
      %v1385 = vpack.c.bf16 %v1380, %v1379
      %v1391 = vunpack.c.l.b16 %v1381
      %v1392 = vunpack.c.h.b16 %v1381
      %v1393 = vunpack.c.l.b16 %v1382
      %v1394 = vunpack.c.h.b16 %v1382
      %v1395 = vunpack.c.l.b16 %v1383
      %v1396 = vunpack.c.h.b16 %v1383
      %v1397 = vunpack.c.l.b16 %v1384
      %v1398 = vunpack.c.h.b16 %v1384
      %v1399 = vunpack.c.l.b16 %v1385
      %v1400 = vunpack.c.h.b16 %v1385
      %v1401 = vpack.c.b16 %v1391, %v1391
      %v1402 = vpack.c.b16 %v1392, %v1392
      %v1403 = vpack.c.b16 %v1393, %v1393
      %v1404 = vpack.c.b16 %v1394, %v1394
      %v1405 = vpack.c.b16 %v1395, %v1395
      %v1406 = vpack.c.b16 %v1396, %v1396
      %v1407 = vpack.c.b16 %v1397, %v1397
      %v1408 = vpack.c.b16 %v1398, %v1398
      %v1409 = vpack.c.b16 %v1399, %v1399
      %v1410 = vpack.c.b16 %v1400, %v1400
      %vm1421 = vcmask 257024
      %1422 = vst.msk [vmem:[%s170] sm:$0xf] %vm1421, %v1401
      %1423 = vst.msk [vmem:[%s170 + $0x4] sm:$0xf] %vm1421, %v1402
      %1424 = vst.msk [vmem:[%s170 + $0x8] sm:$0xf] %vm1421, %v1403
      %1425 = vst.msk [vmem:[%s170 + $0xc] sm:$0xf] %vm1421, %v1404
      %1426 = vst.msk [vmem:[%s170 + $0x10] sm:$0xf] %vm1421, %v1405
      %1427 = vst.msk [vmem:[%s170 + $0x14] sm:$0xf] %vm1421, %v1406
      %1428 = vst.msk [vmem:[%s170 + $0x18] sm:$0xf] %vm1421, %v1407
      %1429 = vst.msk [vmem:[%s170 + $0x1c] sm:$0xf] %vm1421, %v1408
      %1430 = vst.msk [vmem:[%s170 + $0x20] sm:$0xf] %vm1421, %v1409
      %1431 = vst.msk [vmem:[%s170 + $0x24] sm:$0xf] %vm1421, %v1410
      %p1432 = scmp.lt.s32.totalorder %s14, 1
      %s1433 = scalar_select %p1432, %s14, 1
      %s1434 = smul.addr %s1433, 10
      %s1435 = smul.addr %s1434, 4
      %s1436 = scalar_lea.vmem %s3, %s1435
      // Predicated region
      $region33: #{vgg_forward.11} parent=31 // pred_check
        %p1437 = pneg %p100
      $region34: #{vgg_forward.11} parent=31 // pred_check_branch
        %1439 = sbr.rel (%p1437) target = $region36
      $region35: #{vgg_forward.11} parent=31 // pred_region
        _
      $region36: #{vgg_forward.11} parent=31 // pred_fallthru
        _
    $region32: #{vgg_forward.11} parent=5 // pred_fallthru
      _
    %p1440 = scmp.le.s32.totalorder 2, %s9
    // Predicated region
    $region37: #{vgg_forward.11} parent=5 // pred_check
      %p1441 = pneg %p1440
    $region38: #{vgg_forward.11} parent=5 // pred_check_branch
      %1443 = sbr.rel (%p1441) target = $region40
    $region39: #{vgg_forward.11} parent=5 // pred_region
      %s1444 = ssub.s32 %s9, 2
      // Predicated region
      $region41: #{vgg_forward.11} parent=39 // pred_check
        %p1445 = pneg %p106
      $region42: #{vgg_forward.11} parent=39 // pred_check_branch
        %1447 = sbr.rel (%p1445) target = $region44
      $region43: #{vgg_forward.11} parent=39 // pred_region
        %p1448 = scmp.lt.s32.totalorder %s15, 1
        %s1449 = scalar_select %p1448, %s15, 1
        %s1450 = smul.addr %s1449, 10
        %s1451 = smul.addr %s1450, 4
        %s1452 = scalar_lea.vmem %s3, %s1451
      $region44: #{vgg_forward.11} parent=39 // pred_fallthru
        _
    $region40: #{vgg_forward.11} parent=5 // pred_fallthru
      _
  $region6: #{vgg_forward.11} parent=0 // loop_footer
    %s13 = sadd.s32 1, %s9
  $region7: #{vgg_forward.11} parent=0 // loop_footer_branch
    %8 = sbr.rel target = $region3
  $region8: #{vgg_forward.11} parent=0 // loop_exit
    _

// kernel: vgg_forward.12
$region0: #{vgg_forward.12}
  #allocation0 [shape = 'u32[]', space=smem, size = 0x4, offset = 0x4, fixed_abs, tag = 'smem constant byte address 0x4 - core index']
  #allocation1 [shape = 'u32[144,128]{1,0:T(1,128)}', space=vmem, size = 0x12000, scoped, tag = 'internal scratch']
  %s0 = inlined_call_operand.vmem [shape: bf16[32,32], index: 0, kind: input, shape index: {}]
  %s1 = inlined_call_operand.vmem [shape: bf16[32,32], index: 1, kind: input, shape index: {}]
  %s2 = inlined_call_operand.vmem [shape: bf16[32,32], index: 2, kind: input, shape index: {}]
  %s3 = inlined_call_operand.vmem [shape: bf16[32,32], index: 3, kind: input, shape index: {}]
  %s4 = inlined_call_operand.vmem [shape: bf16[32,32], index: 4, kind: output, shape index: {}]
  %s5 = sld [smem:[#allocation0]]
  $region26: #{vgg_forward.12} parent=0
    _
  %s7 = ssub.s32 1, %s5
  %s8 = scalar_select 0, %s7, %s5
  // Predicated region
  $region2: #{vgg_forward.12} parent=0 // pred_check
    _
  $region3: #{vgg_forward.12} parent=0 // pred_check_branch
    %10 = sbr.rel (0) target = $region5
  $region4: #{vgg_forward.12} parent=0 // pred_region
    _
  $region5: #{vgg_forward.12} parent=0 // pred_fallthru
    _
  // Predicated region
  $region6: #{vgg_forward.12} parent=0 // pred_check
    _
  $region7: #{vgg_forward.12} parent=0 // pred_check_branch
    %12 = sbr.rel (0) target = $region9
  $region8: #{vgg_forward.12} parent=0 // pred_region
    _
  $region9: #{vgg_forward.12} parent=0 // pred_fallthru
    _
  // Predicated region
  $region10: #{vgg_forward.12} parent=0 // pred_check
    _
  $region11: #{vgg_forward.12} parent=0 // pred_check_branch
    %14 = sbr.rel (0) target = $region13
  $region12: #{vgg_forward.12} parent=0 // pred_region
    _
  $region13: #{vgg_forward.12} parent=0 // pred_fallthru
    _
  // Predicated region
  $region14: #{vgg_forward.12} parent=0 // pred_check
    _
  $region15: #{vgg_forward.12} parent=0 // pred_check_branch
    %16 = sbr.rel (0) target = $region17
  $region16: #{vgg_forward.12} parent=0 // pred_region
    _
  $region17: #{vgg_forward.12} parent=0 // pred_fallthru
    _
  %v17 = vld [vmem:[%s0] sm:$0xf]
  %v18 = vld [vmem:[%s0 + $0x4] sm:$0xf]
  %v19 = vld [vmem:[%s0 + $0x8] sm:$0xf]
  %v20 = vld [vmem:[%s0 + $0xc] sm:$0xf]
  %v21 = vld [vmem:[%s1] sm:$0xf]
  %v22 = vld [vmem:[%s1 + $0x4] sm:$0xf]
  %v23 = vld [vmem:[%s1 + $0x8] sm:$0xf]
  %v24 = vld [vmem:[%s1 + $0xc] sm:$0xf]
  %v25 = vmax.bf16 %v17, %v21
  %v26 = vmax.bf16 %v18, %v22
  %v27 = vmax.bf16 %v19, %v23
  %v28 = vmax.bf16 %v20, %v24
  %v29 = vld [vmem:[%s2] sm:$0xf]
  %v30 = vld [vmem:[%s2 + $0x4] sm:$0xf]
  %v31 = vld [vmem:[%s2 + $0x8] sm:$0xf]
  %v32 = vld [vmem:[%s2 + $0xc] sm:$0xf]
  %v33 = vld [vmem:[%s3] sm:$0xf]
  %v34 = vld [vmem:[%s3 + $0x4] sm:$0xf]
  %v35 = vld [vmem:[%s3 + $0x8] sm:$0xf]
  %v36 = vld [vmem:[%s3 + $0xc] sm:$0xf]
  %v37 = vmax.bf16 %v29, %v33
  %v38 = vmax.bf16 %v30, %v34
  %v39 = vmax.bf16 %v31, %v35
  %v40 = vmax.bf16 %v32, %v36
  %v41 = vmax.bf16 %v25, %v37
  %v42 = vmax.bf16 %v26, %v38
  %v43 = vmax.bf16 %v27, %v39
  %v44 = vmax.bf16 %v28, %v40
  %vm45 = vcmask 257024
  %46 = vst.msk [vmem:[%s4] sm:$0xf] %vm45, %v41
  %47 = vst.msk [vmem:[%s4 + $0x4] sm:$0xf] %vm45, %v42
  %48 = vst.msk [vmem:[%s4 + $0x8] sm:$0xf] %vm45, %v43
  %49 = vst.msk [vmem:[%s4 + $0xc] sm:$0xf] %vm45, %v44
  // Predicated region
  $region18: #{vgg_forward.12} parent=0 // pred_check
    _
  $region19: #{vgg_forward.12} parent=0 // pred_check_branch
    %51 = sbr.rel (0) target = $region21
  $region20: #{vgg_forward.12} parent=0 // pred_region
    _
  $region21: #{vgg_forward.12} parent=0 // pred_fallthru
    _
  // Predicated region
  $region22: #{vgg_forward.12} parent=0 // pred_check
    _
  $region23: #{vgg_forward.12} parent=0 // pred_check_branch
    %53 = sbr.rel (0) target = $region25
  $region24: #{vgg_forward.12} parent=0 // pred_region
    _
  $region25: #{vgg_forward.12} parent=0 // pred_fallthru
    _

// kernel: vgg_forward.14
$region0: #{vgg_forward.14}
  #allocation0 [shape = 'u32[]', space=smem, size = 0x4, offset = 0x4, fixed_abs, tag = 'smem constant byte address 0x4 - core index']
  #allocation1 [shape = 'u32[144,128]{1,0:T(1,128)}', space=vmem, size = 0x12000, scoped, tag = 'internal scratch']
  %s0 = inlined_call_operand.vmem [shape: bf16[8,64], index: 0, kind: input, shape index: {}]
  %s1 = inlined_call_operand.vmem [shape: bf16[8,64], index: 1, kind: input, shape index: {}]
  %s2 = inlined_call_operand.vmem [shape: bf16[8,64], index: 2, kind: input, shape index: {}]
  %s3 = inlined_call_operand.vmem [shape: bf16[8,64], index: 3, kind: input, shape index: {}]
  %s4 = inlined_call_operand.vmem [shape: bf16[8,64], index: 4, kind: output, shape index: {}]
  %s5 = sld [smem:[#allocation0]]
  $region26: #{vgg_forward.14} parent=0
    _
  %s7 = ssub.s32 1, %s5
  %s8 = scalar_select 0, %s7, %s5
  // Predicated region
  $region2: #{vgg_forward.14} parent=0 // pred_check
    _
  $region3: #{vgg_forward.14} parent=0 // pred_check_branch
    %10 = sbr.rel (0) target = $region5
  $region4: #{vgg_forward.14} parent=0 // pred_region
    _
  $region5: #{vgg_forward.14} parent=0 // pred_fallthru
    _
  // Predicated region
  $region6: #{vgg_forward.14} parent=0 // pred_check
    _
  $region7: #{vgg_forward.14} parent=0 // pred_check_branch
    %12 = sbr.rel (0) target = $region9
  $region8: #{vgg_forward.14} parent=0 // pred_region
    _
  $region9: #{vgg_forward.14} parent=0 // pred_fallthru
    _
  // Predicated region
  $region10: #{vgg_forward.14} parent=0 // pred_check
    _
  $region11: #{vgg_forward.14} parent=0 // pred_check_branch
    %14 = sbr.rel (0) target = $region13
  $region12: #{vgg_forward.14} parent=0 // pred_region
    _
  $region13: #{vgg_forward.14} parent=0 // pred_fallthru
    _
  // Predicated region
  $region14: #{vgg_forward.14} parent=0 // pred_check
    _
  $region15: #{vgg_forward.14} parent=0 // pred_check_branch
    %16 = sbr.rel (0) target = $region17
  $region16: #{vgg_forward.14} parent=0 // pred_region
    _
  $region17: #{vgg_forward.14} parent=0 // pred_fallthru
    _
  %v17 = vld [vmem:[%s0] sm:$0xf]
  %v18 = vld [vmem:[%s1] sm:$0xf]
  %v19 = vmax.bf16 %v17, %v18
  %v20 = vld [vmem:[%s2] sm:$0xf]
  %v21 = vld [vmem:[%s3] sm:$0xf]
  %v22 = vmax.bf16 %v20, %v21
  %v23 = vmax.bf16 %v19, %v22
  %vm24 = vcmask 519168
  %25 = vst.msk [vmem:[%s4] sm:$0xf] %vm24, %v23
  // Predicated region
  $region18: #{vgg_forward.14} parent=0 // pred_check
    _
  $region19: #{vgg_forward.14} parent=0 // pred_check_branch
    %27 = sbr.rel (0) target = $region21
  $region20: #{vgg_forward.14} parent=0 // pred_region
    _
  $region21: #{vgg_forward.14} parent=0 // pred_fallthru
    _
  // Predicated region
  $region22: #{vgg_forward.14} parent=0 // pred_check
    _
  $region23: #{vgg_forward.14} parent=0 // pred_check_branch
    %29 = sbr.rel (0) target = $region25
  $region24: #{vgg_forward.14} parent=0 // pred_region
    _
  $region25: #{vgg_forward.14} parent=0 // pred_fallthru
    _

// kernel: vgg_forward.13
$region0: #{vgg_forward.13}
  #allocation0 [shape = 'u32[]', space=smem, size = 0x4, offset = 0x4, fixed_abs, tag = 'smem constant byte address 0x4 - core index']
  #allocation1 [shape = 'u32[144,128]{1,0:T(1,128)}', space=vmem, size = 0x12000, scoped, tag = 'internal scratch']
  %s0 = inlined_call_operand.vmem [shape: bf16[2,40,32], index: 0, kind: input, shape index: {}]
  %s1 = inlined_call_operand.vmem [shape: bf16[9,32,64], index: 1, kind: input, shape index: {}]
  %s2 = inlined_call_operand.vmem [shape: f32[1,64], index: 2, kind: input, shape index: {}]
  %s3 = inlined_call_operand.vmem [shape: bf16[2,24,64], index: 3, kind: output, shape index: {}]
  %s4 = sld [smem:[#allocation0]]
  $region45: #{vgg_forward.13} parent=0
    _
  %s6 = ssub.s32 1, %s4
  %s7 = scalar_select 0, %s6, %s4
  loop: start=0, step=1, limit=4
  $region2: #{vgg_forward.13} parent=0 // loop_pre_header
    _
  $region3: #{vgg_forward.13} parent=0 // loop_header
    %s9 = sphi 0, %s13
    %p10 = scmp.ge.s32.totalorder %s9, 4
    %s19 = sphi 0, %s21
    %s22 = sphi 0, %s19
    %s23 = sphi 0, %s22
    %s39 = sphi 0, %s23
    %s43 = sphi 0, %s43
    %s45 = sphi 0, %s43
    %s46 = sphi 0, %s45
    %s60 = sphi 0, %s46
    %s64 = sphi 0, %s64
    %s66 = sphi 0, %s64
    %s67 = sphi 0, %s66
    %s81 = sphi 0, %s67
    %s87 = sphi 0, %s89
    %s90 = sphi 0, %s87
    %s91 = sphi 0, %s90
    %s107 = sphi 0, %s91
  $region4: #{vgg_forward.13} parent=0 // loop_header_branch
    %12 = sbr.rel (%p10) target = $region8
  $region5: #{vgg_forward.13} parent=0 // loop_body
    %s14 = ssub.s32 %s9, 1
    %s15 = ssub.s32 %s9, 2
    %s16 = sadd.s32 %s9, 1
    %s17 = ssub.s32 %s9, %s16
    %p18 = scmp.eq.s32.totalorder %s17, 0
    %s20 = sadd.s32 %s19, 1
    %s21 = scalar_select %p18, %s19, %s20
    %p24 = pneg %p18
    %p25 = scmp.eq.s32.totalorder %s9, 1
    %p26 = por %p24, %p25
    %p27 = scmp.ne.s32.totalorder %s19, %s22
    %p28 = scmp.eq.s32.totalorder %s9, 0
    %p29 = por %p27, %p28
    %p30 = scmp.ne.s32.totalorder %s19, %s22
    %p31 = scmp.eq.s32.totalorder %s14, 1
    %p32 = por %p30, %p31
    %p33 = scmp.ne.s32.totalorder %s22, %s23
    %p34 = scmp.eq.s32.totalorder %s14, 0
    %p35 = por %p33, %p34
    %p36 = scmp.ne.s32.totalorder %s22, %s23
    %p37 = scmp.eq.s32.totalorder %s15, 1
    %p38 = por %p36, %p37
    %p40 = scmp.ne.s32.totalorder %s23, %s39
    %p41 = scmp.eq.s32.totalorder %s15, 0
    %p42 = por %p40, %p41
    %s44 = sadd.s32 %s43, 1
    %p47 = scmp.eq.s32.totalorder %s9, 1
    %p48 = scmp.ne.s32.totalorder %s43, %s45
    %p49 = scmp.eq.s32.totalorder %s9, 0
    %p50 = por %p48, %p49
    %p51 = scmp.ne.s32.totalorder %s43, %s45
    %p52 = scmp.eq.s32.totalorder %s14, 1
    %p53 = por %p51, %p52
    %p54 = scmp.ne.s32.totalorder %s45, %s46
    %p55 = scmp.eq.s32.totalorder %s14, 0
    %p56 = por %p54, %p55
    %p57 = scmp.ne.s32.totalorder %s45, %s46
    %p58 = scmp.eq.s32.totalorder %s15, 1
    %p59 = por %p57, %p58
    %p61 = scmp.ne.s32.totalorder %s46, %s60
    %p62 = scmp.eq.s32.totalorder %s15, 0
    %p63 = por %p61, %p62
    %s65 = sadd.s32 %s64, 1
    %p68 = scmp.eq.s32.totalorder %s9, 1
    %p69 = scmp.ne.s32.totalorder %s64, %s66
    %p70 = scmp.eq.s32.totalorder %s9, 0
    %p71 = por %p69, %p70
    %p72 = scmp.ne.s32.totalorder %s64, %s66
    %p73 = scmp.eq.s32.totalorder %s14, 1
    %p74 = por %p72, %p73
    %p75 = scmp.ne.s32.totalorder %s66, %s67
    %p76 = scmp.eq.s32.totalorder %s14, 0
    %p77 = por %p75, %p76
    %p78 = scmp.ne.s32.totalorder %s66, %s67
    %p79 = scmp.eq.s32.totalorder %s15, 1
    %p80 = por %p78, %p79
    %p82 = scmp.ne.s32.totalorder %s67, %s81
    %p83 = scmp.eq.s32.totalorder %s15, 0
    %p84 = por %p82, %p83
    %s85 = ssub.s32 %s9, %s16
    %p86 = scmp.eq.s32.totalorder %s85, 0
    %s88 = sadd.s32 %s87, 1
    %s89 = scalar_select %p86, %s87, %s88
    %p92 = pneg %p86
    %p93 = scmp.eq.s32.totalorder %s9, 1
    %p94 = por %p92, %p93
    %p95 = scmp.ne.s32.totalorder %s87, %s90
    %p96 = scmp.eq.s32.totalorder %s9, 0
    %p97 = por %p95, %p96
    %p98 = scmp.ne.s32.totalorder %s87, %s90
    %p99 = scmp.eq.s32.totalorder %s14, 1
    %p100 = por %p98, %p99
    %p101 = scmp.ne.s32.totalorder %s90, %s91
    %p102 = scmp.eq.s32.totalorder %s14, 0
    %p103 = por %p101, %p102
    %p104 = scmp.ne.s32.totalorder %s90, %s91
    %p105 = scmp.eq.s32.totalorder %s15, 1
    %p106 = por %p104, %p105
    %p108 = scmp.ne.s32.totalorder %s91, %s107
    %p109 = scmp.eq.s32.totalorder %s15, 0
    %p110 = por %p108, %p109
    %p111 = scmp.le.s32.totalorder 1, %s9
    %p112 = scmp.lt.s32.totalorder %s9, 3
    %p113 = pnand %p111, %p112
    %p114 = pneg %p113
    // Predicated region
    $region9: #{vgg_forward.13} parent=5 // pred_check
      _
    $region10: #{vgg_forward.13} parent=5 // pred_check_branch
      %116 = sbr.rel (%p113) target = $region12
    $region11: #{vgg_forward.13} parent=5 // pred_region
      %s117 = ssub.s32 %s9, 1
      // Predicated region
      $region13: #{vgg_forward.13} parent=11 // pred_check
        %p118 = pneg %p56
      $region14: #{vgg_forward.13} parent=11 // pred_check_branch
        %120 = sbr.rel (%p118) target = $region16
      $region15: #{vgg_forward.13} parent=11 // pred_region
        _
      $region16: #{vgg_forward.13} parent=11 // pred_fallthru
        _
      // Predicated region
      $region17: #{vgg_forward.13} parent=11 // pred_check
        %p121 = pneg %p77
      $region18: #{vgg_forward.13} parent=11 // pred_check_branch
        %123 = sbr.rel (%p121) target = $region20
      $region19: #{vgg_forward.13} parent=11 // pred_region
        _
      $region20: #{vgg_forward.13} parent=11 // pred_fallthru
        _
    $region12: #{vgg_forward.13} parent=5 // pred_fallthru
      _
    %p124 = scmp.lt.s32.totalorder %s9, 2
    // Predicated region
    $region21: #{vgg_forward.13} parent=5 // pred_check
      %p125 = pneg %p124
    $region22: #{vgg_forward.13} parent=5 // pred_check_branch
      %127 = sbr.rel (%p125) target = $region24
    $region23: #{vgg_forward.13} parent=5 // pred_region
      // Predicated region
      $region25: #{vgg_forward.13} parent=23 // pred_check
        %p128 = pneg %p29
      $region26: #{vgg_forward.13} parent=23 // pred_check_branch
        %130 = sbr.rel (%p128) target = $region28
      $region27: #{vgg_forward.13} parent=23 // pred_region
        %p131 = scmp.lt.s32.totalorder %s9, 1
        %s132 = scalar_select %p131, %s9, 1
        %s133 = smul.addr %s132, 5
        %s134 = smul.addr %s133, 4
        %s135 = scalar_lea.vmem %s0, %s134
      $region28: #{vgg_forward.13} parent=23 // pred_fallthru
        _
    $region24: #{vgg_forward.13} parent=5 // pred_fallthru
      _
    %p136 = scmp.le.s32.totalorder 1, %s9
    %p137 = scmp.lt.s32.totalorder %s9, 3
    %p138 = pnand %p136, %p137
    %p139 = pneg %p138
    // Predicated region
    $region29: #{vgg_forward.13} parent=5 // pred_check
      _
    $region30: #{vgg_forward.13} parent=5 // pred_check_branch
      %141 = sbr.rel (%p138) target = $region32
    $region31: #{vgg_forward.13} parent=5 // pred_region
      %s142 = ssub.s32 %s9, 1
      %p143 = scmp.lt.s32.totalorder %s14, 1
      %s144 = scalar_select %p143, %s14, 1
      %s145 = smul.addr %s144, 5
      %s146 = smul.addr %s145, 4
      %s147 = scalar_lea.vmem %s0, %s146
      %p148 = pneg %p35
      %p149 = pneg %p32
      %p150 = pneg %p56
      %p151 = pneg %p53
      %p152 = pneg %p77
      %p153 = pneg %p74
      %p154 = pneg %p103
      %p155 = pneg %p100
      %p156 = scmp.lt.s32.totalorder %s14, 1
      %s157 = scalar_select %p156, %s14, 1
      %s158 = smul.addr %s157, 3
      %s159 = smul.addr %s158, 4
      %s160 = scalar_lea.vmem %s3, %s159
      %p161 = scmp.lt.s32.totalorder %s14, 1
      %s162 = scalar_select %p161, %s14, 1
      %s163 = smul.addr %s162, 5
      %s164 = smul.addr %s163, 4
      %s165 = scalar_lea.vmem %s0, %s164
      %p166 = scmp.lt.s32.totalorder %s14, 1
      %s167 = scalar_select %p166, %s14, 1
      %s168 = smul.addr %s167, 3
      %s169 = smul.addr %s168, 4
      %s170 = scalar_lea.vmem %s3, %s169
      %v172 = vld [vmem:[%s165] sm:$0xf]
      %v173 = vld [vmem:[%s165 + $0x4] sm:$0xf]
      %v174 = vld [vmem:[%s165 + $0x8] sm:$0xf]
      %v175 = vld [vmem:[%s165 + $0xc] sm:$0xf]
      %v176 = vld [vmem:[%s165 + $0x10] sm:$0xf]
      %v177 = vld [vmem:[%s1] sm:$0xf]
      %v178 = vld [vmem:[%s1 + $0x4] sm:$0xf]
      %v179 = vld [vmem:[%s1 + $0x8] sm:$0xf]
      %v180 = vld [vmem:[%s1 + $0xc] sm:$0xf]
      %s181 = scalar_lea.vmem %s1, 16
      %v182 = vld [vmem:[%s181] sm:$0xf]
      %v183 = vld [vmem:[%s181 + $0x4] sm:$0xf]
      %v184 = vld [vmem:[%s181 + $0x8] sm:$0xf]
      %v185 = vld [vmem:[%s181 + $0xc] sm:$0xf]
      %v190 = vunpack.c.l.b16 %v172
      %v191 = vunpack.c.l.b16 %v173
      %v192 = vunpack.c.l.b16 %v174
      %v193 = vunpack.c.l.b16 %v175
      %v194 = vpack.c.b16 %v191, %v190
      %v195 = vpack.c.b16 %v193, %v192
      %vm196 = vsmask.f32 7424
      %v198 = vshrl.u32 %v194, 16
      %v200 = vshll.u32 %v194, 16
      %v202 = vrot.slane %v200, 1
      %v203 = vor.u32 %v198, %v202
      %v205 = vshll.u32 %v195, 16
      %v207 = vrot.slane %v205, 1
      %v208 = vsel %vm196, %v203, %v207
      %v209 = vshrl.u32 %v195, 16
      %v211 = vor.u32 %v209, %v207
      %v216 = vunpack.c.l.b16 %v182
      %v217 = vunpack.c.l.b16 %v183
      %v218 = vunpack.c.l.b16 %v184
      %v219 = vunpack.c.l.b16 %v185
      %v220 = vpack.c.b16 %v217, %v216
      %v221 = vpack.c.b16 %v219, %v218
      %vm224 = vcmask 261120
      %v226 = vsel %vm224, %v208, 0
      %v229 = vsel %vm224, %v211, 0
      %231 = vmatprep.subr.bf16.mxu0 0
      %232 = vmatpush1.bf16.msra.mxu0 %v220
      %233 = vmatprep.subr.bf16.mxu0 0
      %234 = vmatpush1.bf16.msra.mxu0 %v221
      %235 = vmatprep.subr.bf16.mxu0 0
      %236 = vmatpush1.bf16.msra.mxu0 0
      %237 = vmatprep.subr.bf16.mxu0 0
      %238 = vmatpush1.bf16.msra.mxu0 0
      %239 = vmatprep.subr.bf16.mxu0 0
      %240 = vmatpush1.bf16.msra.mxu0 0
      %241 = vmatprep.subr.bf16.mxu0 0
      %242 = vmatpush1.bf16.msra.mxu0 0
      %243 = vmatprep.subr.bf16.mxu0 0
      %244 = vmatpush1.bf16.msra.mxu0 0
      %245 = vmatprep.subr.bf16.mxu0 0
      %246 = vmatpush1.bf16.msra.mxu0 0
      %247 = vmatprep.subr.bf16.mxu0 0
      %248 = vmatpush1.bf16.msra.mxu0 0
      %249 = vmatprep.subr.bf16.mxu0 0
      %250 = vmatpush1.bf16.msra.mxu0 0
      %251 = vmatprep.subr.bf16.mxu0 0
      %252 = vmatpush1.bf16.msra.mxu0 0
      %253 = vmatprep.subr.bf16.mxu0 0
      %254 = vmatpush1.bf16.msra.mxu0 0
      %255 = vmatprep.subr.bf16.mxu0 0
      %256 = vmatpush1.bf16.msra.mxu0 0
      %257 = vmatprep.subr.bf16.mxu0 0
      %258 = vmatpush1.bf16.msra.mxu0 0
      %259 = vmatprep.subr.bf16.mxu0 0
      %260 = vmatpush1.bf16.msra.mxu0 0
      %261 = vmatprep.subr.bf16.mxu0 0
      %262 = vmatpush1.bf16.msra.mxu0 0
      %263 = vmatprep.mubr.bf16.mxu0 0
      %264 = vmatmul.mubr.bf16.gmra.mrb[0].mxu0 %v226
      %v265 = vpop.f32.mrb[0].mxu0
      %v266 = vadd.f32 0.0, %v265
      %v267 = vpop.f32.mrb[0].mxu0
      %v268 = vpop.f32.mrb[0].mxu0
      %v269 = vadd.f32 0.0, %v268
      %v270 = vpop.f32.mrb[0].mxu0
      %271 = vmatprep.mubr.bf16.mxu0 0
      %272 = vmatmul.mubr.bf16.gmra.mrb[0].mxu0 %v229
      %v273 = vpop.f32.mrb[0].mxu0
      %v274 = vadd.f32 0.0, %v273
      %v275 = vpop.f32.mrb[0].mxu0
      %v276 = vpop.f32.mrb[0].mxu0
      %v277 = vpop.f32.mrb[0].mxu0
      %278 = vdwg.mxu0
      %v279 = vpack.c.b16 %v192, %v192
      %v284 = vunpack.c.l.b16 %v177
      %v285 = vunpack.c.l.b16 %v178
      %v286 = vunpack.c.l.b16 %v179
      %v287 = vunpack.c.l.b16 %v180
      %v288 = vpack.c.b16 %v285, %v284
      %v289 = vpack.c.b16 %v287, %v286
      %v292 = vsel %vm224, %v194, 0
      %v295 = vsel %vm224, %v279, 0
      %297 = vmatprep.subr.bf16.mxu0 0
      %298 = vmatpush1.bf16.msra.mxu0 %v288
      %299 = vmatprep.subr.bf16.mxu0 0
      %300 = vmatpush1.bf16.msra.mxu0 %v289
      %301 = vmatprep.subr.bf16.mxu0 0
      %302 = vmatpush1.bf16.msra.mxu0 0
      %303 = vmatprep.subr.bf16.mxu0 0
      %304 = vmatpush1.bf16.msra.mxu0 0
      %305 = vmatprep.subr.bf16.mxu0 0
      %306 = vmatpush1.bf16.msra.mxu0 0
      %307 = vmatprep.subr.bf16.mxu0 0
      %308 = vmatpush1.bf16.msra.mxu0 0
      %309 = vmatprep.subr.bf16.mxu0 0
      %310 = vmatpush1.bf16.msra.mxu0 0
      %311 = vmatprep.subr.bf16.mxu0 0
      %312 = vmatpush1.bf16.msra.mxu0 0
      %313 = vmatprep.subr.bf16.mxu0 0
      %314 = vmatpush1.bf16.msra.mxu0 0
      %315 = vmatprep.subr.bf16.mxu0 0
      %316 = vmatpush1.bf16.msra.mxu0 0
      %317 = vmatprep.subr.bf16.mxu0 0
      %318 = vmatpush1.bf16.msra.mxu0 0
      %319 = vmatprep.subr.bf16.mxu0 0
      %320 = vmatpush1.bf16.msra.mxu0 0
      %321 = vmatprep.subr.bf16.mxu0 0
      %322 = vmatpush1.bf16.msra.mxu0 0
      %323 = vmatprep.subr.bf16.mxu0 0
      %324 = vmatpush1.bf16.msra.mxu0 0
      %325 = vmatprep.subr.bf16.mxu0 0
      %326 = vmatpush1.bf16.msra.mxu0 0
      %327 = vmatprep.subr.bf16.mxu0 0
      %328 = vmatpush1.bf16.msra.mxu0 0
      %329 = vmatprep.mubr.bf16.mxu0 0
      %330 = vmatmul.mubr.bf16.gmra.mrb[0].mxu0 %v292
      %v331 = vpop.f32.mrb[0].mxu0
      %v332 = vadd.f32 %v266, %v331
      %v333 = vpop.f32.mrb[0].mxu0
      %v334 = vpop.f32.mrb[0].mxu0
      %v335 = vadd.f32 %v269, %v334
      %v336 = vpop.f32.mrb[0].mxu0
      %337 = vmatprep.mubr.bf16.mxu0 0
      %338 = vmatmul.mubr.bf16.gmra.mrb[0].mxu0 %v295
      %v339 = vpop.f32.mrb[0].mxu0
      %v340 = vadd.f32 %v274, %v339
      %v341 = vpop.f32.mrb[0].mxu0
      %v342 = vpop.f32.mrb[0].mxu0
      %v343 = vpop.f32.mrb[0].mxu0
      %344 = vdwg.mxu0
      %s345 = scalar_lea.vmem %s1, 32
      %v346 = vld [vmem:[%s345] sm:$0xf]
      %v347 = vld [vmem:[%s345 + $0x4] sm:$0xf]
      %v348 = vld [vmem:[%s345 + $0x8] sm:$0xf]
      %v349 = vld [vmem:[%s345 + $0xc] sm:$0xf]
      %vm350 = vcmask 1046528
      %v351 = vrot.slane %v194, 1
      %v352 = vrot.slane %v195, 1
      %v353 = vsel %vm350, %v351, %v352
      %v358 = vunpack.c.l.b16 %v346
      %v359 = vunpack.c.l.b16 %v347
      %v360 = vunpack.c.l.b16 %v348
      %v361 = vunpack.c.l.b16 %v349
      %v362 = vpack.c.b16 %v359, %v358
      %v363 = vpack.c.b16 %v361, %v360
      %v367 = vsel %vm224, %v353, 0
      %v370 = vsel %vm224, %v352, 0
      %372 = vmatprep.subr.bf16.mxu0 0
      %373 = vmatpush1.bf16.msra.mxu0 %v362
      %374 = vmatprep.subr.bf16.mxu0 0
      %375 = vmatpush1.bf16.msra.mxu0 %v363
      %376 = vmatprep.subr.bf16.mxu0 0
      %377 = vmatpush1.bf16.msra.mxu0 0
      %378 = vmatprep.subr.bf16.mxu0 0
      %379 = vmatpush1.bf16.msra.mxu0 0
      %380 = vmatprep.subr.bf16.mxu0 0
      %381 = vmatpush1.bf16.msra.mxu0 0
      %382 = vmatprep.subr.bf16.mxu0 0
      %383 = vmatpush1.bf16.msra.mxu0 0
      %384 = vmatprep.subr.bf16.mxu0 0
      %385 = vmatpush1.bf16.msra.mxu0 0
      %386 = vmatprep.subr.bf16.mxu0 0
      %387 = vmatpush1.bf16.msra.mxu0 0
      %388 = vmatprep.subr.bf16.mxu0 0
      %389 = vmatpush1.bf16.msra.mxu0 0
      %390 = vmatprep.subr.bf16.mxu0 0
      %391 = vmatpush1.bf16.msra.mxu0 0
      %392 = vmatprep.subr.bf16.mxu0 0
      %393 = vmatpush1.bf16.msra.mxu0 0
      %394 = vmatprep.subr.bf16.mxu0 0
      %395 = vmatpush1.bf16.msra.mxu0 0
      %396 = vmatprep.subr.bf16.mxu0 0
      %397 = vmatpush1.bf16.msra.mxu0 0
      %398 = vmatprep.subr.bf16.mxu0 0
      %399 = vmatpush1.bf16.msra.mxu0 0
      %400 = vmatprep.subr.bf16.mxu0 0
      %401 = vmatpush1.bf16.msra.mxu0 0
      %402 = vmatprep.subr.bf16.mxu0 0
      %403 = vmatpush1.bf16.msra.mxu0 0
      %404 = vmatprep.mubr.bf16.mxu0 0
      %405 = vmatmul.mubr.bf16.gmra.mrb[0].mxu0 %v367
      %v406 = vpop.f32.mrb[0].mxu0
      %v407 = vadd.f32 0.0, %v406
      %v408 = vpop.f32.mrb[0].mxu0
      %v409 = vpop.f32.mrb[0].mxu0
      %v410 = vadd.f32 0.0, %v409
      %v411 = vpop.f32.mrb[0].mxu0
      %412 = vmatprep.mubr.bf16.mxu0 0
      %413 = vmatmul.mubr.bf16.gmra.mrb[0].mxu0 %v370
      %v414 = vpop.f32.mrb[0].mxu0
      %v415 = vadd.f32 0.0, %v414
      %v416 = vpop.f32.mrb[0].mxu0
      %v417 = vpop.f32.mrb[0].mxu0
      %v418 = vpop.f32.mrb[0].mxu0
      %419 = vdwg.mxu0
      %v420 = vadd.f32 %v332, %v407
      %v421 = vadd.f32 %v335, %v410
      %v422 = vadd.f32 %v340, %v415
      %s423 = scalar_lea.vmem %s1, 48
      %v424 = vld [vmem:[%s423] sm:$0xf]
      %v425 = vld [vmem:[%s423 + $0x4] sm:$0xf]
      %v426 = vld [vmem:[%s423 + $0x8] sm:$0xf]
      %v427 = vld [vmem:[%s423 + $0xc] sm:$0xf]
      %vm428 = vcmask 1044480
      %v429 = vrot.slane %v194, 3
      %v430 = vrot.slane %v195, 3
      %v431 = vsel %vm428, %v429, %v430
      %v436 = vunpack.c.l.b16 %v424
      %v437 = vunpack.c.l.b16 %v425
      %v438 = vunpack.c.l.b16 %v426
      %v439 = vunpack.c.l.b16 %v427
      %v440 = vpack.c.b16 %v437, %v436
      %v441 = vpack.c.b16 %v439, %v438
      %v445 = vsel %vm224, %v431, 0
      %v448 = vsel %vm224, %v430, 0
      %450 = vmatprep.subr.bf16.mxu0 0
      %451 = vmatpush1.bf16.msra.mxu0 %v440
      %452 = vmatprep.subr.bf16.mxu0 0
      %453 = vmatpush1.bf16.msra.mxu0 %v441
      %454 = vmatprep.subr.bf16.mxu0 0
      %455 = vmatpush1.bf16.msra.mxu0 0
      %456 = vmatprep.subr.bf16.mxu0 0
      %457 = vmatpush1.bf16.msra.mxu0 0
      %458 = vmatprep.subr.bf16.mxu0 0
      %459 = vmatpush1.bf16.msra.mxu0 0
      %460 = vmatprep.subr.bf16.mxu0 0
      %461 = vmatpush1.bf16.msra.mxu0 0
      %462 = vmatprep.subr.bf16.mxu0 0
      %463 = vmatpush1.bf16.msra.mxu0 0
      %464 = vmatprep.subr.bf16.mxu0 0
      %465 = vmatpush1.bf16.msra.mxu0 0
      %466 = vmatprep.subr.bf16.mxu0 0
      %467 = vmatpush1.bf16.msra.mxu0 0
      %468 = vmatprep.subr.bf16.mxu0 0
      %469 = vmatpush1.bf16.msra.mxu0 0
      %470 = vmatprep.subr.bf16.mxu0 0
      %471 = vmatpush1.bf16.msra.mxu0 0
      %472 = vmatprep.subr.bf16.mxu0 0
      %473 = vmatpush1.bf16.msra.mxu0 0
      %474 = vmatprep.subr.bf16.mxu0 0
      %475 = vmatpush1.bf16.msra.mxu0 0
      %476 = vmatprep.subr.bf16.mxu0 0
      %477 = vmatpush1.bf16.msra.mxu0 0
      %478 = vmatprep.subr.bf16.mxu0 0
      %479 = vmatpush1.bf16.msra.mxu0 0
      %480 = vmatprep.subr.bf16.mxu0 0
      %481 = vmatpush1.bf16.msra.mxu0 0
      %482 = vmatprep.mubr.bf16.mxu0 0
      %483 = vmatmul.mubr.bf16.gmra.mrb[0].mxu0 %v445
      %v484 = vpop.f32.mrb[0].mxu0
      %v485 = vadd.f32 0.0, %v484
      %v486 = vpop.f32.mrb[0].mxu0
      %v487 = vpop.f32.mrb[0].mxu0
      %v488 = vadd.f32 0.0, %v487
      %v489 = vpop.f32.mrb[0].mxu0
      %490 = vmatprep.mubr.bf16.mxu0 0
      %491 = vmatmul.mubr.bf16.gmra.mrb[0].mxu0 %v448
      %v492 = vpop.f32.mrb[0].mxu0
      %v493 = vadd.f32 0.0, %v492
      %v494 = vpop.f32.mrb[0].mxu0
      %v495 = vpop.f32.mrb[0].mxu0
      %v496 = vpop.f32.mrb[0].mxu0
      %497 = vdwg.mxu0
      %v498 = vadd.f32 %v420, %v485
      %v499 = vadd.f32 %v421, %v488
      %v500 = vadd.f32 %v422, %v493
      %s501 = scalar_lea.vmem %s1, 64
      %v502 = vld [vmem:[%s501] sm:$0xf]
      %v503 = vld [vmem:[%s501 + $0x4] sm:$0xf]
      %v504 = vld [vmem:[%s501 + $0x8] sm:$0xf]
      %v505 = vld [vmem:[%s501 + $0xc] sm:$0xf]
      %vm506 = vsmask.f32 4352
      %v507 = vrot.slane %v198, 3
      %v508 = vrot.slane %v200, 4
      %v509 = vor.u32 %v507, %v508
      %v510 = vrot.slane %v209, 3
      %v511 = vrot.slane %v205, 4
      %v512 = vor.u32 %v510, %v511
      %v513 = vsel %vm506, %v509, %v512
      %v518 = vunpack.c.l.b16 %v502
      %v519 = vunpack.c.l.b16 %v503
      %v520 = vunpack.c.l.b16 %v504
      %v521 = vunpack.c.l.b16 %v505
      %v522 = vpack.c.b16 %v519, %v518
      %v523 = vpack.c.b16 %v521, %v520
      %v527 = vsel %vm224, %v513, 0
      %v530 = vsel %vm224, %v512, 0
      %532 = vmatprep.subr.bf16.mxu0 0
      %533 = vmatpush1.bf16.msra.mxu0 %v522
      %534 = vmatprep.subr.bf16.mxu0 0
      %535 = vmatpush1.bf16.msra.mxu0 %v523
      %536 = vmatprep.subr.bf16.mxu0 0
      %537 = vmatpush1.bf16.msra.mxu0 0
      %538 = vmatprep.subr.bf16.mxu0 0
      %539 = vmatpush1.bf16.msra.mxu0 0
      %540 = vmatprep.subr.bf16.mxu0 0
      %541 = vmatpush1.bf16.msra.mxu0 0
      %542 = vmatprep.subr.bf16.mxu0 0
      %543 = vmatpush1.bf16.msra.mxu0 0
      %544 = vmatprep.subr.bf16.mxu0 0
      %545 = vmatpush1.bf16.msra.mxu0 0
      %546 = vmatprep.subr.bf16.mxu0 0
      %547 = vmatpush1.bf16.msra.mxu0 0
      %548 = vmatprep.subr.bf16.mxu0 0
      %549 = vmatpush1.bf16.msra.mxu0 0
      %550 = vmatprep.subr.bf16.mxu0 0
      %551 = vmatpush1.bf16.msra.mxu0 0
      %552 = vmatprep.subr.bf16.mxu0 0
      %553 = vmatpush1.bf16.msra.mxu0 0
      %554 = vmatprep.subr.bf16.mxu0 0
      %555 = vmatpush1.bf16.msra.mxu0 0
      %556 = vmatprep.subr.bf16.mxu0 0
      %557 = vmatpush1.bf16.msra.mxu0 0
      %558 = vmatprep.subr.bf16.mxu0 0
      %559 = vmatpush1.bf16.msra.mxu0 0
      %560 = vmatprep.subr.bf16.mxu0 0
      %561 = vmatpush1.bf16.msra.mxu0 0
      %562 = vmatprep.subr.bf16.mxu0 0
      %563 = vmatpush1.bf16.msra.mxu0 0
      %564 = vmatprep.mubr.bf16.mxu0 0
      %565 = vmatmul.mubr.bf16.gmra.mrb[0].mxu0 %v527
      %v566 = vpop.f32.mrb[0].mxu0
      %v567 = vadd.f32 0.0, %v566
      %v568 = vpop.f32.mrb[0].mxu0
      %v569 = vpop.f32.mrb[0].mxu0
      %v570 = vadd.f32 0.0, %v569
      %v571 = vpop.f32.mrb[0].mxu0
      %572 = vmatprep.mubr.bf16.mxu0 0
      %573 = vmatmul.mubr.bf16.gmra.mrb[0].mxu0 %v530
      %v574 = vpop.f32.mrb[0].mxu0
      %v575 = vadd.f32 0.0, %v574
      %v576 = vpop.f32.mrb[0].mxu0
      %v577 = vpop.f32.mrb[0].mxu0
      %v578 = vpop.f32.mrb[0].mxu0
      %579 = vdwg.mxu0
      %v580 = vadd.f32 %v498, %v567
      %v581 = vadd.f32 %v499, %v570
      %v582 = vadd.f32 %v500, %v575
      %s583 = scalar_lea.vmem %s1, 80
      %v584 = vld [vmem:[%s583] sm:$0xf]
      %v585 = vld [vmem:[%s583 + $0x4] sm:$0xf]
      %v586 = vld [vmem:[%s583 + $0x8] sm:$0xf]
      %v587 = vld [vmem:[%s583 + $0xc] sm:$0xf]
      %v588 = vpack.c.b16 %v192, %v191
      %v589 = vpack.c.b16 %v193, %v193
      %v594 = vunpack.c.l.b16 %v584
      %v595 = vunpack.c.l.b16 %v585
      %v596 = vunpack.c.l.b16 %v586
      %v597 = vunpack.c.l.b16 %v587
      %v598 = vpack.c.b16 %v595, %v594
      %v599 = vpack.c.b16 %v597, %v596
      %v603 = vsel %vm224, %v588, 0
      %v606 = vsel %vm224, %v589, 0
      %608 = vmatprep.subr.bf16.mxu0 0
      %609 = vmatpush1.bf16.msra.mxu0 %v598
      %610 = vmatprep.subr.bf16.mxu0 0
      %611 = vmatpush1.bf16.msra.mxu0 %v599
      %612 = vmatprep.subr.bf16.mxu0 0
      %613 = vmatpush1.bf16.msra.mxu0 0
      %614 = vmatprep.subr.bf16.mxu0 0
      %615 = vmatpush1.bf16.msra.mxu0 0
      %616 = vmatprep.subr.bf16.mxu0 0
      %617 = vmatpush1.bf16.msra.mxu0 0
      %618 = vmatprep.subr.bf16.mxu0 0
      %619 = vmatpush1.bf16.msra.mxu0 0
      %620 = vmatprep.subr.bf16.mxu0 0
      %621 = vmatpush1.bf16.msra.mxu0 0
      %622 = vmatprep.subr.bf16.mxu0 0
      %623 = vmatpush1.bf16.msra.mxu0 0
      %624 = vmatprep.subr.bf16.mxu0 0
      %625 = vmatpush1.bf16.msra.mxu0 0
      %626 = vmatprep.subr.bf16.mxu0 0
      %627 = vmatpush1.bf16.msra.mxu0 0
      %628 = vmatprep.subr.bf16.mxu0 0
      %629 = vmatpush1.bf16.msra.mxu0 0
      %630 = vmatprep.subr.bf16.mxu0 0
      %631 = vmatpush1.bf16.msra.mxu0 0
      %632 = vmatprep.subr.bf16.mxu0 0
      %633 = vmatpush1.bf16.msra.mxu0 0
      %634 = vmatprep.subr.bf16.mxu0 0
      %635 = vmatpush1.bf16.msra.mxu0 0
      %636 = vmatprep.subr.bf16.mxu0 0
      %637 = vmatpush1.bf16.msra.mxu0 0
      %638 = vmatprep.subr.bf16.mxu0 0
      %639 = vmatpush1.bf16.msra.mxu0 0
      %640 = vmatprep.mubr.bf16.mxu0 0
      %641 = vmatmul.mubr.bf16.gmra.mrb[0].mxu0 %v603
      %v642 = vpop.f32.mrb[0].mxu0
      %v643 = vadd.f32 0.0, %v642
      %v644 = vpop.f32.mrb[0].mxu0
      %v645 = vpop.f32.mrb[0].mxu0
      %v646 = vadd.f32 0.0, %v645
      %v647 = vpop.f32.mrb[0].mxu0
      %648 = vmatprep.mubr.bf16.mxu0 0
      %649 = vmatmul.mubr.bf16.gmra.mrb[0].mxu0 %v606
      %v650 = vpop.f32.mrb[0].mxu0
      %v651 = vadd.f32 0.0, %v650
      %v652 = vpop.f32.mrb[0].mxu0
      %v653 = vpop.f32.mrb[0].mxu0
      %v654 = vpop.f32.mrb[0].mxu0
      %655 = vdwg.mxu0
      %v656 = vadd.f32 %v580, %v643
      %v657 = vadd.f32 %v581, %v646
      %v658 = vadd.f32 %v582, %v651
      %s659 = scalar_lea.vmem %s1, 96
      %v660 = vld [vmem:[%s659] sm:$0xf]
      %v661 = vld [vmem:[%s659 + $0x4] sm:$0xf]
      %v662 = vld [vmem:[%s659 + $0x8] sm:$0xf]
      %v663 = vld [vmem:[%s659 + $0xc] sm:$0xf]
      %v665 = vunpack.c.l.b16 %v176
      %v666 = vpack.c.b16 %v665, %v193
      %vm667 = vcmask 1045504
      %v668 = vrot.slane %v588, 2
      %v669 = vrot.slane %v666, 2
      %v670 = vsel %vm667, %v668, %v669
      %v675 = vunpack.c.l.b16 %v660
      %v676 = vunpack.c.l.b16 %v661
      %v677 = vunpack.c.l.b16 %v662
      %v678 = vunpack.c.l.b16 %v663
      %v679 = vpack.c.b16 %v676, %v675
      %v680 = vpack.c.b16 %v678, %v677
      %v684 = vsel %vm224, %v670, 0
      %v687 = vsel %vm224, %v669, 0
      %689 = vmatprep.subr.bf16.mxu0 0
      %690 = vmatpush1.bf16.msra.mxu0 %v679
      %691 = vmatprep.subr.bf16.mxu0 0
      %692 = vmatpush1.bf16.msra.mxu0 %v680
      %693 = vmatprep.subr.bf16.mxu0 0
      %694 = vmatpush1.bf16.msra.mxu0 0
      %695 = vmatprep.subr.bf16.mxu0 0
      %696 = vmatpush1.bf16.msra.mxu0 0
      %697 = vmatprep.subr.bf16.mxu0 0
      %698 = vmatpush1.bf16.msra.mxu0 0
      %699 = vmatprep.subr.bf16.mxu0 0
      %700 = vmatpush1.bf16.msra.mxu0 0
      %701 = vmatprep.subr.bf16.mxu0 0
      %702 = vmatpush1.bf16.msra.mxu0 0
      %703 = vmatprep.subr.bf16.mxu0 0
      %704 = vmatpush1.bf16.msra.mxu0 0
      %705 = vmatprep.subr.bf16.mxu0 0
      %706 = vmatpush1.bf16.msra.mxu0 0
      %707 = vmatprep.subr.bf16.mxu0 0
      %708 = vmatpush1.bf16.msra.mxu0 0
      %709 = vmatprep.subr.bf16.mxu0 0
      %710 = vmatpush1.bf16.msra.mxu0 0
      %711 = vmatprep.subr.bf16.mxu0 0
      %712 = vmatpush1.bf16.msra.mxu0 0
      %713 = vmatprep.subr.bf16.mxu0 0
      %714 = vmatpush1.bf16.msra.mxu0 0
      %715 = vmatprep.subr.bf16.mxu0 0
      %716 = vmatpush1.bf16.msra.mxu0 0
      %717 = vmatprep.subr.bf16.mxu0 0
      %718 = vmatpush1.bf16.msra.mxu0 0
      %719 = vmatprep.subr.bf16.mxu0 0
      %720 = vmatpush1.bf16.msra.mxu0 0
      %721 = vmatprep.mubr.bf16.mxu0 0
      %722 = vmatmul.mubr.bf16.gmra.mrb[0].mxu0 %v684
      %v723 = vpop.f32.mrb[0].mxu0
      %v724 = vadd.f32 0.0, %v723
      %v725 = vpop.f32.mrb[0].mxu0
      %v726 = vpop.f32.mrb[0].mxu0
      %v727 = vadd.f32 0.0, %v726
      %v728 = vpop.f32.mrb[0].mxu0
      %729 = vmatprep.mubr.bf16.mxu0 0
      %730 = vmatmul.mubr.bf16.gmra.mrb[0].mxu0 %v687
      %v731 = vpop.f32.mrb[0].mxu0
      %v732 = vadd.f32 0.0, %v731
      %v733 = vpop.f32.mrb[0].mxu0
      %v734 = vpop.f32.mrb[0].mxu0
      %v735 = vpop.f32.mrb[0].mxu0
      %736 = vdwg.mxu0
      %v737 = vadd.f32 %v656, %v724
      %v738 = vadd.f32 %v657, %v727
      %v739 = vadd.f32 %v658, %v732
      %s740 = scalar_lea.vmem %s1, 112
      %v741 = vld [vmem:[%s740] sm:$0xf]
      %v742 = vld [vmem:[%s740 + $0x4] sm:$0xf]
      %v743 = vld [vmem:[%s740 + $0x8] sm:$0xf]
      %v744 = vld [vmem:[%s740 + $0xc] sm:$0xf]
      %vm745 = vsmask.f32 5376
      %v746 = vshrl.u32 %v588, 16
      %v748 = vrot.slane %v746, 2
      %v749 = vshll.u32 %v588, 16
      %v751 = vrot.slane %v749, 3
      %v752 = vor.u32 %v748, %v751
      %v754 = vshrl.u32 %v666, 16
      %v756 = vrot.slane %v754, 2
      %v757 = vshll.u32 %v666, 16
      %v759 = vrot.slane %v757, 3
      %v760 = vor.u32 %v756, %v759
      %v761 = vsel %vm745, %v752, %v760
      %v766 = vunpack.c.l.b16 %v741
      %v767 = vunpack.c.l.b16 %v742
      %v768 = vunpack.c.l.b16 %v743
      %v769 = vunpack.c.l.b16 %v744
      %v770 = vpack.c.b16 %v767, %v766
      %v771 = vpack.c.b16 %v769, %v768
      %v775 = vsel %vm224, %v761, 0
      %v778 = vsel %vm224, %v760, 0
      %780 = vmatprep.subr.bf16.mxu0 0
      %781 = vmatpush1.bf16.msra.mxu0 %v770
      %782 = vmatprep.subr.bf16.mxu0 0
      %783 = vmatpush1.bf16.msra.mxu0 %v771
      %784 = vmatprep.subr.bf16.mxu0 0
      %785 = vmatpush1.bf16.msra.mxu0 0
      %786 = vmatprep.subr.bf16.mxu0 0
      %787 = vmatpush1.bf16.msra.mxu0 0
      %788 = vmatprep.subr.bf16.mxu0 0
      %789 = vmatpush1.bf16.msra.mxu0 0
      %790 = vmatprep.subr.bf16.mxu0 0
      %791 = vmatpush1.bf16.msra.mxu0 0
      %792 = vmatprep.subr.bf16.mxu0 0
      %793 = vmatpush1.bf16.msra.mxu0 0
      %794 = vmatprep.subr.bf16.mxu0 0
      %795 = vmatpush1.bf16.msra.mxu0 0
      %796 = vmatprep.subr.bf16.mxu0 0
      %797 = vmatpush1.bf16.msra.mxu0 0
      %798 = vmatprep.subr.bf16.mxu0 0
      %799 = vmatpush1.bf16.msra.mxu0 0
      %800 = vmatprep.subr.bf16.mxu0 0
      %801 = vmatpush1.bf16.msra.mxu0 0
      %802 = vmatprep.subr.bf16.mxu0 0
      %803 = vmatpush1.bf16.msra.mxu0 0
      %804 = vmatprep.subr.bf16.mxu0 0
      %805 = vmatpush1.bf16.msra.mxu0 0
      %806 = vmatprep.subr.bf16.mxu0 0
      %807 = vmatpush1.bf16.msra.mxu0 0
      %808 = vmatprep.subr.bf16.mxu0 0
      %809 = vmatpush1.bf16.msra.mxu0 0
      %810 = vmatprep.subr.bf16.mxu0 0
      %811 = vmatpush1.bf16.msra.mxu0 0
      %812 = vmatprep.mubr.bf16.mxu0 0
      %813 = vmatmul.mubr.bf16.gmra.mrb[0].mxu0 %v775
      %v814 = vpop.f32.mrb[0].mxu0
      %v815 = vadd.f32 0.0, %v814
      %v816 = vpop.f32.mrb[0].mxu0
      %v817 = vpop.f32.mrb[0].mxu0
      %v818 = vadd.f32 0.0, %v817
      %v819 = vpop.f32.mrb[0].mxu0
      %820 = vmatprep.mubr.bf16.mxu0 0
      %821 = vmatmul.mubr.bf16.gmra.mrb[0].mxu0 %v778
      %v822 = vpop.f32.mrb[0].mxu0
      %v823 = vadd.f32 0.0, %v822
      %v824 = vpop.f32.mrb[0].mxu0
      %v825 = vpop.f32.mrb[0].mxu0
      %v826 = vpop.f32.mrb[0].mxu0
      %827 = vdwg.mxu0
      %v828 = vadd.f32 %v737, %v815
      %v829 = vadd.f32 %v738, %v818
      %v830 = vadd.f32 %v739, %v823
      %s831 = scalar_lea.vmem %s1, 128
      %v832 = vld [vmem:[%s831] sm:$0xf]
      %v833 = vld [vmem:[%s831 + $0x4] sm:$0xf]
      %v834 = vld [vmem:[%s831 + $0x8] sm:$0xf]
      %v835 = vld [vmem:[%s831 + $0xc] sm:$0xf]
      %v836 = vrot.slane %v588, 3
      %v837 = vrot.slane %v666, 3
      %v838 = vsel %vm428, %v836, %v837
      %v843 = vunpack.c.l.b16 %v832
      %v844 = vunpack.c.l.b16 %v833
      %v845 = vunpack.c.l.b16 %v834
      %v846 = vunpack.c.l.b16 %v835
      %v847 = vpack.c.b16 %v844, %v843
      %v848 = vpack.c.b16 %v846, %v845
      %v852 = vsel %vm224, %v838, 0
      %v855 = vsel %vm224, %v837, 0
      %857 = vmatprep.subr.bf16.mxu0 0
      %858 = vmatpush1.bf16.msra.mxu0 %v847
      %859 = vmatprep.subr.bf16.mxu0 0
      %860 = vmatpush1.bf16.msra.mxu0 %v848
      %861 = vmatprep.subr.bf16.mxu0 0
      %862 = vmatpush1.bf16.msra.mxu0 0
      %863 = vmatprep.subr.bf16.mxu0 0
      %864 = vmatpush1.bf16.msra.mxu0 0
      %865 = vmatprep.subr.bf16.mxu0 0
      %866 = vmatpush1.bf16.msra.mxu0 0
      %867 = vmatprep.subr.bf16.mxu0 0
      %868 = vmatpush1.bf16.msra.mxu0 0
      %869 = vmatprep.subr.bf16.mxu0 0
      %870 = vmatpush1.bf16.msra.mxu0 0
      %871 = vmatprep.subr.bf16.mxu0 0
      %872 = vmatpush1.bf16.msra.mxu0 0
      %873 = vmatprep.subr.bf16.mxu0 0
      %874 = vmatpush1.bf16.msra.mxu0 0
      %875 = vmatprep.subr.bf16.mxu0 0
      %876 = vmatpush1.bf16.msra.mxu0 0
      %877 = vmatprep.subr.bf16.mxu0 0
      %878 = vmatpush1.bf16.msra.mxu0 0
      %879 = vmatprep.subr.bf16.mxu0 0
      %880 = vmatpush1.bf16.msra.mxu0 0
      %881 = vmatprep.subr.bf16.mxu0 0
      %882 = vmatpush1.bf16.msra.mxu0 0
      %883 = vmatprep.subr.bf16.mxu0 0
      %884 = vmatpush1.bf16.msra.mxu0 0
      %885 = vmatprep.subr.bf16.mxu0 0
      %886 = vmatpush1.bf16.msra.mxu0 0
      %887 = vmatprep.subr.bf16.mxu0 0
      %888 = vmatpush1.bf16.msra.mxu0 0
      %889 = vmatprep.mubr.bf16.mxu0 0
      %890 = vmatmul.mubr.bf16.gmra.mrb[0].mxu0 %v852
      %v891 = vpop.f32.mrb[0].mxu0
      %v892 = vadd.f32 0.0, %v891
      %v893 = vpop.f32.mrb[0].mxu0
      %v894 = vpop.f32.mrb[0].mxu0
      %v895 = vadd.f32 0.0, %v894
      %v896 = vpop.f32.mrb[0].mxu0
      %897 = vmatprep.mubr.bf16.mxu0 0
      %898 = vmatmul.mubr.bf16.gmra.mrb[0].mxu0 %v855
      %v899 = vpop.f32.mrb[0].mxu0
      %v900 = vadd.f32 0.0, %v899
      %v901 = vpop.f32.mrb[0].mxu0
      %v902 = vpop.f32.mrb[0].mxu0
      %v903 = vpop.f32.mrb[0].mxu0
      %904 = vdwg.mxu0
      %v905 = vadd.f32 %v828, %v892
      %v906 = vadd.f32 %v829, %v895
      %v907 = vadd.f32 %v830, %v900
      %v908 = vld [vmem:[%s2] sm:$0x1]
      %v910 = vlaneseq
      %v911 = vshrl.u32 %v910, 7
      %v912 = vsub.s32 0, %v911
      %v913 = vrot.slane %v908, %v912
      %v915 = vadd.f32 %v905, %v913
      %v916 = vadd.f32 %v906, %v913
      %v917 = vadd.f32 %v907, %v913
      %v918 = vmax.f32 %v915, 0.0
      %v919 = vmax.f32 %v916, 0.0
      %v920 = vmax.f32 %v917, 0.0
      %v921 = vpack.c.bf16 %v919, %v918
      %v922 = vpack.c.bf16 %v920, %v920
      %v925 = vunpack.c.l.b16 %v921
      %v926 = vunpack.c.h.b16 %v921
      %v927 = vunpack.c.l.b16 %v922
      %v928 = vpack.c.b16 %v925, %v925
      %v929 = vpack.c.b16 %v926, %v926
      %v930 = vpack.c.b16 %v927, %v927
      %vm934 = vcmask 519168
      %935 = vst.msk [vmem:[%s170] sm:$0xf] %vm934, %v928
      %936 = vst.msk [vmem:[%s170 + $0x4] sm:$0xf] %vm934, %v929
      %937 = vst.msk [vmem:[%s170 + $0x8] sm:$0xf] %vm934, %v930
      %p938 = scmp.lt.s32.totalorder %s14, 1
      %s939 = scalar_select %p938, %s14, 1
      %s940 = smul.addr %s939, 3
      %s941 = smul.addr %s940, 4
      %s942 = scalar_lea.vmem %s3, %s941
      // Predicated region
      $region33: #{vgg_forward.13} parent=31 // pred_check
        %p943 = pneg %p100
      $region34: #{vgg_forward.13} parent=31 // pred_check_branch
        %945 = sbr.rel (%p943) target = $region36
      $region35: #{vgg_forward.13} parent=31 // pred_region
        _
      $region36: #{vgg_forward.13} parent=31 // pred_fallthru
        _
    $region32: #{vgg_forward.13} parent=5 // pred_fallthru
      _
    %p946 = scmp.le.s32.totalorder 2, %s9
    // Predicated region
    $region37: #{vgg_forward.13} parent=5 // pred_check
      %p947 = pneg %p946
    $region38: #{vgg_forward.13} parent=5 // pred_check_branch
      %949 = sbr.rel (%p947) target = $region40
    $region39: #{vgg_forward.13} parent=5 // pred_region
      %s950 = ssub.s32 %s9, 2
      // Predicated region
      $region41: #{vgg_forward.13} parent=39 // pred_check
        %p951 = pneg %p106
      $region42: #{vgg_forward.13} parent=39 // pred_check_branch
        %953 = sbr.rel (%p951) target = $region44
      $region43: #{vgg_forward.13} parent=39 // pred_region
        %p954 = scmp.lt.s32.totalorder %s15, 1
        %s955 = scalar_select %p954, %s15, 1
        %s956 = smul.addr %s955, 3
        %s957 = smul.addr %s956, 4
        %s958 = scalar_lea.vmem %s3, %s957
      $region44: #{vgg_forward.13} parent=39 // pred_fallthru
        _
    $region40: #{vgg_forward.13} parent=5 // pred_fallthru
      _
  $region6: #{vgg_forward.13} parent=0 // loop_footer
    %s13 = sadd.s32 1, %s9
  $region7: #{vgg_forward.13} parent=0 // loop_footer_branch
    %8 = sbr.rel target = $region3
  $region8: #{vgg_forward.13} parent=0 // loop_exit
    _

// kernel: vgg_forward.15
$region0: #{vgg_forward.15}
  #allocation0 [shape = 'u32[]', space=smem, size = 0x4, offset = 0x4, fixed_abs, tag = 'smem constant byte address 0x4 - core index']
  #allocation1 [shape = 'u32[144,128]{1,0:T(1,128)}', space=vmem, size = 0x12000, scoped, tag = 'internal scratch']
  %s0 = inlined_call_operand.vmem [shape: bf16[2,24,64], index: 0, kind: input, shape index: {}]
  %s1 = inlined_call_operand.vmem [shape: bf16[9,64,512], index: 1, kind: input, shape index: {}]
  %s2 = inlined_call_operand.vmem [shape: f32[1,512], index: 2, kind: input, shape index: {}]
  %s3 = inlined_call_operand.vmem [shape: bf16[2,8,512], index: 3, kind: output, shape index: {}]
  %s4 = sld [smem:[#allocation0]]
  $region45: #{vgg_forward.15} parent=0
    _
  %s6 = ssub.s32 1, %s4
  %s7 = scalar_select 0, %s6, %s4
  loop: start=0, step=1, limit=4
  $region2: #{vgg_forward.15} parent=0 // loop_pre_header
    _
  $region3: #{vgg_forward.15} parent=0 // loop_header
    %s9 = sphi 0, %s13
    %p10 = scmp.ge.s32.totalorder %s9, 4
    %s19 = sphi 0, %s21
    %s22 = sphi 0, %s19
    %s23 = sphi 0, %s22
    %s39 = sphi 0, %s23
    %s43 = sphi 0, %s43
    %s45 = sphi 0, %s43
    %s46 = sphi 0, %s45
    %s60 = sphi 0, %s46
    %s64 = sphi 0, %s64
    %s66 = sphi 0, %s64
    %s67 = sphi 0, %s66
    %s81 = sphi 0, %s67
    %s87 = sphi 0, %s89
    %s90 = sphi 0, %s87
    %s91 = sphi 0, %s90
    %s107 = sphi 0, %s91
  $region4: #{vgg_forward.15} parent=0 // loop_header_branch
    %12 = sbr.rel (%p10) target = $region8
  $region5: #{vgg_forward.15} parent=0 // loop_body
    %s14 = ssub.s32 %s9, 1
    %s15 = ssub.s32 %s9, 2
    %s16 = sadd.s32 %s9, 1
    %s17 = ssub.s32 %s9, %s16
    %p18 = scmp.eq.s32.totalorder %s17, 0
    %s20 = sadd.s32 %s19, 1
    %s21 = scalar_select %p18, %s19, %s20
    %p24 = pneg %p18
    %p25 = scmp.eq.s32.totalorder %s9, 1
    %p26 = por %p24, %p25
    %p27 = scmp.ne.s32.totalorder %s19, %s22
    %p28 = scmp.eq.s32.totalorder %s9, 0
    %p29 = por %p27, %p28
    %p30 = scmp.ne.s32.totalorder %s19, %s22
    %p31 = scmp.eq.s32.totalorder %s14, 1
    %p32 = por %p30, %p31
    %p33 = scmp.ne.s32.totalorder %s22, %s23
    %p34 = scmp.eq.s32.totalorder %s14, 0
    %p35 = por %p33, %p34
    %p36 = scmp.ne.s32.totalorder %s22, %s23
    %p37 = scmp.eq.s32.totalorder %s15, 1
    %p38 = por %p36, %p37
    %p40 = scmp.ne.s32.totalorder %s23, %s39
    %p41 = scmp.eq.s32.totalorder %s15, 0
    %p42 = por %p40, %p41
    %s44 = sadd.s32 %s43, 1
    %p47 = scmp.eq.s32.totalorder %s9, 1
    %p48 = scmp.ne.s32.totalorder %s43, %s45
    %p49 = scmp.eq.s32.totalorder %s9, 0
    %p50 = por %p48, %p49
    %p51 = scmp.ne.s32.totalorder %s43, %s45
    %p52 = scmp.eq.s32.totalorder %s14, 1
    %p53 = por %p51, %p52
    %p54 = scmp.ne.s32.totalorder %s45, %s46
    %p55 = scmp.eq.s32.totalorder %s14, 0
    %p56 = por %p54, %p55
    %p57 = scmp.ne.s32.totalorder %s45, %s46
    %p58 = scmp.eq.s32.totalorder %s15, 1
    %p59 = por %p57, %p58
    %p61 = scmp.ne.s32.totalorder %s46, %s60
    %p62 = scmp.eq.s32.totalorder %s15, 0
    %p63 = por %p61, %p62
    %s65 = sadd.s32 %s64, 1
    %p68 = scmp.eq.s32.totalorder %s9, 1
    %p69 = scmp.ne.s32.totalorder %s64, %s66
    %p70 = scmp.eq.s32.totalorder %s9, 0
    %p71 = por %p69, %p70
    %p72 = scmp.ne.s32.totalorder %s64, %s66
    %p73 = scmp.eq.s32.totalorder %s14, 1
    %p74 = por %p72, %p73
    %p75 = scmp.ne.s32.totalorder %s66, %s67
    %p76 = scmp.eq.s32.totalorder %s14, 0
    %p77 = por %p75, %p76
    %p78 = scmp.ne.s32.totalorder %s66, %s67
    %p79 = scmp.eq.s32.totalorder %s15, 1
    %p80 = por %p78, %p79
    %p82 = scmp.ne.s32.totalorder %s67, %s81
    %p83 = scmp.eq.s32.totalorder %s15, 0
    %p84 = por %p82, %p83
    %s85 = ssub.s32 %s9, %s16
    %p86 = scmp.eq.s32.totalorder %s85, 0
    %s88 = sadd.s32 %s87, 1
    %s89 = scalar_select %p86, %s87, %s88
    %p92 = pneg %p86
    %p93 = scmp.eq.s32.totalorder %s9, 1
    %p94 = por %p92, %p93
    %p95 = scmp.ne.s32.totalorder %s87, %s90
    %p96 = scmp.eq.s32.totalorder %s9, 0
    %p97 = por %p95, %p96
    %p98 = scmp.ne.s32.totalorder %s87, %s90
    %p99 = scmp.eq.s32.totalorder %s14, 1
    %p100 = por %p98, %p99
    %p101 = scmp.ne.s32.totalorder %s90, %s91
    %p102 = scmp.eq.s32.totalorder %s14, 0
    %p103 = por %p101, %p102
    %p104 = scmp.ne.s32.totalorder %s90, %s91
    %p105 = scmp.eq.s32.totalorder %s15, 1
    %p106 = por %p104, %p105
    %p108 = scmp.ne.s32.totalorder %s91, %s107
    %p109 = scmp.eq.s32.totalorder %s15, 0
    %p110 = por %p108, %p109
    %p111 = scmp.le.s32.totalorder 1, %s9
    %p112 = scmp.lt.s32.totalorder %s9, 3
    %p113 = pnand %p111, %p112
    %p114 = pneg %p113
    // Predicated region
    $region9: #{vgg_forward.15} parent=5 // pred_check
      _
    $region10: #{vgg_forward.15} parent=5 // pred_check_branch
      %116 = sbr.rel (%p113) target = $region12
    $region11: #{vgg_forward.15} parent=5 // pred_region
      %s117 = ssub.s32 %s9, 1
      // Predicated region
      $region13: #{vgg_forward.15} parent=11 // pred_check
        %p118 = pneg %p56
      $region14: #{vgg_forward.15} parent=11 // pred_check_branch
        %120 = sbr.rel (%p118) target = $region16
      $region15: #{vgg_forward.15} parent=11 // pred_region
        _
      $region16: #{vgg_forward.15} parent=11 // pred_fallthru
        _
      // Predicated region
      $region17: #{vgg_forward.15} parent=11 // pred_check
        %p121 = pneg %p77
      $region18: #{vgg_forward.15} parent=11 // pred_check_branch
        %123 = sbr.rel (%p121) target = $region20
      $region19: #{vgg_forward.15} parent=11 // pred_region
        _
      $region20: #{vgg_forward.15} parent=11 // pred_fallthru
        _
    $region12: #{vgg_forward.15} parent=5 // pred_fallthru
      _
    %p124 = scmp.lt.s32.totalorder %s9, 2
    // Predicated region
    $region21: #{vgg_forward.15} parent=5 // pred_check
      %p125 = pneg %p124
    $region22: #{vgg_forward.15} parent=5 // pred_check_branch
      %127 = sbr.rel (%p125) target = $region24
    $region23: #{vgg_forward.15} parent=5 // pred_region
      // Predicated region
      $region25: #{vgg_forward.15} parent=23 // pred_check
        %p128 = pneg %p29
      $region26: #{vgg_forward.15} parent=23 // pred_check_branch
        %130 = sbr.rel (%p128) target = $region28
      $region27: #{vgg_forward.15} parent=23 // pred_region
        %p131 = scmp.lt.s32.totalorder %s9, 1
        %s132 = scalar_select %p131, %s9, 1
        %s133 = smul.addr %s132, 3
        %s134 = smul.addr %s133, 4
        %s135 = scalar_lea.vmem %s0, %s134
      $region28: #{vgg_forward.15} parent=23 // pred_fallthru
        _
    $region24: #{vgg_forward.15} parent=5 // pred_fallthru
      _
    %p136 = scmp.le.s32.totalorder 1, %s9
    %p137 = scmp.lt.s32.totalorder %s9, 3
    %p138 = pnand %p136, %p137
    %p139 = pneg %p138
    // Predicated region
    $region29: #{vgg_forward.15} parent=5 // pred_check
      _
    $region30: #{vgg_forward.15} parent=5 // pred_check_branch
      %141 = sbr.rel (%p138) target = $region32
    $region31: #{vgg_forward.15} parent=5 // pred_region
      %s142 = ssub.s32 %s9, 1
      %p143 = scmp.lt.s32.totalorder %s14, 1
      %s144 = scalar_select %p143, %s14, 1
      %s145 = smul.addr %s144, 3
      %s146 = smul.addr %s145, 4
      %s147 = scalar_lea.vmem %s0, %s146
      %p148 = pneg %p35
      %p149 = pneg %p32
      %p150 = pneg %p56
      %p151 = pneg %p53
      %p152 = pneg %p77
      %p153 = pneg %p74
      %p154 = pneg %p103
      %p155 = pneg %p100
      %p156 = scmp.lt.s32.totalorder %s14, 1
      %s157 = scalar_select %p156, %s14, 1
      %s158 = smul.addr %s157, 4
      %s159 = smul.addr %s158, 4
      %s160 = scalar_lea.vmem %s3, %s159
      %p161 = scmp.lt.s32.totalorder %s14, 1
      %s162 = scalar_select %p161, %s14, 1
      %s163 = smul.addr %s162, 3
      %s164 = smul.addr %s163, 4
      %s165 = scalar_lea.vmem %s0, %s164
      %p166 = scmp.lt.s32.totalorder %s14, 1
      %s167 = scalar_select %p166, %s14, 1
      %s168 = smul.addr %s167, 4
      %s169 = smul.addr %s168, 4
      %s170 = scalar_lea.vmem %s3, %s169
      %v172 = vld [vmem:[%s165] sm:$0xf]
      %v173 = vld [vmem:[%s165 + $0x4] sm:$0xf]
      %v174 = vld [vmem:[%s165 + $0x8] sm:$0xf]
      %v175 = vld [vmem:[%s1] sm:$0xff]
      %v176 = vld [vmem:[%s1 + $0x8] sm:$0xff]
      %v177 = vld [vmem:[%s1 + $0x10] sm:$0xff]
      %v178 = vld [vmem:[%s1 + $0x18] sm:$0xff]
      %v179 = vld [vmem:[%s1 + $0x20] sm:$0xff]
      %v180 = vld [vmem:[%s1 + $0x28] sm:$0xff]
      %v181 = vld [vmem:[%s1 + $0x30] sm:$0xff]
      %v182 = vld [vmem:[%s1 + $0x38] sm:$0xff]
      %v183 = vld [vmem:[%s1 + $0x40] sm:$0xff]
      %v184 = vld [vmem:[%s1 + $0x48] sm:$0xff]
      %v185 = vld [vmem:[%s1 + $0x50] sm:$0xff]
      %v186 = vld [vmem:[%s1 + $0x58] sm:$0xff]
      %v187 = vld [vmem:[%s1 + $0x60] sm:$0xff]
      %v188 = vld [vmem:[%s1 + $0x68] sm:$0xff]
      %v189 = vld [vmem:[%s1 + $0x70] sm:$0xff]
      %v190 = vld [vmem:[%s1 + $0x78] sm:$0xff]
      %s191 = scalar_lea.vmem %s1, 128
      %v192 = vld [vmem:[%s191] sm:$0xff]
      %v193 = vld [vmem:[%s191 + $0x8] sm:$0xff]
      %v194 = vld [vmem:[%s191 + $0x10] sm:$0xff]
      %v195 = vld [vmem:[%s191 + $0x18] sm:$0xff]
      %v196 = vld [vmem:[%s191 + $0x20] sm:$0xff]
      %v197 = vld [vmem:[%s191 + $0x28] sm:$0xff]
      %v198 = vld [vmem:[%s191 + $0x30] sm:$0xff]
      %v199 = vld [vmem:[%s191 + $0x38] sm:$0xff]
      %v200 = vld [vmem:[%s191 + $0x40] sm:$0xff]
      %v201 = vld [vmem:[%s191 + $0x48] sm:$0xff]
      %v202 = vld [vmem:[%s191 + $0x50] sm:$0xff]
      %v203 = vld [vmem:[%s191 + $0x58] sm:$0xff]
      %v204 = vld [vmem:[%s191 + $0x60] sm:$0xff]
      %v205 = vld [vmem:[%s191 + $0x68] sm:$0xff]
      %v206 = vld [vmem:[%s191 + $0x70] sm:$0xff]
      %v207 = vld [vmem:[%s191 + $0x78] sm:$0xff]
      %v210 = vunpack.c.l.b16 %v172
      %v211 = vunpack.c.l.b16 %v173
      %v212 = vpack.c.b16 %v211, %v210
      %v214 = vshrl.u32 %v212, 16
      %v216 = vshll.u32 %v212, 16
      %v218 = vrot.slane %v216, 1
      %v219 = vor.u32 %v214, %v218
      %v236 = vunpack.c.l.b16 %v192
      %v237 = vunpack.c.h.b16 %v192
      %v238 = vunpack.c.l.b16 %v193
      %v239 = vunpack.c.h.b16 %v193
      %v240 = vunpack.c.l.b16 %v194
      %v241 = vunpack.c.h.b16 %v194
      %v242 = vunpack.c.l.b16 %v195
      %v243 = vunpack.c.h.b16 %v195
      %v244 = vunpack.c.l.b16 %v196
      %v245 = vunpack.c.h.b16 %v196
      %v246 = vunpack.c.l.b16 %v197
      %v247 = vunpack.c.h.b16 %v197
      %v248 = vunpack.c.l.b16 %v198
      %v249 = vunpack.c.h.b16 %v198
      %v250 = vunpack.c.l.b16 %v199
      %v251 = vunpack.c.h.b16 %v199
      %v252 = vunpack.c.l.b16 %v200
      %v253 = vunpack.c.h.b16 %v200
      %v254 = vunpack.c.l.b16 %v201
      %v255 = vunpack.c.h.b16 %v201
      %v256 = vunpack.c.l.b16 %v202
      %v257 = vunpack.c.h.b16 %v202
      %v258 = vunpack.c.l.b16 %v203
      %v259 = vunpack.c.h.b16 %v203
      %v260 = vunpack.c.l.b16 %v204
      %v261 = vunpack.c.h.b16 %v204
      %v262 = vunpack.c.l.b16 %v205
      %v263 = vunpack.c.h.b16 %v205
      %v264 = vunpack.c.l.b16 %v206
      %v265 = vunpack.c.h.b16 %v206
      %v266 = vunpack.c.l.b16 %v207
      %v267 = vunpack.c.h.b16 %v207
      %v268 = vpack.c.b16 %v240, %v236
      %v269 = vpack.c.b16 %v241, %v237
      %v270 = vpack.c.b16 %v242, %v238
      %v271 = vpack.c.b16 %v243, %v239
      %v272 = vpack.c.b16 %v248, %v244
      %v273 = vpack.c.b16 %v249, %v245
      %v274 = vpack.c.b16 %v250, %v246
      %v275 = vpack.c.b16 %v251, %v247
      %v276 = vpack.c.b16 %v256, %v252
      %v277 = vpack.c.b16 %v257, %v253
      %v278 = vpack.c.b16 %v258, %v254
      %v279 = vpack.c.b16 %v259, %v255
      %v280 = vpack.c.b16 %v264, %v260
      %v281 = vpack.c.b16 %v265, %v261
      %v282 = vpack.c.b16 %v266, %v262
      %v283 = vpack.c.b16 %v267, %v263
      %vm300 = vcmask 523264
      %v302 = vsel %vm300, %v219, 0
      %304 = vmatprep.subr.bf16.mxu0 %v269
      %305 = vmatpush1.bf16.msra.mxu0 %v268
      %306 = vmatprep.subr.bf16.mxu0 %v273
      %307 = vmatpush1.bf16.msra.mxu0 %v272
      %308 = vmatprep.subr.bf16.mxu0 %v277
      %309 = vmatpush1.bf16.msra.mxu0 %v276
      %310 = vmatprep.subr.bf16.mxu0 %v281
      %311 = vmatpush1.bf16.msra.mxu0 %v280
      %312 = vmatprep.subr.bf16.mxu0 0
      %313 = vmatpush1.bf16.msra.mxu0 0
      %314 = vmatprep.subr.bf16.mxu0 0
      %315 = vmatpush1.bf16.msra.mxu0 0
      %316 = vmatprep.subr.bf16.mxu0 0
      %317 = vmatpush1.bf16.msra.mxu0 0
      %318 = vmatprep.subr.bf16.mxu0 0
      %319 = vmatpush1.bf16.msra.mxu0 0
      %320 = vmatprep.subr.bf16.mxu0 0
      %321 = vmatpush1.bf16.msra.mxu0 0
      %322 = vmatprep.subr.bf16.mxu0 0
      %323 = vmatpush1.bf16.msra.mxu0 0
      %324 = vmatprep.subr.bf16.mxu0 0
      %325 = vmatpush1.bf16.msra.mxu0 0
      %326 = vmatprep.subr.bf16.mxu0 0
      %327 = vmatpush1.bf16.msra.mxu0 0
      %328 = vmatprep.subr.bf16.mxu0 0
      %329 = vmatpush1.bf16.msra.mxu0 0
      %330 = vmatprep.subr.bf16.mxu0 0
      %331 = vmatpush1.bf16.msra.mxu0 0
      %332 = vmatprep.subr.bf16.mxu0 0
      %333 = vmatpush1.bf16.msra.mxu0 0
      %334 = vmatprep.subr.bf16.mxu0 0
      %335 = vmatpush1.bf16.msra.mxu0 0
      %336 = vmatprep.mubr.bf16.mxu0 0
      %337 = vmatmul.mubr.bf16.gmra.mrb[0].mxu0 %v302
      %v338 = vpop.f32.mrb[0].mxu0
      %v339 = vadd.f32 0.0, %v338
      %v340 = vpop.f32.mrb[0].mxu0
      %v341 = vadd.f32 0.0, %v340
      %v342 = vpop.f32.mrb[0].mxu0
      %v343 = vpop.f32.mrb[0].mxu0
      %344 = vdwg.mxu0
      %345 = vmatprep.subr.bf16.mxu0 %v271
      %346 = vmatpush1.bf16.msra.mxu0 %v270
      %347 = vmatprep.subr.bf16.mxu0 %v275
      %348 = vmatpush1.bf16.msra.mxu0 %v274
      %349 = vmatprep.subr.bf16.mxu0 %v279
      %350 = vmatpush1.bf16.msra.mxu0 %v278
      %351 = vmatprep.subr.bf16.mxu0 %v283
      %352 = vmatpush1.bf16.msra.mxu0 %v282
      %353 = vmatprep.subr.bf16.mxu0 0
      %354 = vmatpush1.bf16.msra.mxu0 0
      %355 = vmatprep.subr.bf16.mxu0 0
      %356 = vmatpush1.bf16.msra.mxu0 0
      %357 = vmatprep.subr.bf16.mxu0 0
      %358 = vmatpush1.bf16.msra.mxu0 0
      %359 = vmatprep.subr.bf16.mxu0 0
      %360 = vmatpush1.bf16.msra.mxu0 0
      %361 = vmatprep.subr.bf16.mxu0 0
      %362 = vmatpush1.bf16.msra.mxu0 0
      %363 = vmatprep.subr.bf16.mxu0 0
      %364 = vmatpush1.bf16.msra.mxu0 0
      %365 = vmatprep.subr.bf16.mxu0 0
      %366 = vmatpush1.bf16.msra.mxu0 0
      %367 = vmatprep.subr.bf16.mxu0 0
      %368 = vmatpush1.bf16.msra.mxu0 0
      %369 = vmatprep.subr.bf16.mxu0 0
      %370 = vmatpush1.bf16.msra.mxu0 0
      %371 = vmatprep.subr.bf16.mxu0 0
      %372 = vmatpush1.bf16.msra.mxu0 0
      %373 = vmatprep.subr.bf16.mxu0 0
      %374 = vmatpush1.bf16.msra.mxu0 0
      %375 = vmatprep.subr.bf16.mxu0 0
      %376 = vmatpush1.bf16.msra.mxu0 0
      %377 = vmatprep.mubr.bf16.mxu0 0
      %378 = vmatmul.mubr.bf16.gmra.mrb[0].mxu0 %v302
      %v379 = vpop.f32.mrb[0].mxu0
      %v380 = vadd.f32 0.0, %v379
      %v381 = vpop.f32.mrb[0].mxu0
      %v382 = vadd.f32 0.0, %v381
      %v383 = vpop.f32.mrb[0].mxu0
      %v384 = vpop.f32.mrb[0].mxu0
      %385 = vdwg.mxu0
      %v402 = vunpack.c.l.b16 %v175
      %v403 = vunpack.c.h.b16 %v175
      %v404 = vunpack.c.l.b16 %v176
      %v405 = vunpack.c.h.b16 %v176
      %v406 = vunpack.c.l.b16 %v177
      %v407 = vunpack.c.h.b16 %v177
      %v408 = vunpack.c.l.b16 %v178
      %v409 = vunpack.c.h.b16 %v178
      %v410 = vunpack.c.l.b16 %v179
      %v411 = vunpack.c.h.b16 %v179
      %v412 = vunpack.c.l.b16 %v180
      %v413 = vunpack.c.h.b16 %v180
      %v414 = vunpack.c.l.b16 %v181
      %v415 = vunpack.c.h.b16 %v181
      %v416 = vunpack.c.l.b16 %v182
      %v417 = vunpack.c.h.b16 %v182
      %v418 = vunpack.c.l.b16 %v183
      %v419 = vunpack.c.h.b16 %v183
      %v420 = vunpack.c.l.b16 %v184
      %v421 = vunpack.c.h.b16 %v184
      %v422 = vunpack.c.l.b16 %v185
      %v423 = vunpack.c.h.b16 %v185
      %v424 = vunpack.c.l.b16 %v186
      %v425 = vunpack.c.h.b16 %v186
      %v426 = vunpack.c.l.b16 %v187
      %v427 = vunpack.c.h.b16 %v187
      %v428 = vunpack.c.l.b16 %v188
      %v429 = vunpack.c.h.b16 %v188
      %v430 = vunpack.c.l.b16 %v189
      %v431 = vunpack.c.h.b16 %v189
      %v432 = vunpack.c.l.b16 %v190
      %v433 = vunpack.c.h.b16 %v190
      %v434 = vpack.c.b16 %v406, %v402
      %v435 = vpack.c.b16 %v407, %v403
      %v436 = vpack.c.b16 %v408, %v404
      %v437 = vpack.c.b16 %v409, %v405
      %v438 = vpack.c.b16 %v414, %v410
      %v439 = vpack.c.b16 %v415, %v411
      %v440 = vpack.c.b16 %v416, %v412
      %v441 = vpack.c.b16 %v417, %v413
      %v442 = vpack.c.b16 %v422, %v418
      %v443 = vpack.c.b16 %v423, %v419
      %v444 = vpack.c.b16 %v424, %v420
      %v445 = vpack.c.b16 %v425, %v421
      %v446 = vpack.c.b16 %v430, %v426
      %v447 = vpack.c.b16 %v431, %v427
      %v448 = vpack.c.b16 %v432, %v428
      %v449 = vpack.c.b16 %v433, %v429
      %v467 = vsel %vm300, %v172, 0
      %469 = vmatprep.subr.bf16.mxu0 %v435
      %470 = vmatpush1.bf16.msra.mxu0 %v434
      %471 = vmatprep.subr.bf16.mxu0 %v439
      %472 = vmatpush1.bf16.msra.mxu0 %v438
      %473 = vmatprep.subr.bf16.mxu0 %v443
      %474 = vmatpush1.bf16.msra.mxu0 %v442
      %475 = vmatprep.subr.bf16.mxu0 %v447
      %476 = vmatpush1.bf16.msra.mxu0 %v446
      %477 = vmatprep.subr.bf16.mxu0 0
      %478 = vmatpush1.bf16.msra.mxu0 0
      %479 = vmatprep.subr.bf16.mxu0 0
      %480 = vmatpush1.bf16.msra.mxu0 0
      %481 = vmatprep.subr.bf16.mxu0 0
      %482 = vmatpush1.bf16.msra.mxu0 0
      %483 = vmatprep.subr.bf16.mxu0 0
      %484 = vmatpush1.bf16.msra.mxu0 0
      %485 = vmatprep.subr.bf16.mxu0 0
      %486 = vmatpush1.bf16.msra.mxu0 0
      %487 = vmatprep.subr.bf16.mxu0 0
      %488 = vmatpush1.bf16.msra.mxu0 0
      %489 = vmatprep.subr.bf16.mxu0 0
      %490 = vmatpush1.bf16.msra.mxu0 0
      %491 = vmatprep.subr.bf16.mxu0 0
      %492 = vmatpush1.bf16.msra.mxu0 0
      %493 = vmatprep.subr.bf16.mxu0 0
      %494 = vmatpush1.bf16.msra.mxu0 0
      %495 = vmatprep.subr.bf16.mxu0 0
      %496 = vmatpush1.bf16.msra.mxu0 0
      %497 = vmatprep.subr.bf16.mxu0 0
      %498 = vmatpush1.bf16.msra.mxu0 0
      %499 = vmatprep.subr.bf16.mxu0 0
      %500 = vmatpush1.bf16.msra.mxu0 0
      %501 = vmatprep.mubr.bf16.mxu0 0
      %502 = vmatmul.mubr.bf16.gmra.mrb[0].mxu0 %v467
      %v503 = vpop.f32.mrb[0].mxu0
      %v504 = vadd.f32 %v339, %v503
      %v505 = vpop.f32.mrb[0].mxu0
      %v506 = vadd.f32 %v341, %v505
      %v507 = vpop.f32.mrb[0].mxu0
      %v508 = vpop.f32.mrb[0].mxu0
      %509 = vdwg.mxu0
      %510 = vmatprep.subr.bf16.mxu0 %v437
      %511 = vmatpush1.bf16.msra.mxu0 %v436
      %512 = vmatprep.subr.bf16.mxu0 %v441
      %513 = vmatpush1.bf16.msra.mxu0 %v440
      %514 = vmatprep.subr.bf16.mxu0 %v445
      %515 = vmatpush1.bf16.msra.mxu0 %v444
      %516 = vmatprep.subr.bf16.mxu0 %v449
      %517 = vmatpush1.bf16.msra.mxu0 %v448
      %518 = vmatprep.subr.bf16.mxu0 0
      %519 = vmatpush1.bf16.msra.mxu0 0
      %520 = vmatprep.subr.bf16.mxu0 0
      %521 = vmatpush1.bf16.msra.mxu0 0
      %522 = vmatprep.subr.bf16.mxu0 0
      %523 = vmatpush1.bf16.msra.mxu0 0
      %524 = vmatprep.subr.bf16.mxu0 0
      %525 = vmatpush1.bf16.msra.mxu0 0
      %526 = vmatprep.subr.bf16.mxu0 0
      %527 = vmatpush1.bf16.msra.mxu0 0
      %528 = vmatprep.subr.bf16.mxu0 0
      %529 = vmatpush1.bf16.msra.mxu0 0
      %530 = vmatprep.subr.bf16.mxu0 0
      %531 = vmatpush1.bf16.msra.mxu0 0
      %532 = vmatprep.subr.bf16.mxu0 0
      %533 = vmatpush1.bf16.msra.mxu0 0
      %534 = vmatprep.subr.bf16.mxu0 0
      %535 = vmatpush1.bf16.msra.mxu0 0
      %536 = vmatprep.subr.bf16.mxu0 0
      %537 = vmatpush1.bf16.msra.mxu0 0
      %538 = vmatprep.subr.bf16.mxu0 0
      %539 = vmatpush1.bf16.msra.mxu0 0
      %540 = vmatprep.subr.bf16.mxu0 0
      %541 = vmatpush1.bf16.msra.mxu0 0
      %542 = vmatprep.mubr.bf16.mxu0 0
      %543 = vmatmul.mubr.bf16.gmra.mrb[0].mxu0 %v467
      %v544 = vpop.f32.mrb[0].mxu0
      %v545 = vadd.f32 %v380, %v544
      %v546 = vpop.f32.mrb[0].mxu0
      %v547 = vadd.f32 %v382, %v546
      %v548 = vpop.f32.mrb[0].mxu0
      %v549 = vpop.f32.mrb[0].mxu0
      %550 = vdwg.mxu0
      %s551 = scalar_lea.vmem %s1, 256
      %v552 = vld [vmem:[%s551] sm:$0xff]
      %v553 = vld [vmem:[%s551 + $0x8] sm:$0xff]
      %v554 = vld [vmem:[%s551 + $0x10] sm:$0xff]
      %v555 = vld [vmem:[%s551 + $0x18] sm:$0xff]
      %v556 = vld [vmem:[%s551 + $0x20] sm:$0xff]
      %v557 = vld [vmem:[%s551 + $0x28] sm:$0xff]
      %v558 = vld [vmem:[%s551 + $0x30] sm:$0xff]
      %v559 = vld [vmem:[%s551 + $0x38] sm:$0xff]
      %v560 = vld [vmem:[%s551 + $0x40] sm:$0xff]
      %v561 = vld [vmem:[%s551 + $0x48] sm:$0xff]
      %v562 = vld [vmem:[%s551 + $0x50] sm:$0xff]
      %v563 = vld [vmem:[%s551 + $0x58] sm:$0xff]
      %v564 = vld [vmem:[%s551 + $0x60] sm:$0xff]
      %v565 = vld [vmem:[%s551 + $0x68] sm:$0xff]
      %v566 = vld [vmem:[%s551 + $0x70] sm:$0xff]
      %v567 = vld [vmem:[%s551 + $0x78] sm:$0xff]
      %v568 = vrot.slane %v212, 1
      %v585 = vunpack.c.l.b16 %v552
      %v586 = vunpack.c.h.b16 %v552
      %v587 = vunpack.c.l.b16 %v553
      %v588 = vunpack.c.h.b16 %v553
      %v589 = vunpack.c.l.b16 %v554
      %v590 = vunpack.c.h.b16 %v554
      %v591 = vunpack.c.l.b16 %v555
      %v592 = vunpack.c.h.b16 %v555
      %v593 = vunpack.c.l.b16 %v556
      %v594 = vunpack.c.h.b16 %v556
      %v595 = vunpack.c.l.b16 %v557
      %v596 = vunpack.c.h.b16 %v557
      %v597 = vunpack.c.l.b16 %v558
      %v598 = vunpack.c.h.b16 %v558
      %v599 = vunpack.c.l.b16 %v559
      %v600 = vunpack.c.h.b16 %v559
      %v601 = vunpack.c.l.b16 %v560
      %v602 = vunpack.c.h.b16 %v560
      %v603 = vunpack.c.l.b16 %v561
      %v604 = vunpack.c.h.b16 %v561
      %v605 = vunpack.c.l.b16 %v562
      %v606 = vunpack.c.h.b16 %v562
      %v607 = vunpack.c.l.b16 %v563
      %v608 = vunpack.c.h.b16 %v563
      %v609 = vunpack.c.l.b16 %v564
      %v610 = vunpack.c.h.b16 %v564
      %v611 = vunpack.c.l.b16 %v565
      %v612 = vunpack.c.h.b16 %v565
      %v613 = vunpack.c.l.b16 %v566
      %v614 = vunpack.c.h.b16 %v566
      %v615 = vunpack.c.l.b16 %v567
      %v616 = vunpack.c.h.b16 %v567
      %v617 = vpack.c.b16 %v589, %v585
      %v618 = vpack.c.b16 %v590, %v586
      %v619 = vpack.c.b16 %v591, %v587
      %v620 = vpack.c.b16 %v592, %v588
      %v621 = vpack.c.b16 %v597, %v593
      %v622 = vpack.c.b16 %v598, %v594
      %v623 = vpack.c.b16 %v599, %v595
      %v624 = vpack.c.b16 %v600, %v596
      %v625 = vpack.c.b16 %v605, %v601
      %v626 = vpack.c.b16 %v606, %v602
      %v627 = vpack.c.b16 %v607, %v603
      %v628 = vpack.c.b16 %v608, %v604
      %v629 = vpack.c.b16 %v613, %v609
      %v630 = vpack.c.b16 %v614, %v610
      %v631 = vpack.c.b16 %v615, %v611
      %v632 = vpack.c.b16 %v616, %v612
      %v650 = vsel %vm300, %v568, 0
      %652 = vmatprep.subr.bf16.mxu0 %v618
      %653 = vmatpush1.bf16.msra.mxu0 %v617
      %654 = vmatprep.subr.bf16.mxu0 %v622
      %655 = vmatpush1.bf16.msra.mxu0 %v621
      %656 = vmatprep.subr.bf16.mxu0 %v626
      %657 = vmatpush1.bf16.msra.mxu0 %v625
      %658 = vmatprep.subr.bf16.mxu0 %v630
      %659 = vmatpush1.bf16.msra.mxu0 %v629
      %660 = vmatprep.subr.bf16.mxu0 0
      %661 = vmatpush1.bf16.msra.mxu0 0
      %662 = vmatprep.subr.bf16.mxu0 0
      %663 = vmatpush1.bf16.msra.mxu0 0
      %664 = vmatprep.subr.bf16.mxu0 0
      %665 = vmatpush1.bf16.msra.mxu0 0
      %666 = vmatprep.subr.bf16.mxu0 0
      %667 = vmatpush1.bf16.msra.mxu0 0
      %668 = vmatprep.subr.bf16.mxu0 0
      %669 = vmatpush1.bf16.msra.mxu0 0
      %670 = vmatprep.subr.bf16.mxu0 0
      %671 = vmatpush1.bf16.msra.mxu0 0
      %672 = vmatprep.subr.bf16.mxu0 0
      %673 = vmatpush1.bf16.msra.mxu0 0
      %674 = vmatprep.subr.bf16.mxu0 0
      %675 = vmatpush1.bf16.msra.mxu0 0
      %676 = vmatprep.subr.bf16.mxu0 0
      %677 = vmatpush1.bf16.msra.mxu0 0
      %678 = vmatprep.subr.bf16.mxu0 0
      %679 = vmatpush1.bf16.msra.mxu0 0
      %680 = vmatprep.subr.bf16.mxu0 0
      %681 = vmatpush1.bf16.msra.mxu0 0
      %682 = vmatprep.subr.bf16.mxu0 0
      %683 = vmatpush1.bf16.msra.mxu0 0
      %684 = vmatprep.mubr.bf16.mxu0 0
      %685 = vmatmul.mubr.bf16.gmra.mrb[0].mxu0 %v650
      %v686 = vpop.f32.mrb[0].mxu0
      %v687 = vadd.f32 0.0, %v686
      %v688 = vpop.f32.mrb[0].mxu0
      %v689 = vadd.f32 0.0, %v688
      %v690 = vpop.f32.mrb[0].mxu0
      %v691 = vpop.f32.mrb[0].mxu0
      %692 = vdwg.mxu0
      %693 = vmatprep.subr.bf16.mxu0 %v620
      %694 = vmatpush1.bf16.msra.mxu0 %v619
      %695 = vmatprep.subr.bf16.mxu0 %v624
      %696 = vmatpush1.bf16.msra.mxu0 %v623
      %697 = vmatprep.subr.bf16.mxu0 %v628
      %698 = vmatpush1.bf16.msra.mxu0 %v627
      %699 = vmatprep.subr.bf16.mxu0 %v632
      %700 = vmatpush1.bf16.msra.mxu0 %v631
      %701 = vmatprep.subr.bf16.mxu0 0
      %702 = vmatpush1.bf16.msra.mxu0 0
      %703 = vmatprep.subr.bf16.mxu0 0
      %704 = vmatpush1.bf16.msra.mxu0 0
      %705 = vmatprep.subr.bf16.mxu0 0
      %706 = vmatpush1.bf16.msra.mxu0 0
      %707 = vmatprep.subr.bf16.mxu0 0
      %708 = vmatpush1.bf16.msra.mxu0 0
      %709 = vmatprep.subr.bf16.mxu0 0
      %710 = vmatpush1.bf16.msra.mxu0 0
      %711 = vmatprep.subr.bf16.mxu0 0
      %712 = vmatpush1.bf16.msra.mxu0 0
      %713 = vmatprep.subr.bf16.mxu0 0
      %714 = vmatpush1.bf16.msra.mxu0 0
      %715 = vmatprep.subr.bf16.mxu0 0
      %716 = vmatpush1.bf16.msra.mxu0 0
      %717 = vmatprep.subr.bf16.mxu0 0
      %718 = vmatpush1.bf16.msra.mxu0 0
      %719 = vmatprep.subr.bf16.mxu0 0
      %720 = vmatpush1.bf16.msra.mxu0 0
      %721 = vmatprep.subr.bf16.mxu0 0
      %722 = vmatpush1.bf16.msra.mxu0 0
      %723 = vmatprep.subr.bf16.mxu0 0
      %724 = vmatpush1.bf16.msra.mxu0 0
      %725 = vmatprep.mubr.bf16.mxu0 0
      %726 = vmatmul.mubr.bf16.gmra.mrb[0].mxu0 %v650
      %v727 = vpop.f32.mrb[0].mxu0
      %v728 = vadd.f32 0.0, %v727
      %v729 = vpop.f32.mrb[0].mxu0
      %v730 = vadd.f32 0.0, %v729
      %v731 = vpop.f32.mrb[0].mxu0
      %v732 = vpop.f32.mrb[0].mxu0
      %733 = vdwg.mxu0
      %v734 = vadd.f32 %v504, %v687
      %v735 = vadd.f32 %v506, %v689
      %v736 = vadd.f32 %v545, %v728
      %v737 = vadd.f32 %v547, %v730
      %s738 = scalar_lea.vmem %s1, 384
      %v739 = vld [vmem:[%s738] sm:$0xff]
      %v740 = vld [vmem:[%s738 + $0x8] sm:$0xff]
      %v741 = vld [vmem:[%s738 + $0x10] sm:$0xff]
      %v742 = vld [vmem:[%s738 + $0x18] sm:$0xff]
      %v743 = vld [vmem:[%s738 + $0x20] sm:$0xff]
      %v744 = vld [vmem:[%s738 + $0x28] sm:$0xff]
      %v745 = vld [vmem:[%s738 + $0x30] sm:$0xff]
      %v746 = vld [vmem:[%s738 + $0x38] sm:$0xff]
      %v747 = vld [vmem:[%s738 + $0x40] sm:$0xff]
      %v748 = vld [vmem:[%s738 + $0x48] sm:$0xff]
      %v749 = vld [vmem:[%s738 + $0x50] sm:$0xff]
      %v750 = vld [vmem:[%s738 + $0x58] sm:$0xff]
      %v751 = vld [vmem:[%s738 + $0x60] sm:$0xff]
      %v752 = vld [vmem:[%s738 + $0x68] sm:$0xff]
      %v753 = vld [vmem:[%s738 + $0x70] sm:$0xff]
      %v754 = vld [vmem:[%s738 + $0x78] sm:$0xff]
      %v755 = vrot.slane %v212, 2
      %v772 = vunpack.c.l.b16 %v739
      %v773 = vunpack.c.h.b16 %v739
      %v774 = vunpack.c.l.b16 %v740
      %v775 = vunpack.c.h.b16 %v740
      %v776 = vunpack.c.l.b16 %v741
      %v777 = vunpack.c.h.b16 %v741
      %v778 = vunpack.c.l.b16 %v742
      %v779 = vunpack.c.h.b16 %v742
      %v780 = vunpack.c.l.b16 %v743
      %v781 = vunpack.c.h.b16 %v743
      %v782 = vunpack.c.l.b16 %v744
      %v783 = vunpack.c.h.b16 %v744
      %v784 = vunpack.c.l.b16 %v745
      %v785 = vunpack.c.h.b16 %v745
      %v786 = vunpack.c.l.b16 %v746
      %v787 = vunpack.c.h.b16 %v746
      %v788 = vunpack.c.l.b16 %v747
      %v789 = vunpack.c.h.b16 %v747
      %v790 = vunpack.c.l.b16 %v748
      %v791 = vunpack.c.h.b16 %v748
      %v792 = vunpack.c.l.b16 %v749
      %v793 = vunpack.c.h.b16 %v749
      %v794 = vunpack.c.l.b16 %v750
      %v795 = vunpack.c.h.b16 %v750
      %v796 = vunpack.c.l.b16 %v751
      %v797 = vunpack.c.h.b16 %v751
      %v798 = vunpack.c.l.b16 %v752
      %v799 = vunpack.c.h.b16 %v752
      %v800 = vunpack.c.l.b16 %v753
      %v801 = vunpack.c.h.b16 %v753
      %v802 = vunpack.c.l.b16 %v754
      %v803 = vunpack.c.h.b16 %v754
      %v804 = vpack.c.b16 %v776, %v772
      %v805 = vpack.c.b16 %v777, %v773
      %v806 = vpack.c.b16 %v778, %v774
      %v807 = vpack.c.b16 %v779, %v775
      %v808 = vpack.c.b16 %v784, %v780
      %v809 = vpack.c.b16 %v785, %v781
      %v810 = vpack.c.b16 %v786, %v782
      %v811 = vpack.c.b16 %v787, %v783
      %v812 = vpack.c.b16 %v792, %v788
      %v813 = vpack.c.b16 %v793, %v789
      %v814 = vpack.c.b16 %v794, %v790
      %v815 = vpack.c.b16 %v795, %v791
      %v816 = vpack.c.b16 %v800, %v796
      %v817 = vpack.c.b16 %v801, %v797
      %v818 = vpack.c.b16 %v802, %v798
      %v819 = vpack.c.b16 %v803, %v799
      %v837 = vsel %vm300, %v755, 0
      %839 = vmatprep.subr.bf16.mxu0 %v805
      %840 = vmatpush1.bf16.msra.mxu0 %v804
      %841 = vmatprep.subr.bf16.mxu0 %v809
      %842 = vmatpush1.bf16.msra.mxu0 %v808
      %843 = vmatprep.subr.bf16.mxu0 %v813
      %844 = vmatpush1.bf16.msra.mxu0 %v812
      %845 = vmatprep.subr.bf16.mxu0 %v817
      %846 = vmatpush1.bf16.msra.mxu0 %v816
      %847 = vmatprep.subr.bf16.mxu0 0
      %848 = vmatpush1.bf16.msra.mxu0 0
      %849 = vmatprep.subr.bf16.mxu0 0
      %850 = vmatpush1.bf16.msra.mxu0 0
      %851 = vmatprep.subr.bf16.mxu0 0
      %852 = vmatpush1.bf16.msra.mxu0 0
      %853 = vmatprep.subr.bf16.mxu0 0
      %854 = vmatpush1.bf16.msra.mxu0 0
      %855 = vmatprep.subr.bf16.mxu0 0
      %856 = vmatpush1.bf16.msra.mxu0 0
      %857 = vmatprep.subr.bf16.mxu0 0
      %858 = vmatpush1.bf16.msra.mxu0 0
      %859 = vmatprep.subr.bf16.mxu0 0
      %860 = vmatpush1.bf16.msra.mxu0 0
      %861 = vmatprep.subr.bf16.mxu0 0
      %862 = vmatpush1.bf16.msra.mxu0 0
      %863 = vmatprep.subr.bf16.mxu0 0
      %864 = vmatpush1.bf16.msra.mxu0 0
      %865 = vmatprep.subr.bf16.mxu0 0
      %866 = vmatpush1.bf16.msra.mxu0 0
      %867 = vmatprep.subr.bf16.mxu0 0
      %868 = vmatpush1.bf16.msra.mxu0 0
      %869 = vmatprep.subr.bf16.mxu0 0
      %870 = vmatpush1.bf16.msra.mxu0 0
      %871 = vmatprep.mubr.bf16.mxu0 0
      %872 = vmatmul.mubr.bf16.gmra.mrb[0].mxu0 %v837
      %v873 = vpop.f32.mrb[0].mxu0
      %v874 = vadd.f32 0.0, %v873
      %v875 = vpop.f32.mrb[0].mxu0
      %v876 = vadd.f32 0.0, %v875
      %v877 = vpop.f32.mrb[0].mxu0
      %v878 = vpop.f32.mrb[0].mxu0
      %879 = vdwg.mxu0
      %880 = vmatprep.subr.bf16.mxu0 %v807
      %881 = vmatpush1.bf16.msra.mxu0 %v806
      %882 = vmatprep.subr.bf16.mxu0 %v811
      %883 = vmatpush1.bf16.msra.mxu0 %v810
      %884 = vmatprep.subr.bf16.mxu0 %v815
      %885 = vmatpush1.bf16.msra.mxu0 %v814
      %886 = vmatprep.subr.bf16.mxu0 %v819
      %887 = vmatpush1.bf16.msra.mxu0 %v818
      %888 = vmatprep.subr.bf16.mxu0 0
      %889 = vmatpush1.bf16.msra.mxu0 0
      %890 = vmatprep.subr.bf16.mxu0 0
      %891 = vmatpush1.bf16.msra.mxu0 0
      %892 = vmatprep.subr.bf16.mxu0 0
      %893 = vmatpush1.bf16.msra.mxu0 0
      %894 = vmatprep.subr.bf16.mxu0 0
      %895 = vmatpush1.bf16.msra.mxu0 0
      %896 = vmatprep.subr.bf16.mxu0 0
      %897 = vmatpush1.bf16.msra.mxu0 0
      %898 = vmatprep.subr.bf16.mxu0 0
      %899 = vmatpush1.bf16.msra.mxu0 0
      %900 = vmatprep.subr.bf16.mxu0 0
      %901 = vmatpush1.bf16.msra.mxu0 0
      %902 = vmatprep.subr.bf16.mxu0 0
      %903 = vmatpush1.bf16.msra.mxu0 0
      %904 = vmatprep.subr.bf16.mxu0 0
      %905 = vmatpush1.bf16.msra.mxu0 0
      %906 = vmatprep.subr.bf16.mxu0 0
      %907 = vmatpush1.bf16.msra.mxu0 0
      %908 = vmatprep.subr.bf16.mxu0 0
      %909 = vmatpush1.bf16.msra.mxu0 0
      %910 = vmatprep.subr.bf16.mxu0 0
      %911 = vmatpush1.bf16.msra.mxu0 0
      %912 = vmatprep.mubr.bf16.mxu0 0
      %913 = vmatmul.mubr.bf16.gmra.mrb[0].mxu0 %v837
      %v914 = vpop.f32.mrb[0].mxu0
      %v915 = vadd.f32 0.0, %v914
      %v916 = vpop.f32.mrb[0].mxu0
      %v917 = vadd.f32 0.0, %v916
      %v918 = vpop.f32.mrb[0].mxu0
      %v919 = vpop.f32.mrb[0].mxu0
      %920 = vdwg.mxu0
      %v921 = vadd.f32 %v734, %v874
      %v922 = vadd.f32 %v735, %v876
      %v923 = vadd.f32 %v736, %v915
      %v924 = vadd.f32 %v737, %v917
      %s925 = scalar_lea.vmem %s1, 512
      %v926 = vld [vmem:[%s925] sm:$0xff]
      %v927 = vld [vmem:[%s925 + $0x8] sm:$0xff]
      %v928 = vld [vmem:[%s925 + $0x10] sm:$0xff]
      %v929 = vld [vmem:[%s925 + $0x18] sm:$0xff]
      %v930 = vld [vmem:[%s925 + $0x20] sm:$0xff]
      %v931 = vld [vmem:[%s925 + $0x28] sm:$0xff]
      %v932 = vld [vmem:[%s925 + $0x30] sm:$0xff]
      %v933 = vld [vmem:[%s925 + $0x38] sm:$0xff]
      %v934 = vld [vmem:[%s925 + $0x40] sm:$0xff]
      %v935 = vld [vmem:[%s925 + $0x48] sm:$0xff]
      %v936 = vld [vmem:[%s925 + $0x50] sm:$0xff]
      %v937 = vld [vmem:[%s925 + $0x58] sm:$0xff]
      %v938 = vld [vmem:[%s925 + $0x60] sm:$0xff]
      %v939 = vld [vmem:[%s925 + $0x68] sm:$0xff]
      %v940 = vld [vmem:[%s925 + $0x70] sm:$0xff]
      %v941 = vld [vmem:[%s925 + $0x78] sm:$0xff]
      %v942 = vrot.slane %v214, 2
      %v943 = vrot.slane %v216, 3
      %v944 = vor.u32 %v942, %v943
      %v961 = vunpack.c.l.b16 %v926
      %v962 = vunpack.c.h.b16 %v926
      %v963 = vunpack.c.l.b16 %v927
      %v964 = vunpack.c.h.b16 %v927
      %v965 = vunpack.c.l.b16 %v928
      %v966 = vunpack.c.h.b16 %v928
      %v967 = vunpack.c.l.b16 %v929
      %v968 = vunpack.c.h.b16 %v929
      %v969 = vunpack.c.l.b16 %v930
      %v970 = vunpack.c.h.b16 %v930
      %v971 = vunpack.c.l.b16 %v931
      %v972 = vunpack.c.h.b16 %v931
      %v973 = vunpack.c.l.b16 %v932
      %v974 = vunpack.c.h.b16 %v932
      %v975 = vunpack.c.l.b16 %v933
      %v976 = vunpack.c.h.b16 %v933
      %v977 = vunpack.c.l.b16 %v934
      %v978 = vunpack.c.h.b16 %v934
      %v979 = vunpack.c.l.b16 %v935
      %v980 = vunpack.c.h.b16 %v935
      %v981 = vunpack.c.l.b16 %v936
      %v982 = vunpack.c.h.b16 %v936
      %v983 = vunpack.c.l.b16 %v937
      %v984 = vunpack.c.h.b16 %v937
      %v985 = vunpack.c.l.b16 %v938
      %v986 = vunpack.c.h.b16 %v938
      %v987 = vunpack.c.l.b16 %v939
      %v988 = vunpack.c.h.b16 %v939
      %v989 = vunpack.c.l.b16 %v940
      %v990 = vunpack.c.h.b16 %v940
      %v991 = vunpack.c.l.b16 %v941
      %v992 = vunpack.c.h.b16 %v941
      %v993 = vpack.c.b16 %v965, %v961
      %v994 = vpack.c.b16 %v966, %v962
      %v995 = vpack.c.b16 %v967, %v963
      %v996 = vpack.c.b16 %v968, %v964
      %v997 = vpack.c.b16 %v973, %v969
      %v998 = vpack.c.b16 %v974, %v970
      %v999 = vpack.c.b16 %v975, %v971
      %v1000 = vpack.c.b16 %v976, %v972
      %v1001 = vpack.c.b16 %v981, %v977
      %v1002 = vpack.c.b16 %v982, %v978
      %v1003 = vpack.c.b16 %v983, %v979
      %v1004 = vpack.c.b16 %v984, %v980
      %v1005 = vpack.c.b16 %v989, %v985
      %v1006 = vpack.c.b16 %v990, %v986
      %v1007 = vpack.c.b16 %v991, %v987
      %v1008 = vpack.c.b16 %v992, %v988
      %v1026 = vsel %vm300, %v944, 0
      %1028 = vmatprep.subr.bf16.mxu0 %v994
      %1029 = vmatpush1.bf16.msra.mxu0 %v993
      %1030 = vmatprep.subr.bf16.mxu0 %v998
      %1031 = vmatpush1.bf16.msra.mxu0 %v997
      %1032 = vmatprep.subr.bf16.mxu0 %v1002
      %1033 = vmatpush1.bf16.msra.mxu0 %v1001
      %1034 = vmatprep.subr.bf16.mxu0 %v1006
      %1035 = vmatpush1.bf16.msra.mxu0 %v1005
      %1036 = vmatprep.subr.bf16.mxu0 0
      %1037 = vmatpush1.bf16.msra.mxu0 0
      %1038 = vmatprep.subr.bf16.mxu0 0
      %1039 = vmatpush1.bf16.msra.mxu0 0
      %1040 = vmatprep.subr.bf16.mxu0 0
      %1041 = vmatpush1.bf16.msra.mxu0 0
      %1042 = vmatprep.subr.bf16.mxu0 0
      %1043 = vmatpush1.bf16.msra.mxu0 0
      %1044 = vmatprep.subr.bf16.mxu0 0
      %1045 = vmatpush1.bf16.msra.mxu0 0
      %1046 = vmatprep.subr.bf16.mxu0 0
      %1047 = vmatpush1.bf16.msra.mxu0 0
      %1048 = vmatprep.subr.bf16.mxu0 0
      %1049 = vmatpush1.bf16.msra.mxu0 0
      %1050 = vmatprep.subr.bf16.mxu0 0
      %1051 = vmatpush1.bf16.msra.mxu0 0
      %1052 = vmatprep.subr.bf16.mxu0 0
      %1053 = vmatpush1.bf16.msra.mxu0 0
      %1054 = vmatprep.subr.bf16.mxu0 0
      %1055 = vmatpush1.bf16.msra.mxu0 0
      %1056 = vmatprep.subr.bf16.mxu0 0
      %1057 = vmatpush1.bf16.msra.mxu0 0
      %1058 = vmatprep.subr.bf16.mxu0 0
      %1059 = vmatpush1.bf16.msra.mxu0 0
      %1060 = vmatprep.mubr.bf16.mxu0 0
      %1061 = vmatmul.mubr.bf16.gmra.mrb[0].mxu0 %v1026
      %v1062 = vpop.f32.mrb[0].mxu0
      %v1063 = vadd.f32 0.0, %v1062
      %v1064 = vpop.f32.mrb[0].mxu0
      %v1065 = vadd.f32 0.0, %v1064
      %v1066 = vpop.f32.mrb[0].mxu0
      %v1067 = vpop.f32.mrb[0].mxu0
      %1068 = vdwg.mxu0
      %1069 = vmatprep.subr.bf16.mxu0 %v996
      %1070 = vmatpush1.bf16.msra.mxu0 %v995
      %1071 = vmatprep.subr.bf16.mxu0 %v1000
      %1072 = vmatpush1.bf16.msra.mxu0 %v999
      %1073 = vmatprep.subr.bf16.mxu0 %v1004
      %1074 = vmatpush1.bf16.msra.mxu0 %v1003
      %1075 = vmatprep.subr.bf16.mxu0 %v1008
      %1076 = vmatpush1.bf16.msra.mxu0 %v1007
      %1077 = vmatprep.subr.bf16.mxu0 0
      %1078 = vmatpush1.bf16.msra.mxu0 0
      %1079 = vmatprep.subr.bf16.mxu0 0
      %1080 = vmatpush1.bf16.msra.mxu0 0
      %1081 = vmatprep.subr.bf16.mxu0 0
      %1082 = vmatpush1.bf16.msra.mxu0 0
      %1083 = vmatprep.subr.bf16.mxu0 0
      %1084 = vmatpush1.bf16.msra.mxu0 0
      %1085 = vmatprep.subr.bf16.mxu0 0
      %1086 = vmatpush1.bf16.msra.mxu0 0
      %1087 = vmatprep.subr.bf16.mxu0 0
      %1088 = vmatpush1.bf16.msra.mxu0 0
      %1089 = vmatprep.subr.bf16.mxu0 0
      %1090 = vmatpush1.bf16.msra.mxu0 0
      %1091 = vmatprep.subr.bf16.mxu0 0
      %1092 = vmatpush1.bf16.msra.mxu0 0
      %1093 = vmatprep.subr.bf16.mxu0 0
      %1094 = vmatpush1.bf16.msra.mxu0 0
      %1095 = vmatprep.subr.bf16.mxu0 0
      %1096 = vmatpush1.bf16.msra.mxu0 0
      %1097 = vmatprep.subr.bf16.mxu0 0
      %1098 = vmatpush1.bf16.msra.mxu0 0
      %1099 = vmatprep.subr.bf16.mxu0 0
      %1100 = vmatpush1.bf16.msra.mxu0 0
      %1101 = vmatprep.mubr.bf16.mxu0 0
      %1102 = vmatmul.mubr.bf16.gmra.mrb[0].mxu0 %v1026
      %v1103 = vpop.f32.mrb[0].mxu0
      %v1104 = vadd.f32 0.0, %v1103
      %v1105 = vpop.f32.mrb[0].mxu0
      %v1106 = vadd.f32 0.0, %v1105
      %v1107 = vpop.f32.mrb[0].mxu0
      %v1108 = vpop.f32.mrb[0].mxu0
      %1109 = vdwg.mxu0
      %v1110 = vadd.f32 %v921, %v1063
      %v1111 = vadd.f32 %v922, %v1065
      %v1112 = vadd.f32 %v923, %v1104
      %v1113 = vadd.f32 %v924, %v1106
      %s1114 = scalar_lea.vmem %s1, 640
      %v1115 = vld [vmem:[%s1114] sm:$0xff]
      %v1116 = vld [vmem:[%s1114 + $0x8] sm:$0xff]
      %v1117 = vld [vmem:[%s1114 + $0x10] sm:$0xff]
      %v1118 = vld [vmem:[%s1114 + $0x18] sm:$0xff]
      %v1119 = vld [vmem:[%s1114 + $0x20] sm:$0xff]
      %v1120 = vld [vmem:[%s1114 + $0x28] sm:$0xff]
      %v1121 = vld [vmem:[%s1114 + $0x30] sm:$0xff]
      %v1122 = vld [vmem:[%s1114 + $0x38] sm:$0xff]
      %v1123 = vld [vmem:[%s1114 + $0x40] sm:$0xff]
      %v1124 = vld [vmem:[%s1114 + $0x48] sm:$0xff]
      %v1125 = vld [vmem:[%s1114 + $0x50] sm:$0xff]
      %v1126 = vld [vmem:[%s1114 + $0x58] sm:$0xff]
      %v1127 = vld [vmem:[%s1114 + $0x60] sm:$0xff]
      %v1128 = vld [vmem:[%s1114 + $0x68] sm:$0xff]
      %v1129 = vld [vmem:[%s1114 + $0x70] sm:$0xff]
      %v1130 = vld [vmem:[%s1114 + $0x78] sm:$0xff]
      %v1131 = vrot.slane %v212, 3
      %v1148 = vunpack.c.l.b16 %v1115
      %v1149 = vunpack.c.h.b16 %v1115
      %v1150 = vunpack.c.l.b16 %v1116
      %v1151 = vunpack.c.h.b16 %v1116
      %v1152 = vunpack.c.l.b16 %v1117
      %v1153 = vunpack.c.h.b16 %v1117
      %v1154 = vunpack.c.l.b16 %v1118
      %v1155 = vunpack.c.h.b16 %v1118
      %v1156 = vunpack.c.l.b16 %v1119
      %v1157 = vunpack.c.h.b16 %v1119
      %v1158 = vunpack.c.l.b16 %v1120
      %v1159 = vunpack.c.h.b16 %v1120
      %v1160 = vunpack.c.l.b16 %v1121
      %v1161 = vunpack.c.h.b16 %v1121
      %v1162 = vunpack.c.l.b16 %v1122
      %v1163 = vunpack.c.h.b16 %v1122
      %v1164 = vunpack.c.l.b16 %v1123
      %v1165 = vunpack.c.h.b16 %v1123
      %v1166 = vunpack.c.l.b16 %v1124
      %v1167 = vunpack.c.h.b16 %v1124
      %v1168 = vunpack.c.l.b16 %v1125
      %v1169 = vunpack.c.h.b16 %v1125
      %v1170 = vunpack.c.l.b16 %v1126
      %v1171 = vunpack.c.h.b16 %v1126
      %v1172 = vunpack.c.l.b16 %v1127
      %v1173 = vunpack.c.h.b16 %v1127
      %v1174 = vunpack.c.l.b16 %v1128
      %v1175 = vunpack.c.h.b16 %v1128
      %v1176 = vunpack.c.l.b16 %v1129
      %v1177 = vunpack.c.h.b16 %v1129
      %v1178 = vunpack.c.l.b16 %v1130
      %v1179 = vunpack.c.h.b16 %v1130
      %v1180 = vpack.c.b16 %v1152, %v1148
      %v1181 = vpack.c.b16 %v1153, %v1149
      %v1182 = vpack.c.b16 %v1154, %v1150
      %v1183 = vpack.c.b16 %v1155, %v1151
      %v1184 = vpack.c.b16 %v1160, %v1156
      %v1185 = vpack.c.b16 %v1161, %v1157
      %v1186 = vpack.c.b16 %v1162, %v1158
      %v1187 = vpack.c.b16 %v1163, %v1159
      %v1188 = vpack.c.b16 %v1168, %v1164
      %v1189 = vpack.c.b16 %v1169, %v1165
      %v1190 = vpack.c.b16 %v1170, %v1166
      %v1191 = vpack.c.b16 %v1171, %v1167
      %v1192 = vpack.c.b16 %v1176, %v1172
      %v1193 = vpack.c.b16 %v1177, %v1173
      %v1194 = vpack.c.b16 %v1178, %v1174
      %v1195 = vpack.c.b16 %v1179, %v1175
      %v1213 = vsel %vm300, %v1131, 0
      %1215 = vmatprep.subr.bf16.mxu0 %v1181
      %1216 = vmatpush1.bf16.msra.mxu0 %v1180
      %1217 = vmatprep.subr.bf16.mxu0 %v1185
      %1218 = vmatpush1.bf16.msra.mxu0 %v1184
      %1219 = vmatprep.subr.bf16.mxu0 %v1189
      %1220 = vmatpush1.bf16.msra.mxu0 %v1188
      %1221 = vmatprep.subr.bf16.mxu0 %v1193
      %1222 = vmatpush1.bf16.msra.mxu0 %v1192
      %1223 = vmatprep.subr.bf16.mxu0 0
      %1224 = vmatpush1.bf16.msra.mxu0 0
      %1225 = vmatprep.subr.bf16.mxu0 0
      %1226 = vmatpush1.bf16.msra.mxu0 0
      %1227 = vmatprep.subr.bf16.mxu0 0
      %1228 = vmatpush1.bf16.msra.mxu0 0
      %1229 = vmatprep.subr.bf16.mxu0 0
      %1230 = vmatpush1.bf16.msra.mxu0 0
      %1231 = vmatprep.subr.bf16.mxu0 0
      %1232 = vmatpush1.bf16.msra.mxu0 0
      %1233 = vmatprep.subr.bf16.mxu0 0
      %1234 = vmatpush1.bf16.msra.mxu0 0
      %1235 = vmatprep.subr.bf16.mxu0 0
      %1236 = vmatpush1.bf16.msra.mxu0 0
      %1237 = vmatprep.subr.bf16.mxu0 0
      %1238 = vmatpush1.bf16.msra.mxu0 0
      %1239 = vmatprep.subr.bf16.mxu0 0
      %1240 = vmatpush1.bf16.msra.mxu0 0
      %1241 = vmatprep.subr.bf16.mxu0 0
      %1242 = vmatpush1.bf16.msra.mxu0 0
      %1243 = vmatprep.subr.bf16.mxu0 0
      %1244 = vmatpush1.bf16.msra.mxu0 0
      %1245 = vmatprep.subr.bf16.mxu0 0
      %1246 = vmatpush1.bf16.msra.mxu0 0
      %1247 = vmatprep.mubr.bf16.mxu0 0
      %1248 = vmatmul.mubr.bf16.gmra.mrb[0].mxu0 %v1213
      %v1249 = vpop.f32.mrb[0].mxu0
      %v1250 = vadd.f32 0.0, %v1249
      %v1251 = vpop.f32.mrb[0].mxu0
      %v1252 = vadd.f32 0.0, %v1251
      %v1253 = vpop.f32.mrb[0].mxu0
      %v1254 = vpop.f32.mrb[0].mxu0
      %1255 = vdwg.mxu0
      %1256 = vmatprep.subr.bf16.mxu0 %v1183
      %1257 = vmatpush1.bf16.msra.mxu0 %v1182
      %1258 = vmatprep.subr.bf16.mxu0 %v1187
      %1259 = vmatpush1.bf16.msra.mxu0 %v1186
      %1260 = vmatprep.subr.bf16.mxu0 %v1191
      %1261 = vmatpush1.bf16.msra.mxu0 %v1190
      %1262 = vmatprep.subr.bf16.mxu0 %v1195
      %1263 = vmatpush1.bf16.msra.mxu0 %v1194
      %1264 = vmatprep.subr.bf16.mxu0 0
      %1265 = vmatpush1.bf16.msra.mxu0 0
      %1266 = vmatprep.subr.bf16.mxu0 0
      %1267 = vmatpush1.bf16.msra.mxu0 0
      %1268 = vmatprep.subr.bf16.mxu0 0
      %1269 = vmatpush1.bf16.msra.mxu0 0
      %1270 = vmatprep.subr.bf16.mxu0 0
      %1271 = vmatpush1.bf16.msra.mxu0 0
      %1272 = vmatprep.subr.bf16.mxu0 0
      %1273 = vmatpush1.bf16.msra.mxu0 0
      %1274 = vmatprep.subr.bf16.mxu0 0
      %1275 = vmatpush1.bf16.msra.mxu0 0
      %1276 = vmatprep.subr.bf16.mxu0 0
      %1277 = vmatpush1.bf16.msra.mxu0 0
      %1278 = vmatprep.subr.bf16.mxu0 0
      %1279 = vmatpush1.bf16.msra.mxu0 0
      %1280 = vmatprep.subr.bf16.mxu0 0
      %1281 = vmatpush1.bf16.msra.mxu0 0
      %1282 = vmatprep.subr.bf16.mxu0 0
      %1283 = vmatpush1.bf16.msra.mxu0 0
      %1284 = vmatprep.subr.bf16.mxu0 0
      %1285 = vmatpush1.bf16.msra.mxu0 0
      %1286 = vmatprep.subr.bf16.mxu0 0
      %1287 = vmatpush1.bf16.msra.mxu0 0
      %1288 = vmatprep.mubr.bf16.mxu0 0
      %1289 = vmatmul.mubr.bf16.gmra.mrb[0].mxu0 %v1213
      %v1290 = vpop.f32.mrb[0].mxu0
      %v1291 = vadd.f32 0.0, %v1290
      %v1292 = vpop.f32.mrb[0].mxu0
      %v1293 = vadd.f32 0.0, %v1292
      %v1294 = vpop.f32.mrb[0].mxu0
      %v1295 = vpop.f32.mrb[0].mxu0
      %1296 = vdwg.mxu0
      %v1297 = vadd.f32 %v1110, %v1250
      %v1298 = vadd.f32 %v1111, %v1252
      %v1299 = vadd.f32 %v1112, %v1291
      %v1300 = vadd.f32 %v1113, %v1293
      %s1301 = scalar_lea.vmem %s1, 768
      %v1302 = vld [vmem:[%s1301] sm:$0xff]
      %v1303 = vld [vmem:[%s1301 + $0x8] sm:$0xff]
      %v1304 = vld [vmem:[%s1301 + $0x10] sm:$0xff]
      %v1305 = vld [vmem:[%s1301 + $0x18] sm:$0xff]
      %v1306 = vld [vmem:[%s1301 + $0x20] sm:$0xff]
      %v1307 = vld [vmem:[%s1301 + $0x28] sm:$0xff]
      %v1308 = vld [vmem:[%s1301 + $0x30] sm:$0xff]
      %v1309 = vld [vmem:[%s1301 + $0x38] sm:$0xff]
      %v1310 = vld [vmem:[%s1301 + $0x40] sm:$0xff]
      %v1311 = vld [vmem:[%s1301 + $0x48] sm:$0xff]
      %v1312 = vld [vmem:[%s1301 + $0x50] sm:$0xff]
      %v1313 = vld [vmem:[%s1301 + $0x58] sm:$0xff]
      %v1314 = vld [vmem:[%s1301 + $0x60] sm:$0xff]
      %v1315 = vld [vmem:[%s1301 + $0x68] sm:$0xff]
      %v1316 = vld [vmem:[%s1301 + $0x70] sm:$0xff]
      %v1317 = vld [vmem:[%s1301 + $0x78] sm:$0xff]
      %v1334 = vunpack.c.l.b16 %v1302
      %v1335 = vunpack.c.h.b16 %v1302
      %v1336 = vunpack.c.l.b16 %v1303
      %v1337 = vunpack.c.h.b16 %v1303
      %v1338 = vunpack.c.l.b16 %v1304
      %v1339 = vunpack.c.h.b16 %v1304
      %v1340 = vunpack.c.l.b16 %v1305
      %v1341 = vunpack.c.h.b16 %v1305
      %v1342 = vunpack.c.l.b16 %v1306
      %v1343 = vunpack.c.h.b16 %v1306
      %v1344 = vunpack.c.l.b16 %v1307
      %v1345 = vunpack.c.h.b16 %v1307
      %v1346 = vunpack.c.l.b16 %v1308
      %v1347 = vunpack.c.h.b16 %v1308
      %v1348 = vunpack.c.l.b16 %v1309
      %v1349 = vunpack.c.h.b16 %v1309
      %v1350 = vunpack.c.l.b16 %v1310
      %v1351 = vunpack.c.h.b16 %v1310
      %v1352 = vunpack.c.l.b16 %v1311
      %v1353 = vunpack.c.h.b16 %v1311
      %v1354 = vunpack.c.l.b16 %v1312
      %v1355 = vunpack.c.h.b16 %v1312
      %v1356 = vunpack.c.l.b16 %v1313
      %v1357 = vunpack.c.h.b16 %v1313
      %v1358 = vunpack.c.l.b16 %v1314
      %v1359 = vunpack.c.h.b16 %v1314
      %v1360 = vunpack.c.l.b16 %v1315
      %v1361 = vunpack.c.h.b16 %v1315
      %v1362 = vunpack.c.l.b16 %v1316
      %v1363 = vunpack.c.h.b16 %v1316
      %v1364 = vunpack.c.l.b16 %v1317
      %v1365 = vunpack.c.h.b16 %v1317
      %v1366 = vpack.c.b16 %v1338, %v1334
      %v1367 = vpack.c.b16 %v1339, %v1335
      %v1368 = vpack.c.b16 %v1340, %v1336
      %v1369 = vpack.c.b16 %v1341, %v1337
      %v1370 = vpack.c.b16 %v1346, %v1342
      %v1371 = vpack.c.b16 %v1347, %v1343
      %v1372 = vpack.c.b16 %v1348, %v1344
      %v1373 = vpack.c.b16 %v1349, %v1345
      %v1374 = vpack.c.b16 %v1354, %v1350
      %v1375 = vpack.c.b16 %v1355, %v1351
      %v1376 = vpack.c.b16 %v1356, %v1352
      %v1377 = vpack.c.b16 %v1357, %v1353
      %v1378 = vpack.c.b16 %v1362, %v1358
      %v1379 = vpack.c.b16 %v1363, %v1359
      %v1380 = vpack.c.b16 %v1364, %v1360
      %v1381 = vpack.c.b16 %v1365, %v1361
      %v1399 = vsel %vm300, %v173, 0
      %1401 = vmatprep.subr.bf16.mxu0 %v1367
      %1402 = vmatpush1.bf16.msra.mxu0 %v1366
      %1403 = vmatprep.subr.bf16.mxu0 %v1371
      %1404 = vmatpush1.bf16.msra.mxu0 %v1370
      %1405 = vmatprep.subr.bf16.mxu0 %v1375
      %1406 = vmatpush1.bf16.msra.mxu0 %v1374
      %1407 = vmatprep.subr.bf16.mxu0 %v1379
      %1408 = vmatpush1.bf16.msra.mxu0 %v1378
      %1409 = vmatprep.subr.bf16.mxu0 0
      %1410 = vmatpush1.bf16.msra.mxu0 0
      %1411 = vmatprep.subr.bf16.mxu0 0
      %1412 = vmatpush1.bf16.msra.mxu0 0
      %1413 = vmatprep.subr.bf16.mxu0 0
      %1414 = vmatpush1.bf16.msra.mxu0 0
      %1415 = vmatprep.subr.bf16.mxu0 0
      %1416 = vmatpush1.bf16.msra.mxu0 0
      %1417 = vmatprep.subr.bf16.mxu0 0
      %1418 = vmatpush1.bf16.msra.mxu0 0
      %1419 = vmatprep.subr.bf16.mxu0 0
      %1420 = vmatpush1.bf16.msra.mxu0 0
      %1421 = vmatprep.subr.bf16.mxu0 0
      %1422 = vmatpush1.bf16.msra.mxu0 0
      %1423 = vmatprep.subr.bf16.mxu0 0
      %1424 = vmatpush1.bf16.msra.mxu0 0
      %1425 = vmatprep.subr.bf16.mxu0 0
      %1426 = vmatpush1.bf16.msra.mxu0 0
      %1427 = vmatprep.subr.bf16.mxu0 0
      %1428 = vmatpush1.bf16.msra.mxu0 0
      %1429 = vmatprep.subr.bf16.mxu0 0
      %1430 = vmatpush1.bf16.msra.mxu0 0
      %1431 = vmatprep.subr.bf16.mxu0 0
      %1432 = vmatpush1.bf16.msra.mxu0 0
      %1433 = vmatprep.mubr.bf16.mxu0 0
      %1434 = vmatmul.mubr.bf16.gmra.mrb[0].mxu0 %v1399
      %v1435 = vpop.f32.mrb[0].mxu0
      %v1436 = vadd.f32 0.0, %v1435
      %v1437 = vpop.f32.mrb[0].mxu0
      %v1438 = vadd.f32 0.0, %v1437
      %v1439 = vpop.f32.mrb[0].mxu0
      %v1440 = vpop.f32.mrb[0].mxu0
      %1441 = vdwg.mxu0
      %1442 = vmatprep.subr.bf16.mxu0 %v1369
      %1443 = vmatpush1.bf16.msra.mxu0 %v1368
      %1444 = vmatprep.subr.bf16.mxu0 %v1373
      %1445 = vmatpush1.bf16.msra.mxu0 %v1372
      %1446 = vmatprep.subr.bf16.mxu0 %v1377
      %1447 = vmatpush1.bf16.msra.mxu0 %v1376
      %1448 = vmatprep.subr.bf16.mxu0 %v1381
      %1449 = vmatpush1.bf16.msra.mxu0 %v1380
      %1450 = vmatprep.subr.bf16.mxu0 0
      %1451 = vmatpush1.bf16.msra.mxu0 0
      %1452 = vmatprep.subr.bf16.mxu0 0
      %1453 = vmatpush1.bf16.msra.mxu0 0
      %1454 = vmatprep.subr.bf16.mxu0 0
      %1455 = vmatpush1.bf16.msra.mxu0 0
      %1456 = vmatprep.subr.bf16.mxu0 0
      %1457 = vmatpush1.bf16.msra.mxu0 0
      %1458 = vmatprep.subr.bf16.mxu0 0
      %1459 = vmatpush1.bf16.msra.mxu0 0
      %1460 = vmatprep.subr.bf16.mxu0 0
      %1461 = vmatpush1.bf16.msra.mxu0 0
      %1462 = vmatprep.subr.bf16.mxu0 0
      %1463 = vmatpush1.bf16.msra.mxu0 0
      %1464 = vmatprep.subr.bf16.mxu0 0
      %1465 = vmatpush1.bf16.msra.mxu0 0
      %1466 = vmatprep.subr.bf16.mxu0 0
      %1467 = vmatpush1.bf16.msra.mxu0 0
      %1468 = vmatprep.subr.bf16.mxu0 0
      %1469 = vmatpush1.bf16.msra.mxu0 0
      %1470 = vmatprep.subr.bf16.mxu0 0
      %1471 = vmatpush1.bf16.msra.mxu0 0
      %1472 = vmatprep.subr.bf16.mxu0 0
      %1473 = vmatpush1.bf16.msra.mxu0 0
      %1474 = vmatprep.mubr.bf16.mxu0 0
      %1475 = vmatmul.mubr.bf16.gmra.mrb[0].mxu0 %v1399
      %v1476 = vpop.f32.mrb[0].mxu0
      %v1477 = vadd.f32 0.0, %v1476
      %v1478 = vpop.f32.mrb[0].mxu0
      %v1479 = vadd.f32 0.0, %v1478
      %v1480 = vpop.f32.mrb[0].mxu0
      %v1481 = vpop.f32.mrb[0].mxu0
      %1482 = vdwg.mxu0
      %v1483 = vadd.f32 %v1297, %v1436
      %v1484 = vadd.f32 %v1298, %v1438
      %v1485 = vadd.f32 %v1299, %v1477
      %v1486 = vadd.f32 %v1300, %v1479
      %s1487 = scalar_lea.vmem %s1, 896
      %v1488 = vld [vmem:[%s1487] sm:$0xff]
      %v1489 = vld [vmem:[%s1487 + $0x8] sm:$0xff]
      %v1490 = vld [vmem:[%s1487 + $0x10] sm:$0xff]
      %v1491 = vld [vmem:[%s1487 + $0x18] sm:$0xff]
      %v1492 = vld [vmem:[%s1487 + $0x20] sm:$0xff]
      %v1493 = vld [vmem:[%s1487 + $0x28] sm:$0xff]
      %v1494 = vld [vmem:[%s1487 + $0x30] sm:$0xff]
      %v1495 = vld [vmem:[%s1487 + $0x38] sm:$0xff]
      %v1496 = vld [vmem:[%s1487 + $0x40] sm:$0xff]
      %v1497 = vld [vmem:[%s1487 + $0x48] sm:$0xff]
      %v1498 = vld [vmem:[%s1487 + $0x50] sm:$0xff]
      %v1499 = vld [vmem:[%s1487 + $0x58] sm:$0xff]
      %v1500 = vld [vmem:[%s1487 + $0x60] sm:$0xff]
      %v1501 = vld [vmem:[%s1487 + $0x68] sm:$0xff]
      %v1502 = vld [vmem:[%s1487 + $0x70] sm:$0xff]
      %v1503 = vld [vmem:[%s1487 + $0x78] sm:$0xff]
      %v1505 = vunpack.c.l.b16 %v174
      %v1506 = vpack.c.b16 %v1505, %v211
      %v1508 = vshrl.u32 %v1506, 16
      %v1510 = vshll.u32 %v1506, 16
      %v1512 = vrot.slane %v1510, 1
      %v1513 = vor.u32 %v1508, %v1512
      %v1530 = vunpack.c.l.b16 %v1488
      %v1531 = vunpack.c.h.b16 %v1488
      %v1532 = vunpack.c.l.b16 %v1489
      %v1533 = vunpack.c.h.b16 %v1489
      %v1534 = vunpack.c.l.b16 %v1490
      %v1535 = vunpack.c.h.b16 %v1490
      %v1536 = vunpack.c.l.b16 %v1491
      %v1537 = vunpack.c.h.b16 %v1491
      %v1538 = vunpack.c.l.b16 %v1492
      %v1539 = vunpack.c.h.b16 %v1492
      %v1540 = vunpack.c.l.b16 %v1493
      %v1541 = vunpack.c.h.b16 %v1493
      %v1542 = vunpack.c.l.b16 %v1494
      %v1543 = vunpack.c.h.b16 %v1494
      %v1544 = vunpack.c.l.b16 %v1495
      %v1545 = vunpack.c.h.b16 %v1495
      %v1546 = vunpack.c.l.b16 %v1496
      %v1547 = vunpack.c.h.b16 %v1496
      %v1548 = vunpack.c.l.b16 %v1497
      %v1549 = vunpack.c.h.b16 %v1497
      %v1550 = vunpack.c.l.b16 %v1498
      %v1551 = vunpack.c.h.b16 %v1498
      %v1552 = vunpack.c.l.b16 %v1499
      %v1553 = vunpack.c.h.b16 %v1499
      %v1554 = vunpack.c.l.b16 %v1500
      %v1555 = vunpack.c.h.b16 %v1500
      %v1556 = vunpack.c.l.b16 %v1501
      %v1557 = vunpack.c.h.b16 %v1501
      %v1558 = vunpack.c.l.b16 %v1502
      %v1559 = vunpack.c.h.b16 %v1502
      %v1560 = vunpack.c.l.b16 %v1503
      %v1561 = vunpack.c.h.b16 %v1503
      %v1562 = vpack.c.b16 %v1534, %v1530
      %v1563 = vpack.c.b16 %v1535, %v1531
      %v1564 = vpack.c.b16 %v1536, %v1532
      %v1565 = vpack.c.b16 %v1537, %v1533
      %v1566 = vpack.c.b16 %v1542, %v1538
      %v1567 = vpack.c.b16 %v1543, %v1539
      %v1568 = vpack.c.b16 %v1544, %v1540
      %v1569 = vpack.c.b16 %v1545, %v1541
      %v1570 = vpack.c.b16 %v1550, %v1546
      %v1571 = vpack.c.b16 %v1551, %v1547
      %v1572 = vpack.c.b16 %v1552, %v1548
      %v1573 = vpack.c.b16 %v1553, %v1549
      %v1574 = vpack.c.b16 %v1558, %v1554
      %v1575 = vpack.c.b16 %v1559, %v1555
      %v1576 = vpack.c.b16 %v1560, %v1556
      %v1577 = vpack.c.b16 %v1561, %v1557
      %v1595 = vsel %vm300, %v1513, 0
      %1597 = vmatprep.subr.bf16.mxu0 %v1563
      %1598 = vmatpush1.bf16.msra.mxu0 %v1562
      %1599 = vmatprep.subr.bf16.mxu0 %v1567
      %1600 = vmatpush1.bf16.msra.mxu0 %v1566
      %1601 = vmatprep.subr.bf16.mxu0 %v1571
      %1602 = vmatpush1.bf16.msra.mxu0 %v1570
      %1603 = vmatprep.subr.bf16.mxu0 %v1575
      %1604 = vmatpush1.bf16.msra.mxu0 %v1574
      %1605 = vmatprep.subr.bf16.mxu0 0
      %1606 = vmatpush1.bf16.msra.mxu0 0
      %1607 = vmatprep.subr.bf16.mxu0 0
      %1608 = vmatpush1.bf16.msra.mxu0 0
      %1609 = vmatprep.subr.bf16.mxu0 0
      %1610 = vmatpush1.bf16.msra.mxu0 0
      %1611 = vmatprep.subr.bf16.mxu0 0
      %1612 = vmatpush1.bf16.msra.mxu0 0
      %1613 = vmatprep.subr.bf16.mxu0 0
      %1614 = vmatpush1.bf16.msra.mxu0 0
      %1615 = vmatprep.subr.bf16.mxu0 0
      %1616 = vmatpush1.bf16.msra.mxu0 0
      %1617 = vmatprep.subr.bf16.mxu0 0
      %1618 = vmatpush1.bf16.msra.mxu0 0
      %1619 = vmatprep.subr.bf16.mxu0 0
      %1620 = vmatpush1.bf16.msra.mxu0 0
      %1621 = vmatprep.subr.bf16.mxu0 0
      %1622 = vmatpush1.bf16.msra.mxu0 0
      %1623 = vmatprep.subr.bf16.mxu0 0
      %1624 = vmatpush1.bf16.msra.mxu0 0
      %1625 = vmatprep.subr.bf16.mxu0 0
      %1626 = vmatpush1.bf16.msra.mxu0 0
      %1627 = vmatprep.subr.bf16.mxu0 0
      %1628 = vmatpush1.bf16.msra.mxu0 0
      %1629 = vmatprep.mubr.bf16.mxu0 0
      %1630 = vmatmul.mubr.bf16.gmra.mrb[0].mxu0 %v1595
      %v1631 = vpop.f32.mrb[0].mxu0
      %v1632 = vadd.f32 0.0, %v1631
      %v1633 = vpop.f32.mrb[0].mxu0
      %v1634 = vadd.f32 0.0, %v1633
      %v1635 = vpop.f32.mrb[0].mxu0
      %v1636 = vpop.f32.mrb[0].mxu0
      %1637 = vdwg.mxu0
      %1638 = vmatprep.subr.bf16.mxu0 %v1565
      %1639 = vmatpush1.bf16.msra.mxu0 %v1564
      %1640 = vmatprep.subr.bf16.mxu0 %v1569
      %1641 = vmatpush1.bf16.msra.mxu0 %v1568
      %1642 = vmatprep.subr.bf16.mxu0 %v1573
      %1643 = vmatpush1.bf16.msra.mxu0 %v1572
      %1644 = vmatprep.subr.bf16.mxu0 %v1577
      %1645 = vmatpush1.bf16.msra.mxu0 %v1576
      %1646 = vmatprep.subr.bf16.mxu0 0
      %1647 = vmatpush1.bf16.msra.mxu0 0
      %1648 = vmatprep.subr.bf16.mxu0 0
      %1649 = vmatpush1.bf16.msra.mxu0 0
      %1650 = vmatprep.subr.bf16.mxu0 0
      %1651 = vmatpush1.bf16.msra.mxu0 0
      %1652 = vmatprep.subr.bf16.mxu0 0
      %1653 = vmatpush1.bf16.msra.mxu0 0
      %1654 = vmatprep.subr.bf16.mxu0 0
      %1655 = vmatpush1.bf16.msra.mxu0 0
      %1656 = vmatprep.subr.bf16.mxu0 0
      %1657 = vmatpush1.bf16.msra.mxu0 0
      %1658 = vmatprep.subr.bf16.mxu0 0
      %1659 = vmatpush1.bf16.msra.mxu0 0
      %1660 = vmatprep.subr.bf16.mxu0 0
      %1661 = vmatpush1.bf16.msra.mxu0 0
      %1662 = vmatprep.subr.bf16.mxu0 0
      %1663 = vmatpush1.bf16.msra.mxu0 0
      %1664 = vmatprep.subr.bf16.mxu0 0
      %1665 = vmatpush1.bf16.msra.mxu0 0
      %1666 = vmatprep.subr.bf16.mxu0 0
      %1667 = vmatpush1.bf16.msra.mxu0 0
      %1668 = vmatprep.subr.bf16.mxu0 0
      %1669 = vmatpush1.bf16.msra.mxu0 0
      %1670 = vmatprep.mubr.bf16.mxu0 0
      %1671 = vmatmul.mubr.bf16.gmra.mrb[0].mxu0 %v1595
      %v1672 = vpop.f32.mrb[0].mxu0
      %v1673 = vadd.f32 0.0, %v1672
      %v1674 = vpop.f32.mrb[0].mxu0
      %v1675 = vadd.f32 0.0, %v1674
      %v1676 = vpop.f32.mrb[0].mxu0
      %v1677 = vpop.f32.mrb[0].mxu0
      %1678 = vdwg.mxu0
      %v1679 = vadd.f32 %v1483, %v1632
      %v1680 = vadd.f32 %v1484, %v1634
      %v1681 = vadd.f32 %v1485, %v1673
      %v1682 = vadd.f32 %v1486, %v1675
      %s1683 = scalar_lea.vmem %s1, 1024
      %v1684 = vld [vmem:[%s1683] sm:$0xff]
      %v1685 = vld [vmem:[%s1683 + $0x8] sm:$0xff]
      %v1686 = vld [vmem:[%s1683 + $0x10] sm:$0xff]
      %v1687 = vld [vmem:[%s1683 + $0x18] sm:$0xff]
      %v1688 = vld [vmem:[%s1683 + $0x20] sm:$0xff]
      %v1689 = vld [vmem:[%s1683 + $0x28] sm:$0xff]
      %v1690 = vld [vmem:[%s1683 + $0x30] sm:$0xff]
      %v1691 = vld [vmem:[%s1683 + $0x38] sm:$0xff]
      %v1692 = vld [vmem:[%s1683 + $0x40] sm:$0xff]
      %v1693 = vld [vmem:[%s1683 + $0x48] sm:$0xff]
      %v1694 = vld [vmem:[%s1683 + $0x50] sm:$0xff]
      %v1695 = vld [vmem:[%s1683 + $0x58] sm:$0xff]
      %v1696 = vld [vmem:[%s1683 + $0x60] sm:$0xff]
      %v1697 = vld [vmem:[%s1683 + $0x68] sm:$0xff]
      %v1698 = vld [vmem:[%s1683 + $0x70] sm:$0xff]
      %v1699 = vld [vmem:[%s1683 + $0x78] sm:$0xff]
      %v1700 = vrot.slane %v1506, 1
      %v1717 = vunpack.c.l.b16 %v1684
      %v1718 = vunpack.c.h.b16 %v1684
      %v1719 = vunpack.c.l.b16 %v1685
      %v1720 = vunpack.c.h.b16 %v1685
      %v1721 = vunpack.c.l.b16 %v1686
      %v1722 = vunpack.c.h.b16 %v1686
      %v1723 = vunpack.c.l.b16 %v1687
      %v1724 = vunpack.c.h.b16 %v1687
      %v1725 = vunpack.c.l.b16 %v1688
      %v1726 = vunpack.c.h.b16 %v1688
      %v1727 = vunpack.c.l.b16 %v1689
      %v1728 = vunpack.c.h.b16 %v1689
      %v1729 = vunpack.c.l.b16 %v1690
      %v1730 = vunpack.c.h.b16 %v1690
      %v1731 = vunpack.c.l.b16 %v1691
      %v1732 = vunpack.c.h.b16 %v1691
      %v1733 = vunpack.c.l.b16 %v1692
      %v1734 = vunpack.c.h.b16 %v1692
      %v1735 = vunpack.c.l.b16 %v1693
      %v1736 = vunpack.c.h.b16 %v1693
      %v1737 = vunpack.c.l.b16 %v1694
      %v1738 = vunpack.c.h.b16 %v1694
      %v1739 = vunpack.c.l.b16 %v1695
      %v1740 = vunpack.c.h.b16 %v1695
      %v1741 = vunpack.c.l.b16 %v1696
      %v1742 = vunpack.c.h.b16 %v1696
      %v1743 = vunpack.c.l.b16 %v1697
      %v1744 = vunpack.c.h.b16 %v1697
      %v1745 = vunpack.c.l.b16 %v1698
      %v1746 = vunpack.c.h.b16 %v1698
      %v1747 = vunpack.c.l.b16 %v1699
      %v1748 = vunpack.c.h.b16 %v1699
      %v1749 = vpack.c.b16 %v1721, %v1717
      %v1750 = vpack.c.b16 %v1722, %v1718
      %v1751 = vpack.c.b16 %v1723, %v1719
      %v1752 = vpack.c.b16 %v1724, %v1720
      %v1753 = vpack.c.b16 %v1729, %v1725
      %v1754 = vpack.c.b16 %v1730, %v1726
      %v1755 = vpack.c.b16 %v1731, %v1727
      %v1756 = vpack.c.b16 %v1732, %v1728
      %v1757 = vpack.c.b16 %v1737, %v1733
      %v1758 = vpack.c.b16 %v1738, %v1734
      %v1759 = vpack.c.b16 %v1739, %v1735
      %v1760 = vpack.c.b16 %v1740, %v1736
      %v1761 = vpack.c.b16 %v1745, %v1741
      %v1762 = vpack.c.b16 %v1746, %v1742
      %v1763 = vpack.c.b16 %v1747, %v1743
      %v1764 = vpack.c.b16 %v1748, %v1744
      %v1782 = vsel %vm300, %v1700, 0
      %1784 = vmatprep.subr.bf16.mxu0 %v1750
      %1785 = vmatpush1.bf16.msra.mxu0 %v1749
      %1786 = vmatprep.subr.bf16.mxu0 %v1754
      %1787 = vmatpush1.bf16.msra.mxu0 %v1753
      %1788 = vmatprep.subr.bf16.mxu0 %v1758
      %1789 = vmatpush1.bf16.msra.mxu0 %v1757
      %1790 = vmatprep.subr.bf16.mxu0 %v1762
      %1791 = vmatpush1.bf16.msra.mxu0 %v1761
      %1792 = vmatprep.subr.bf16.mxu0 0
      %1793 = vmatpush1.bf16.msra.mxu0 0
      %1794 = vmatprep.subr.bf16.mxu0 0
      %1795 = vmatpush1.bf16.msra.mxu0 0
      %1796 = vmatprep.subr.bf16.mxu0 0
      %1797 = vmatpush1.bf16.msra.mxu0 0
      %1798 = vmatprep.subr.bf16.mxu0 0
      %1799 = vmatpush1.bf16.msra.mxu0 0
      %1800 = vmatprep.subr.bf16.mxu0 0
      %1801 = vmatpush1.bf16.msra.mxu0 0
      %1802 = vmatprep.subr.bf16.mxu0 0
      %1803 = vmatpush1.bf16.msra.mxu0 0
      %1804 = vmatprep.subr.bf16.mxu0 0
      %1805 = vmatpush1.bf16.msra.mxu0 0
      %1806 = vmatprep.subr.bf16.mxu0 0
      %1807 = vmatpush1.bf16.msra.mxu0 0
      %1808 = vmatprep.subr.bf16.mxu0 0
      %1809 = vmatpush1.bf16.msra.mxu0 0
      %1810 = vmatprep.subr.bf16.mxu0 0
      %1811 = vmatpush1.bf16.msra.mxu0 0
      %1812 = vmatprep.subr.bf16.mxu0 0
      %1813 = vmatpush1.bf16.msra.mxu0 0
      %1814 = vmatprep.subr.bf16.mxu0 0
      %1815 = vmatpush1.bf16.msra.mxu0 0
      %1816 = vmatprep.mubr.bf16.mxu0 0
      %1817 = vmatmul.mubr.bf16.gmra.mrb[0].mxu0 %v1782
      %v1818 = vpop.f32.mrb[0].mxu0
      %v1819 = vadd.f32 0.0, %v1818
      %v1820 = vpop.f32.mrb[0].mxu0
      %v1821 = vadd.f32 0.0, %v1820
      %v1822 = vpop.f32.mrb[0].mxu0
      %v1823 = vpop.f32.mrb[0].mxu0
      %1824 = vdwg.mxu0
      %1825 = vmatprep.subr.bf16.mxu0 %v1752
      %1826 = vmatpush1.bf16.msra.mxu0 %v1751
      %1827 = vmatprep.subr.bf16.mxu0 %v1756
      %1828 = vmatpush1.bf16.msra.mxu0 %v1755
      %1829 = vmatprep.subr.bf16.mxu0 %v1760
      %1830 = vmatpush1.bf16.msra.mxu0 %v1759
      %1831 = vmatprep.subr.bf16.mxu0 %v1764
      %1832 = vmatpush1.bf16.msra.mxu0 %v1763
      %1833 = vmatprep.subr.bf16.mxu0 0
      %1834 = vmatpush1.bf16.msra.mxu0 0
      %1835 = vmatprep.subr.bf16.mxu0 0
      %1836 = vmatpush1.bf16.msra.mxu0 0
      %1837 = vmatprep.subr.bf16.mxu0 0
      %1838 = vmatpush1.bf16.msra.mxu0 0
      %1839 = vmatprep.subr.bf16.mxu0 0
      %1840 = vmatpush1.bf16.msra.mxu0 0
      %1841 = vmatprep.subr.bf16.mxu0 0
      %1842 = vmatpush1.bf16.msra.mxu0 0
      %1843 = vmatprep.subr.bf16.mxu0 0
      %1844 = vmatpush1.bf16.msra.mxu0 0
      %1845 = vmatprep.subr.bf16.mxu0 0
      %1846 = vmatpush1.bf16.msra.mxu0 0
      %1847 = vmatprep.subr.bf16.mxu0 0
      %1848 = vmatpush1.bf16.msra.mxu0 0
      %1849 = vmatprep.subr.bf16.mxu0 0
      %1850 = vmatpush1.bf16.msra.mxu0 0
      %1851 = vmatprep.subr.bf16.mxu0 0
      %1852 = vmatpush1.bf16.msra.mxu0 0
      %1853 = vmatprep.subr.bf16.mxu0 0
      %1854 = vmatpush1.bf16.msra.mxu0 0
      %1855 = vmatprep.subr.bf16.mxu0 0
      %1856 = vmatpush1.bf16.msra.mxu0 0
      %1857 = vmatprep.mubr.bf16.mxu0 0
      %1858 = vmatmul.mubr.bf16.gmra.mrb[0].mxu0 %v1782
      %v1859 = vpop.f32.mrb[0].mxu0
      %v1860 = vadd.f32 0.0, %v1859
      %v1861 = vpop.f32.mrb[0].mxu0
      %v1862 = vadd.f32 0.0, %v1861
      %v1863 = vpop.f32.mrb[0].mxu0
      %v1864 = vpop.f32.mrb[0].mxu0
      %1865 = vdwg.mxu0
      %v1866 = vadd.f32 %v1679, %v1819
      %v1867 = vadd.f32 %v1680, %v1821
      %v1868 = vadd.f32 %v1681, %v1860
      %v1869 = vadd.f32 %v1682, %v1862
      %v1870 = vld [vmem:[%s2] sm:$0xf]
      %v1872 = vlaneseq
      %v1873 = vshrl.u32 %v1872, 7
      %v1874 = vsub.s32 0, %v1873
      %v1875 = vrot.slane %v1870, %v1874
      %v1876 = vlaneseq
      %v1877 = vshrl.u32 %v1876, 7
      %v1878 = vsub.s32 1, %v1877
      %v1879 = vrot.slane %v1870, %v1878
      %v1880 = vlaneseq
      %v1881 = vshrl.u32 %v1880, 7
      %v1882 = vsub.s32 2, %v1881
      %v1883 = vrot.slane %v1870, %v1882
      %v1884 = vlaneseq
      %v1885 = vshrl.u32 %v1884, 7
      %v1886 = vsub.s32 3, %v1885
      %v1887 = vrot.slane %v1870, %v1886
      %v1892 = vadd.f32 %v1866, %v1875
      %v1893 = vadd.f32 %v1867, %v1879
      %v1894 = vadd.f32 %v1868, %v1883
      %v1895 = vadd.f32 %v1869, %v1887
      %v1896 = vmax.f32 %v1892, 0.0
      %v1897 = vmax.f32 %v1893, 0.0
      %v1898 = vmax.f32 %v1894, 0.0
      %v1899 = vmax.f32 %v1895, 0.0
      %v1900 = vpack.c.bf16 %v1896, %v1896
      %v1901 = vpack.c.bf16 %v1897, %v1897
      %v1902 = vpack.c.bf16 %v1898, %v1898
      %v1903 = vpack.c.bf16 %v1899, %v1899
      %v1908 = vunpack.c.l.b16 %v1900
      %v1909 = vunpack.c.l.b16 %v1901
      %v1910 = vunpack.c.l.b16 %v1902
      %v1911 = vunpack.c.l.b16 %v1903
      %v1912 = vpack.c.b16 %v1909, %v1908
      %v1913 = vpack.c.b16 %v1911, %v1910
      %1916 = vst [vmem:[%s170] sm:$0xff] %v1912
      %1917 = vst [vmem:[%s170 + $0x8] sm:$0xff] %v1913
      %p1918 = scmp.lt.s32.totalorder %s14, 1
      %s1919 = scalar_select %p1918, %s14, 1
      %s1920 = smul.addr %s1919, 4
      %s1921 = smul.addr %s1920, 4
      %s1922 = scalar_lea.vmem %s3, %s1921
      // Predicated region
      $region33: #{vgg_forward.15} parent=31 // pred_check
        %p1923 = pneg %p100
      $region34: #{vgg_forward.15} parent=31 // pred_check_branch
        %1925 = sbr.rel (%p1923) target = $region36
      $region35: #{vgg_forward.15} parent=31 // pred_region
        _
      $region36: #{vgg_forward.15} parent=31 // pred_fallthru
        _
    $region32: #{vgg_forward.15} parent=5 // pred_fallthru
      _
    %p1926 = scmp.le.s32.totalorder 2, %s9
    // Predicated region
    $region37: #{vgg_forward.15} parent=5 // pred_check
      %p1927 = pneg %p1926
    $region38: #{vgg_forward.15} parent=5 // pred_check_branch
      %1929 = sbr.rel (%p1927) target = $region40
    $region39: #{vgg_forward.15} parent=5 // pred_region
      %s1930 = ssub.s32 %s9, 2
      // Predicated region
      $region41: #{vgg_forward.15} parent=39 // pred_check
        %p1931 = pneg %p106
      $region42: #{vgg_forward.15} parent=39 // pred_check_branch
        %1933 = sbr.rel (%p1931) target = $region44
      $region43: #{vgg_forward.15} parent=39 // pred_region
        %p1934 = scmp.lt.s32.totalorder %s15, 1
        %s1935 = scalar_select %p1934, %s15, 1
        %s1936 = smul.addr %s1935, 4
        %s1937 = smul.addr %s1936, 4
        %s1938 = scalar_lea.vmem %s3, %s1937
      $region44: #{vgg_forward.15} parent=39 // pred_fallthru
        _
    $region40: #{vgg_forward.15} parent=5 // pred_fallthru
      _
  $region6: #{vgg_forward.15} parent=0 // loop_footer
    %s13 = sadd.s32 1, %s9
  $region7: #{vgg_forward.15} parent=0 // loop_footer_branch
    %8 = sbr.rel target = $region3
  $region8: #{vgg_forward.15} parent=0 // loop_exit
    _

// kernel: vgg_forward.16
$region0: #{vgg_forward.16}
  #allocation0 [shape = 'u32[]', space=smem, size = 0x4, offset = 0x4, fixed_abs, tag = 'smem constant byte address 0x4 - core index']
  #allocation1 [shape = 'u32[144,128]{1,0:T(1,128)}', space=vmem, size = 0x12000, scoped, tag = 'internal scratch']
  %s0 = inlined_call_operand.vmem [shape: bf16[2,512], index: 0, kind: input, shape index: {}]
  %s1 = inlined_call_operand.vmem [shape: bf16[2,512], index: 1, kind: input, shape index: {}]
  %s2 = inlined_call_operand.vmem [shape: bf16[2,512], index: 2, kind: input, shape index: {}]
  %s3 = inlined_call_operand.vmem [shape: bf16[2,512], index: 3, kind: input, shape index: {}]
  %s4 = inlined_call_operand.vmem [shape: bf16[2,512], index: 4, kind: output, shape index: {}]
  %s5 = sld [smem:[#allocation0]]
  $region26: #{vgg_forward.16} parent=0
    _
  %s7 = ssub.s32 1, %s5
  %s8 = scalar_select 0, %s7, %s5
  // Predicated region
  $region2: #{vgg_forward.16} parent=0 // pred_check
    _
  $region3: #{vgg_forward.16} parent=0 // pred_check_branch
    %10 = sbr.rel (0) target = $region5
  $region4: #{vgg_forward.16} parent=0 // pred_region
    _
  $region5: #{vgg_forward.16} parent=0 // pred_fallthru
    _
  // Predicated region
  $region6: #{vgg_forward.16} parent=0 // pred_check
    _
  $region7: #{vgg_forward.16} parent=0 // pred_check_branch
    %12 = sbr.rel (0) target = $region9
  $region8: #{vgg_forward.16} parent=0 // pred_region
    _
  $region9: #{vgg_forward.16} parent=0 // pred_fallthru
    _
  // Predicated region
  $region10: #{vgg_forward.16} parent=0 // pred_check
    _
  $region11: #{vgg_forward.16} parent=0 // pred_check_branch
    %14 = sbr.rel (0) target = $region13
  $region12: #{vgg_forward.16} parent=0 // pred_region
    _
  $region13: #{vgg_forward.16} parent=0 // pred_fallthru
    _
  // Predicated region
  $region14: #{vgg_forward.16} parent=0 // pred_check
    _
  $region15: #{vgg_forward.16} parent=0 // pred_check_branch
    %16 = sbr.rel (0) target = $region17
  $region16: #{vgg_forward.16} parent=0 // pred_region
    _
  $region17: #{vgg_forward.16} parent=0 // pred_fallthru
    _
  %v17 = vld [vmem:[%s0] sm:$0xf]
  %v18 = vld [vmem:[%s1] sm:$0xf]
  %v19 = vmax.bf16 %v17, %v18
  %v20 = vld [vmem:[%s2] sm:$0xf]
  %v21 = vld [vmem:[%s3] sm:$0xf]
  %v22 = vmax.bf16 %v20, %v21
  %v23 = vmax.bf16 %v19, %v22
  %24 = vst [vmem:[%s4] sm:$0xf] %v23
  // Predicated region
  $region18: #{vgg_forward.16} parent=0 // pred_check
    _
  $region19: #{vgg_forward.16} parent=0 // pred_check_branch
    %26 = sbr.rel (0) target = $region21
  $region20: #{vgg_forward.16} parent=0 // pred_region
    _
  $region21: #{vgg_forward.16} parent=0 // pred_fallthru
    _
  // Predicated region
  $region22: #{vgg_forward.16} parent=0 // pred_check
    _
  $region23: #{vgg_forward.16} parent=0 // pred_check_branch
    %28 = sbr.rel (0) target = $region25
  $region24: #{vgg_forward.16} parent=0 // pred_region
    _
  $region25: #{vgg_forward.16} parent=0 // pred_fallthru
    _

// kernel: vgg_forward.17
$region0: #{vgg_forward.17}
  #allocation0 [shape = 'u32[]', space=smem, size = 0x4, offset = 0x4, fixed_abs, tag = 'smem constant byte address 0x4 - core index']
  #allocation1 [shape = 'u32[144,128]{1,0:T(1,128)}', space=vmem, size = 0x12000, scoped, tag = 'internal scratch']
  #allocation2 [shape = 'f32[8,512]{1,0:T(8,128)}', space=vmem, size = 0x4000, scoped, tag = 'scratch operand']
  %s0 = inlined_call_operand.vmem [shape: bf16[8,512], index: 0, kind: input, shape index: {}]
  %s1 = inlined_call_operand.vmem [shape: bf16[512,1024], index: 1, kind: input, shape index: {}]
  %s2 = inlined_call_operand.vmem [shape: f32[1,1024], index: 2, kind: input, shape index: {}]
  %s3 = inlined_call_operand.vmem [shape: f32[8,1024], index: 3, kind: output, shape index: {}]
  %s4 = sld [smem:[#allocation0]]
  $region76: #{vgg_forward.17} parent=0
    _
  %s6 = ssub.s32 1, %s4
  %s7 = scalar_select 0, %s6, %s4
  $region1: #{vgg_forward.17} parent=0
    #allocation3 [shape = 'u8[1048576]{0}', space=vmem, size = 0x100000, scoped, tag = 'input window, operand 1']
    loop: start=0, step=1, limit=4
    $region2: #{vgg_forward.17} parent=1 // loop_pre_header
      _
    $region3: #{vgg_forward.17} parent=1 // loop_header
      %s9 = sphi 0, %s13
      %p10 = scmp.ge.s32.totalorder %s9, 4
      %s16 = sphi 0, %s35
      %s17 = sphi 0, %s31
      %s18 = sphi 0, %s27
      %s19 = sphi 0, %s16
      %s20 = sphi 0, %s17
      %s21 = sphi 0, %s18
      %s22 = sphi 0, %s19
      %s23 = sphi 0, %s20
      %s24 = sphi 0, %s21
      %s40 = sphi 0, %s42
      %s43 = sphi 0, %s40
      %s44 = sphi 0, %s43
      %s60 = sphi 0, %s44
      %s68 = sphi 0, %s70
      %s71 = sphi 0, %s68
      %s72 = sphi 0, %s71
      %s88 = sphi 0, %s72
      %s94 = sphi 0, %s96
      %s97 = sphi 0, %s94
      %s98 = sphi 0, %s97
      %s114 = sphi 0, %s98
      %s122 = sphi 0, %s124
      %s125 = sphi 0, %s122
      %s126 = sphi 0, %s125
      %s142 = sphi 0, %s126
    $region4: #{vgg_forward.17} parent=1 // loop_header_branch
      %12 = sbr.rel (%p10) target = $region8
    $region5: #{vgg_forward.17} parent=1 // loop_body
      %s14 = ssub.s32 %s9, 1
      %s15 = ssub.s32 %s9, 2
      %s25 = sadd.s32 1, %s18
      %p26 = scmp.ge.s32.totalorder %s25, 1
      %s27 = scalar_select %p26, 0, %s25
      %s28 = sadd.s32 1, %s17
      %s29 = scalar_select %p26, %s28, %s17
      %p30 = scmp.ge.s32.totalorder %s29, 2
      %s31 = scalar_select %p30, 0, %s29
      %s32 = sadd.s32 1, %s16
      %s33 = scalar_select %p30, %s32, %s16
      %p34 = scmp.ge.s32.totalorder %s33, 1
      %s35 = scalar_select %p34, 0, %s33
      %s36 = ssub.s32 %s16, %s35
      %s37 = ssub.s32 %s18, %s27
      %s38 = sor.u32 %s36, %s37
      %p39 = scmp.eq.s32.totalorder %s38, 0
      %s41 = sadd.s32 %s40, 1
      %s42 = scalar_select %p39, %s40, %s41
      %p45 = pneg %p39
      %p46 = scmp.eq.s32.totalorder %s9, 1
      %p47 = por %p45, %p46
      %p48 = scmp.ne.s32.totalorder %s40, %s43
      %p49 = scmp.eq.s32.totalorder %s9, 0
      %p50 = por %p48, %p49
      %p51 = scmp.ne.s32.totalorder %s40, %s43
      %p52 = scmp.eq.s32.totalorder %s14, 1
      %p53 = por %p51, %p52
      %p54 = scmp.ne.s32.totalorder %s43, %s44
      %p55 = scmp.eq.s32.totalorder %s14, 0
      %p56 = por %p54, %p55
      %p57 = scmp.ne.s32.totalorder %s43, %s44
      %p58 = scmp.eq.s32.totalorder %s15, 1
      %p59 = por %p57, %p58
      %p61 = scmp.ne.s32.totalorder %s44, %s60
      %p62 = scmp.eq.s32.totalorder %s15, 0
      %p63 = por %p61, %p62
      %s64 = ssub.s32 %s18, %s27
      %s65 = ssub.s32 %s17, %s31
      %s66 = sor.u32 %s64, %s65
      %p67 = scmp.eq.s32.totalorder %s66, 0
      %s69 = sadd.s32 %s68, 1
      %s70 = scalar_select %p67, %s68, %s69
      %p73 = pneg %p67
      %p74 = scmp.eq.s32.totalorder %s9, 1
      %p75 = por %p73, %p74
      %p76 = scmp.ne.s32.totalorder %s68, %s71
      %p77 = scmp.eq.s32.totalorder %s9, 0
      %p78 = por %p76, %p77
      %p79 = scmp.ne.s32.totalorder %s68, %s71
      %p80 = scmp.eq.s32.totalorder %s14, 1
      %p81 = por %p79, %p80
      %p82 = scmp.ne.s32.totalorder %s71, %s72
      %p83 = scmp.eq.s32.totalorder %s14, 0
      %p84 = por %p82, %p83
      %p85 = scmp.ne.s32.totalorder %s71, %s72
      %p86 = scmp.eq.s32.totalorder %s15, 1
      %p87 = por %p85, %p86
      %p89 = scmp.ne.s32.totalorder %s72, %s88
      %p90 = scmp.eq.s32.totalorder %s15, 0
      %p91 = por %p89, %p90
      %s92 = ssub.s32 %s17, %s31
      %p93 = scmp.eq.s32.totalorder %s92, 0
      %s95 = sadd.s32 %s94, 1
      %s96 = scalar_select %p93, %s94, %s95
      %p99 = pneg %p93
      %p100 = scmp.eq.s32.totalorder %s9, 1
      %p101 = por %p99, %p100
      %p102 = scmp.ne.s32.totalorder %s94, %s97
      %p103 = scmp.eq.s32.totalorder %s9, 0
      %p104 = por %p102, %p103
      %p105 = scmp.ne.s32.totalorder %s94, %s97
      %p106 = scmp.eq.s32.totalorder %s14, 1
      %p107 = por %p105, %p106
      %p108 = scmp.ne.s32.totalorder %s97, %s98
      %p109 = scmp.eq.s32.totalorder %s14, 0
      %p110 = por %p108, %p109
      %p111 = scmp.ne.s32.totalorder %s97, %s98
      %p112 = scmp.eq.s32.totalorder %s15, 1
      %p113 = por %p111, %p112
      %p115 = scmp.ne.s32.totalorder %s98, %s114
      %p116 = scmp.eq.s32.totalorder %s15, 0
      %p117 = por %p115, %p116
      %s118 = ssub.s32 %s16, %s35
      %s119 = ssub.s32 %s17, %s31
      %s120 = sor.u32 %s118, %s119
      %p121 = scmp.eq.s32.totalorder %s120, 0
      %s123 = sadd.s32 %s122, 1
      %s124 = scalar_select %p121, %s122, %s123
      %p127 = pneg %p121
      %p128 = scmp.eq.s32.totalorder %s9, 1
      %p129 = por %p127, %p128
      %p130 = scmp.ne.s32.totalorder %s122, %s125
      %p131 = scmp.eq.s32.totalorder %s9, 0
      %p132 = por %p130, %p131
      %p133 = scmp.ne.s32.totalorder %s122, %s125
      %p134 = scmp.eq.s32.totalorder %s14, 1
      %p135 = por %p133, %p134
      %p136 = scmp.ne.s32.totalorder %s125, %s126
      %p137 = scmp.eq.s32.totalorder %s14, 0
      %p138 = por %p136, %p137
      %p139 = scmp.ne.s32.totalorder %s125, %s126
      %p140 = scmp.eq.s32.totalorder %s15, 1
      %p141 = por %p139, %p140
      %p143 = scmp.ne.s32.totalorder %s126, %s142
      %p144 = scmp.eq.s32.totalorder %s15, 0
      %p145 = por %p143, %p144
      %p146 = scmp.le.s32.totalorder 1, %s9
      %p147 = scmp.lt.s32.totalorder %s9, 3
      %p148 = pnand %p146, %p147
      %p149 = pneg %p148
      // Predicated region
      $region9: #{vgg_forward.17} parent=5 // pred_check
        _
      $region10: #{vgg_forward.17} parent=5 // pred_check_branch
        %151 = sbr.rel (%p148) target = $region12
      $region11: #{vgg_forward.17} parent=5 // pred_region
        %s152 = ssub.s32 %s9, 1
        // Predicated region
        $region13: #{vgg_forward.17} parent=11 // pred_check
          %p153 = pneg %p56
        $region14: #{vgg_forward.17} parent=11 // pred_check_branch
          %155 = sbr.rel (%p153) target = $region16
        $region15: #{vgg_forward.17} parent=11 // pred_region
          %s156 = smul.u32 4, %s21
          %p157 = scmp.lt.s32.totalorder %s19, 0
          %s158 = scalar_select %p157, %s19, 0
          %p159 = scmp.lt.s32.totalorder %s156, 3
          %s160 = scalar_select %p159, %s156, 3
          %s161 = smul.addr %s158, 4
          %s162 = sadd.s32 %s160, %s161
          %s163 = smul.addr %s162, 4
          %s164 = scalar_lea.vmem %s0, %s163
          %s165 = smul.u32 4, %s21
        $region16: #{vgg_forward.17} parent=11 // pred_fallthru
          _
      $region12: #{vgg_forward.17} parent=5 // pred_fallthru
        _
      %p166 = scmp.lt.s32.totalorder %s9, 2
      // Predicated region
      $region17: #{vgg_forward.17} parent=5 // pred_check
        %p167 = pneg %p166
      $region18: #{vgg_forward.17} parent=5 // pred_check_branch
        %169 = sbr.rel (%p167) target = $region20
      $region19: #{vgg_forward.17} parent=5 // pred_region
        // Predicated region
        $region21: #{vgg_forward.17} parent=19 // pred_check
          %p170 = pneg %p78
        $region22: #{vgg_forward.17} parent=19 // pred_check_branch
          %172 = sbr.rel (%p170) target = $region24
        $region23: #{vgg_forward.17} parent=19 // pred_region
          %s173 = sand.u32 %s68, 1
          %s174 = sand.u32 %s68, 1
          %s175 = smul.addr %s174, 1024
          %s176 = scalar_lea.vmem [#allocation3], %s175
          %s177 = smul.u32 64, %s18
          %s178 = smul.u32 4, %s17
          %s179 = smul.addr %s177, 8
          %s180 = sadd.s32 %s178, %s179
          %s181 = smul.addr %s180, 4
          %s182 = scalar_lea.vmem %s1, %s181
          // Predicated region
          $region25: #{vgg_forward.17} parent=23 // pred_check
            _
          $region26: #{vgg_forward.17} parent=23 // pred_check_branch
            %184 = sbr.rel (0) target = $region28
          $region27: #{vgg_forward.17} parent=23 // pred_region
            // Predicated region
            $region29: #{vgg_forward.17} parent=27 // pred_check
              _
            $region30: #{vgg_forward.17} parent=27 // pred_check_branch
              %186 = sbr.rel (0) target = $region32
            $region31: #{vgg_forward.17} parent=27 // pred_region
              loop: start=0, step=1, limit=1
              $region33: #{vgg_forward.17} parent=31 // loop_pre_header
                _
              $region34: #{vgg_forward.17} parent=31 // loop_header
                %s188 = sphi 0, %s192
                %p189 = scmp.ge.s32.totalorder %s188, 1
                %s193 = sphi %s182, %s182
                %s194 = sphi %s176, %s176
              $region35: #{vgg_forward.17} parent=31 // loop_header_branch
                %191 = sbr.rel (%p189) target = $region39
              $region36: #{vgg_forward.17} parent=31 // loop_body
                %v195 = vld [vmem:[%s193] sm:$0xff]
                %196 = vst [vmem:[%s194] sm:$0xff] %v195
                %v197 = vld [vmem:[%s193 + $0x8] sm:$0xff]
                %198 = vst [vmem:[%s194 + $0x8] sm:$0xff] %v197
                %v199 = vld [vmem:[%s193 + $0x20] sm:$0xff]
                %200 = vst [vmem:[%s194 + $0x10] sm:$0xff] %v199
                %v201 = vld [vmem:[%s193 + $0x28] sm:$0xff]
                %202 = vst [vmem:[%s194 + $0x18] sm:$0xff] %v201
                %v203 = vld [vmem:[%s193 + $0x40] sm:$0xff]
                %204 = vst [vmem:[%s194 + $0x20] sm:$0xff] %v203
                %v205 = vld [vmem:[%s193 + $0x48] sm:$0xff]
                %206 = vst [vmem:[%s194 + $0x28] sm:$0xff] %v205
                %v207 = vld [vmem:[%s193 + $0x60] sm:$0xff]
                %208 = vst [vmem:[%s194 + $0x30] sm:$0xff] %v207
                %v209 = vld [vmem:[%s193 + $0x68] sm:$0xff]
                %210 = vst [vmem:[%s194 + $0x38] sm:$0xff] %v209
                %v211 = vld [vmem:[%s193 + $0x80] sm:$0xff]
                %212 = vst [vmem:[%s194 + $0x40] sm:$0xff] %v211
                %v213 = vld [vmem:[%s193 + $0x88] sm:$0xff]
                %214 = vst [vmem:[%s194 + $0x48] sm:$0xff] %v213
                %v215 = vld [vmem:[%s193 + $0xa0] sm:$0xff]
                %216 = vst [vmem:[%s194 + $0x50] sm:$0xff] %v215
                %v217 = vld [vmem:[%s193 + $0xa8] sm:$0xff]
                %218 = vst [vmem:[%s194 + $0x58] sm:$0xff] %v217
                %v219 = vld [vmem:[%s193 + $0xc0] sm:$0xff]
                %220 = vst [vmem:[%s194 + $0x60] sm:$0xff] %v219
                %v221 = vld [vmem:[%s193 + $0xc8] sm:$0xff]
                %222 = vst [vmem:[%s194 + $0x68] sm:$0xff] %v221
                %v223 = vld [vmem:[%s193 + $0xe0] sm:$0xff]
                %224 = vst [vmem:[%s194 + $0x70] sm:$0xff] %v223
                %v225 = vld [vmem:[%s193 + $0xe8] sm:$0xff]
                %226 = vst [vmem:[%s194 + $0x78] sm:$0xff] %v225
                %v227 = vld [vmem:[%s193 + $0x100] sm:$0xff]
                %228 = vst [vmem:[%s194 + $0x80] sm:$0xff] %v227
                %v229 = vld [vmem:[%s193 + $0x108] sm:$0xff]
                %230 = vst [vmem:[%s194 + $0x88] sm:$0xff] %v229
                %v231 = vld [vmem:[%s193 + $0x120] sm:$0xff]
                %232 = vst [vmem:[%s194 + $0x90] sm:$0xff] %v231
                %v233 = vld [vmem:[%s193 + $0x128] sm:$0xff]
                %234 = vst [vmem:[%s194 + $0x98] sm:$0xff] %v233
                %v235 = vld [vmem:[%s193 + $0x140] sm:$0xff]
                %236 = vst [vmem:[%s194 + $0xa0] sm:$0xff] %v235
                %v237 = vld [vmem:[%s193 + $0x148] sm:$0xff]
                %238 = vst [vmem:[%s194 + $0xa8] sm:$0xff] %v237
                %v239 = vld [vmem:[%s193 + $0x160] sm:$0xff]
                %240 = vst [vmem:[%s194 + $0xb0] sm:$0xff] %v239
                %v241 = vld [vmem:[%s193 + $0x168] sm:$0xff]
                %242 = vst [vmem:[%s194 + $0xb8] sm:$0xff] %v241
                %v243 = vld [vmem:[%s193 + $0x180] sm:$0xff]
                %244 = vst [vmem:[%s194 + $0xc0] sm:$0xff] %v243
                %v245 = vld [vmem:[%s193 + $0x188] sm:$0xff]
                %246 = vst [vmem:[%s194 + $0xc8] sm:$0xff] %v245
                %v247 = vld [vmem:[%s193 + $0x1a0] sm:$0xff]
                %248 = vst [vmem:[%s194 + $0xd0] sm:$0xff] %v247
                %v249 = vld [vmem:[%s193 + $0x1a8] sm:$0xff]
                %250 = vst [vmem:[%s194 + $0xd8] sm:$0xff] %v249
                %v251 = vld [vmem:[%s193 + $0x1c0] sm:$0xff]
                %252 = vst [vmem:[%s194 + $0xe0] sm:$0xff] %v251
                %v253 = vld [vmem:[%s193 + $0x1c8] sm:$0xff]
                %254 = vst [vmem:[%s194 + $0xe8] sm:$0xff] %v253
                %v255 = vld [vmem:[%s193 + $0x1e0] sm:$0xff]
                %256 = vst [vmem:[%s194 + $0xf0] sm:$0xff] %v255
                %v257 = vld [vmem:[%s193 + $0x1e8] sm:$0xff]
                %258 = vst [vmem:[%s194 + $0xf8] sm:$0xff] %v257
                %v259 = vld [vmem:[%s193 + $0x200] sm:$0xff]
                %260 = vst [vmem:[%s194 + $0x100] sm:$0xff] %v259
                %v261 = vld [vmem:[%s193 + $0x208] sm:$0xff]
                %262 = vst [vmem:[%s194 + $0x108] sm:$0xff] %v261
                %v263 = vld [vmem:[%s193 + $0x220] sm:$0xff]
                %264 = vst [vmem:[%s194 + $0x110] sm:$0xff] %v263
                %v265 = vld [vmem:[%s193 + $0x228] sm:$0xff]
                %266 = vst [vmem:[%s194 + $0x118] sm:$0xff] %v265
                %v267 = vld [vmem:[%s193 + $0x240] sm:$0xff]
                %268 = vst [vmem:[%s194 + $0x120] sm:$0xff] %v267
                %v269 = vld [vmem:[%s193 + $0x248] sm:$0xff]
                %270 = vst [vmem:[%s194 + $0x128] sm:$0xff] %v269
                %v271 = vld [vmem:[%s193 + $0x260] sm:$0xff]
                %272 = vst [vmem:[%s194 + $0x130] sm:$0xff] %v271
                %v273 = vld [vmem:[%s193 + $0x268] sm:$0xff]
                %274 = vst [vmem:[%s194 + $0x138] sm:$0xff] %v273
                %v275 = vld [vmem:[%s193 + $0x280] sm:$0xff]
                %276 = vst [vmem:[%s194 + $0x140] sm:$0xff] %v275
                %v277 = vld [vmem:[%s193 + $0x288] sm:$0xff]
                %278 = vst [vmem:[%s194 + $0x148] sm:$0xff] %v277
                %v279 = vld [vmem:[%s193 + $0x2a0] sm:$0xff]
                %280 = vst [vmem:[%s194 + $0x150] sm:$0xff] %v279
                %v281 = vld [vmem:[%s193 + $0x2a8] sm:$0xff]
                %282 = vst [vmem:[%s194 + $0x158] sm:$0xff] %v281
                %v283 = vld [vmem:[%s193 + $0x2c0] sm:$0xff]
                %284 = vst [vmem:[%s194 + $0x160] sm:$0xff] %v283
                %v285 = vld [vmem:[%s193 + $0x2c8] sm:$0xff]
                %286 = vst [vmem:[%s194 + $0x168] sm:$0xff] %v285
                %v287 = vld [vmem:[%s193 + $0x2e0] sm:$0xff]
                %288 = vst [vmem:[%s194 + $0x170] sm:$0xff] %v287
                %v289 = vld [vmem:[%s193 + $0x2e8] sm:$0xff]
                %290 = vst [vmem:[%s194 + $0x178] sm:$0xff] %v289
                %v291 = vld [vmem:[%s193 + $0x300] sm:$0xff]
                %292 = vst [vmem:[%s194 + $0x180] sm:$0xff] %v291
                %v293 = vld [vmem:[%s193 + $0x308] sm:$0xff]
                %294 = vst [vmem:[%s194 + $0x188] sm:$0xff] %v293
                %v295 = vld [vmem:[%s193 + $0x320] sm:$0xff]
                %296 = vst [vmem:[%s194 + $0x190] sm:$0xff] %v295
                %v297 = vld [vmem:[%s193 + $0x328] sm:$0xff]
                %298 = vst [vmem:[%s194 + $0x198] sm:$0xff] %v297
                %v299 = vld [vmem:[%s193 + $0x340] sm:$0xff]
                %300 = vst [vmem:[%s194 + $0x1a0] sm:$0xff] %v299
                %v301 = vld [vmem:[%s193 + $0x348] sm:$0xff]
                %302 = vst [vmem:[%s194 + $0x1a8] sm:$0xff] %v301
                %v303 = vld [vmem:[%s193 + $0x360] sm:$0xff]
                %304 = vst [vmem:[%s194 + $0x1b0] sm:$0xff] %v303
                %v305 = vld [vmem:[%s193 + $0x368] sm:$0xff]
                %306 = vst [vmem:[%s194 + $0x1b8] sm:$0xff] %v305
                %v307 = vld [vmem:[%s193 + $0x380] sm:$0xff]
                %308 = vst [vmem:[%s194 + $0x1c0] sm:$0xff] %v307
                %v309 = vld [vmem:[%s193 + $0x388] sm:$0xff]
                %310 = vst [vmem:[%s194 + $0x1c8] sm:$0xff] %v309
                %v311 = vld [vmem:[%s193 + $0x3a0] sm:$0xff]
                %312 = vst [vmem:[%s194 + $0x1d0] sm:$0xff] %v311
                %v313 = vld [vmem:[%s193 + $0x3a8] sm:$0xff]
                %314 = vst [vmem:[%s194 + $0x1d8] sm:$0xff] %v313
                %v315 = vld [vmem:[%s193 + $0x3c0] sm:$0xff]
                %316 = vst [vmem:[%s194 + $0x1e0] sm:$0xff] %v315
                %v317 = vld [vmem:[%s193 + $0x3c8] sm:$0xff]
                %318 = vst [vmem:[%s194 + $0x1e8] sm:$0xff] %v317
                %v319 = vld [vmem:[%s193 + $0x3e0] sm:$0xff]
                %320 = vst [vmem:[%s194 + $0x1f0] sm:$0xff] %v319
                %v321 = vld [vmem:[%s193 + $0x3e8] sm:$0xff]
                %322 = vst [vmem:[%s194 + $0x1f8] sm:$0xff] %v321
                %v323 = vld [vmem:[%s193 + $0x400] sm:$0xff]
                %324 = vst [vmem:[%s194 + $0x200] sm:$0xff] %v323
                %v325 = vld [vmem:[%s193 + $0x408] sm:$0xff]
                %326 = vst [vmem:[%s194 + $0x208] sm:$0xff] %v325
                %v327 = vld [vmem:[%s193 + $0x420] sm:$0xff]
                %328 = vst [vmem:[%s194 + $0x210] sm:$0xff] %v327
                %v329 = vld [vmem:[%s193 + $0x428] sm:$0xff]
                %330 = vst [vmem:[%s194 + $0x218] sm:$0xff] %v329
                %v331 = vld [vmem:[%s193 + $0x440] sm:$0xff]
                %332 = vst [vmem:[%s194 + $0x220] sm:$0xff] %v331
                %v333 = vld [vmem:[%s193 + $0x448] sm:$0xff]
                %334 = vst [vmem:[%s194 + $0x228] sm:$0xff] %v333
                %v335 = vld [vmem:[%s193 + $0x460] sm:$0xff]
                %336 = vst [vmem:[%s194 + $0x230] sm:$0xff] %v335
                %v337 = vld [vmem:[%s193 + $0x468] sm:$0xff]
                %338 = vst [vmem:[%s194 + $0x238] sm:$0xff] %v337
                %v339 = vld [vmem:[%s193 + $0x480] sm:$0xff]
                %340 = vst [vmem:[%s194 + $0x240] sm:$0xff] %v339
                %v341 = vld [vmem:[%s193 + $0x488] sm:$0xff]
                %342 = vst [vmem:[%s194 + $0x248] sm:$0xff] %v341
                %v343 = vld [vmem:[%s193 + $0x4a0] sm:$0xff]
                %344 = vst [vmem:[%s194 + $0x250] sm:$0xff] %v343
                %v345 = vld [vmem:[%s193 + $0x4a8] sm:$0xff]
                %346 = vst [vmem:[%s194 + $0x258] sm:$0xff] %v345
                %v347 = vld [vmem:[%s193 + $0x4c0] sm:$0xff]
                %348 = vst [vmem:[%s194 + $0x260] sm:$0xff] %v347
                %v349 = vld [vmem:[%s193 + $0x4c8] sm:$0xff]
                %350 = vst [vmem:[%s194 + $0x268] sm:$0xff] %v349
                %v351 = vld [vmem:[%s193 + $0x4e0] sm:$0xff]
                %352 = vst [vmem:[%s194 + $0x270] sm:$0xff] %v351
                %v353 = vld [vmem:[%s193 + $0x4e8] sm:$0xff]
                %354 = vst [vmem:[%s194 + $0x278] sm:$0xff] %v353
                %v355 = vld [vmem:[%s193 + $0x500] sm:$0xff]
                %356 = vst [vmem:[%s194 + $0x280] sm:$0xff] %v355
                %v357 = vld [vmem:[%s193 + $0x508] sm:$0xff]
                %358 = vst [vmem:[%s194 + $0x288] sm:$0xff] %v357
                %v359 = vld [vmem:[%s193 + $0x520] sm:$0xff]
                %360 = vst [vmem:[%s194 + $0x290] sm:$0xff] %v359
                %v361 = vld [vmem:[%s193 + $0x528] sm:$0xff]
                %362 = vst [vmem:[%s194 + $0x298] sm:$0xff] %v361
                %v363 = vld [vmem:[%s193 + $0x540] sm:$0xff]
                %364 = vst [vmem:[%s194 + $0x2a0] sm:$0xff] %v363
                %v365 = vld [vmem:[%s193 + $0x548] sm:$0xff]
                %366 = vst [vmem:[%s194 + $0x2a8] sm:$0xff] %v365
                %v367 = vld [vmem:[%s193 + $0x560] sm:$0xff]
                %368 = vst [vmem:[%s194 + $0x2b0] sm:$0xff] %v367
                %v369 = vld [vmem:[%s193 + $0x568] sm:$0xff]
                %370 = vst [vmem:[%s194 + $0x2b8] sm:$0xff] %v369
                %v371 = vld [vmem:[%s193 + $0x580] sm:$0xff]
                %372 = vst [vmem:[%s194 + $0x2c0] sm:$0xff] %v371
                %v373 = vld [vmem:[%s193 + $0x588] sm:$0xff]
                %374 = vst [vmem:[%s194 + $0x2c8] sm:$0xff] %v373
                %v375 = vld [vmem:[%s193 + $0x5a0] sm:$0xff]
                %376 = vst [vmem:[%s194 + $0x2d0] sm:$0xff] %v375
                %v377 = vld [vmem:[%s193 + $0x5a8] sm:$0xff]
                %378 = vst [vmem:[%s194 + $0x2d8] sm:$0xff] %v377
                %v379 = vld [vmem:[%s193 + $0x5c0] sm:$0xff]
                %380 = vst [vmem:[%s194 + $0x2e0] sm:$0xff] %v379
                %v381 = vld [vmem:[%s193 + $0x5c8] sm:$0xff]
                %382 = vst [vmem:[%s194 + $0x2e8] sm:$0xff] %v381
                %v383 = vld [vmem:[%s193 + $0x5e0] sm:$0xff]
                %384 = vst [vmem:[%s194 + $0x2f0] sm:$0xff] %v383
                %v385 = vld [vmem:[%s193 + $0x5e8] sm:$0xff]
                %386 = vst [vmem:[%s194 + $0x2f8] sm:$0xff] %v385
                %v387 = vld [vmem:[%s193 + $0x600] sm:$0xff]
                %388 = vst [vmem:[%s194 + $0x300] sm:$0xff] %v387
                %v389 = vld [vmem:[%s193 + $0x608] sm:$0xff]
                %390 = vst [vmem:[%s194 + $0x308] sm:$0xff] %v389
                %v391 = vld [vmem:[%s193 + $0x620] sm:$0xff]
                %392 = vst [vmem:[%s194 + $0x310] sm:$0xff] %v391
                %v393 = vld [vmem:[%s193 + $0x628] sm:$0xff]
                %394 = vst [vmem:[%s194 + $0x318] sm:$0xff] %v393
                %v395 = vld [vmem:[%s193 + $0x640] sm:$0xff]
                %396 = vst [vmem:[%s194 + $0x320] sm:$0xff] %v395
                %v397 = vld [vmem:[%s193 + $0x648] sm:$0xff]
                %398 = vst [vmem:[%s194 + $0x328] sm:$0xff] %v397
                %v399 = vld [vmem:[%s193 + $0x660] sm:$0xff]
                %400 = vst [vmem:[%s194 + $0x330] sm:$0xff] %v399
                %v401 = vld [vmem:[%s193 + $0x668] sm:$0xff]
                %402 = vst [vmem:[%s194 + $0x338] sm:$0xff] %v401
                %v403 = vld [vmem:[%s193 + $0x680] sm:$0xff]
                %404 = vst [vmem:[%s194 + $0x340] sm:$0xff] %v403
                %v405 = vld [vmem:[%s193 + $0x688] sm:$0xff]
                %406 = vst [vmem:[%s194 + $0x348] sm:$0xff] %v405
                %v407 = vld [vmem:[%s193 + $0x6a0] sm:$0xff]
                %408 = vst [vmem:[%s194 + $0x350] sm:$0xff] %v407
                %v409 = vld [vmem:[%s193 + $0x6a8] sm:$0xff]
                %410 = vst [vmem:[%s194 + $0x358] sm:$0xff] %v409
                %v411 = vld [vmem:[%s193 + $0x6c0] sm:$0xff]
                %412 = vst [vmem:[%s194 + $0x360] sm:$0xff] %v411
                %v413 = vld [vmem:[%s193 + $0x6c8] sm:$0xff]
                %414 = vst [vmem:[%s194 + $0x368] sm:$0xff] %v413
                %v415 = vld [vmem:[%s193 + $0x6e0] sm:$0xff]
                %416 = vst [vmem:[%s194 + $0x370] sm:$0xff] %v415
                %v417 = vld [vmem:[%s193 + $0x6e8] sm:$0xff]
                %418 = vst [vmem:[%s194 + $0x378] sm:$0xff] %v417
                %v419 = vld [vmem:[%s193 + $0x700] sm:$0xff]
                %420 = vst [vmem:[%s194 + $0x380] sm:$0xff] %v419
                %v421 = vld [vmem:[%s193 + $0x708] sm:$0xff]
                %422 = vst [vmem:[%s194 + $0x388] sm:$0xff] %v421
                %v423 = vld [vmem:[%s193 + $0x720] sm:$0xff]
                %424 = vst [vmem:[%s194 + $0x390] sm:$0xff] %v423
                %v425 = vld [vmem:[%s193 + $0x728] sm:$0xff]
                %426 = vst [vmem:[%s194 + $0x398] sm:$0xff] %v425
                %v427 = vld [vmem:[%s193 + $0x740] sm:$0xff]
                %428 = vst [vmem:[%s194 + $0x3a0] sm:$0xff] %v427
                %v429 = vld [vmem:[%s193 + $0x748] sm:$0xff]
                %430 = vst [vmem:[%s194 + $0x3a8] sm:$0xff] %v429
                %v431 = vld [vmem:[%s193 + $0x760] sm:$0xff]
                %432 = vst [vmem:[%s194 + $0x3b0] sm:$0xff] %v431
                %v433 = vld [vmem:[%s193 + $0x768] sm:$0xff]
                %434 = vst [vmem:[%s194 + $0x3b8] sm:$0xff] %v433
                %v435 = vld [vmem:[%s193 + $0x780] sm:$0xff]
                %436 = vst [vmem:[%s194 + $0x3c0] sm:$0xff] %v435
                %v437 = vld [vmem:[%s193 + $0x788] sm:$0xff]
                %438 = vst [vmem:[%s194 + $0x3c8] sm:$0xff] %v437
                %v439 = vld [vmem:[%s193 + $0x7a0] sm:$0xff]
                %440 = vst [vmem:[%s194 + $0x3d0] sm:$0xff] %v439
                %v441 = vld [vmem:[%s193 + $0x7a8] sm:$0xff]
                %442 = vst [vmem:[%s194 + $0x3d8] sm:$0xff] %v441
                %v443 = vld [vmem:[%s193 + $0x7c0] sm:$0xff]
                %444 = vst [vmem:[%s194 + $0x3e0] sm:$0xff] %v443
                %v445 = vld [vmem:[%s193 + $0x7c8] sm:$0xff]
                %446 = vst [vmem:[%s194 + $0x3e8] sm:$0xff] %v445
                %v447 = vld [vmem:[%s193 + $0x7e0] sm:$0xff]
                %448 = vst [vmem:[%s194 + $0x3f0] sm:$0xff] %v447
                %v449 = vld [vmem:[%s193 + $0x7e8] sm:$0xff]
                %450 = vst [vmem:[%s194 + $0x3f8] sm:$0xff] %v449
              $region37: #{vgg_forward.17} parent=31 // loop_footer
                %s192 = sadd.s32 1, %s188
              $region38: #{vgg_forward.17} parent=31 // loop_footer_branch
                %187 = sbr.rel target = $region34
              $region39: #{vgg_forward.17} parent=31 // loop_exit
                _
            $region32: #{vgg_forward.17} parent=27 // pred_fallthru
              _
            // Predicated region
            $region40: #{vgg_forward.17} parent=27 // pred_check
              _
            $region41: #{vgg_forward.17} parent=27 // pred_check_branch
              %452 = sbr.rel target = $region43
            $region42: #{vgg_forward.17} parent=27 // pred_region
              _
            $region43: #{vgg_forward.17} parent=27 // pred_fallthru
              _
          $region28: #{vgg_forward.17} parent=23 // pred_fallthru
            _
          %453 = vnop
        $region24: #{vgg_forward.17} parent=19 // pred_fallthru
          _
        // Predicated region
        $region44: #{vgg_forward.17} parent=19 // pred_check
          %p454 = pneg %p104
        $region45: #{vgg_forward.17} parent=19 // pred_check_branch
          %456 = sbr.rel (%p454) target = $region47
        $region46: #{vgg_forward.17} parent=19 // pred_region
          %s457 = smul.u32 4, %s17
          %p458 = scmp.lt.s32.totalorder %s457, 7
          %s459 = scalar_select %p458, %s457, 7
          %s460 = scalar_lea.vmem %s2, %s459
          %s461 = smul.u32 4, %s17
        $region47: #{vgg_forward.17} parent=19 // pred_fallthru
          _
      $region20: #{vgg_forward.17} parent=5 // pred_fallthru
        _
      %p462 = scmp.le.s32.totalorder 1, %s9
      %p463 = scmp.lt.s32.totalorder %s9, 3
      %p464 = pnand %p462, %p463
      %p465 = pneg %p464
      // Predicated region
      $region48: #{vgg_forward.17} parent=5 // pred_check
        _
      $region49: #{vgg_forward.17} parent=5 // pred_check_branch
        %467 = sbr.rel (%p464) target = $region51
      $region50: #{vgg_forward.17} parent=5 // pred_region
        %s468 = ssub.s32 %s9, 1
        %s469 = sand.u32 %s71, 1
        %s470 = sand.u32 %s71, 1
        %s471 = smul.addr %s470, 1024
        %s472 = scalar_lea.vmem [#allocation3], %s471
        // Predicated region
        $region52: #{vgg_forward.17} parent=50 // pred_check
          %p473 = pneg %p84
        $region53: #{vgg_forward.17} parent=50 // pred_check_branch
          %475 = sbr.rel (%p473) target = $region55
        $region54: #{vgg_forward.17} parent=50 // pred_region
          _
        $region55: #{vgg_forward.17} parent=50 // pred_fallthru
          _
        %s476 = smul.u32 4, %s21
        %p477 = scmp.lt.s32.totalorder %s19, 0
        %s478 = scalar_select %p477, %s19, 0
        %p479 = scmp.lt.s32.totalorder %s476, 3
        %s480 = scalar_select %p479, %s476, 3
        %s481 = smul.addr %s478, 4
        %s482 = sadd.s32 %s480, %s481
        %s483 = smul.addr %s482, 4
        %s484 = scalar_lea.vmem %s0, %s483
        %p485 = pneg %p56
        %p486 = pneg %p53
        %s487 = sand.u32 %s71, 1
        %s488 = sand.u32 %s71, 1
        %s489 = smul.addr %s488, 1024
        %s490 = scalar_lea.vmem [#allocation3], %s489
        %p491 = pneg %p84
        %p492 = pneg %p81
        %s493 = smul.u32 4, %s20
        %p494 = scmp.lt.s32.totalorder %s493, 7
        %s495 = scalar_select %p494, %s493, 7
        %s496 = scalar_lea.vmem %s2, %s495
        %p497 = pneg %p110
        %p498 = pneg %p107
        %p499 = pneg %p138
        %p500 = pneg %p135
        %s501 = smul.u32 4, %s20
        %p502 = scmp.lt.s32.totalorder %s19, 0
        %s503 = scalar_select %p502, %s19, 0
        %p504 = scmp.lt.s32.totalorder %s501, 7
        %s505 = scalar_select %p504, %s501, 7
        %s506 = smul.addr %s503, 8
        %s507 = sadd.s32 %s505, %s506
        %s508 = smul.addr %s507, 8
        %s509 = scalar_lea.vmem %s3, %s508
        %s510 = smul.u32 4, %s21
        %p511 = scmp.lt.s32.totalorder %s19, 0
        %s512 = scalar_select %p511, %s19, 0
        %p513 = scmp.lt.s32.totalorder %s510, 3
        %s514 = scalar_select %p513, %s510, 3
        %s515 = smul.addr %s512, 4
        %s516 = sadd.s32 %s514, %s515
        %s517 = smul.addr %s516, 4
        %s518 = scalar_lea.vmem %s0, %s517
        %s519 = smul.u32 4, %s21
        %s520 = smul.u32 64, %s21
        %s521 = smul.u32 4, %s20
        %s522 = smul.u32 4, %s20
        %p523 = scmp.lt.s32.totalorder %s522, 7
        %s524 = scalar_select %p523, %s522, 7
        %s525 = scalar_lea.vmem %s2, %s524
        %s526 = smul.u32 4, %s20
        %s527 = smul.u32 4, %s20
        %p528 = scmp.lt.s32.totalorder %s19, 0
        %s529 = scalar_select %p528, %s19, 0
        %p530 = scmp.lt.s32.totalorder %s527, 7
        %s531 = scalar_select %p530, %s527, 7
        %s532 = smul.addr %s529, 8
        %s533 = sadd.s32 %s531, %s532
        %s534 = smul.addr %s533, 8
        %s535 = scalar_lea.vmem %s3, %s534
        %s536 = smul.u32 4, %s20
        %p537 = scmp.eq.s32.totalorder %s21, 0
        // Predicated region
        $region56: #{vgg_forward.17} parent=50 // pred_check
          %p538 = pneg %p537
        $region57: #{vgg_forward.17} parent=50 // pred_check_branch
          %540 = sbr.rel (%p538) target = $region59
        $region58: #{vgg_forward.17} parent=50 // pred_region
          %541 = vst [vmem:[#allocation2] sm:$0xff] 0.0
          %542 = vst [vmem:[#allocation2 + $0x8] sm:$0xff] 0.0
          %543 = vst [vmem:[#allocation2 + $0x10] sm:$0xff] 0.0
          %544 = vst [vmem:[#allocation2 + $0x18] sm:$0xff] 0.0
        $region59: #{vgg_forward.17} parent=50 // pred_fallthru
          _
        %v545 = vld [vmem:[#allocation2] sm:$0xff]
        %v546 = vld [vmem:[#allocation2 + $0x8] sm:$0xff]
        %v547 = vld [vmem:[#allocation2 + $0x10] sm:$0xff]
        %v548 = vld [vmem:[#allocation2 + $0x18] sm:$0xff]
        %v549 = vld [vmem:[%s518] sm:$0xff]
        %v550 = vld [vmem:[%s518 + $0x8] sm:$0xff]
        %v551 = vld [vmem:[%s472] sm:$0xff]
        %v552 = vld [vmem:[%s472 + $0x8] sm:$0xff]
        %v553 = vld [vmem:[%s472 + $0x10] sm:$0xff]
        %v554 = vld [vmem:[%s472 + $0x18] sm:$0xff]
        %v555 = vld [vmem:[%s472 + $0x20] sm:$0xff]
        %v556 = vld [vmem:[%s472 + $0x28] sm:$0xff]
        %v557 = vld [vmem:[%s472 + $0x30] sm:$0xff]
        %v558 = vld [vmem:[%s472 + $0x38] sm:$0xff]
        %v559 = vld [vmem:[%s472 + $0x40] sm:$0xff]
        %v560 = vld [vmem:[%s472 + $0x48] sm:$0xff]
        %v561 = vld [vmem:[%s472 + $0x50] sm:$0xff]
        %v562 = vld [vmem:[%s472 + $0x58] sm:$0xff]
        %v563 = vld [vmem:[%s472 + $0x60] sm:$0xff]
        %v564 = vld [vmem:[%s472 + $0x68] sm:$0xff]
        %v565 = vld [vmem:[%s472 + $0x70] sm:$0xff]
        %v566 = vld [vmem:[%s472 + $0x78] sm:$0xff]
        %v567 = vld [vmem:[%s472 + $0x80] sm:$0xff]
        %v568 = vld [vmem:[%s472 + $0x88] sm:$0xff]
        %v569 = vld [vmem:[%s472 + $0x90] sm:$0xff]
        %v570 = vld [vmem:[%s472 + $0x98] sm:$0xff]
        %v571 = vld [vmem:[%s472 + $0xa0] sm:$0xff]
        %v572 = vld [vmem:[%s472 + $0xa8] sm:$0xff]
        %v573 = vld [vmem:[%s472 + $0xb0] sm:$0xff]
        %v574 = vld [vmem:[%s472 + $0xb8] sm:$0xff]
        %v575 = vld [vmem:[%s472 + $0xc0] sm:$0xff]
        %v576 = vld [vmem:[%s472 + $0xc8] sm:$0xff]
        %v577 = vld [vmem:[%s472 + $0xd0] sm:$0xff]
        %v578 = vld [vmem:[%s472 + $0xd8] sm:$0xff]
        %v579 = vld [vmem:[%s472 + $0xe0] sm:$0xff]
        %v580 = vld [vmem:[%s472 + $0xe8] sm:$0xff]
        %v581 = vld [vmem:[%s472 + $0xf0] sm:$0xff]
        %v582 = vld [vmem:[%s472 + $0xf8] sm:$0xff]
        %v583 = vld [vmem:[%s472 + $0x100] sm:$0xff]
        %v584 = vld [vmem:[%s472 + $0x108] sm:$0xff]
        %v585 = vld [vmem:[%s472 + $0x110] sm:$0xff]
        %v586 = vld [vmem:[%s472 + $0x118] sm:$0xff]
        %v587 = vld [vmem:[%s472 + $0x120] sm:$0xff]
        %v588 = vld [vmem:[%s472 + $0x128] sm:$0xff]
        %v589 = vld [vmem:[%s472 + $0x130] sm:$0xff]
        %v590 = vld [vmem:[%s472 + $0x138] sm:$0xff]
        %v591 = vld [vmem:[%s472 + $0x140] sm:$0xff]
        %v592 = vld [vmem:[%s472 + $0x148] sm:$0xff]
        %v593 = vld [vmem:[%s472 + $0x150] sm:$0xff]
        %v594 = vld [vmem:[%s472 + $0x158] sm:$0xff]
        %v595 = vld [vmem:[%s472 + $0x160] sm:$0xff]
        %v596 = vld [vmem:[%s472 + $0x168] sm:$0xff]
        %v597 = vld [vmem:[%s472 + $0x170] sm:$0xff]
        %v598 = vld [vmem:[%s472 + $0x178] sm:$0xff]
        %v599 = vld [vmem:[%s472 + $0x180] sm:$0xff]
        %v600 = vld [vmem:[%s472 + $0x188] sm:$0xff]
        %v601 = vld [vmem:[%s472 + $0x190] sm:$0xff]
        %v602 = vld [vmem:[%s472 + $0x198] sm:$0xff]
        %v603 = vld [vmem:[%s472 + $0x1a0] sm:$0xff]
        %v604 = vld [vmem:[%s472 + $0x1a8] sm:$0xff]
        %v605 = vld [vmem:[%s472 + $0x1b0] sm:$0xff]
        %v606 = vld [vmem:[%s472 + $0x1b8] sm:$0xff]
        %v607 = vld [vmem:[%s472 + $0x1c0] sm:$0xff]
        %v608 = vld [vmem:[%s472 + $0x1c8] sm:$0xff]
        %v609 = vld [vmem:[%s472 + $0x1d0] sm:$0xff]
        %v610 = vld [vmem:[%s472 + $0x1d8] sm:$0xff]
        %v611 = vld [vmem:[%s472 + $0x1e0] sm:$0xff]
        %v612 = vld [vmem:[%s472 + $0x1e8] sm:$0xff]
        %v613 = vld [vmem:[%s472 + $0x1f0] sm:$0xff]
        %v614 = vld [vmem:[%s472 + $0x1f8] sm:$0xff]
        %v615 = vld [vmem:[%s472 + $0x200] sm:$0xff]
        %v616 = vld [vmem:[%s472 + $0x208] sm:$0xff]
        %v617 = vld [vmem:[%s472 + $0x210] sm:$0xff]
        %v618 = vld [vmem:[%s472 + $0x218] sm:$0xff]
        %v619 = vld [vmem:[%s472 + $0x220] sm:$0xff]
        %v620 = vld [vmem:[%s472 + $0x228] sm:$0xff]
        %v621 = vld [vmem:[%s472 + $0x230] sm:$0xff]
        %v622 = vld [vmem:[%s472 + $0x238] sm:$0xff]
        %v623 = vld [vmem:[%s472 + $0x240] sm:$0xff]
        %v624 = vld [vmem:[%s472 + $0x248] sm:$0xff]
        %v625 = vld [vmem:[%s472 + $0x250] sm:$0xff]
        %v626 = vld [vmem:[%s472 + $0x258] sm:$0xff]
        %v627 = vld [vmem:[%s472 + $0x260] sm:$0xff]
        %v628 = vld [vmem:[%s472 + $0x268] sm:$0xff]
        %v629 = vld [vmem:[%s472 + $0x270] sm:$0xff]
        %v630 = vld [vmem:[%s472 + $0x278] sm:$0xff]
        %v631 = vld [vmem:[%s472 + $0x280] sm:$0xff]
        %v632 = vld [vmem:[%s472 + $0x288] sm:$0xff]
        %v633 = vld [vmem:[%s472 + $0x290] sm:$0xff]
        %v634 = vld [vmem:[%s472 + $0x298] sm:$0xff]
        %v635 = vld [vmem:[%s472 + $0x2a0] sm:$0xff]
        %v636 = vld [vmem:[%s472 + $0x2a8] sm:$0xff]
        %v637 = vld [vmem:[%s472 + $0x2b0] sm:$0xff]
        %v638 = vld [vmem:[%s472 + $0x2b8] sm:$0xff]
        %v639 = vld [vmem:[%s472 + $0x2c0] sm:$0xff]
        %v640 = vld [vmem:[%s472 + $0x2c8] sm:$0xff]
        %v641 = vld [vmem:[%s472 + $0x2d0] sm:$0xff]
        %v642 = vld [vmem:[%s472 + $0x2d8] sm:$0xff]
        %v643 = vld [vmem:[%s472 + $0x2e0] sm:$0xff]
        %v644 = vld [vmem:[%s472 + $0x2e8] sm:$0xff]
        %v645 = vld [vmem:[%s472 + $0x2f0] sm:$0xff]
        %v646 = vld [vmem:[%s472 + $0x2f8] sm:$0xff]
        %v647 = vld [vmem:[%s472 + $0x300] sm:$0xff]
        %v648 = vld [vmem:[%s472 + $0x308] sm:$0xff]
        %v649 = vld [vmem:[%s472 + $0x310] sm:$0xff]
        %v650 = vld [vmem:[%s472 + $0x318] sm:$0xff]
        %v651 = vld [vmem:[%s472 + $0x320] sm:$0xff]
        %v652 = vld [vmem:[%s472 + $0x328] sm:$0xff]
        %v653 = vld [vmem:[%s472 + $0x330] sm:$0xff]
        %v654 = vld [vmem:[%s472 + $0x338] sm:$0xff]
        %v655 = vld [vmem:[%s472 + $0x340] sm:$0xff]
        %v656 = vld [vmem:[%s472 + $0x348] sm:$0xff]
        %v657 = vld [vmem:[%s472 + $0x350] sm:$0xff]
        %v658 = vld [vmem:[%s472 + $0x358] sm:$0xff]
        %v659 = vld [vmem:[%s472 + $0x360] sm:$0xff]
        %v660 = vld [vmem:[%s472 + $0x368] sm:$0xff]
        %v661 = vld [vmem:[%s472 + $0x370] sm:$0xff]
        %v662 = vld [vmem:[%s472 + $0x378] sm:$0xff]
        %v663 = vld [vmem:[%s472 + $0x380] sm:$0xff]
        %v664 = vld [vmem:[%s472 + $0x388] sm:$0xff]
        %v665 = vld [vmem:[%s472 + $0x390] sm:$0xff]
        %v666 = vld [vmem:[%s472 + $0x398] sm:$0xff]
        %v667 = vld [vmem:[%s472 + $0x3a0] sm:$0xff]
        %v668 = vld [vmem:[%s472 + $0x3a8] sm:$0xff]
        %v669 = vld [vmem:[%s472 + $0x3b0] sm:$0xff]
        %v670 = vld [vmem:[%s472 + $0x3b8] sm:$0xff]
        %v671 = vld [vmem:[%s472 + $0x3c0] sm:$0xff]
        %v672 = vld [vmem:[%s472 + $0x3c8] sm:$0xff]
        %v673 = vld [vmem:[%s472 + $0x3d0] sm:$0xff]
        %v674 = vld [vmem:[%s472 + $0x3d8] sm:$0xff]
        %v675 = vld [vmem:[%s472 + $0x3e0] sm:$0xff]
        %v676 = vld [vmem:[%s472 + $0x3e8] sm:$0xff]
        %v677 = vld [vmem:[%s472 + $0x3f0] sm:$0xff]
        %v678 = vld [vmem:[%s472 + $0x3f8] sm:$0xff]
        %v681 = vunpack.c.l.b16 %v549
        %v682 = vunpack.c.h.b16 %v549
        %v683 = vunpack.c.l.b16 %v550
        %v684 = vunpack.c.h.b16 %v550
        %v685 = vpack.c.b16 %v681, %v681
        %v686 = vpack.c.b16 %v682, %v682
        %v687 = vpack.c.b16 %v683, %v683
        %v688 = vpack.c.b16 %v684, %v684
        %v821 = vunpack.c.l.b16 %v551
        %v822 = vunpack.c.h.b16 %v551
        %v823 = vunpack.c.l.b16 %v552
        %v824 = vunpack.c.h.b16 %v552
        %v825 = vunpack.c.l.b16 %v553
        %v826 = vunpack.c.h.b16 %v553
        %v827 = vunpack.c.l.b16 %v554
        %v828 = vunpack.c.h.b16 %v554
        %v829 = vunpack.c.l.b16 %v555
        %v830 = vunpack.c.h.b16 %v555
        %v831 = vunpack.c.l.b16 %v556
        %v832 = vunpack.c.h.b16 %v556
        %v833 = vunpack.c.l.b16 %v557
        %v834 = vunpack.c.h.b16 %v557
        %v835 = vunpack.c.l.b16 %v558
        %v836 = vunpack.c.h.b16 %v558
        %v837 = vunpack.c.l.b16 %v559
        %v838 = vunpack.c.h.b16 %v559
        %v839 = vunpack.c.l.b16 %v560
        %v840 = vunpack.c.h.b16 %v560
        %v841 = vunpack.c.l.b16 %v561
        %v842 = vunpack.c.h.b16 %v561
        %v843 = vunpack.c.l.b16 %v562
        %v844 = vunpack.c.h.b16 %v562
        %v845 = vunpack.c.l.b16 %v563
        %v846 = vunpack.c.h.b16 %v563
        %v847 = vunpack.c.l.b16 %v564
        %v848 = vunpack.c.h.b16 %v564
        %v849 = vunpack.c.l.b16 %v565
        %v850 = vunpack.c.h.b16 %v565
        %v851 = vunpack.c.l.b16 %v566
        %v852 = vunpack.c.h.b16 %v566
        %v853 = vunpack.c.l.b16 %v567
        %v854 = vunpack.c.h.b16 %v567
        %v855 = vunpack.c.l.b16 %v568
        %v856 = vunpack.c.h.b16 %v568
        %v857 = vunpack.c.l.b16 %v569
        %v858 = vunpack.c.h.b16 %v569
        %v859 = vunpack.c.l.b16 %v570
        %v860 = vunpack.c.h.b16 %v570
        %v861 = vunpack.c.l.b16 %v571
        %v862 = vunpack.c.h.b16 %v571
        %v863 = vunpack.c.l.b16 %v572
        %v864 = vunpack.c.h.b16 %v572
        %v865 = vunpack.c.l.b16 %v573
        %v866 = vunpack.c.h.b16 %v573
        %v867 = vunpack.c.l.b16 %v574
        %v868 = vunpack.c.h.b16 %v574
        %v869 = vunpack.c.l.b16 %v575
        %v870 = vunpack.c.h.b16 %v575
        %v871 = vunpack.c.l.b16 %v576
        %v872 = vunpack.c.h.b16 %v576
        %v873 = vunpack.c.l.b16 %v577
        %v874 = vunpack.c.h.b16 %v577
        %v875 = vunpack.c.l.b16 %v578
        %v876 = vunpack.c.h.b16 %v578
        %v877 = vunpack.c.l.b16 %v579
        %v878 = vunpack.c.h.b16 %v579
        %v879 = vunpack.c.l.b16 %v580
        %v880 = vunpack.c.h.b16 %v580
        %v881 = vunpack.c.l.b16 %v581
        %v882 = vunpack.c.h.b16 %v581
        %v883 = vunpack.c.l.b16 %v582
        %v884 = vunpack.c.h.b16 %v582
        %v885 = vunpack.c.l.b16 %v583
        %v886 = vunpack.c.h.b16 %v583
        %v887 = vunpack.c.l.b16 %v584
        %v888 = vunpack.c.h.b16 %v584
        %v889 = vunpack.c.l.b16 %v585
        %v890 = vunpack.c.h.b16 %v585
        %v891 = vunpack.c.l.b16 %v586
        %v892 = vunpack.c.h.b16 %v586
        %v893 = vunpack.c.l.b16 %v587
        %v894 = vunpack.c.h.b16 %v587
        %v895 = vunpack.c.l.b16 %v588
        %v896 = vunpack.c.h.b16 %v588
        %v897 = vunpack.c.l.b16 %v589
        %v898 = vunpack.c.h.b16 %v589
        %v899 = vunpack.c.l.b16 %v590
        %v900 = vunpack.c.h.b16 %v590
        %v901 = vunpack.c.l.b16 %v591
        %v902 = vunpack.c.h.b16 %v591
        %v903 = vunpack.c.l.b16 %v592
        %v904 = vunpack.c.h.b16 %v592
        %v905 = vunpack.c.l.b16 %v593
        %v906 = vunpack.c.h.b16 %v593
        %v907 = vunpack.c.l.b16 %v594
        %v908 = vunpack.c.h.b16 %v594
        %v909 = vunpack.c.l.b16 %v595
        %v910 = vunpack.c.h.b16 %v595
        %v911 = vunpack.c.l.b16 %v596
        %v912 = vunpack.c.h.b16 %v596
        %v913 = vunpack.c.l.b16 %v597
        %v914 = vunpack.c.h.b16 %v597
        %v915 = vunpack.c.l.b16 %v598
        %v916 = vunpack.c.h.b16 %v598
        %v917 = vunpack.c.l.b16 %v599
        %v918 = vunpack.c.h.b16 %v599
        %v919 = vunpack.c.l.b16 %v600
        %v920 = vunpack.c.h.b16 %v600
        %v921 = vunpack.c.l.b16 %v601
        %v922 = vunpack.c.h.b16 %v601
        %v923 = vunpack.c.l.b16 %v602
        %v924 = vunpack.c.h.b16 %v602
        %v925 = vunpack.c.l.b16 %v603
        %v926 = vunpack.c.h.b16 %v603
        %v927 = vunpack.c.l.b16 %v604
        %v928 = vunpack.c.h.b16 %v604
        %v929 = vunpack.c.l.b16 %v605
        %v930 = vunpack.c.h.b16 %v605
        %v931 = vunpack.c.l.b16 %v606
        %v932 = vunpack.c.h.b16 %v606
        %v933 = vunpack.c.l.b16 %v607
        %v934 = vunpack.c.h.b16 %v607
        %v935 = vunpack.c.l.b16 %v608
        %v936 = vunpack.c.h.b16 %v608
        %v937 = vunpack.c.l.b16 %v609
        %v938 = vunpack.c.h.b16 %v609
        %v939 = vunpack.c.l.b16 %v610
        %v940 = vunpack.c.h.b16 %v610
        %v941 = vunpack.c.l.b16 %v611
        %v942 = vunpack.c.h.b16 %v611
        %v943 = vunpack.c.l.b16 %v612
        %v944 = vunpack.c.h.b16 %v612
        %v945 = vunpack.c.l.b16 %v613
        %v946 = vunpack.c.h.b16 %v613
        %v947 = vunpack.c.l.b16 %v614
        %v948 = vunpack.c.h.b16 %v614
        %v949 = vunpack.c.l.b16 %v615
        %v950 = vunpack.c.h.b16 %v615
        %v951 = vunpack.c.l.b16 %v616
        %v952 = vunpack.c.h.b16 %v616
        %v953 = vunpack.c.l.b16 %v617
        %v954 = vunpack.c.h.b16 %v617
        %v955 = vunpack.c.l.b16 %v618
        %v956 = vunpack.c.h.b16 %v618
        %v957 = vunpack.c.l.b16 %v619
        %v958 = vunpack.c.h.b16 %v619
        %v959 = vunpack.c.l.b16 %v620
        %v960 = vunpack.c.h.b16 %v620
        %v961 = vunpack.c.l.b16 %v621
        %v962 = vunpack.c.h.b16 %v621
        %v963 = vunpack.c.l.b16 %v622
        %v964 = vunpack.c.h.b16 %v622
        %v965 = vunpack.c.l.b16 %v623
        %v966 = vunpack.c.h.b16 %v623
        %v967 = vunpack.c.l.b16 %v624
        %v968 = vunpack.c.h.b16 %v624
        %v969 = vunpack.c.l.b16 %v625
        %v970 = vunpack.c.h.b16 %v625
        %v971 = vunpack.c.l.b16 %v626
        %v972 = vunpack.c.h.b16 %v626
        %v973 = vunpack.c.l.b16 %v627
        %v974 = vunpack.c.h.b16 %v627
        %v975 = vunpack.c.l.b16 %v628
        %v976 = vunpack.c.h.b16 %v628
        %v977 = vunpack.c.l.b16 %v629
        %v978 = vunpack.c.h.b16 %v629
        %v979 = vunpack.c.l.b16 %v630
        %v980 = vunpack.c.h.b16 %v630
        %v981 = vunpack.c.l.b16 %v631
        %v982 = vunpack.c.h.b16 %v631
        %v983 = vunpack.c.l.b16 %v632
        %v984 = vunpack.c.h.b16 %v632
        %v985 = vunpack.c.l.b16 %v633
        %v986 = vunpack.c.h.b16 %v633
        %v987 = vunpack.c.l.b16 %v634
        %v988 = vunpack.c.h.b16 %v634
        %v989 = vunpack.c.l.b16 %v635
        %v990 = vunpack.c.h.b16 %v635
        %v991 = vunpack.c.l.b16 %v636
        %v992 = vunpack.c.h.b16 %v636
        %v993 = vunpack.c.l.b16 %v637
        %v994 = vunpack.c.h.b16 %v637
        %v995 = vunpack.c.l.b16 %v638
        %v996 = vunpack.c.h.b16 %v638
        %v997 = vunpack.c.l.b16 %v639
        %v998 = vunpack.c.h.b16 %v639
        %v999 = vunpack.c.l.b16 %v640
        %v1000 = vunpack.c.h.b16 %v640
        %v1001 = vunpack.c.l.b16 %v641
        %v1002 = vunpack.c.h.b16 %v641
        %v1003 = vunpack.c.l.b16 %v642
        %v1004 = vunpack.c.h.b16 %v642
        %v1005 = vunpack.c.l.b16 %v643
        %v1006 = vunpack.c.h.b16 %v643
        %v1007 = vunpack.c.l.b16 %v644
        %v1008 = vunpack.c.h.b16 %v644
        %v1009 = vunpack.c.l.b16 %v645
        %v1010 = vunpack.c.h.b16 %v645
        %v1011 = vunpack.c.l.b16 %v646
        %v1012 = vunpack.c.h.b16 %v646
        %v1013 = vunpack.c.l.b16 %v647
        %v1014 = vunpack.c.h.b16 %v647
        %v1015 = vunpack.c.l.b16 %v648
        %v1016 = vunpack.c.h.b16 %v648
        %v1017 = vunpack.c.l.b16 %v649
        %v1018 = vunpack.c.h.b16 %v649
        %v1019 = vunpack.c.l.b16 %v650
        %v1020 = vunpack.c.h.b16 %v650
        %v1021 = vunpack.c.l.b16 %v651
        %v1022 = vunpack.c.h.b16 %v651
        %v1023 = vunpack.c.l.b16 %v652
        %v1024 = vunpack.c.h.b16 %v652
        %v1025 = vunpack.c.l.b16 %v653
        %v1026 = vunpack.c.h.b16 %v653
        %v1027 = vunpack.c.l.b16 %v654
        %v1028 = vunpack.c.h.b16 %v654
        %v1029 = vunpack.c.l.b16 %v655
        %v1030 = vunpack.c.h.b16 %v655
        %v1031 = vunpack.c.l.b16 %v656
        %v1032 = vunpack.c.h.b16 %v656
        %v1033 = vunpack.c.l.b16 %v657
        %v1034 = vunpack.c.h.b16 %v657
        %v1035 = vunpack.c.l.b16 %v658
        %v1036 = vunpack.c.h.b16 %v658
        %v1037 = vunpack.c.l.b16 %v659
        %v1038 = vunpack.c.h.b16 %v659
        %v1039 = vunpack.c.l.b16 %v660
        %v1040 = vunpack.c.h.b16 %v660
        %v1041 = vunpack.c.l.b16 %v661
        %v1042 = vunpack.c.h.b16 %v661
        %v1043 = vunpack.c.l.b16 %v662
        %v1044 = vunpack.c.h.b16 %v662
        %v1045 = vunpack.c.l.b16 %v663
        %v1046 = vunpack.c.h.b16 %v663
        %v1047 = vunpack.c.l.b16 %v664
        %v1048 = vunpack.c.h.b16 %v664
        %v1049 = vunpack.c.l.b16 %v665
        %v1050 = vunpack.c.h.b16 %v665
        %v1051 = vunpack.c.l.b16 %v666
        %v1052 = vunpack.c.h.b16 %v666
        %v1053 = vunpack.c.l.b16 %v667
        %v1054 = vunpack.c.h.b16 %v667
        %v1055 = vunpack.c.l.b16 %v668
        %v1056 = vunpack.c.h.b16 %v668
        %v1057 = vunpack.c.l.b16 %v669
        %v1058 = vunpack.c.h.b16 %v669
        %v1059 = vunpack.c.l.b16 %v670
        %v1060 = vunpack.c.h.b16 %v670
        %v1061 = vunpack.c.l.b16 %v671
        %v1062 = vunpack.c.h.b16 %v671
        %v1063 = vunpack.c.l.b16 %v672
        %v1064 = vunpack.c.h.b16 %v672
        %v1065 = vunpack.c.l.b16 %v673
        %v1066 = vunpack.c.h.b16 %v673
        %v1067 = vunpack.c.l.b16 %v674
        %v1068 = vunpack.c.h.b16 %v674
        %v1069 = vunpack.c.l.b16 %v675
        %v1070 = vunpack.c.h.b16 %v675
        %v1071 = vunpack.c.l.b16 %v676
        %v1072 = vunpack.c.h.b16 %v676
        %v1073 = vunpack.c.l.b16 %v677
        %v1074 = vunpack.c.h.b16 %v677
        %v1075 = vunpack.c.l.b16 %v678
        %v1076 = vunpack.c.h.b16 %v678
        %v1077 = vpack.c.b16 %v825, %v821
        %v1078 = vpack.c.b16 %v826, %v822
        %v1079 = vpack.c.b16 %v827, %v823
        %v1080 = vpack.c.b16 %v828, %v824
        %v1081 = vpack.c.b16 %v833, %v829
        %v1082 = vpack.c.b16 %v834, %v830
        %v1083 = vpack.c.b16 %v835, %v831
        %v1084 = vpack.c.b16 %v836, %v832
        %v1085 = vpack.c.b16 %v841, %v837
        %v1086 = vpack.c.b16 %v842, %v838
        %v1087 = vpack.c.b16 %v843, %v839
        %v1088 = vpack.c.b16 %v844, %v840
        %v1089 = vpack.c.b16 %v849, %v845
        %v1090 = vpack.c.b16 %v850, %v846
        %v1091 = vpack.c.b16 %v851, %v847
        %v1092 = vpack.c.b16 %v852, %v848
        %v1093 = vpack.c.b16 %v857, %v853
        %v1094 = vpack.c.b16 %v858, %v854
        %v1095 = vpack.c.b16 %v859, %v855
        %v1096 = vpack.c.b16 %v860, %v856
        %v1097 = vpack.c.b16 %v865, %v861
        %v1098 = vpack.c.b16 %v866, %v862
        %v1099 = vpack.c.b16 %v867, %v863
        %v1100 = vpack.c.b16 %v868, %v864
        %v1101 = vpack.c.b16 %v873, %v869
        %v1102 = vpack.c.b16 %v874, %v870
        %v1103 = vpack.c.b16 %v875, %v871
        %v1104 = vpack.c.b16 %v876, %v872
        %v1105 = vpack.c.b16 %v881, %v877
        %v1106 = vpack.c.b16 %v882, %v878
        %v1107 = vpack.c.b16 %v883, %v879
        %v1108 = vpack.c.b16 %v884, %v880
        %v1109 = vpack.c.b16 %v889, %v885
        %v1110 = vpack.c.b16 %v890, %v886
        %v1111 = vpack.c.b16 %v891, %v887
        %v1112 = vpack.c.b16 %v892, %v888
        %v1113 = vpack.c.b16 %v897, %v893
        %v1114 = vpack.c.b16 %v898, %v894
        %v1115 = vpack.c.b16 %v899, %v895
        %v1116 = vpack.c.b16 %v900, %v896
        %v1117 = vpack.c.b16 %v905, %v901
        %v1118 = vpack.c.b16 %v906, %v902
        %v1119 = vpack.c.b16 %v907, %v903
        %v1120 = vpack.c.b16 %v908, %v904
        %v1121 = vpack.c.b16 %v913, %v909
        %v1122 = vpack.c.b16 %v914, %v910
        %v1123 = vpack.c.b16 %v915, %v911
        %v1124 = vpack.c.b16 %v916, %v912
        %v1125 = vpack.c.b16 %v921, %v917
        %v1126 = vpack.c.b16 %v922, %v918
        %v1127 = vpack.c.b16 %v923, %v919
        %v1128 = vpack.c.b16 %v924, %v920
        %v1129 = vpack.c.b16 %v929, %v925
        %v1130 = vpack.c.b16 %v930, %v926
        %v1131 = vpack.c.b16 %v931, %v927
        %v1132 = vpack.c.b16 %v932, %v928
        %v1133 = vpack.c.b16 %v937, %v933
        %v1134 = vpack.c.b16 %v938, %v934
        %v1135 = vpack.c.b16 %v939, %v935
        %v1136 = vpack.c.b16 %v940, %v936
        %v1137 = vpack.c.b16 %v945, %v941
        %v1138 = vpack.c.b16 %v946, %v942
        %v1139 = vpack.c.b16 %v947, %v943
        %v1140 = vpack.c.b16 %v948, %v944
        %v1141 = vpack.c.b16 %v953, %v949
        %v1142 = vpack.c.b16 %v954, %v950
        %v1143 = vpack.c.b16 %v955, %v951
        %v1144 = vpack.c.b16 %v956, %v952
        %v1145 = vpack.c.b16 %v961, %v957
        %v1146 = vpack.c.b16 %v962, %v958
        %v1147 = vpack.c.b16 %v963, %v959
        %v1148 = vpack.c.b16 %v964, %v960
        %v1149 = vpack.c.b16 %v969, %v965
        %v1150 = vpack.c.b16 %v970, %v966
        %v1151 = vpack.c.b16 %v971, %v967
        %v1152 = vpack.c.b16 %v972, %v968
        %v1153 = vpack.c.b16 %v977, %v973
        %v1154 = vpack.c.b16 %v978, %v974
        %v1155 = vpack.c.b16 %v979, %v975
        %v1156 = vpack.c.b16 %v980, %v976
        %v1157 = vpack.c.b16 %v985, %v981
        %v1158 = vpack.c.b16 %v986, %v982
        %v1159 = vpack.c.b16 %v987, %v983
        %v1160 = vpack.c.b16 %v988, %v984
        %v1161 = vpack.c.b16 %v993, %v989
        %v1162 = vpack.c.b16 %v994, %v990
        %v1163 = vpack.c.b16 %v995, %v991
        %v1164 = vpack.c.b16 %v996, %v992
        %v1165 = vpack.c.b16 %v1001, %v997
        %v1166 = vpack.c.b16 %v1002, %v998
        %v1167 = vpack.c.b16 %v1003, %v999
        %v1168 = vpack.c.b16 %v1004, %v1000
        %v1169 = vpack.c.b16 %v1009, %v1005
        %v1170 = vpack.c.b16 %v1010, %v1006
        %v1171 = vpack.c.b16 %v1011, %v1007
        %v1172 = vpack.c.b16 %v1012, %v1008
        %v1173 = vpack.c.b16 %v1017, %v1013
        %v1174 = vpack.c.b16 %v1018, %v1014
        %v1175 = vpack.c.b16 %v1019, %v1015
        %v1176 = vpack.c.b16 %v1020, %v1016
        %v1177 = vpack.c.b16 %v1025, %v1021
        %v1178 = vpack.c.b16 %v1026, %v1022
        %v1179 = vpack.c.b16 %v1027, %v1023
        %v1180 = vpack.c.b16 %v1028, %v1024
        %v1181 = vpack.c.b16 %v1033, %v1029
        %v1182 = vpack.c.b16 %v1034, %v1030
        %v1183 = vpack.c.b16 %v1035, %v1031
        %v1184 = vpack.c.b16 %v1036, %v1032
        %v1185 = vpack.c.b16 %v1041, %v1037
        %v1186 = vpack.c.b16 %v1042, %v1038
        %v1187 = vpack.c.b16 %v1043, %v1039
        %v1188 = vpack.c.b16 %v1044, %v1040
        %v1189 = vpack.c.b16 %v1049, %v1045
        %v1190 = vpack.c.b16 %v1050, %v1046
        %v1191 = vpack.c.b16 %v1051, %v1047
        %v1192 = vpack.c.b16 %v1052, %v1048
        %v1193 = vpack.c.b16 %v1057, %v1053
        %v1194 = vpack.c.b16 %v1058, %v1054
        %v1195 = vpack.c.b16 %v1059, %v1055
        %v1196 = vpack.c.b16 %v1060, %v1056
        %v1197 = vpack.c.b16 %v1065, %v1061
        %v1198 = vpack.c.b16 %v1066, %v1062
        %v1199 = vpack.c.b16 %v1067, %v1063
        %v1200 = vpack.c.b16 %v1068, %v1064
        %v1201 = vpack.c.b16 %v1073, %v1069
        %v1202 = vpack.c.b16 %v1074, %v1070
        %v1203 = vpack.c.b16 %v1075, %v1071
        %v1204 = vpack.c.b16 %v1076, %v1072
        %1333 = vmatprep.subr.bf16.mxu0 %v1078
        %1334 = vmatpush1.bf16.msra.mxu0 %v1077
        %1335 = vmatprep.subr.bf16.mxu0 %v1082
        %1336 = vmatpush1.bf16.msra.mxu0 %v1081
        %1337 = vmatprep.subr.bf16.mxu0 %v1086
        %1338 = vmatpush1.bf16.msra.mxu0 %v1085
        %1339 = vmatprep.subr.bf16.mxu0 %v1090
        %1340 = vmatpush1.bf16.msra.mxu0 %v1089
        %1341 = vmatprep.subr.bf16.mxu0 %v1094
        %1342 = vmatpush1.bf16.msra.mxu0 %v1093
        %1343 = vmatprep.subr.bf16.mxu0 %v1098
        %1344 = vmatpush1.bf16.msra.mxu0 %v1097
        %1345 = vmatprep.subr.bf16.mxu0 %v1102
        %1346 = vmatpush1.bf16.msra.mxu0 %v1101
        %1347 = vmatprep.subr.bf16.mxu0 %v1106
        %1348 = vmatpush1.bf16.msra.mxu0 %v1105
        %1349 = vmatprep.subr.bf16.mxu0 %v1110
        %1350 = vmatpush1.bf16.msra.mxu0 %v1109
        %1351 = vmatprep.subr.bf16.mxu0 %v1114
        %1352 = vmatpush1.bf16.msra.mxu0 %v1113
        %1353 = vmatprep.subr.bf16.mxu0 %v1118
        %1354 = vmatpush1.bf16.msra.mxu0 %v1117
        %1355 = vmatprep.subr.bf16.mxu0 %v1122
        %1356 = vmatpush1.bf16.msra.mxu0 %v1121
        %1357 = vmatprep.subr.bf16.mxu0 %v1126
        %1358 = vmatpush1.bf16.msra.mxu0 %v1125
        %1359 = vmatprep.subr.bf16.mxu0 %v1130
        %1360 = vmatpush1.bf16.msra.mxu0 %v1129
        %1361 = vmatprep.subr.bf16.mxu0 %v1134
        %1362 = vmatpush1.bf16.msra.mxu0 %v1133
        %1363 = vmatprep.subr.bf16.mxu0 %v1138
        %1364 = vmatpush1.bf16.msra.mxu0 %v1137
        %1365 = vmatprep.mubr.bf16.mxu0 %v686
        %1366 = vmatmul.mubr.bf16.gmra.mrb[0].mxu0 %v685
        %v1367 = vpop.f32.mrb[0].mxu0
        %v1368 = vadd.f32 0.0, %v1367
        %v1369 = vpop.f32.mrb[0].mxu0
        %v1370 = vadd.f32 0.0, %v1369
        %v1371 = vpop.f32.mrb[0].mxu0
        %v1372 = vpop.f32.mrb[0].mxu0
        %1373 = vdwg.mxu0
        %1374 = vmatprep.subr.bf16.mxu0 %v1142
        %1375 = vmatpush1.bf16.msra.mxu0 %v1141
        %1376 = vmatprep.subr.bf16.mxu0 %v1146
        %1377 = vmatpush1.bf16.msra.mxu0 %v1145
        %1378 = vmatprep.subr.bf16.mxu0 %v1150
        %1379 = vmatpush1.bf16.msra.mxu0 %v1149
        %1380 = vmatprep.subr.bf16.mxu0 %v1154
        %1381 = vmatpush1.bf16.msra.mxu0 %v1153
        %1382 = vmatprep.subr.bf16.mxu0 %v1158
        %1383 = vmatpush1.bf16.msra.mxu0 %v1157
        %1384 = vmatprep.subr.bf16.mxu0 %v1162
        %1385 = vmatpush1.bf16.msra.mxu0 %v1161
        %1386 = vmatprep.subr.bf16.mxu0 %v1166
        %1387 = vmatpush1.bf16.msra.mxu0 %v1165
        %1388 = vmatprep.subr.bf16.mxu0 %v1170
        %1389 = vmatpush1.bf16.msra.mxu0 %v1169
        %1390 = vmatprep.subr.bf16.mxu0 %v1174
        %1391 = vmatpush1.bf16.msra.mxu0 %v1173
        %1392 = vmatprep.subr.bf16.mxu0 %v1178
        %1393 = vmatpush1.bf16.msra.mxu0 %v1177
        %1394 = vmatprep.subr.bf16.mxu0 %v1182
        %1395 = vmatpush1.bf16.msra.mxu0 %v1181
        %1396 = vmatprep.subr.bf16.mxu0 %v1186
        %1397 = vmatpush1.bf16.msra.mxu0 %v1185
        %1398 = vmatprep.subr.bf16.mxu0 %v1190
        %1399 = vmatpush1.bf16.msra.mxu0 %v1189
        %1400 = vmatprep.subr.bf16.mxu0 %v1194
        %1401 = vmatpush1.bf16.msra.mxu0 %v1193
        %1402 = vmatprep.subr.bf16.mxu0 %v1198
        %1403 = vmatpush1.bf16.msra.mxu0 %v1197
        %1404 = vmatprep.subr.bf16.mxu0 %v1202
        %1405 = vmatpush1.bf16.msra.mxu0 %v1201
        %1406 = vmatprep.mubr.bf16.mxu0 %v688
        %1407 = vmatmul.mubr.bf16.gmra.mrb[0].mxu0 %v687
        %v1408 = vpop.f32.mrb[0].mxu0
        %v1409 = vadd.f32 %v1368, %v1408
        %v1410 = vpop.f32.mrb[0].mxu0
        %v1411 = vadd.f32 %v1370, %v1410
        %v1412 = vpop.f32.mrb[0].mxu0
        %v1413 = vpop.f32.mrb[0].mxu0
        %1414 = vdwg.mxu0
        %1415 = vmatprep.subr.bf16.mxu0 %v1080
        %1416 = vmatpush1.bf16.msra.mxu0 %v1079
        %1417 = vmatprep.subr.bf16.mxu0 %v1084
        %1418 = vmatpush1.bf16.msra.mxu0 %v1083
        %1419 = vmatprep.subr.bf16.mxu0 %v1088
        %1420 = vmatpush1.bf16.msra.mxu0 %v1087
        %1421 = vmatprep.subr.bf16.mxu0 %v1092
        %1422 = vmatpush1.bf16.msra.mxu0 %v1091
        %1423 = vmatprep.subr.bf16.mxu0 %v1096
        %1424 = vmatpush1.bf16.msra.mxu0 %v1095
        %1425 = vmatprep.subr.bf16.mxu0 %v1100
        %1426 = vmatpush1.bf16.msra.mxu0 %v1099
        %1427 = vmatprep.subr.bf16.mxu0 %v1104
        %1428 = vmatpush1.bf16.msra.mxu0 %v1103
        %1429 = vmatprep.subr.bf16.mxu0 %v1108
        %1430 = vmatpush1.bf16.msra.mxu0 %v1107
        %1431 = vmatprep.subr.bf16.mxu0 %v1112
        %1432 = vmatpush1.bf16.msra.mxu0 %v1111
        %1433 = vmatprep.subr.bf16.mxu0 %v1116
        %1434 = vmatpush1.bf16.msra.mxu0 %v1115
        %1435 = vmatprep.subr.bf16.mxu0 %v1120
        %1436 = vmatpush1.bf16.msra.mxu0 %v1119
        %1437 = vmatprep.subr.bf16.mxu0 %v1124
        %1438 = vmatpush1.bf16.msra.mxu0 %v1123
        %1439 = vmatprep.subr.bf16.mxu0 %v1128
        %1440 = vmatpush1.bf16.msra.mxu0 %v1127
        %1441 = vmatprep.subr.bf16.mxu0 %v1132
        %1442 = vmatpush1.bf16.msra.mxu0 %v1131
        %1443 = vmatprep.subr.bf16.mxu0 %v1136
        %1444 = vmatpush1.bf16.msra.mxu0 %v1135
        %1445 = vmatprep.subr.bf16.mxu0 %v1140
        %1446 = vmatpush1.bf16.msra.mxu0 %v1139
        %1447 = vmatprep.mubr.bf16.mxu0 %v686
        %1448 = vmatmul.mubr.bf16.gmra.mrb[0].mxu0 %v685
        %v1449 = vpop.f32.mrb[0].mxu0
        %v1450 = vadd.f32 0.0, %v1449
        %v1451 = vpop.f32.mrb[0].mxu0
        %v1452 = vadd.f32 0.0, %v1451
        %v1453 = vpop.f32.mrb[0].mxu0
        %v1454 = vpop.f32.mrb[0].mxu0
        %1455 = vdwg.mxu0
        %1456 = vmatprep.subr.bf16.mxu0 %v1144
        %1457 = vmatpush1.bf16.msra.mxu0 %v1143
        %1458 = vmatprep.subr.bf16.mxu0 %v1148
        %1459 = vmatpush1.bf16.msra.mxu0 %v1147
        %1460 = vmatprep.subr.bf16.mxu0 %v1152
        %1461 = vmatpush1.bf16.msra.mxu0 %v1151
        %1462 = vmatprep.subr.bf16.mxu0 %v1156
        %1463 = vmatpush1.bf16.msra.mxu0 %v1155
        %1464 = vmatprep.subr.bf16.mxu0 %v1160
        %1465 = vmatpush1.bf16.msra.mxu0 %v1159
        %1466 = vmatprep.subr.bf16.mxu0 %v1164
        %1467 = vmatpush1.bf16.msra.mxu0 %v1163
        %1468 = vmatprep.subr.bf16.mxu0 %v1168
        %1469 = vmatpush1.bf16.msra.mxu0 %v1167
        %1470 = vmatprep.subr.bf16.mxu0 %v1172
        %1471 = vmatpush1.bf16.msra.mxu0 %v1171
        %1472 = vmatprep.subr.bf16.mxu0 %v1176
        %1473 = vmatpush1.bf16.msra.mxu0 %v1175
        %1474 = vmatprep.subr.bf16.mxu0 %v1180
        %1475 = vmatpush1.bf16.msra.mxu0 %v1179
        %1476 = vmatprep.subr.bf16.mxu0 %v1184
        %1477 = vmatpush1.bf16.msra.mxu0 %v1183
        %1478 = vmatprep.subr.bf16.mxu0 %v1188
        %1479 = vmatpush1.bf16.msra.mxu0 %v1187
        %1480 = vmatprep.subr.bf16.mxu0 %v1192
        %1481 = vmatpush1.bf16.msra.mxu0 %v1191
        %1482 = vmatprep.subr.bf16.mxu0 %v1196
        %1483 = vmatpush1.bf16.msra.mxu0 %v1195
        %1484 = vmatprep.subr.bf16.mxu0 %v1200
        %1485 = vmatpush1.bf16.msra.mxu0 %v1199
        %1486 = vmatprep.subr.bf16.mxu0 %v1204
        %1487 = vmatpush1.bf16.msra.mxu0 %v1203
        %1488 = vmatprep.mubr.bf16.mxu0 %v688
        %1489 = vmatmul.mubr.bf16.gmra.mrb[0].mxu0 %v687
        %v1490 = vpop.f32.mrb[0].mxu0
        %v1491 = vadd.f32 %v1450, %v1490
        %v1492 = vpop.f32.mrb[0].mxu0
        %v1493 = vadd.f32 %v1452, %v1492
        %v1494 = vpop.f32.mrb[0].mxu0
        %v1495 = vpop.f32.mrb[0].mxu0
        %1496 = vdwg.mxu0
        %v1497 = vadd.f32 %v545, %v1409
        %v1498 = vadd.f32 %v546, %v1411
        %v1499 = vadd.f32 %v547, %v1491
        %v1500 = vadd.f32 %v548, %v1493
        %1501 = vst [vmem:[#allocation2] sm:$0xff] %v1497
        %1502 = vst [vmem:[#allocation2 + $0x8] sm:$0xff] %v1498
        %1503 = vst [vmem:[#allocation2 + $0x10] sm:$0xff] %v1499
        %1504 = vst [vmem:[#allocation2 + $0x18] sm:$0xff] %v1500
        // Predicated region
        $region60: #{vgg_forward.17} parent=50 // pred_check
          %p1505 = pneg %p537
        $region61: #{vgg_forward.17} parent=50 // pred_check_branch
          %1507 = sbr.rel (%p1505) target = $region63
        $region62: #{vgg_forward.17} parent=50 // pred_region
          %v1508 = vld [vmem:[#allocation2] sm:$0xff]
          %v1509 = vld [vmem:[#allocation2 + $0x8] sm:$0xff]
          %v1510 = vld [vmem:[#allocation2 + $0x10] sm:$0xff]
          %v1511 = vld [vmem:[#allocation2 + $0x18] sm:$0xff]
          %v1512 = vld [vmem:[%s525] sm:$0xf]
          %v1514 = vlaneseq
          %v1515 = vshrl.u32 %v1514, 7
          %v1516 = vsub.s32 0, %v1515
          %v1517 = vrot.slane %v1512, %v1516
          %v1518 = vlaneseq
          %v1519 = vshrl.u32 %v1518, 7
          %v1520 = vsub.s32 1, %v1519
          %v1521 = vrot.slane %v1512, %v1520
          %v1522 = vlaneseq
          %v1523 = vshrl.u32 %v1522, 7
          %v1524 = vsub.s32 2, %v1523
          %v1525 = vrot.slane %v1512, %v1524
          %v1526 = vlaneseq
          %v1527 = vshrl.u32 %v1526, 7
          %v1528 = vsub.s32 3, %v1527
          %v1529 = vrot.slane %v1512, %v1528
          %v1534 = vadd.f32 %v1508, %v1517
          %v1535 = vadd.f32 %v1509, %v1521
          %v1536 = vadd.f32 %v1510, %v1525
          %v1537 = vadd.f32 %v1511, %v1529
          %1538 = vst [vmem:[%s535] sm:$0xff] %v1534
          %1539 = vst [vmem:[%s535 + $0x8] sm:$0xff] %v1535
          %1540 = vst [vmem:[%s535 + $0x10] sm:$0xff] %v1536
          %1541 = vst [vmem:[%s535 + $0x18] sm:$0xff] %v1537
        $region63: #{vgg_forward.17} parent=50 // pred_fallthru
          _
        %s1542 = smul.u32 4, %s20
        %p1543 = scmp.lt.s32.totalorder %s19, 0
        %s1544 = scalar_select %p1543, %s19, 0
        %p1545 = scmp.lt.s32.totalorder %s1542, 7
        %s1546 = scalar_select %p1545, %s1542, 7
        %s1547 = smul.addr %s1544, 8
        %s1548 = sadd.s32 %s1546, %s1547
        %s1549 = smul.addr %s1548, 8
        %s1550 = scalar_lea.vmem %s3, %s1549
        // Predicated region
        $region64: #{vgg_forward.17} parent=50 // pred_check
          %p1551 = pneg %p135
        $region65: #{vgg_forward.17} parent=50 // pred_check_branch
          %1553 = sbr.rel (%p1551) target = $region67
        $region66: #{vgg_forward.17} parent=50 // pred_region
          %s1554 = smul.u32 4, %s20
        $region67: #{vgg_forward.17} parent=50 // pred_fallthru
          _
      $region51: #{vgg_forward.17} parent=5 // pred_fallthru
        _
      %p1555 = scmp.le.s32.totalorder 2, %s9
      // Predicated region
      $region68: #{vgg_forward.17} parent=5 // pred_check
        %p1556 = pneg %p1555
      $region69: #{vgg_forward.17} parent=5 // pred_check_branch
        %1558 = sbr.rel (%p1556) target = $region71
      $region70: #{vgg_forward.17} parent=5 // pred_region
        %s1559 = ssub.s32 %s9, 2
        // Predicated region
        $region72: #{vgg_forward.17} parent=70 // pred_check
          %p1560 = pneg %p141
        $region73: #{vgg_forward.17} parent=70 // pred_check_branch
          %1562 = sbr.rel (%p1560) target = $region75
        $region74: #{vgg_forward.17} parent=70 // pred_region
          %s1563 = smul.u32 4, %s23
          %p1564 = scmp.lt.s32.totalorder %s22, 0
          %s1565 = scalar_select %p1564, %s22, 0
          %p1566 = scmp.lt.s32.totalorder %s1563, 7
          %s1567 = scalar_select %p1566, %s1563, 7
          %s1568 = smul.addr %s1565, 8
          %s1569 = sadd.s32 %s1567, %s1568
          %s1570 = smul.addr %s1569, 8
          %s1571 = scalar_lea.vmem %s3, %s1570
        $region75: #{vgg_forward.17} parent=70 // pred_fallthru
          _
      $region71: #{vgg_forward.17} parent=5 // pred_fallthru
        _
    $region6: #{vgg_forward.17} parent=1 // loop_footer
      %s13 = sadd.s32 1, %s9
    $region7: #{vgg_forward.17} parent=1 // loop_footer_branch
      %8 = sbr.rel target = $region3
    $region8: #{vgg_forward.17} parent=1 // loop_exit
      _

</llo_original>
